<compile_context>
chip_gen: v7x
topology: tpu7x:2x2x1
jax: 0.10.0
libtpu: 0.0.40
codegen_flags: <defaults>
</compile_context>

<pallas_src>
import functools

import numpy as np
import jax
import jax.numpy as jnp
from jax import lax
from jax.experimental import pallas as pl
from jax.experimental.pallas import tpu as pltpu


# ------------------------- Pallas kernels -------------------------

def _conv_relu_pool_kernel(x_ref, w_ref, b_ref, o_ref, *, K, Ho, Wo, Cout):
    """Fused 'same' conv + bias + ReLU + MaxPool2d(2,2) for ONE image.

    x_ref: (1, 4, Hp2, Wp2*Cin)   padded input split into (row-parity,
           col-parity) planes, q = ph*2+pw, lanes = (w, cin) flattened.
    w_ref: (2*K*2, Wp2*Cin, Wo*Cout)  offset block-diagonal weights indexed by
           flattened (dw, kh, pw); built once in _prep_conv_params.
    b_ref: (1, Wo*Cout)           bias tiled over the Wo lane groups.
    o_ref: (1, Ho, Wo*Cout)       pooled output, [ho, wo*Cout + co] layout.
    """
    WoC = Wo * Cout
    cache = {}

    def load(ph, pw, r0):                      # hoist/reuse the few distinct slices
        key = (ph, pw, r0)
        if key not in cache:
            cache[key] = x_ref[0, ph * 2 + pw, r0:r0 + Ho, :]
        return cache[key]

    pooled = None
    for dh in range(2):                        # pool phase (output row parity)
        for dw in range(2):                    # pool phase (output col parity)
            acc = jnp.zeros((Ho, WoC), jnp.float32)
            for kh in range(K):
                ph, r0 = (dh + kh) % 2, (dh + kh) // 2
                for pw in range(2):
                    w_idx = (dw * K + kh) * 2 + pw
                    acc = acc + jnp.dot(load(ph, pw, r0), w_ref[w_idx],
                                        preferred_element_type=jnp.float32)
            pooled = acc if pooled is None else jnp.maximum(pooled, acc)

    # bias is uniform per channel and ReLU is monotone, so
    # relu(max(conv) + b) == maxpool(relu(conv + b))
    o_ref[0] = jnp.maximum(pooled + b_ref[...], 0.0).astype(o_ref.dtype)


def _fc_stack_kernel(x_ref, w1_ref, b1_ref, w2_ref, b2_ref, w3_ref, b3_ref, o_ref):
    h = jnp.dot(x_ref[...], w1_ref[...], preferred_element_type=jnp.float32) + b1_ref[...]
    h = jnp.maximum(h, 0.0)
    h = jnp.dot(h, w2_ref[...], preferred_element_type=jnp.float32) + b2_ref[...]
    h = jnp.maximum(h, 0.0)
    y = jnp.dot(h, w3_ref[...], preferred_element_type=jnp.float32) + b3_ref[...]
    o_ref[...] = y.astype(o_ref.dtype)


# ------------------------- wrappers -------------------------

def conv_relu_pool(x_nhwc, w_comb, b_tiled, *, K, pad, Cout):
    """Fused conv(pad) + ReLU + MaxPool2d(2,2); one grid step per image."""
    N, H, W, Cin = x_nhwc.shape
    Hp, Wp = H + 2 * pad, W + 2 * pad
    Hp2, Wp2 = Hp // 2, Wp // 2
    Ho, Wo = H // 2, W // 2

    # glue: zero-pad + split into the 4 parity planes (tiny XLA ops)
    xp = jnp.pad(x_nhwc, ((0, 0), (pad, pad), (pad, pad), (0, 0)))
    xq = xp.reshape(N, Hp2, 2, Wp2, 2, Cin)
    xq = jnp.transpose(xq, (0, 2, 4, 1, 3, 5))          # (N, ph, pw, r, c, cin)
    xq = xq.reshape(N, 4, Hp2, Wp2 * Cin)

    out = pl.pallas_call(
        functools.partial(_conv_relu_pool_kernel, K=K, Ho=Ho, Wo=Wo, Cout=Cout),
        out_shape=jax.ShapeDtypeStruct((N, Ho, Wo * Cout), jnp.float32),
        grid=(N,),
        in_specs=[
            pl.BlockSpec((1, 4, Hp2, Wp2 * Cin), lambda n: (n, 0, 0, 0)),
            pl.BlockSpec(w_comb.shape, lambda n: (0, 0, 0)),
            pl.BlockSpec(b_tiled.shape, lambda n: (0, 0)),
        ],
        out_specs=pl.BlockSpec((1, Ho, Wo * Cout), lambda n: (n, 0, 0)),
        compiler_params=pltpu.CompilerParams(dimension_semantics=("parallel",)),
    )(xq, w_comb, b_tiled)
    return out.reshape(N, Ho, Wo, Cout)                 # row-major no-op reshape


def fc_stack(x, w1, b1, w2, b2, w3, b3):
    """fc1 + ReLU + fc2 + ReLU + fc3 in a single kernel."""
    N = x.shape[0]
    args = (x, w1, b1, w2, b2, w3, b3)
    return pl.pallas_call(
        _fc_stack_kernel,
        out_shape=jax.ShapeDtypeStruct((N, w3.shape[1]), jnp.float32),
        grid=(1,),
        in_specs=[pl.BlockSpec(a.shape, lambda i: (0, 0)) for a in args],
        out_specs=pl.BlockSpec((N, w3.shape[1]), lambda i: (0, 0)),
        compiler_params=pltpu.CompilerParams(dimension_semantics=("arbitrary",)),
    )(*args)


# ------------------------- one-time param preparation -------------------------

def _prep_conv_params(w_oihw, b, H, W, pad):
    """Offset block-diagonal weights for the fused conv+pool kernel.

    comb[dw, kh, pw][(c0+wo)*Cin + ci, wo*Cout + co] = w[co, ci, kh, kw]
      for every kw with (dw+kw) % 2 == pw, c0 = (dw+kw) // 2.
    """
    w = np.asarray(w_oihw, np.float32)                  # (Cout, Cin, K, K)
    Cout, Cin, K, _ = w.shape
    Wo = W // 2
    Wp2 = (W + 2 * pad) // 2
    comb = np.zeros((2, K, 2, Wp2 * Cin, Wo * Cout), np.float32)
    for dw in range(2):
        for kh in range(K):
            for kw in range(K):
                pw = (dw + kw) % 2
                c0 = (dw + kw) // 2
                wt = w[:, :, kh, kw].T                  # (Cin, Cout)
                for wo in range(Wo):
                    r = (c0 + wo) * Cin
                    c = wo * Cout
                    comb[dw, kh, pw, r:r + Cin, c:c + Cout] += wt
    comb = comb.reshape(2 * K * 2, Wp2 * Cin, Wo * Cout)
    b_tiled = np.tile(np.asarray(b, np.float32), Wo)[None, :]   # (1, Wo*Cout)
    return jnp.asarray(comb), jnp.asarray(b_tiled)


def prepare_params(p):
    """Hoisted re-layout of torch-format params into kernel formats."""
    c1_w, c1_b = _prep_conv_params(p["w1"], p["b1"], 32, 32, 2)
    c2_w, c2_b = _prep_conv_params(p["w2"], p["b2"], 16, 16, 1)
    c3_w, c3_b = _prep_conv_params(p["w3"], p["b3"], 8, 8, 1)
    # torch flattens NCHW (c*16 + h*4 + w); our conv3 output flattens as
    # (h*48 + w*12 + c) -> permute fc1's input columns once here.
    f1 = np.asarray(p["fc1_w"], np.float32).reshape(128, 12, 4, 4)
    f1 = np.transpose(f1, (2, 3, 1, 0)).reshape(12 * 4 * 4, 128)
    return dict(
        c1_w=c1_w, c1_b=c1_b, c2_w=c2_w, c2_b=c2_b, c3_w=c3_w, c3_b=c3_b,
        fc1_w=jnp.asarray(f1),
        fc1_b=jnp.asarray(p["fc1_b"], jnp.float32).reshape(1, -1),
        fc2_w=jnp.asarray(np.asarray(p["fc2_w"], np.float32).T),
        fc2_b=jnp.asarray(p["fc2_b"], jnp.float32).reshape(1, -1),
        fc3_w=jnp.asarray(np.asarray(p["fc3_w"], np.float32).T),
        fc3_b=jnp.asarray(p["fc3_b"], jnp.float32).reshape(1, -1),
    )


# ------------------------- forward -------------------------

def dainet3_forward(x_nchw, pp):
    x = jnp.transpose(x_nchw, (0, 2, 3, 1))                       # NCHW -> NHWC
    # layer1: Conv(3->12,k5,p2) + Dropout(0.1)[eval: identity] + ReLU + MaxPool
    x = conv_relu_pool(x, pp["c1_w"], pp["c1_b"], K=5, pad=2, Cout=12)  # (N,16,16,12)
    # layer2: Conv(12->24,k3,p1) + ReLU + MaxPool
    x = conv_relu_pool(x, pp["c2_w"], pp["c2_b"], K=3, pad=1, Cout=24)  # (N,8,8,24)
    # layer3: Conv(24->12,k3,p1) + ReLU + MaxPool
    x = conv_relu_pool(x, pp["c3_w"], pp["c3_b"], K=3, pad=1, Cout=12)  # (N,4,4,12)
    N = x.shape[0]
    x = x.reshape(N, 4 * 4 * 12)          # (h,w,c) flatten; fc1_w pre-permuted
    return fc_stack(x, pp["fc1_w"], pp["fc1_b"], pp["fc2_w"], pp["fc2_b"],
                    pp["fc3_w"], pp["fc3_b"])


# ------------------------- params & reference -------------------------

def init_params(key):
    ks = jax.random.split(key, 12)

    def init(k, shape, fan_in):
        return jax.random.normal(k, shape, jnp.float32) / jnp.sqrt(float(fan_in))

    return dict(
        w1=init(ks[0], (12, 3, 5, 5), 3 * 25), b1=init(ks[1], (12,), 3 * 25),
        w2=init(ks[2], (24, 12, 3, 3), 12 * 9), b2=init(ks[3], (24,), 12 * 9),
        w3=init(ks[4], (12, 24, 3, 3), 24 * 9), b3=init(ks[5], (12,), 24 * 9),
        fc1_w=init(ks[6], (128, 192), 192), fc1_b=init(ks[7], (128,), 192),
        fc2_w=init(ks[8], (84, 128), 128), fc2_b=init(ks[9], (84,), 128),
        fc3_w=init(ks[10], (10, 84), 84), fc3_b=init(ks[11], (10,), 84),
    )


def reference_forward(x_nchw, p):
    """Pure-JAX (XLA) reference with PyTorch NCHW semantics, for verification."""
    def conv(x, w, b, pad):
        y = lax.conv_general_dilated(
            x, w, (1, 1), [(pad, pad), (pad, pad)],
            dimension_numbers=("NCHW", "OIHW", "NCHW"))
        return y + b[None, :, None, None]

    def pool(x):
        return lax.reduce_window(x, -jnp.inf, lax.max,
                                 (1, 1, 2, 2), (1, 1, 2, 2), "VALID")

    x = pool(jax.nn.relu(conv(x_nchw, p["w1"], p["b1"], 2)))
    x = pool(jax.nn.relu(conv(x, p["w2"], p["b2"], 1)))
    x = pool(jax.nn.relu(conv(x, p["w3"], p["b3"], 1)))
    x = x.reshape(x.shape[0], -1)
    x = jax.nn.relu(x @ p["fc1_w"].T + p["fc1_b"])
    x = jax.nn.relu(x @ p["fc2_w"].T + p["fc2_b"])
    return x @ p["fc3_w"].T + p["fc3_b"]


if __name__ == "__main__":
    key = jax.random.PRNGKey(0)
    pkey, xkey = jax.random.split(key)
    params = init_params(pkey)
    prepped = prepare_params(params)      # one-time weight re-layout
    # CIFAR-shaped input: the fc1 dimension (12*4*4) implies 3x32x32.
    x = jax.random.normal(xkey, (2, 3, 32, 32), jnp.float32)

    fwd = jax.jit(dainet3_forward)
    out = jax.block_until_ready(fwd(x, prepped))
    assert out.shape == (2, 10)

    ref = reference_forward(x, params)
    err = float(jnp.max(jnp.abs(out - ref)))
    assert jnp.allclose(out, ref, atol=1e-4, rtol=1e-4), err

    print("KERNEL_OK")
</pallas_src>

<mosaic_0001>
module attributes {stable_mosaic.version = 11 : i64} {
  func.func @_conv_relu_pool_kernel(%arg0: i32, %arg1: memref<1x4x18x54xf32, #tpu.memory_space<vmem>>, %arg2: memref<20x54x192xf32, #tpu.memory_space<vmem>>, %arg3: memref<1x192xf32, #tpu.memory_space<vmem>>, %arg4: memref<1x16x192xf32, #tpu.memory_space<vmem>>) attributes {dimension_semantics = [#tpu.dimension_semantics<parallel>], iteration_bounds = array<i64: 2>, scalar_prefetch = 0 : i64, scratch_operands = 0 : i64, tpu.core_type = #tpu.core_type<tc>, window_params = [{transform_indices = @transform_0, window_bounds = array<i64: 1, 4, 18, 54>}, {pipeline_mode = #tpu.pipeline_mode<synchronous>, transform_indices = @transform_1, window_bounds = array<i64: 20, 54, 192>}, {pipeline_mode = #tpu.pipeline_mode<synchronous>, transform_indices = @transform_2, window_bounds = array<i64: 1, 192>}, {transform_indices = @transform_3, window_bounds = array<i64: 1, 16, 192>}]} {
    %cst = arith.constant 0.000000e+00 : f32
    %0 = vector.broadcast %cst : f32 to vector<16x192xf32>
    %c0 = arith.constant 0 : index
    %c0_0 = arith.constant 0 : index
    %c0_1 = arith.constant 0 : index
    %c0_2 = arith.constant 0 : index
    %1 = vector.load %arg1[%c0, %c0_0, %c0_1, %c0_2] : memref<1x4x18x54xf32, #tpu.memory_space<vmem>>, vector<1x1x16x54xf32>
    %2 = vector.shape_cast %1 : vector<1x1x16x54xf32> to vector<16x54xf32>
    %c0_3 = arith.constant 0 : index
    %c0_4 = arith.constant 0 : index
    %c0_5 = arith.constant 0 : index
    %3 = vector.load %arg2[%c0_3, %c0_4, %c0_5] : memref<20x54x192xf32, #tpu.memory_space<vmem>>, vector<1x54x192xf32>
    %4 = vector.shape_cast %3 : vector<1x54x192xf32> to vector<54x192xf32>
    %cst_6 = arith.constant dense<0.000000e+00> : vector<16x192xf32>
    %5 = tpu.matmul %2, %4, %cst_6 {dimension_numbers = #tpu.dot_dimension_numbers<[1], [0], [0], [1], [0, 0, 1, 1], [], []>} : vector<16x54xf32>, vector<54x192xf32>, vector<16x192xf32> -> vector<16x192xf32>
    %6 = arith.addf %0, %5 : vector<16x192xf32>
    %c0_7 = arith.constant 0 : index
    %c1 = arith.constant 1 : index
    %c0_8 = arith.constant 0 : index
    %c0_9 = arith.constant 0 : index
    %7 = vector.load %arg1[%c0_7, %c1, %c0_8, %c0_9] : memref<1x4x18x54xf32, #tpu.memory_space<vmem>>, vector<1x1x16x54xf32>
    %8 = vector.shape_cast %7 : vector<1x1x16x54xf32> to vector<16x54xf32>
    %c1_10 = arith.constant 1 : index
    %c0_11 = arith.constant 0 : index
    %c0_12 = arith.constant 0 : index
    %9 = vector.load %arg2[%c1_10, %c0_11, %c0_12] : memref<20x54x192xf32, #tpu.memory_space<vmem>>, vector<1x54x192xf32>
    %10 = vector.shape_cast %9 : vector<1x54x192xf32> to vector<54x192xf32>
    %cst_13 = arith.constant dense<0.000000e+00> : vector<16x192xf32>
    %11 = tpu.matmul %8, %10, %cst_13 {dimension_numbers = #tpu.dot_dimension_numbers<[1], [0], [0], [1], [0, 0, 1, 1], [], []>} : vector<16x54xf32>, vector<54x192xf32>, vector<16x192xf32> -> vector<16x192xf32>
    %12 = arith.addf %6, %11 : vector<16x192xf32>
    %c0_14 = arith.constant 0 : index
    %c2 = arith.constant 2 : index
    %c0_15 = arith.constant 0 : index
    %c0_16 = arith.constant 0 : index
    %13 = vector.load %arg1[%c0_14, %c2, %c0_15, %c0_16] : memref<1x4x18x54xf32, #tpu.memory_space<vmem>>, vector<1x1x16x54xf32>
    %14 = vector.shape_cast %13 : vector<1x1x16x54xf32> to vector<16x54xf32>
    %c2_17 = arith.constant 2 : index
    %c0_18 = arith.constant 0 : index
    %c0_19 = arith.constant 0 : index
    %15 = vector.load %arg2[%c2_17, %c0_18, %c0_19] : memref<20x54x192xf32, #tpu.memory_space<vmem>>, vector<1x54x192xf32>
    %16 = vector.shape_cast %15 : vector<1x54x192xf32> to vector<54x192xf32>
    %cst_20 = arith.constant dense<0.000000e+00> : vector<16x192xf32>
    %17 = tpu.matmul %14, %16, %cst_20 {dimension_numbers = #tpu.dot_dimension_numbers<[1], [0], [0], [1], [0, 0, 1, 1], [], []>} : vector<16x54xf32>, vector<54x192xf32>, vector<16x192xf32> -> vector<16x192xf32>
    %18 = arith.addf %12, %17 : vector<16x192xf32>
    %c0_21 = arith.constant 0 : index
    %c3 = arith.constant 3 : index
    %c0_22 = arith.constant 0 : index
    %c0_23 = arith.constant 0 : index
    %19 = vector.load %arg1[%c0_21, %c3, %c0_22, %c0_23] : memref<1x4x18x54xf32, #tpu.memory_space<vmem>>, vector<1x1x16x54xf32>
    %20 = vector.shape_cast %19 : vector<1x1x16x54xf32> to vector<16x54xf32>
    %c3_24 = arith.constant 3 : index
    %c0_25 = arith.constant 0 : index
    %c0_26 = arith.constant 0 : index
    %21 = vector.load %arg2[%c3_24, %c0_25, %c0_26] : memref<20x54x192xf32, #tpu.memory_space<vmem>>, vector<1x54x192xf32>
    %22 = vector.shape_cast %21 : vector<1x54x192xf32> to vector<54x192xf32>
    %cst_27 = arith.constant dense<0.000000e+00> : vector<16x192xf32>
    %23 = tpu.matmul %20, %22, %cst_27 {dimension_numbers = #tpu.dot_dimension_numbers<[1], [0], [0], [1], [0, 0, 1, 1], [], []>} : vector<16x54xf32>, vector<54x192xf32>, vector<16x192xf32> -> vector<16x192xf32>
    %24 = arith.addf %18, %23 : vector<16x192xf32>
    %c0_28 = arith.constant 0 : index
    %c0_29 = arith.constant 0 : index
    %c1_30 = arith.constant 1 : index
    %c0_31 = arith.constant 0 : index
    %25 = vector.load %arg1[%c0_28, %c0_29, %c1_30, %c0_31] : memref<1x4x18x54xf32, #tpu.memory_space<vmem>>, vector<1x1x16x54xf32>
    %26 = vector.shape_cast %25 : vector<1x1x16x54xf32> to vector<16x54xf32>
    %c4 = arith.constant 4 : index
    %c0_32 = arith.constant 0 : index
    %c0_33 = arith.constant 0 : index
    %27 = vector.load %arg2[%c4, %c0_32, %c0_33] : memref<20x54x192xf32, #tpu.memory_space<vmem>>, vector<1x54x192xf32>
    %28 = vector.shape_cast %27 : vector<1x54x192xf32> to vector<54x192xf32>
    %cst_34 = arith.constant dense<0.000000e+00> : vector<16x192xf32>
    %29 = tpu.matmul %26, %28, %cst_34 {dimension_numbers = #tpu.dot_dimension_numbers<[1], [0], [0], [1], [0, 0, 1, 1], [], []>} : vector<16x54xf32>, vector<54x192xf32>, vector<16x192xf32> -> vector<16x192xf32>
    %30 = arith.addf %24, %29 : vector<16x192xf32>
    %c0_35 = arith.constant 0 : index
    %c1_36 = arith.constant 1 : index
    %c1_37 = arith.constant 1 : index
    %c0_38 = arith.constant 0 : index
    %31 = vector.load %arg1[%c0_35, %c1_36, %c1_37, %c0_38] : memref<1x4x18x54xf32, #tpu.memory_space<vmem>>, vector<1x1x16x54xf32>
    %32 = vector.shape_cast %31 : vector<1x1x16x54xf32> to vector<16x54xf32>
    %c5 = arith.constant 5 : index
    %c0_39 = arith.constant 0 : index
    %c0_40 = arith.constant 0 : index
    %33 = vector.load %arg2[%c5, %c0_39, %c0_40] : memref<20x54x192xf32, #tpu.memory_space<vmem>>, vector<1x54x192xf32>
    %34 = vector.shape_cast %33 : vector<1x54x192xf32> to vector<54x192xf32>
    %cst_41 = arith.constant dense<0.000000e+00> : vector<16x192xf32>
    %35 = tpu.matmul %32, %34, %cst_41 {dimension_numbers = #tpu.dot_dimension_numbers<[1], [0], [0], [1], [0, 0, 1, 1], [], []>} : vector<16x54xf32>, vector<54x192xf32>, vector<16x192xf32> -> vector<16x192xf32>
    %36 = arith.addf %30, %35 : vector<16x192xf32>
    %c0_42 = arith.constant 0 : index
    %c2_43 = arith.constant 2 : index
    %c1_44 = arith.constant 1 : index
    %c0_45 = arith.constant 0 : index
    %37 = vector.load %arg1[%c0_42, %c2_43, %c1_44, %c0_45] : memref<1x4x18x54xf32, #tpu.memory_space<vmem>>, vector<1x1x16x54xf32>
    %38 = vector.shape_cast %37 : vector<1x1x16x54xf32> to vector<16x54xf32>
    %c6 = arith.constant 6 : index
    %c0_46 = arith.constant 0 : index
    %c0_47 = arith.constant 0 : index
    %39 = vector.load %arg2[%c6, %c0_46, %c0_47] : memref<20x54x192xf32, #tpu.memory_space<vmem>>, vector<1x54x192xf32>
    %40 = vector.shape_cast %39 : vector<1x54x192xf32> to vector<54x192xf32>
    %cst_48 = arith.constant dense<0.000000e+00> : vector<16x192xf32>
    %41 = tpu.matmul %38, %40, %cst_48 {dimension_numbers = #tpu.dot_dimension_numbers<[1], [0], [0], [1], [0, 0, 1, 1], [], []>} : vector<16x54xf32>, vector<54x192xf32>, vector<16x192xf32> -> vector<16x192xf32>
    %42 = arith.addf %36, %41 : vector<16x192xf32>
    %c0_49 = arith.constant 0 : index
    %c3_50 = arith.constant 3 : index
    %c1_51 = arith.constant 1 : index
    %c0_52 = arith.constant 0 : index
    %43 = vector.load %arg1[%c0_49, %c3_50, %c1_51, %c0_52] : memref<1x4x18x54xf32, #tpu.memory_space<vmem>>, vector<1x1x16x54xf32>
    %44 = vector.shape_cast %43 : vector<1x1x16x54xf32> to vector<16x54xf32>
    %c7 = arith.constant 7 : index
    %c0_53 = arith.constant 0 : index
    %c0_54 = arith.constant 0 : index
    %45 = vector.load %arg2[%c7, %c0_53, %c0_54] : memref<20x54x192xf32, #tpu.memory_space<vmem>>, vector<1x54x192xf32>
    %46 = vector.shape_cast %45 : vector<1x54x192xf32> to vector<54x192xf32>
    %cst_55 = arith.constant dense<0.000000e+00> : vector<16x192xf32>
    %47 = tpu.matmul %44, %46, %cst_55 {dimension_numbers = #tpu.dot_dimension_numbers<[1], [0], [0], [1], [0, 0, 1, 1], [], []>} : vector<16x54xf32>, vector<54x192xf32>, vector<16x192xf32> -> vector<16x192xf32>
    %48 = arith.addf %42, %47 : vector<16x192xf32>
    %c0_56 = arith.constant 0 : index
    %c0_57 = arith.constant 0 : index
    %c2_58 = arith.constant 2 : index
    %c0_59 = arith.constant 0 : index
    %49 = vector.load %arg1[%c0_56, %c0_57, %c2_58, %c0_59] : memref<1x4x18x54xf32, #tpu.memory_space<vmem>>, vector<1x1x16x54xf32>
    %50 = vector.shape_cast %49 : vector<1x1x16x54xf32> to vector<16x54xf32>
    %c8 = arith.constant 8 : index
    %c0_60 = arith.constant 0 : index
    %c0_61 = arith.constant 0 : index
    %51 = vector.load %arg2[%c8, %c0_60, %c0_61] : memref<20x54x192xf32, #tpu.memory_space<vmem>>, vector<1x54x192xf32>
    %52 = vector.shape_cast %51 : vector<1x54x192xf32> to vector<54x192xf32>
    %cst_62 = arith.constant dense<0.000000e+00> : vector<16x192xf32>
    %53 = tpu.matmul %50, %52, %cst_62 {dimension_numbers = #tpu.dot_dimension_numbers<[1], [0], [0], [1], [0, 0, 1, 1], [], []>} : vector<16x54xf32>, vector<54x192xf32>, vector<16x192xf32> -> vector<16x192xf32>
    %54 = arith.addf %48, %53 : vector<16x192xf32>
    %c0_63 = arith.constant 0 : index
    %c1_64 = arith.constant 1 : index
    %c2_65 = arith.constant 2 : index
    %c0_66 = arith.constant 0 : index
    %55 = vector.load %arg1[%c0_63, %c1_64, %c2_65, %c0_66] : memref<1x4x18x54xf32, #tpu.memory_space<vmem>>, vector<1x1x16x54xf32>
    %56 = vector.shape_cast %55 : vector<1x1x16x54xf32> to vector<16x54xf32>
    %c9 = arith.constant 9 : index
    %c0_67 = arith.constant 0 : index
    %c0_68 = arith.constant 0 : index
    %57 = vector.load %arg2[%c9, %c0_67, %c0_68] : memref<20x54x192xf32, #tpu.memory_space<vmem>>, vector<1x54x192xf32>
    %58 = vector.shape_cast %57 : vector<1x54x192xf32> to vector<54x192xf32>
    %cst_69 = arith.constant dense<0.000000e+00> : vector<16x192xf32>
    %59 = tpu.matmul %56, %58, %cst_69 {dimension_numbers = #tpu.dot_dimension_numbers<[1], [0], [0], [1], [0, 0, 1, 1], [], []>} : vector<16x54xf32>, vector<54x192xf32>, vector<16x192xf32> -> vector<16x192xf32>
    %60 = arith.addf %54, %59 : vector<16x192xf32>
    %cst_70 = arith.constant 0.000000e+00 : f32
    %61 = vector.broadcast %cst_70 : f32 to vector<16x192xf32>
    %c10 = arith.constant 10 : index
    %c0_71 = arith.constant 0 : index
    %c0_72 = arith.constant 0 : index
    %62 = vector.load %arg2[%c10, %c0_71, %c0_72] : memref<20x54x192xf32, #tpu.memory_space<vmem>>, vector<1x54x192xf32>
    %63 = vector.shape_cast %62 : vector<1x54x192xf32> to vector<54x192xf32>
    %cst_73 = arith.constant dense<0.000000e+00> : vector<16x192xf32>
    %64 = tpu.matmul %2, %63, %cst_73 {dimension_numbers = #tpu.dot_dimension_numbers<[1], [0], [0], [1], [0, 0, 1, 1], [], []>} : vector<16x54xf32>, vector<54x192xf32>, vector<16x192xf32> -> vector<16x192xf32>
    %65 = arith.addf %61, %64 : vector<16x192xf32>
    %c11 = arith.constant 11 : index
    %c0_74 = arith.constant 0 : index
    %c0_75 = arith.constant 0 : index
    %66 = vector.load %arg2[%c11, %c0_74, %c0_75] : memref<20x54x192xf32, #tpu.memory_space<vmem>>, vector<1x54x192xf32>
    %67 = vector.shape_cast %66 : vector<1x54x192xf32> to vector<54x192xf32>
    %cst_76 = arith.constant dense<0.000000e+00> : vector<16x192xf32>
    %68 = tpu.matmul %8, %67, %cst_76 {dimension_numbers = #tpu.dot_dimension_numbers<[1], [0], [0], [1], [0, 0, 1, 1], [], []>} : vector<16x54xf32>, vector<54x192xf32>, vector<16x192xf32> -> vector<16x192xf32>
    %69 = arith.addf %65, %68 : vector<16x192xf32>
    %c12 = arith.constant 12 : index
    %c0_77 = arith.constant 0 : index
    %c0_78 = arith.constant 0 : index
    %70 = vector.load %arg2[%c12, %c0_77, %c0_78] : memref<20x54x192xf32, #tpu.memory_space<vmem>>, vector<1x54x192xf32>
    %71 = vector.shape_cast %70 : vector<1x54x192xf32> to vector<54x192xf32>
    %cst_79 = arith.constant dense<0.000000e+00> : vector<16x192xf32>
    %72 = tpu.matmul %14, %71, %cst_79 {dimension_numbers = #tpu.dot_dimension_numbers<[1], [0], [0], [1], [0, 0, 1, 1], [], []>} : vector<16x54xf32>, vector<54x192xf32>, vector<16x192xf32> -> vector<16x192xf32>
    %73 = arith.addf %69, %72 : vector<16x192xf32>
    %c13 = arith.constant 13 : index
    %c0_80 = arith.constant 0 : index
    %c0_81 = arith.constant 0 : index
    %74 = vector.load %arg2[%c13, %c0_80, %c0_81] : memref<20x54x192xf32, #tpu.memory_space<vmem>>, vector<1x54x192xf32>
    %75 = vector.shape_cast %74 : vector<1x54x192xf32> to vector<54x192xf32>
    %cst_82 = arith.constant dense<0.000000e+00> : vector<16x192xf32>
    %76 = tpu.matmul %20, %75, %cst_82 {dimension_numbers = #tpu.dot_dimension_numbers<[1], [0], [0], [1], [0, 0, 1, 1], [], []>} : vector<16x54xf32>, vector<54x192xf32>, vector<16x192xf32> -> vector<16x192xf32>
    %77 = arith.addf %73, %76 : vector<16x192xf32>
    %c14 = arith.constant 14 : index
    %c0_83 = arith.constant 0 : index
    %c0_84 = arith.constant 0 : index
    %78 = vector.load %arg2[%c14, %c0_83, %c0_84] : memref<20x54x192xf32, #tpu.memory_space<vmem>>, vector<1x54x192xf32>
    %79 = vector.shape_cast %78 : vector<1x54x192xf32> to vector<54x192xf32>
    %cst_85 = arith.constant dense<0.000000e+00> : vector<16x192xf32>
    %80 = tpu.matmul %26, %79, %cst_85 {dimension_numbers = #tpu.dot_dimension_numbers<[1], [0], [0], [1], [0, 0, 1, 1], [], []>} : vector<16x54xf32>, vector<54x192xf32>, vector<16x192xf32> -> vector<16x192xf32>
    %81 = arith.addf %77, %80 : vector<16x192xf32>
    %c15 = arith.constant 15 : index
    %c0_86 = arith.constant 0 : index
    %c0_87 = arith.constant 0 : index
    %82 = vector.load %arg2[%c15, %c0_86, %c0_87] : memref<20x54x192xf32, #tpu.memory_space<vmem>>, vector<1x54x192xf32>
    %83 = vector.shape_cast %82 : vector<1x54x192xf32> to vector<54x192xf32>
    %cst_88 = arith.constant dense<0.000000e+00> : vector<16x192xf32>
    %84 = tpu.matmul %32, %83, %cst_88 {dimension_numbers = #tpu.dot_dimension_numbers<[1], [0], [0], [1], [0, 0, 1, 1], [], []>} : vector<16x54xf32>, vector<54x192xf32>, vector<16x192xf32> -> vector<16x192xf32>
    %85 = arith.addf %81, %84 : vector<16x192xf32>
    %c16 = arith.constant 16 : index
    %c0_89 = arith.constant 0 : index
    %c0_90 = arith.constant 0 : index
    %86 = vector.load %arg2[%c16, %c0_89, %c0_90] : memref<20x54x192xf32, #tpu.memory_space<vmem>>, vector<1x54x192xf32>
    %87 = vector.shape_cast %86 : vector<1x54x192xf32> to vector<54x192xf32>
    %cst_91 = arith.constant dense<0.000000e+00> : vector<16x192xf32>
    %88 = tpu.matmul %38, %87, %cst_91 {dimension_numbers = #tpu.dot_dimension_numbers<[1], [0], [0], [1], [0, 0, 1, 1], [], []>} : vector<16x54xf32>, vector<54x192xf32>, vector<16x192xf32> -> vector<16x192xf32>
    %89 = arith.addf %85, %88 : vector<16x192xf32>
    %c17 = arith.constant 17 : index
    %c0_92 = arith.constant 0 : index
    %c0_93 = arith.constant 0 : index
    %90 = vector.load %arg2[%c17, %c0_92, %c0_93] : memref<20x54x192xf32, #tpu.memory_space<vmem>>, vector<1x54x192xf32>
    %91 = vector.shape_cast %90 : vector<1x54x192xf32> to vector<54x192xf32>
    %cst_94 = arith.constant dense<0.000000e+00> : vector<16x192xf32>
    %92 = tpu.matmul %44, %91, %cst_94 {dimension_numbers = #tpu.dot_dimension_numbers<[1], [0], [0], [1], [0, 0, 1, 1], [], []>} : vector<16x54xf32>, vector<54x192xf32>, vector<16x192xf32> -> vector<16x192xf32>
    %93 = arith.addf %89, %92 : vector<16x192xf32>
    %c18 = arith.constant 18 : index
    %c0_95 = arith.constant 0 : index
    %c0_96 = arith.constant 0 : index
    %94 = vector.load %arg2[%c18, %c0_95, %c0_96] : memref<20x54x192xf32, #tpu.memory_space<vmem>>, vector<1x54x192xf32>
    %95 = vector.shape_cast %94 : vector<1x54x192xf32> to vector<54x192xf32>
    %cst_97 = arith.constant dense<0.000000e+00> : vector<16x192xf32>
    %96 = tpu.matmul %50, %95, %cst_97 {dimension_numbers = #tpu.dot_dimension_numbers<[1], [0], [0], [1], [0, 0, 1, 1], [], []>} : vector<16x54xf32>, vector<54x192xf32>, vector<16x192xf32> -> vector<16x192xf32>
    %97 = arith.addf %93, %96 : vector<16x192xf32>
    %c19 = arith.constant 19 : index
    %c0_98 = arith.constant 0 : index
    %c0_99 = arith.constant 0 : index
    %98 = vector.load %arg2[%c19, %c0_98, %c0_99] : memref<20x54x192xf32, #tpu.memory_space<vmem>>, vector<1x54x192xf32>
    %99 = vector.shape_cast %98 : vector<1x54x192xf32> to vector<54x192xf32>
    %cst_100 = arith.constant dense<0.000000e+00> : vector<16x192xf32>
    %100 = tpu.matmul %56, %99, %cst_100 {dimension_numbers = #tpu.dot_dimension_numbers<[1], [0], [0], [1], [0, 0, 1, 1], [], []>} : vector<16x54xf32>, vector<54x192xf32>, vector<16x192xf32> -> vector<16x192xf32>
    %101 = arith.addf %97, %100 : vector<16x192xf32>
    %102 = arith.maximumf %60, %101 : vector<16x192xf32>
    %cst_101 = arith.constant 0.000000e+00 : f32
    %103 = vector.broadcast %cst_101 : f32 to vector<16x192xf32>
    %c0_102 = arith.constant 0 : index
    %c0_103 = arith.constant 0 : index
    %c0_104 = arith.constant 0 : index
    %104 = vector.load %arg2[%c0_102, %c0_103, %c0_104] : memref<20x54x192xf32, #tpu.memory_space<vmem>>, vector<1x54x192xf32>
    %105 = vector.shape_cast %104 : vector<1x54x192xf32> to vector<54x192xf32>
    %cst_105 = arith.constant dense<0.000000e+00> : vector<16x192xf32>
    %106 = tpu.matmul %14, %105, %cst_105 {dimension_numbers = #tpu.dot_dimension_numbers<[1], [0], [0], [1], [0, 0, 1, 1], [], []>} : vector<16x54xf32>, vector<54x192xf32>, vector<16x192xf32> -> vector<16x192xf32>
    %107 = arith.addf %103, %106 : vector<16x192xf32>
    %c1_106 = arith.constant 1 : index
    %c0_107 = arith.constant 0 : index
    %c0_108 = arith.constant 0 : index
    %108 = vector.load %arg2[%c1_106, %c0_107, %c0_108] : memref<20x54x192xf32, #tpu.memory_space<vmem>>, vector<1x54x192xf32>
    %109 = vector.shape_cast %108 : vector<1x54x192xf32> to vector<54x192xf32>
    %cst_109 = arith.constant dense<0.000000e+00> : vector<16x192xf32>
    %110 = tpu.matmul %20, %109, %cst_109 {dimension_numbers = #tpu.dot_dimension_numbers<[1], [0], [0], [1], [0, 0, 1, 1], [], []>} : vector<16x54xf32>, vector<54x192xf32>, vector<16x192xf32> -> vector<16x192xf32>
    %111 = arith.addf %107, %110 : vector<16x192xf32>
    %c2_110 = arith.constant 2 : index
    %c0_111 = arith.constant 0 : index
    %c0_112 = arith.constant 0 : index
    %112 = vector.load %arg2[%c2_110, %c0_111, %c0_112] : memref<20x54x192xf32, #tpu.memory_space<vmem>>, vector<1x54x192xf32>
    %113 = vector.shape_cast %112 : vector<1x54x192xf32> to vector<54x192xf32>
    %cst_113 = arith.constant dense<0.000000e+00> : vector<16x192xf32>
    %114 = tpu.matmul %26, %113, %cst_113 {dimension_numbers = #tpu.dot_dimension_numbers<[1], [0], [0], [1], [0, 0, 1, 1], [], []>} : vector<16x54xf32>, vector<54x192xf32>, vector<16x192xf32> -> vector<16x192xf32>
    %115 = arith.addf %111, %114 : vector<16x192xf32>
    %c3_114 = arith.constant 3 : index
    %c0_115 = arith.constant 0 : index
    %c0_116 = arith.constant 0 : index
    %116 = vector.load %arg2[%c3_114, %c0_115, %c0_116] : memref<20x54x192xf32, #tpu.memory_space<vmem>>, vector<1x54x192xf32>
    %117 = vector.shape_cast %116 : vector<1x54x192xf32> to vector<54x192xf32>
    %cst_117 = arith.constant dense<0.000000e+00> : vector<16x192xf32>
    %118 = tpu.matmul %32, %117, %cst_117 {dimension_numbers = #tpu.dot_dimension_numbers<[1], [0], [0], [1], [0, 0, 1, 1], [], []>} : vector<16x54xf32>, vector<54x192xf32>, vector<16x192xf32> -> vector<16x192xf32>
    %119 = arith.addf %115, %118 : vector<16x192xf32>
    %c4_118 = arith.constant 4 : index
    %c0_119 = arith.constant 0 : index
    %c0_120 = arith.constant 0 : index
    %120 = vector.load %arg2[%c4_118, %c0_119, %c0_120] : memref<20x54x192xf32, #tpu.memory_space<vmem>>, vector<1x54x192xf32>
    %121 = vector.shape_cast %120 : vector<1x54x192xf32> to vector<54x192xf32>
    %cst_121 = arith.constant dense<0.000000e+00> : vector<16x192xf32>
    %122 = tpu.matmul %38, %121, %cst_121 {dimension_numbers = #tpu.dot_dimension_numbers<[1], [0], [0], [1], [0, 0, 1, 1], [], []>} : vector<16x54xf32>, vector<54x192xf32>, vector<16x192xf32> -> vector<16x192xf32>
    %123 = arith.addf %119, %122 : vector<16x192xf32>
    %c5_122 = arith.constant 5 : index
    %c0_123 = arith.constant 0 : index
    %c0_124 = arith.constant 0 : index
    %124 = vector.load %arg2[%c5_122, %c0_123, %c0_124] : memref<20x54x192xf32, #tpu.memory_space<vmem>>, vector<1x54x192xf32>
    %125 = vector.shape_cast %124 : vector<1x54x192xf32> to vector<54x192xf32>
    %cst_125 = arith.constant dense<0.000000e+00> : vector<16x192xf32>
    %126 = tpu.matmul %44, %125, %cst_125 {dimension_numbers = #tpu.dot_dimension_numbers<[1], [0], [0], [1], [0, 0, 1, 1], [], []>} : vector<16x54xf32>, vector<54x192xf32>, vector<16x192xf32> -> vector<16x192xf32>
    %127 = arith.addf %123, %126 : vector<16x192xf32>
    %c6_126 = arith.constant 6 : index
    %c0_127 = arith.constant 0 : index
    %c0_128 = arith.constant 0 : index
    %128 = vector.load %arg2[%c6_126, %c0_127, %c0_128] : memref<20x54x192xf32, #tpu.memory_space<vmem>>, vector<1x54x192xf32>
    %129 = vector.shape_cast %128 : vector<1x54x192xf32> to vector<54x192xf32>
    %cst_129 = arith.constant dense<0.000000e+00> : vector<16x192xf32>
    %130 = tpu.matmul %50, %129, %cst_129 {dimension_numbers = #tpu.dot_dimension_numbers<[1], [0], [0], [1], [0, 0, 1, 1], [], []>} : vector<16x54xf32>, vector<54x192xf32>, vector<16x192xf32> -> vector<16x192xf32>
    %131 = arith.addf %127, %130 : vector<16x192xf32>
    %c7_130 = arith.constant 7 : index
    %c0_131 = arith.constant 0 : index
    %c0_132 = arith.constant 0 : index
    %132 = vector.load %arg2[%c7_130, %c0_131, %c0_132] : memref<20x54x192xf32, #tpu.memory_space<vmem>>, vector<1x54x192xf32>
    %133 = vector.shape_cast %132 : vector<1x54x192xf32> to vector<54x192xf32>
    %cst_133 = arith.constant dense<0.000000e+00> : vector<16x192xf32>
    %134 = tpu.matmul %56, %133, %cst_133 {dimension_numbers = #tpu.dot_dimension_numbers<[1], [0], [0], [1], [0, 0, 1, 1], [], []>} : vector<16x54xf32>, vector<54x192xf32>, vector<16x192xf32> -> vector<16x192xf32>
    %135 = arith.addf %131, %134 : vector<16x192xf32>
    %c0_134 = arith.constant 0 : index
    %c2_135 = arith.constant 2 : index
    %c2_136 = arith.constant 2 : index
    %c0_137 = arith.constant 0 : index
    %136 = vector.load %arg1[%c0_134, %c2_135, %c2_136, %c0_137] : memref<1x4x18x54xf32, #tpu.memory_space<vmem>>, vector<1x1x16x54xf32>
    %137 = vector.shape_cast %136 : vector<1x1x16x54xf32> to vector<16x54xf32>
    %c8_138 = arith.constant 8 : index
    %c0_139 = arith.constant 0 : index
    %c0_140 = arith.constant 0 : index
    %138 = vector.load %arg2[%c8_138, %c0_139, %c0_140] : memref<20x54x192xf32, #tpu.memory_space<vmem>>, vector<1x54x192xf32>
    %139 = vector.shape_cast %138 : vector<1x54x192xf32> to vector<54x192xf32>
    %cst_141 = arith.constant dense<0.000000e+00> : vector<16x192xf32>
    %140 = tpu.matmul %137, %139, %cst_141 {dimension_numbers = #tpu.dot_dimension_numbers<[1], [0], [0], [1], [0, 0, 1, 1], [], []>} : vector<16x54xf32>, vector<54x192xf32>, vector<16x192xf32> -> vector<16x192xf32>
    %141 = arith.addf %135, %140 : vector<16x192xf32>
    %c0_142 = arith.constant 0 : index
    %c3_143 = arith.constant 3 : index
    %c2_144 = arith.constant 2 : index
    %c0_145 = arith.constant 0 : index
    %142 = vector.load %arg1[%c0_142, %c3_143, %c2_144, %c0_145] : memref<1x4x18x54xf32, #tpu.memory_space<vmem>>, vector<1x1x16x54xf32>
    %143 = vector.shape_cast %142 : vector<1x1x16x54xf32> to vector<16x54xf32>
    %c9_146 = arith.constant 9 : index
    %c0_147 = arith.constant 0 : index
    %c0_148 = arith.constant 0 : index
    %144 = vector.load %arg2[%c9_146, %c0_147, %c0_148] : memref<20x54x192xf32, #tpu.memory_space<vmem>>, vector<1x54x192xf32>
    %145 = vector.shape_cast %144 : vector<1x54x192xf32> to vector<54x192xf32>
    %cst_149 = arith.constant dense<0.000000e+00> : vector<16x192xf32>
    %146 = tpu.matmul %143, %145, %cst_149 {dimension_numbers = #tpu.dot_dimension_numbers<[1], [0], [0], [1], [0, 0, 1, 1], [], []>} : vector<16x54xf32>, vector<54x192xf32>, vector<16x192xf32> -> vector<16x192xf32>
    %147 = arith.addf %141, %146 : vector<16x192xf32>
    %148 = arith.maximumf %102, %147 : vector<16x192xf32>
    %cst_150 = arith.constant 0.000000e+00 : f32
    %149 = vector.broadcast %cst_150 : f32 to vector<16x192xf32>
    %c10_151 = arith.constant 10 : index
    %c0_152 = arith.constant 0 : index
    %c0_153 = arith.constant 0 : index
    %150 = vector.load %arg2[%c10_151, %c0_152, %c0_153] : memref<20x54x192xf32, #tpu.memory_space<vmem>>, vector<1x54x192xf32>
    %151 = vector.shape_cast %150 : vector<1x54x192xf32> to vector<54x192xf32>
    %cst_154 = arith.constant dense<0.000000e+00> : vector<16x192xf32>
    %152 = tpu.matmul %14, %151, %cst_154 {dimension_numbers = #tpu.dot_dimension_numbers<[1], [0], [0], [1], [0, 0, 1, 1], [], []>} : vector<16x54xf32>, vector<54x192xf32>, vector<16x192xf32> -> vector<16x192xf32>
    %153 = arith.addf %149, %152 : vector<16x192xf32>
    %c11_155 = arith.constant 11 : index
    %c0_156 = arith.constant 0 : index
    %c0_157 = arith.constant 0 : index
    %154 = vector.load %arg2[%c11_155, %c0_156, %c0_157] : memref<20x54x192xf32, #tpu.memory_space<vmem>>, vector<1x54x192xf32>
    %155 = vector.shape_cast %154 : vector<1x54x192xf32> to vector<54x192xf32>
    %cst_158 = arith.constant dense<0.000000e+00> : vector<16x192xf32>
    %156 = tpu.matmul %20, %155, %cst_158 {dimension_numbers = #tpu.dot_dimension_numbers<[1], [0], [0], [1], [0, 0, 1, 1], [], []>} : vector<16x54xf32>, vector<54x192xf32>, vector<16x192xf32> -> vector<16x192xf32>
    %157 = arith.addf %153, %156 : vector<16x192xf32>
    %c12_159 = arith.constant 12 : index
    %c0_160 = arith.constant 0 : index
    %c0_161 = arith.constant 0 : index
    %158 = vector.load %arg2[%c12_159, %c0_160, %c0_161] : memref<20x54x192xf32, #tpu.memory_space<vmem>>, vector<1x54x192xf32>
    %159 = vector.shape_cast %158 : vector<1x54x192xf32> to vector<54x192xf32>
    %cst_162 = arith.constant dense<0.000000e+00> : vector<16x192xf32>
    %160 = tpu.matmul %26, %159, %cst_162 {dimension_numbers = #tpu.dot_dimension_numbers<[1], [0], [0], [1], [0, 0, 1, 1], [], []>} : vector<16x54xf32>, vector<54x192xf32>, vector<16x192xf32> -> vector<16x192xf32>
    %161 = arith.addf %157, %160 : vector<16x192xf32>
    %c13_163 = arith.constant 13 : index
    %c0_164 = arith.constant 0 : index
    %c0_165 = arith.constant 0 : index
    %162 = vector.load %arg2[%c13_163, %c0_164, %c0_165] : memref<20x54x192xf32, #tpu.memory_space<vmem>>, vector<1x54x192xf32>
    %163 = vector.shape_cast %162 : vector<1x54x192xf32> to vector<54x192xf32>
    %cst_166 = arith.constant dense<0.000000e+00> : vector<16x192xf32>
    %164 = tpu.matmul %32, %163, %cst_166 {dimension_numbers = #tpu.dot_dimension_numbers<[1], [0], [0], [1], [0, 0, 1, 1], [], []>} : vector<16x54xf32>, vector<54x192xf32>, vector<16x192xf32> -> vector<16x192xf32>
    %165 = arith.addf %161, %164 : vector<16x192xf32>
    %c14_167 = arith.constant 14 : index
    %c0_168 = arith.constant 0 : index
    %c0_169 = arith.constant 0 : index
    %166 = vector.load %arg2[%c14_167, %c0_168, %c0_169] : memref<20x54x192xf32, #tpu.memory_space<vmem>>, vector<1x54x192xf32>
    %167 = vector.shape_cast %166 : vector<1x54x192xf32> to vector<54x192xf32>
    %cst_170 = arith.constant dense<0.000000e+00> : vector<16x192xf32>
    %168 = tpu.matmul %38, %167, %cst_170 {dimension_numbers = #tpu.dot_dimension_numbers<[1], [0], [0], [1], [0, 0, 1, 1], [], []>} : vector<16x54xf32>, vector<54x192xf32>, vector<16x192xf32> -> vector<16x192xf32>
    %169 = arith.addf %165, %168 : vector<16x192xf32>
    %c15_171 = arith.constant 15 : index
    %c0_172 = arith.constant 0 : index
    %c0_173 = arith.constant 0 : index
    %170 = vector.load %arg2[%c15_171, %c0_172, %c0_173] : memref<20x54x192xf32, #tpu.memory_space<vmem>>, vector<1x54x192xf32>
    %171 = vector.shape_cast %170 : vector<1x54x192xf32> to vector<54x192xf32>
    %cst_174 = arith.constant dense<0.000000e+00> : vector<16x192xf32>
    %172 = tpu.matmul %44, %171, %cst_174 {dimension_numbers = #tpu.dot_dimension_numbers<[1], [0], [0], [1], [0, 0, 1, 1], [], []>} : vector<16x54xf32>, vector<54x192xf32>, vector<16x192xf32> -> vector<16x192xf32>
    %173 = arith.addf %169, %172 : vector<16x192xf32>
    %c16_175 = arith.constant 16 : index
    %c0_176 = arith.constant 0 : index
    %c0_177 = arith.constant 0 : index
    %174 = vector.load %arg2[%c16_175, %c0_176, %c0_177] : memref<20x54x192xf32, #tpu.memory_space<vmem>>, vector<1x54x192xf32>
    %175 = vector.shape_cast %174 : vector<1x54x192xf32> to vector<54x192xf32>
    %cst_178 = arith.constant dense<0.000000e+00> : vector<16x192xf32>
    %176 = tpu.matmul %50, %175, %cst_178 {dimension_numbers = #tpu.dot_dimension_numbers<[1], [0], [0], [1], [0, 0, 1, 1], [], []>} : vector<16x54xf32>, vector<54x192xf32>, vector<16x192xf32> -> vector<16x192xf32>
    %177 = arith.addf %173, %176 : vector<16x192xf32>
    %c17_179 = arith.constant 17 : index
    %c0_180 = arith.constant 0 : index
    %c0_181 = arith.constant 0 : index
    %178 = vector.load %arg2[%c17_179, %c0_180, %c0_181] : memref<20x54x192xf32, #tpu.memory_space<vmem>>, vector<1x54x192xf32>
    %179 = vector.shape_cast %178 : vector<1x54x192xf32> to vector<54x192xf32>
    %cst_182 = arith.constant dense<0.000000e+00> : vector<16x192xf32>
    %180 = tpu.matmul %56, %179, %cst_182 {dimension_numbers = #tpu.dot_dimension_numbers<[1], [0], [0], [1], [0, 0, 1, 1], [], []>} : vector<16x54xf32>, vector<54x192xf32>, vector<16x192xf32> -> vector<16x192xf32>
    %181 = arith.addf %177, %180 : vector<16x192xf32>
    %c18_183 = arith.constant 18 : index
    %c0_184 = arith.constant 0 : index
    %c0_185 = arith.constant 0 : index
    %182 = vector.load %arg2[%c18_183, %c0_184, %c0_185] : memref<20x54x192xf32, #tpu.memory_space<vmem>>, vector<1x54x192xf32>
    %183 = vector.shape_cast %182 : vector<1x54x192xf32> to vector<54x192xf32>
    %cst_186 = arith.constant dense<0.000000e+00> : vector<16x192xf32>
    %184 = tpu.matmul %137, %183, %cst_186 {dimension_numbers = #tpu.dot_dimension_numbers<[1], [0], [0], [1], [0, 0, 1, 1], [], []>} : vector<16x54xf32>, vector<54x192xf32>, vector<16x192xf32> -> vector<16x192xf32>
    %185 = arith.addf %181, %184 : vector<16x192xf32>
    %c19_187 = arith.constant 19 : index
    %c0_188 = arith.constant 0 : index
    %c0_189 = arith.constant 0 : index
    %186 = vector.load %arg2[%c19_187, %c0_188, %c0_189] : memref<20x54x192xf32, #tpu.memory_space<vmem>>, vector<1x54x192xf32>
    %187 = vector.shape_cast %186 : vector<1x54x192xf32> to vector<54x192xf32>
    %cst_190 = arith.constant dense<0.000000e+00> : vector<16x192xf32>
    %188 = tpu.matmul %143, %187, %cst_190 {dimension_numbers = #tpu.dot_dimension_numbers<[1], [0], [0], [1], [0, 0, 1, 1], [], []>} : vector<16x54xf32>, vector<54x192xf32>, vector<16x192xf32> -> vector<16x192xf32>
    %189 = arith.addf %185, %188 : vector<16x192xf32>
    %190 = arith.maximumf %148, %189 : vector<16x192xf32>
    %c0_191 = arith.constant 0 : index
    %c0_192 = arith.constant 0 : index
    %191 = vector.load %arg3[%c0_191, %c0_192] : memref<1x192xf32, #tpu.memory_space<vmem>>, vector<1x192xf32>
    %192 = vector.broadcast %191 : vector<1x192xf32> to vector<16x192xf32>
    %193 = arith.addf %190, %192 : vector<16x192xf32>
    %cst_193 = arith.constant 0.000000e+00 : f32
    %194 = vector.broadcast %cst_193 : f32 to vector<16x192xf32>
    %195 = arith.maximumf %193, %194 : vector<16x192xf32>
    %c0_194 = arith.constant 0 : index
    %c0_195 = arith.constant 0 : index
    %c0_196 = arith.constant 0 : index
    %196 = vector.load %arg4[%c0_194, %c0_195, %c0_196] : memref<1x16x192xf32, #tpu.memory_space<vmem>>, vector<1x16x192xf32>
    %197 = vector.shape_cast %196 : vector<1x16x192xf32> to vector<16x192xf32>
    %198 = vector.shape_cast %195 : vector<16x192xf32> to vector<1x16x192xf32>
    tpu.vector_store %arg4[%c0_194, %c0_195, %c0_196], %198 {strides = array<i32>} : memref<1x16x192xf32, #tpu.memory_space<vmem>>, vector<1x16x192xf32>,
    return
  }
  func.func @transform_0(%arg0: i32) -> (i32, i32, i32, i32) {
    %c0_i32 = arith.constant 0 : i32
    %c0_i32_0 = arith.constant 0 : i32
    %c0_i32_1 = arith.constant 0 : i32
    %c0_i32_2 = arith.constant 0 : i32
    return %arg0, %c0_i32, %c0_i32_0, %c0_i32_1 : i32, i32, i32, i32
  }
  func.func @transform_1(%arg0: i32) -> (i32, i32, i32) {
    %c0_i32 = arith.constant 0 : i32
    %c0_i32_0 = arith.constant 0 : i32
    %c0_i32_1 = arith.constant 0 : i32
    %c0_i32_2 = arith.constant 0 : i32
    return %c0_i32, %c0_i32_0, %c0_i32_1 : i32, i32, i32
  }
  func.func @transform_2(%arg0: i32) -> (i32, i32) {
    %c0_i32 = arith.constant 0 : i32
    %c0_i32_0 = arith.constant 0 : i32
    %c0_i32_1 = arith.constant 0 : i32
    return %c0_i32, %c0_i32_0 : i32, i32
  }
  func.func @transform_3(%arg0: i32) -> (i32, i32, i32) {
    %c0_i32 = arith.constant 0 : i32
    %c0_i32_0 = arith.constant 0 : i32
    %c0_i32_1 = arith.constant 0 : i32
    return %arg0, %c0_i32, %c0_i32_0 : i32, i32, i32
  }
}

module attributes {stable_mosaic.version = 11 : i64} {
  func.func @_conv_relu_pool_kernel(%arg0: i32, %arg1: memref<1x4x9x108xf32, #tpu.memory_space<vmem>>, %arg2: memref<12x108x192xf32, #tpu.memory_space<vmem>>, %arg3: memref<1x192xf32, #tpu.memory_space<vmem>>, %arg4: memref<1x8x192xf32, #tpu.memory_space<vmem>>) attributes {dimension_semantics = [#tpu.dimension_semantics<parallel>], iteration_bounds = array<i64: 2>, scalar_prefetch = 0 : i64, scratch_operands = 0 : i64, tpu.core_type = #tpu.core_type<tc>, window_params = [{transform_indices = @transform_0, window_bounds = array<i64: 1, 4, 9, 108>}, {pipeline_mode = #tpu.pipeline_mode<synchronous>, transform_indices = @transform_1, window_bounds = array<i64: 12, 108, 192>}, {pipeline_mode = #tpu.pipeline_mode<synchronous>, transform_indices = @transform_2, window_bounds = array<i64: 1, 192>}, {transform_indices = @transform_3, window_bounds = array<i64: 1, 8, 192>}]} {
    %cst = arith.constant 0.000000e+00 : f32
    %0 = vector.broadcast %cst : f32 to vector<8x192xf32>
    %c0 = arith.constant 0 : index
    %c0_0 = arith.constant 0 : index
    %c0_1 = arith.constant 0 : index
    %c0_2 = arith.constant 0 : index
    %1 = vector.load %arg1[%c0, %c0_0, %c0_1, %c0_2] : memref<1x4x9x108xf32, #tpu.memory_space<vmem>>, vector<1x1x8x108xf32>
    %2 = vector.shape_cast %1 : vector<1x1x8x108xf32> to vector<8x108xf32>
    %c0_3 = arith.constant 0 : index
    %c0_4 = arith.constant 0 : index
    %c0_5 = arith.constant 0 : index
    %3 = vector.load %arg2[%c0_3, %c0_4, %c0_5] : memref<12x108x192xf32, #tpu.memory_space<vmem>>, vector<1x108x192xf32>
    %4 = vector.shape_cast %3 : vector<1x108x192xf32> to vector<108x192xf32>
    %cst_6 = arith.constant dense<0.000000e+00> : vector<8x192xf32>
    %5 = tpu.matmul %2, %4, %cst_6 {dimension_numbers = #tpu.dot_dimension_numbers<[1], [0], [0], [1], [0, 0, 1, 1], [], []>} : vector<8x108xf32>, vector<108x192xf32>, vector<8x192xf32> -> vector<8x192xf32>
    %6 = arith.addf %0, %5 : vector<8x192xf32>
    %c0_7 = arith.constant 0 : index
    %c1 = arith.constant 1 : index
    %c0_8 = arith.constant 0 : index
    %c0_9 = arith.constant 0 : index
    %7 = vector.load %arg1[%c0_7, %c1, %c0_8, %c0_9] : memref<1x4x9x108xf32, #tpu.memory_space<vmem>>, vector<1x1x8x108xf32>
    %8 = vector.shape_cast %7 : vector<1x1x8x108xf32> to vector<8x108xf32>
    %c1_10 = arith.constant 1 : index
    %c0_11 = arith.constant 0 : index
    %c0_12 = arith.constant 0 : index
    %9 = vector.load %arg2[%c1_10, %c0_11, %c0_12] : memref<12x108x192xf32, #tpu.memory_space<vmem>>, vector<1x108x192xf32>
    %10 = vector.shape_cast %9 : vector<1x108x192xf32> to vector<108x192xf32>
    %cst_13 = arith.constant dense<0.000000e+00> : vector<8x192xf32>
    %11 = tpu.matmul %8, %10, %cst_13 {dimension_numbers = #tpu.dot_dimension_numbers<[1], [0], [0], [1], [0, 0, 1, 1], [], []>} : vector<8x108xf32>, vector<108x192xf32>, vector<8x192xf32> -> vector<8x192xf32>
    %12 = arith.addf %6, %11 : vector<8x192xf32>
    %c0_14 = arith.constant 0 : index
    %c2 = arith.constant 2 : index
    %c0_15 = arith.constant 0 : index
    %c0_16 = arith.constant 0 : index
    %13 = vector.load %arg1[%c0_14, %c2, %c0_15, %c0_16] : memref<1x4x9x108xf32, #tpu.memory_space<vmem>>, vector<1x1x8x108xf32>
    %14 = vector.shape_cast %13 : vector<1x1x8x108xf32> to vector<8x108xf32>
    %c2_17 = arith.constant 2 : index
    %c0_18 = arith.constant 0 : index
    %c0_19 = arith.constant 0 : index
    %15 = vector.load %arg2[%c2_17, %c0_18, %c0_19] : memref<12x108x192xf32, #tpu.memory_space<vmem>>, vector<1x108x192xf32>
    %16 = vector.shape_cast %15 : vector<1x108x192xf32> to vector<108x192xf32>
    %cst_20 = arith.constant dense<0.000000e+00> : vector<8x192xf32>
    %17 = tpu.matmul %14, %16, %cst_20 {dimension_numbers = #tpu.dot_dimension_numbers<[1], [0], [0], [1], [0, 0, 1, 1], [], []>} : vector<8x108xf32>, vector<108x192xf32>, vector<8x192xf32> -> vector<8x192xf32>
    %18 = arith.addf %12, %17 : vector<8x192xf32>
    %c0_21 = arith.constant 0 : index
    %c3 = arith.constant 3 : index
    %c0_22 = arith.constant 0 : index
    %c0_23 = arith.constant 0 : index
    %19 = vector.load %arg1[%c0_21, %c3, %c0_22, %c0_23] : memref<1x4x9x108xf32, #tpu.memory_space<vmem>>, vector<1x1x8x108xf32>
    %20 = vector.shape_cast %19 : vector<1x1x8x108xf32> to vector<8x108xf32>
    %c3_24 = arith.constant 3 : index
    %c0_25 = arith.constant 0 : index
    %c0_26 = arith.constant 0 : index
    %21 = vector.load %arg2[%c3_24, %c0_25, %c0_26] : memref<12x108x192xf32, #tpu.memory_space<vmem>>, vector<1x108x192xf32>
    %22 = vector.shape_cast %21 : vector<1x108x192xf32> to vector<108x192xf32>
    %cst_27 = arith.constant dense<0.000000e+00> : vector<8x192xf32>
    %23 = tpu.matmul %20, %22, %cst_27 {dimension_numbers = #tpu.dot_dimension_numbers<[1], [0], [0], [1], [0, 0, 1, 1], [], []>} : vector<8x108xf32>, vector<108x192xf32>, vector<8x192xf32> -> vector<8x192xf32>
    %24 = arith.addf %18, %23 : vector<8x192xf32>
    %c0_28 = arith.constant 0 : index
    %c0_29 = arith.constant 0 : index
    %c1_30 = arith.constant 1 : index
    %c0_31 = arith.constant 0 : index
    %25 = vector.load %arg1[%c0_28, %c0_29, %c1_30, %c0_31] : memref<1x4x9x108xf32, #tpu.memory_space<vmem>>, vector<1x1x8x108xf32>
    %26 = vector.shape_cast %25 : vector<1x1x8x108xf32> to vector<8x108xf32>
    %c4 = arith.constant 4 : index
    %c0_32 = arith.constant 0 : index
    %c0_33 = arith.constant 0 : index
    %27 = vector.load %arg2[%c4, %c0_32, %c0_33] : memref<12x108x192xf32, #tpu.memory_space<vmem>>, vector<1x108x192xf32>
    %28 = vector.shape_cast %27 : vector<1x108x192xf32> to vector<108x192xf32>
    %cst_34 = arith.constant dense<0.000000e+00> : vector<8x192xf32>
    %29 = tpu.matmul %26, %28, %cst_34 {dimension_numbers = #tpu.dot_dimension_numbers<[1], [0], [0], [1], [0, 0, 1, 1], [], []>} : vector<8x108xf32>, vector<108x192xf32>, vector<8x192xf32> -> vector<8x192xf32>
    %30 = arith.addf %24, %29 : vector<8x192xf32>
    %c0_35 = arith.constant 0 : index
    %c1_36 = arith.constant 1 : index
    %c1_37 = arith.constant 1 : index
    %c0_38 = arith.constant 0 : index
    %31 = vector.load %arg1[%c0_35, %c1_36, %c1_37, %c0_38] : memref<1x4x9x108xf32, #tpu.memory_space<vmem>>, vector<1x1x8x108xf32>
    %32 = vector.shape_cast %31 : vector<1x1x8x108xf32> to vector<8x108xf32>
    %c5 = arith.constant 5 : index
    %c0_39 = arith.constant 0 : index
    %c0_40 = arith.constant 0 : index
    %33 = vector.load %arg2[%c5, %c0_39, %c0_40] : memref<12x108x192xf32, #tpu.memory_space<vmem>>, vector<1x108x192xf32>
    %34 = vector.shape_cast %33 : vector<1x108x192xf32> to vector<108x192xf32>
    %cst_41 = arith.constant dense<0.000000e+00> : vector<8x192xf32>
    %35 = tpu.matmul %32, %34, %cst_41 {dimension_numbers = #tpu.dot_dimension_numbers<[1], [0], [0], [1], [0, 0, 1, 1], [], []>} : vector<8x108xf32>, vector<108x192xf32>, vector<8x192xf32> -> vector<8x192xf32>
    %36 = arith.addf %30, %35 : vector<8x192xf32>
    %cst_42 = arith.constant 0.000000e+00 : f32
    %37 = vector.broadcast %cst_42 : f32 to vector<8x192xf32>
    %c6 = arith.constant 6 : index
    %c0_43 = arith.constant 0 : index
    %c0_44 = arith.constant 0 : index
    %38 = vector.load %arg2[%c6, %c0_43, %c0_44] : memref<12x108x192xf32, #tpu.memory_space<vmem>>, vector<1x108x192xf32>
    %39 = vector.shape_cast %38 : vector<1x108x192xf32> to vector<108x192xf32>
    %cst_45 = arith.constant dense<0.000000e+00> : vector<8x192xf32>
    %40 = tpu.matmul %2, %39, %cst_45 {dimension_numbers = #tpu.dot_dimension_numbers<[1], [0], [0], [1], [0, 0, 1, 1], [], []>} : vector<8x108xf32>, vector<108x192xf32>, vector<8x192xf32> -> vector<8x192xf32>
    %41 = arith.addf %37, %40 : vector<8x192xf32>
    %c7 = arith.constant 7 : index
    %c0_46 = arith.constant 0 : index
    %c0_47 = arith.constant 0 : index
    %42 = vector.load %arg2[%c7, %c0_46, %c0_47] : memref<12x108x192xf32, #tpu.memory_space<vmem>>, vector<1x108x192xf32>
    %43 = vector.shape_cast %42 : vector<1x108x192xf32> to vector<108x192xf32>
    %cst_48 = arith.constant dense<0.000000e+00> : vector<8x192xf32>
    %44 = tpu.matmul %8, %43, %cst_48 {dimension_numbers = #tpu.dot_dimension_numbers<[1], [0], [0], [1], [0, 0, 1, 1], [], []>} : vector<8x108xf32>, vector<108x192xf32>, vector<8x192xf32> -> vector<8x192xf32>
    %45 = arith.addf %41, %44 : vector<8x192xf32>
    %c8 = arith.constant 8 : index
    %c0_49 = arith.constant 0 : index
    %c0_50 = arith.constant 0 : index
    %46 = vector.load %arg2[%c8, %c0_49, %c0_50] : memref<12x108x192xf32, #tpu.memory_space<vmem>>, vector<1x108x192xf32>
    %47 = vector.shape_cast %46 : vector<1x108x192xf32> to vector<108x192xf32>
    %cst_51 = arith.constant dense<0.000000e+00> : vector<8x192xf32>
    %48 = tpu.matmul %14, %47, %cst_51 {dimension_numbers = #tpu.dot_dimension_numbers<[1], [0], [0], [1], [0, 0, 1, 1], [], []>} : vector<8x108xf32>, vector<108x192xf32>, vector<8x192xf32> -> vector<8x192xf32>
    %49 = arith.addf %45, %48 : vector<8x192xf32>
    %c9 = arith.constant 9 : index
    %c0_52 = arith.constant 0 : index
    %c0_53 = arith.constant 0 : index
    %50 = vector.load %arg2[%c9, %c0_52, %c0_53] : memref<12x108x192xf32, #tpu.memory_space<vmem>>, vector<1x108x192xf32>
    %51 = vector.shape_cast %50 : vector<1x108x192xf32> to vector<108x192xf32>
    %cst_54 = arith.constant dense<0.000000e+00> : vector<8x192xf32>
    %52 = tpu.matmul %20, %51, %cst_54 {dimension_numbers = #tpu.dot_dimension_numbers<[1], [0], [0], [1], [0, 0, 1, 1], [], []>} : vector<8x108xf32>, vector<108x192xf32>, vector<8x192xf32> -> vector<8x192xf32>
    %53 = arith.addf %49, %52 : vector<8x192xf32>
    %c10 = arith.constant 10 : index
    %c0_55 = arith.constant 0 : index
    %c0_56 = arith.constant 0 : index
    %54 = vector.load %arg2[%c10, %c0_55, %c0_56] : memref<12x108x192xf32, #tpu.memory_space<vmem>>, vector<1x108x192xf32>
    %55 = vector.shape_cast %54 : vector<1x108x192xf32> to vector<108x192xf32>
    %cst_57 = arith.constant dense<0.000000e+00> : vector<8x192xf32>
    %56 = tpu.matmul %26, %55, %cst_57 {dimension_numbers = #tpu.dot_dimension_numbers<[1], [0], [0], [1], [0, 0, 1, 1], [], []>} : vector<8x108xf32>, vector<108x192xf32>, vector<8x192xf32> -> vector<8x192xf32>
    %57 = arith.addf %53, %56 : vector<8x192xf32>
    %c11 = arith.constant 11 : index
    %c0_58 = arith.constant 0 : index
    %c0_59 = arith.constant 0 : index
    %58 = vector.load %arg2[%c11, %c0_58, %c0_59] : memref<12x108x192xf32, #tpu.memory_space<vmem>>, vector<1x108x192xf32>
    %59 = vector.shape_cast %58 : vector<1x108x192xf32> to vector<108x192xf32>
    %cst_60 = arith.constant dense<0.000000e+00> : vector<8x192xf32>
    %60 = tpu.matmul %32, %59, %cst_60 {dimension_numbers = #tpu.dot_dimension_numbers<[1], [0], [0], [1], [0, 0, 1, 1], [], []>} : vector<8x108xf32>, vector<108x192xf32>, vector<8x192xf32> -> vector<8x192xf32>
    %61 = arith.addf %57, %60 : vector<8x192xf32>
    %62 = arith.maximumf %36, %61 : vector<8x192xf32>
    %cst_61 = arith.constant 0.000000e+00 : f32
    %63 = vector.broadcast %cst_61 : f32 to vector<8x192xf32>
    %c0_62 = arith.constant 0 : index
    %c0_63 = arith.constant 0 : index
    %c0_64 = arith.constant 0 : index
    %64 = vector.load %arg2[%c0_62, %c0_63, %c0_64] : memref<12x108x192xf32, #tpu.memory_space<vmem>>, vector<1x108x192xf32>
    %65 = vector.shape_cast %64 : vector<1x108x192xf32> to vector<108x192xf32>
    %cst_65 = arith.constant dense<0.000000e+00> : vector<8x192xf32>
    %66 = tpu.matmul %14, %65, %cst_65 {dimension_numbers = #tpu.dot_dimension_numbers<[1], [0], [0], [1], [0, 0, 1, 1], [], []>} : vector<8x108xf32>, vector<108x192xf32>, vector<8x192xf32> -> vector<8x192xf32>
    %67 = arith.addf %63, %66 : vector<8x192xf32>
    %c1_66 = arith.constant 1 : index
    %c0_67 = arith.constant 0 : index
    %c0_68 = arith.constant 0 : index
    %68 = vector.load %arg2[%c1_66, %c0_67, %c0_68] : memref<12x108x192xf32, #tpu.memory_space<vmem>>, vector<1x108x192xf32>
    %69 = vector.shape_cast %68 : vector<1x108x192xf32> to vector<108x192xf32>
    %cst_69 = arith.constant dense<0.000000e+00> : vector<8x192xf32>
    %70 = tpu.matmul %20, %69, %cst_69 {dimension_numbers = #tpu.dot_dimension_numbers<[1], [0], [0], [1], [0, 0, 1, 1], [], []>} : vector<8x108xf32>, vector<108x192xf32>, vector<8x192xf32> -> vector<8x192xf32>
    %71 = arith.addf %67, %70 : vector<8x192xf32>
    %c2_70 = arith.constant 2 : index
    %c0_71 = arith.constant 0 : index
    %c0_72 = arith.constant 0 : index
    %72 = vector.load %arg2[%c2_70, %c0_71, %c0_72] : memref<12x108x192xf32, #tpu.memory_space<vmem>>, vector<1x108x192xf32>
    %73 = vector.shape_cast %72 : vector<1x108x192xf32> to vector<108x192xf32>
    %cst_73 = arith.constant dense<0.000000e+00> : vector<8x192xf32>
    %74 = tpu.matmul %26, %73, %cst_73 {dimension_numbers = #tpu.dot_dimension_numbers<[1], [0], [0], [1], [0, 0, 1, 1], [], []>} : vector<8x108xf32>, vector<108x192xf32>, vector<8x192xf32> -> vector<8x192xf32>
    %75 = arith.addf %71, %74 : vector<8x192xf32>
    %c3_74 = arith.constant 3 : index
    %c0_75 = arith.constant 0 : index
    %c0_76 = arith.constant 0 : index
    %76 = vector.load %arg2[%c3_74, %c0_75, %c0_76] : memref<12x108x192xf32, #tpu.memory_space<vmem>>, vector<1x108x192xf32>
    %77 = vector.shape_cast %76 : vector<1x108x192xf32> to vector<108x192xf32>
    %cst_77 = arith.constant dense<0.000000e+00> : vector<8x192xf32>
    %78 = tpu.matmul %32, %77, %cst_77 {dimension_numbers = #tpu.dot_dimension_numbers<[1], [0], [0], [1], [0, 0, 1, 1], [], []>} : vector<8x108xf32>, vector<108x192xf32>, vector<8x192xf32> -> vector<8x192xf32>
    %79 = arith.addf %75, %78 : vector<8x192xf32>
    %c0_78 = arith.constant 0 : index
    %c2_79 = arith.constant 2 : index
    %c1_80 = arith.constant 1 : index
    %c0_81 = arith.constant 0 : index
    %80 = vector.load %arg1[%c0_78, %c2_79, %c1_80, %c0_81] : memref<1x4x9x108xf32, #tpu.memory_space<vmem>>, vector<1x1x8x108xf32>
    %81 = vector.shape_cast %80 : vector<1x1x8x108xf32> to vector<8x108xf32>
    %c4_82 = arith.constant 4 : index
    %c0_83 = arith.constant 0 : index
    %c0_84 = arith.constant 0 : index
    %82 = vector.load %arg2[%c4_82, %c0_83, %c0_84] : memref<12x108x192xf32, #tpu.memory_space<vmem>>, vector<1x108x192xf32>
    %83 = vector.shape_cast %82 : vector<1x108x192xf32> to vector<108x192xf32>
    %cst_85 = arith.constant dense<0.000000e+00> : vector<8x192xf32>
    %84 = tpu.matmul %81, %83, %cst_85 {dimension_numbers = #tpu.dot_dimension_numbers<[1], [0], [0], [1], [0, 0, 1, 1], [], []>} : vector<8x108xf32>, vector<108x192xf32>, vector<8x192xf32> -> vector<8x192xf32>
    %85 = arith.addf %79, %84 : vector<8x192xf32>
    %c0_86 = arith.constant 0 : index
    %c3_87 = arith.constant 3 : index
    %c1_88 = arith.constant 1 : index
    %c0_89 = arith.constant 0 : index
    %86 = vector.load %arg1[%c0_86, %c3_87, %c1_88, %c0_89] : memref<1x4x9x108xf32, #tpu.memory_space<vmem>>, vector<1x1x8x108xf32>
    %87 = vector.shape_cast %86 : vector<1x1x8x108xf32> to vector<8x108xf32>
    %c5_90 = arith.constant 5 : index
    %c0_91 = arith.constant 0 : index
    %c0_92 = arith.constant 0 : index
    %88 = vector.load %arg2[%c5_90, %c0_91, %c0_92] : memref<12x108x192xf32, #tpu.memory_space<vmem>>, vector<1x108x192xf32>
    %89 = vector.shape_cast %88 : vector<1x108x192xf32> to vector<108x192xf32>
    %cst_93 = arith.constant dense<0.000000e+00> : vector<8x192xf32>
    %90 = tpu.matmul %87, %89, %cst_93 {dimension_numbers = #tpu.dot_dimension_numbers<[1], [0], [0], [1], [0, 0, 1, 1], [], []>} : vector<8x108xf32>, vector<108x192xf32>, vector<8x192xf32> -> vector<8x192xf32>
    %91 = arith.addf %85, %90 : vector<8x192xf32>
    %92 = arith.maximumf %62, %91 : vector<8x192xf32>
    %cst_94 = arith.constant 0.000000e+00 : f32
    %93 = vector.broadcast %cst_94 : f32 to vector<8x192xf32>
    %c6_95 = arith.constant 6 : index
    %c0_96 = arith.constant 0 : index
    %c0_97 = arith.constant 0 : index
    %94 = vector.load %arg2[%c6_95, %c0_96, %c0_97] : memref<12x108x192xf32, #tpu.memory_space<vmem>>, vector<1x108x192xf32>
    %95 = vector.shape_cast %94 : vector<1x108x192xf32> to vector<108x192xf32>
    %cst_98 = arith.constant dense<0.000000e+00> : vector<8x192xf32>
    %96 = tpu.matmul %14, %95, %cst_98 {dimension_numbers = #tpu.dot_dimension_numbers<[1], [0], [0], [1], [0, 0, 1, 1], [], []>} : vector<8x108xf32>, vector<108x192xf32>, vector<8x192xf32> -> vector<8x192xf32>
    %97 = arith.addf %93, %96 : vector<8x192xf32>
    %c7_99 = arith.constant 7 : index
    %c0_100 = arith.constant 0 : index
    %c0_101 = arith.constant 0 : index
    %98 = vector.load %arg2[%c7_99, %c0_100, %c0_101] : memref<12x108x192xf32, #tpu.memory_space<vmem>>, vector<1x108x192xf32>
    %99 = vector.shape_cast %98 : vector<1x108x192xf32> to vector<108x192xf32>
    %cst_102 = arith.constant dense<0.000000e+00> : vector<8x192xf32>
    %100 = tpu.matmul %20, %99, %cst_102 {dimension_numbers = #tpu.dot_dimension_numbers<[1], [0], [0], [1], [0, 0, 1, 1], [], []>} : vector<8x108xf32>, vector<108x192xf32>, vector<8x192xf32> -> vector<8x192xf32>
    %101 = arith.addf %97, %100 : vector<8x192xf32>
    %c8_103 = arith.constant 8 : index
    %c0_104 = arith.constant 0 : index
    %c0_105 = arith.constant 0 : index
    %102 = vector.load %arg2[%c8_103, %c0_104, %c0_105] : memref<12x108x192xf32, #tpu.memory_space<vmem>>, vector<1x108x192xf32>
    %103 = vector.shape_cast %102 : vector<1x108x192xf32> to vector<108x192xf32>
    %cst_106 = arith.constant dense<0.000000e+00> : vector<8x192xf32>
    %104 = tpu.matmul %26, %103, %cst_106 {dimension_numbers = #tpu.dot_dimension_numbers<[1], [0], [0], [1], [0, 0, 1, 1], [], []>} : vector<8x108xf32>, vector<108x192xf32>, vector<8x192xf32> -> vector<8x192xf32>
    %105 = arith.addf %101, %104 : vector<8x192xf32>
    %c9_107 = arith.constant 9 : index
    %c0_108 = arith.constant 0 : index
    %c0_109 = arith.constant 0 : index
    %106 = vector.load %arg2[%c9_107, %c0_108, %c0_109] : memref<12x108x192xf32, #tpu.memory_space<vmem>>, vector<1x108x192xf32>
    %107 = vector.shape_cast %106 : vector<1x108x192xf32> to vector<108x192xf32>
    %cst_110 = arith.constant dense<0.000000e+00> : vector<8x192xf32>
    %108 = tpu.matmul %32, %107, %cst_110 {dimension_numbers = #tpu.dot_dimension_numbers<[1], [0], [0], [1], [0, 0, 1, 1], [], []>} : vector<8x108xf32>, vector<108x192xf32>, vector<8x192xf32> -> vector<8x192xf32>
    %109 = arith.addf %105, %108 : vector<8x192xf32>
    %c10_111 = arith.constant 10 : index
    %c0_112 = arith.constant 0 : index
    %c0_113 = arith.constant 0 : index
    %110 = vector.load %arg2[%c10_111, %c0_112, %c0_113] : memref<12x108x192xf32, #tpu.memory_space<vmem>>, vector<1x108x192xf32>
    %111 = vector.shape_cast %110 : vector<1x108x192xf32> to vector<108x192xf32>
    %cst_114 = arith.constant dense<0.000000e+00> : vector<8x192xf32>
    %112 = tpu.matmul %81, %111, %cst_114 {dimension_numbers = #tpu.dot_dimension_numbers<[1], [0], [0], [1], [0, 0, 1, 1], [], []>} : vector<8x108xf32>, vector<108x192xf32>, vector<8x192xf32> -> vector<8x192xf32>
    %113 = arith.addf %109, %112 : vector<8x192xf32>
    %c11_115 = arith.constant 11 : index
    %c0_116 = arith.constant 0 : index
    %c0_117 = arith.constant 0 : index
    %114 = vector.load %arg2[%c11_115, %c0_116, %c0_117] : memref<12x108x192xf32, #tpu.memory_space<vmem>>, vector<1x108x192xf32>
    %115 = vector.shape_cast %114 : vector<1x108x192xf32> to vector<108x192xf32>
    %cst_118 = arith.constant dense<0.000000e+00> : vector<8x192xf32>
    %116 = tpu.matmul %87, %115, %cst_118 {dimension_numbers = #tpu.dot_dimension_numbers<[1], [0], [0], [1], [0, 0, 1, 1], [], []>} : vector<8x108xf32>, vector<108x192xf32>, vector<8x192xf32> -> vector<8x192xf32>
    %117 = arith.addf %113, %116 : vector<8x192xf32>
    %118 = arith.maximumf %92, %117 : vector<8x192xf32>
    %c0_119 = arith.constant 0 : index
    %c0_120 = arith.constant 0 : index
    %119 = vector.load %arg3[%c0_119, %c0_120] : memref<1x192xf32, #tpu.memory_space<vmem>>, vector<1x192xf32>
    %120 = vector.broadcast %119 : vector<1x192xf32> to vector<8x192xf32>
    %121 = arith.addf %118, %120 : vector<8x192xf32>
    %cst_121 = arith.constant 0.000000e+00 : f32
    %122 = vector.broadcast %cst_121 : f32 to vector<8x192xf32>
    %123 = arith.maximumf %121, %122 : vector<8x192xf32>
    %c0_122 = arith.constant 0 : index
    %c0_123 = arith.constant 0 : index
    %c0_124 = arith.constant 0 : index
    %124 = vector.load %arg4[%c0_122, %c0_123, %c0_124] : memref<1x8x192xf32, #tpu.memory_space<vmem>>, vector<1x8x192xf32>
    %125 = vector.shape_cast %124 : vector<1x8x192xf32> to vector<8x192xf32>
    %126 = vector.shape_cast %123 : vector<8x192xf32> to vector<1x8x192xf32>
    tpu.vector_store %arg4[%c0_122, %c0_123, %c0_124], %126 {strides = array<i32>} : memref<1x8x192xf32, #tpu.memory_space<vmem>>, vector<1x8x192xf32>,
    return
  }
  func.func @transform_0(%arg0: i32) -> (i32, i32, i32, i32) {
    %c0_i32 = arith.constant 0 : i32
    %c0_i32_0 = arith.constant 0 : i32
    %c0_i32_1 = arith.constant 0 : i32
    %c0_i32_2 = arith.constant 0 : i32
    return %arg0, %c0_i32, %c0_i32_0, %c0_i32_1 : i32, i32, i32, i32
  }
  func.func @transform_1(%arg0: i32) -> (i32, i32, i32) {
    %c0_i32 = arith.constant 0 : i32
    %c0_i32_0 = arith.constant 0 : i32
    %c0_i32_1 = arith.constant 0 : i32
    %c0_i32_2 = arith.constant 0 : i32
    return %c0_i32, %c0_i32_0, %c0_i32_1 : i32, i32, i32
  }
  func.func @transform_2(%arg0: i32) -> (i32, i32) {
    %c0_i32 = arith.constant 0 : i32
    %c0_i32_0 = arith.constant 0 : i32
    %c0_i32_1 = arith.constant 0 : i32
    return %c0_i32, %c0_i32_0 : i32, i32
  }
  func.func @transform_3(%arg0: i32) -> (i32, i32, i32) {
    %c0_i32 = arith.constant 0 : i32
    %c0_i32_0 = arith.constant 0 : i32
    %c0_i32_1 = arith.constant 0 : i32
    return %arg0, %c0_i32, %c0_i32_0 : i32, i32, i32
  }
}

module attributes {stable_mosaic.version = 11 : i64} {
  func.func @_conv_relu_pool_kernel(%arg0: i32, %arg1: memref<1x4x5x120xf32, #tpu.memory_space<vmem>>, %arg2: memref<12x120x48xf32, #tpu.memory_space<vmem>>, %arg3: memref<1x48xf32, #tpu.memory_space<vmem>>, %arg4: memref<1x4x48xf32, #tpu.memory_space<vmem>>) attributes {dimension_semantics = [#tpu.dimension_semantics<parallel>], iteration_bounds = array<i64: 2>, scalar_prefetch = 0 : i64, scratch_operands = 0 : i64, tpu.core_type = #tpu.core_type<tc>, window_params = [{transform_indices = @transform_0, window_bounds = array<i64: 1, 4, 5, 120>}, {pipeline_mode = #tpu.pipeline_mode<synchronous>, transform_indices = @transform_1, window_bounds = array<i64: 12, 120, 48>}, {pipeline_mode = #tpu.pipeline_mode<synchronous>, transform_indices = @transform_2, window_bounds = array<i64: 1, 48>}, {transform_indices = @transform_3, window_bounds = array<i64: 1, 4, 48>}]} {
    %cst = arith.constant 0.000000e+00 : f32
    %0 = vector.broadcast %cst : f32 to vector<4x48xf32>
    %c0 = arith.constant 0 : index
    %c0_0 = arith.constant 0 : index
    %c0_1 = arith.constant 0 : index
    %c0_2 = arith.constant 0 : index
    %1 = vector.load %arg1[%c0, %c0_0, %c0_1, %c0_2] : memref<1x4x5x120xf32, #tpu.memory_space<vmem>>, vector<1x1x4x120xf32>
    %2 = vector.shape_cast %1 : vector<1x1x4x120xf32> to vector<4x120xf32>
    %c0_3 = arith.constant 0 : index
    %c0_4 = arith.constant 0 : index
    %c0_5 = arith.constant 0 : index
    %3 = vector.load %arg2[%c0_3, %c0_4, %c0_5] : memref<12x120x48xf32, #tpu.memory_space<vmem>>, vector<1x120x48xf32>
    %4 = vector.shape_cast %3 : vector<1x120x48xf32> to vector<120x48xf32>
    %cst_6 = arith.constant dense<0.000000e+00> : vector<4x48xf32>
    %5 = tpu.matmul %2, %4, %cst_6 {dimension_numbers = #tpu.dot_dimension_numbers<[1], [0], [0], [1], [0, 0, 1, 1], [], []>} : vector<4x120xf32>, vector<120x48xf32>, vector<4x48xf32> -> vector<4x48xf32>
    %6 = arith.addf %0, %5 : vector<4x48xf32>
    %c0_7 = arith.constant 0 : index
    %c1 = arith.constant 1 : index
    %c0_8 = arith.constant 0 : index
    %c0_9 = arith.constant 0 : index
    %7 = vector.load %arg1[%c0_7, %c1, %c0_8, %c0_9] : memref<1x4x5x120xf32, #tpu.memory_space<vmem>>, vector<1x1x4x120xf32>
    %8 = vector.shape_cast %7 : vector<1x1x4x120xf32> to vector<4x120xf32>
    %c1_10 = arith.constant 1 : index
    %c0_11 = arith.constant 0 : index
    %c0_12 = arith.constant 0 : index
    %9 = vector.load %arg2[%c1_10, %c0_11, %c0_12] : memref<12x120x48xf32, #tpu.memory_space<vmem>>, vector<1x120x48xf32>
    %10 = vector.shape_cast %9 : vector<1x120x48xf32> to vector<120x48xf32>
    %cst_13 = arith.constant dense<0.000000e+00> : vector<4x48xf32>
    %11 = tpu.matmul %8, %10, %cst_13 {dimension_numbers = #tpu.dot_dimension_numbers<[1], [0], [0], [1], [0, 0, 1, 1], [], []>} : vector<4x120xf32>, vector<120x48xf32>, vector<4x48xf32> -> vector<4x48xf32>
    %12 = arith.addf %6, %11 : vector<4x48xf32>
    %c0_14 = arith.constant 0 : index
    %c2 = arith.constant 2 : index
    %c0_15 = arith.constant 0 : index
    %c0_16 = arith.constant 0 : index
    %13 = vector.load %arg1[%c0_14, %c2, %c0_15, %c0_16] : memref<1x4x5x120xf32, #tpu.memory_space<vmem>>, vector<1x1x4x120xf32>
    %14 = vector.shape_cast %13 : vector<1x1x4x120xf32> to vector<4x120xf32>
    %c2_17 = arith.constant 2 : index
    %c0_18 = arith.constant 0 : index
    %c0_19 = arith.constant 0 : index
    %15 = vector.load %arg2[%c2_17, %c0_18, %c0_19] : memref<12x120x48xf32, #tpu.memory_space<vmem>>, vector<1x120x48xf32>
    %16 = vector.shape_cast %15 : vector<1x120x48xf32> to vector<120x48xf32>
    %cst_20 = arith.constant dense<0.000000e+00> : vector<4x48xf32>
    %17 = tpu.matmul %14, %16, %cst_20 {dimension_numbers = #tpu.dot_dimension_numbers<[1], [0], [0], [1], [0, 0, 1, 1], [], []>} : vector<4x120xf32>, vector<120x48xf32>, vector<4x48xf32> -> vector<4x48xf32>
    %18 = arith.addf %12, %17 : vector<4x48xf32>
    %c0_21 = arith.constant 0 : index
    %c3 = arith.constant 3 : index
    %c0_22 = arith.constant 0 : index
    %c0_23 = arith.constant 0 : index
    %19 = vector.load %arg1[%c0_21, %c3, %c0_22, %c0_23] : memref<1x4x5x120xf32, #tpu.memory_space<vmem>>, vector<1x1x4x120xf32>
    %20 = vector.shape_cast %19 : vector<1x1x4x120xf32> to vector<4x120xf32>
    %c3_24 = arith.constant 3 : index
    %c0_25 = arith.constant 0 : index
    %c0_26 = arith.constant 0 : index
    %21 = vector.load %arg2[%c3_24, %c0_25, %c0_26] : memref<12x120x48xf32, #tpu.memory_space<vmem>>, vector<1x120x48xf32>
    %22 = vector.shape_cast %21 : vector<1x120x48xf32> to vector<120x48xf32>
    %cst_27 = arith.constant dense<0.000000e+00> : vector<4x48xf32>
    %23 = tpu.matmul %20, %22, %cst_27 {dimension_numbers = #tpu.dot_dimension_numbers<[1], [0], [0], [1], [0, 0, 1, 1], [], []>} : vector<4x120xf32>, vector<120x48xf32>, vector<4x48xf32> -> vector<4x48xf32>
    %24 = arith.addf %18, %23 : vector<4x48xf32>
    %c0_28 = arith.constant 0 : index
    %c0_29 = arith.constant 0 : index
    %c1_30 = arith.constant 1 : index
    %c0_31 = arith.constant 0 : index
    %25 = vector.load %arg1[%c0_28, %c0_29, %c1_30, %c0_31] : memref<1x4x5x120xf32, #tpu.memory_space<vmem>>, vector<1x1x4x120xf32>
    %26 = vector.shape_cast %25 : vector<1x1x4x120xf32> to vector<4x120xf32>
    %c4 = arith.constant 4 : index
    %c0_32 = arith.constant 0 : index
    %c0_33 = arith.constant 0 : index
    %27 = vector.load %arg2[%c4, %c0_32, %c0_33] : memref<12x120x48xf32, #tpu.memory_space<vmem>>, vector<1x120x48xf32>
    %28 = vector.shape_cast %27 : vector<1x120x48xf32> to vector<120x48xf32>
    %cst_34 = arith.constant dense<0.000000e+00> : vector<4x48xf32>
    %29 = tpu.matmul %26, %28, %cst_34 {dimension_numbers = #tpu.dot_dimension_numbers<[1], [0], [0], [1], [0, 0, 1, 1], [], []>} : vector<4x120xf32>, vector<120x48xf32>, vector<4x48xf32> -> vector<4x48xf32>
    %30 = arith.addf %24, %29 : vector<4x48xf32>
    %c0_35 = arith.constant 0 : index
    %c1_36 = arith.constant 1 : index
    %c1_37 = arith.constant 1 : index
    %c0_38 = arith.constant 0 : index
    %31 = vector.load %arg1[%c0_35, %c1_36, %c1_37, %c0_38] : memref<1x4x5x120xf32, #tpu.memory_space<vmem>>, vector<1x1x4x120xf32>
    %32 = vector.shape_cast %31 : vector<1x1x4x120xf32> to vector<4x120xf32>
    %c5 = arith.constant 5 : index
    %c0_39 = arith.constant 0 : index
    %c0_40 = arith.constant 0 : index
    %33 = vector.load %arg2[%c5, %c0_39, %c0_40] : memref<12x120x48xf32, #tpu.memory_space<vmem>>, vector<1x120x48xf32>
    %34 = vector.shape_cast %33 : vector<1x120x48xf32> to vector<120x48xf32>
    %cst_41 = arith.constant dense<0.000000e+00> : vector<4x48xf32>
    %35 = tpu.matmul %32, %34, %cst_41 {dimension_numbers = #tpu.dot_dimension_numbers<[1], [0], [0], [1], [0, 0, 1, 1], [], []>} : vector<4x120xf32>, vector<120x48xf32>, vector<4x48xf32> -> vector<4x48xf32>
    %36 = arith.addf %30, %35 : vector<4x48xf32>
    %cst_42 = arith.constant 0.000000e+00 : f32
    %37 = vector.broadcast %cst_42 : f32 to vector<4x48xf32>
    %c6 = arith.constant 6 : index
    %c0_43 = arith.constant 0 : index
    %c0_44 = arith.constant 0 : index
    %38 = vector.load %arg2[%c6, %c0_43, %c0_44] : memref<12x120x48xf32, #tpu.memory_space<vmem>>, vector<1x120x48xf32>
    %39 = vector.shape_cast %38 : vector<1x120x48xf32> to vector<120x48xf32>
    %cst_45 = arith.constant dense<0.000000e+00> : vector<4x48xf32>
    %40 = tpu.matmul %2, %39, %cst_45 {dimension_numbers = #tpu.dot_dimension_numbers<[1], [0], [0], [1], [0, 0, 1, 1], [], []>} : vector<4x120xf32>, vector<120x48xf32>, vector<4x48xf32> -> vector<4x48xf32>
    %41 = arith.addf %37, %40 : vector<4x48xf32>
    %c7 = arith.constant 7 : index
    %c0_46 = arith.constant 0 : index
    %c0_47 = arith.constant 0 : index
    %42 = vector.load %arg2[%c7, %c0_46, %c0_47] : memref<12x120x48xf32, #tpu.memory_space<vmem>>, vector<1x120x48xf32>
    %43 = vector.shape_cast %42 : vector<1x120x48xf32> to vector<120x48xf32>
    %cst_48 = arith.constant dense<0.000000e+00> : vector<4x48xf32>
    %44 = tpu.matmul %8, %43, %cst_48 {dimension_numbers = #tpu.dot_dimension_numbers<[1], [0], [0], [1], [0, 0, 1, 1], [], []>} : vector<4x120xf32>, vector<120x48xf32>, vector<4x48xf32> -> vector<4x48xf32>
    %45 = arith.addf %41, %44 : vector<4x48xf32>
    %c8 = arith.constant 8 : index
    %c0_49 = arith.constant 0 : index
    %c0_50 = arith.constant 0 : index
    %46 = vector.load %arg2[%c8, %c0_49, %c0_50] : memref<12x120x48xf32, #tpu.memory_space<vmem>>, vector<1x120x48xf32>
    %47 = vector.shape_cast %46 : vector<1x120x48xf32> to vector<120x48xf32>
    %cst_51 = arith.constant dense<0.000000e+00> : vector<4x48xf32>
    %48 = tpu.matmul %14, %47, %cst_51 {dimension_numbers = #tpu.dot_dimension_numbers<[1], [0], [0], [1], [0, 0, 1, 1], [], []>} : vector<4x120xf32>, vector<120x48xf32>, vector<4x48xf32> -> vector<4x48xf32>
    %49 = arith.addf %45, %48 : vector<4x48xf32>
    %c9 = arith.constant 9 : index
    %c0_52 = arith.constant 0 : index
    %c0_53 = arith.constant 0 : index
    %50 = vector.load %arg2[%c9, %c0_52, %c0_53] : memref<12x120x48xf32, #tpu.memory_space<vmem>>, vector<1x120x48xf32>
    %51 = vector.shape_cast %50 : vector<1x120x48xf32> to vector<120x48xf32>
    %cst_54 = arith.constant dense<0.000000e+00> : vector<4x48xf32>
    %52 = tpu.matmul %20, %51, %cst_54 {dimension_numbers = #tpu.dot_dimension_numbers<[1], [0], [0], [1], [0, 0, 1, 1], [], []>} : vector<4x120xf32>, vector<120x48xf32>, vector<4x48xf32> -> vector<4x48xf32>
    %53 = arith.addf %49, %52 : vector<4x48xf32>
    %c10 = arith.constant 10 : index
    %c0_55 = arith.constant 0 : index
    %c0_56 = arith.constant 0 : index
    %54 = vector.load %arg2[%c10, %c0_55, %c0_56] : memref<12x120x48xf32, #tpu.memory_space<vmem>>, vector<1x120x48xf32>
    %55 = vector.shape_cast %54 : vector<1x120x48xf32> to vector<120x48xf32>
    %cst_57 = arith.constant dense<0.000000e+00> : vector<4x48xf32>
    %56 = tpu.matmul %26, %55, %cst_57 {dimension_numbers = #tpu.dot_dimension_numbers<[1], [0], [0], [1], [0, 0, 1, 1], [], []>} : vector<4x120xf32>, vector<120x48xf32>, vector<4x48xf32> -> vector<4x48xf32>
    %57 = arith.addf %53, %56 : vector<4x48xf32>
    %c11 = arith.constant 11 : index
    %c0_58 = arith.constant 0 : index
    %c0_59 = arith.constant 0 : index
    %58 = vector.load %arg2[%c11, %c0_58, %c0_59] : memref<12x120x48xf32, #tpu.memory_space<vmem>>, vector<1x120x48xf32>
    %59 = vector.shape_cast %58 : vector<1x120x48xf32> to vector<120x48xf32>
    %cst_60 = arith.constant dense<0.000000e+00> : vector<4x48xf32>
    %60 = tpu.matmul %32, %59, %cst_60 {dimension_numbers = #tpu.dot_dimension_numbers<[1], [0], [0], [1], [0, 0, 1, 1], [], []>} : vector<4x120xf32>, vector<120x48xf32>, vector<4x48xf32> -> vector<4x48xf32>
    %61 = arith.addf %57, %60 : vector<4x48xf32>
    %62 = arith.maximumf %36, %61 : vector<4x48xf32>
    %cst_61 = arith.constant 0.000000e+00 : f32
    %63 = vector.broadcast %cst_61 : f32 to vector<4x48xf32>
    %c0_62 = arith.constant 0 : index
    %c0_63 = arith.constant 0 : index
    %c0_64 = arith.constant 0 : index
    %64 = vector.load %arg2[%c0_62, %c0_63, %c0_64] : memref<12x120x48xf32, #tpu.memory_space<vmem>>, vector<1x120x48xf32>
    %65 = vector.shape_cast %64 : vector<1x120x48xf32> to vector<120x48xf32>
    %cst_65 = arith.constant dense<0.000000e+00> : vector<4x48xf32>
    %66 = tpu.matmul %14, %65, %cst_65 {dimension_numbers = #tpu.dot_dimension_numbers<[1], [0], [0], [1], [0, 0, 1, 1], [], []>} : vector<4x120xf32>, vector<120x48xf32>, vector<4x48xf32> -> vector<4x48xf32>
    %67 = arith.addf %63, %66 : vector<4x48xf32>
    %c1_66 = arith.constant 1 : index
    %c0_67 = arith.constant 0 : index
    %c0_68 = arith.constant 0 : index
    %68 = vector.load %arg2[%c1_66, %c0_67, %c0_68] : memref<12x120x48xf32, #tpu.memory_space<vmem>>, vector<1x120x48xf32>
    %69 = vector.shape_cast %68 : vector<1x120x48xf32> to vector<120x48xf32>
    %cst_69 = arith.constant dense<0.000000e+00> : vector<4x48xf32>
    %70 = tpu.matmul %20, %69, %cst_69 {dimension_numbers = #tpu.dot_dimension_numbers<[1], [0], [0], [1], [0, 0, 1, 1], [], []>} : vector<4x120xf32>, vector<120x48xf32>, vector<4x48xf32> -> vector<4x48xf32>
    %71 = arith.addf %67, %70 : vector<4x48xf32>
    %c2_70 = arith.constant 2 : index
    %c0_71 = arith.constant 0 : index
    %c0_72 = arith.constant 0 : index
    %72 = vector.load %arg2[%c2_70, %c0_71, %c0_72] : memref<12x120x48xf32, #tpu.memory_space<vmem>>, vector<1x120x48xf32>
    %73 = vector.shape_cast %72 : vector<1x120x48xf32> to vector<120x48xf32>
    %cst_73 = arith.constant dense<0.000000e+00> : vector<4x48xf32>
    %74 = tpu.matmul %26, %73, %cst_73 {dimension_numbers = #tpu.dot_dimension_numbers<[1], [0], [0], [1], [0, 0, 1, 1], [], []>} : vector<4x120xf32>, vector<120x48xf32>, vector<4x48xf32> -> vector<4x48xf32>
    %75 = arith.addf %71, %74 : vector<4x48xf32>
    %c3_74 = arith.constant 3 : index
    %c0_75 = arith.constant 0 : index
    %c0_76 = arith.constant 0 : index
    %76 = vector.load %arg2[%c3_74, %c0_75, %c0_76] : memref<12x120x48xf32, #tpu.memory_space<vmem>>, vector<1x120x48xf32>
    %77 = vector.shape_cast %76 : vector<1x120x48xf32> to vector<120x48xf32>
    %cst_77 = arith.constant dense<0.000000e+00> : vector<4x48xf32>
    %78 = tpu.matmul %32, %77, %cst_77 {dimension_numbers = #tpu.dot_dimension_numbers<[1], [0], [0], [1], [0, 0, 1, 1], [], []>} : vector<4x120xf32>, vector<120x48xf32>, vector<4x48xf32> -> vector<4x48xf32>
    %79 = arith.addf %75, %78 : vector<4x48xf32>
    %c0_78 = arith.constant 0 : index
    %c2_79 = arith.constant 2 : index
    %c1_80 = arith.constant 1 : index
    %c0_81 = arith.constant 0 : index
    %80 = vector.load %arg1[%c0_78, %c2_79, %c1_80, %c0_81] : memref<1x4x5x120xf32, #tpu.memory_space<vmem>>, vector<1x1x4x120xf32>
    %81 = vector.shape_cast %80 : vector<1x1x4x120xf32> to vector<4x120xf32>
    %c4_82 = arith.constant 4 : index
    %c0_83 = arith.constant 0 : index
    %c0_84 = arith.constant 0 : index
    %82 = vector.load %arg2[%c4_82, %c0_83, %c0_84] : memref<12x120x48xf32, #tpu.memory_space<vmem>>, vector<1x120x48xf32>
    %83 = vector.shape_cast %82 : vector<1x120x48xf32> to vector<120x48xf32>
    %cst_85 = arith.constant dense<0.000000e+00> : vector<4x48xf32>
    %84 = tpu.matmul %81, %83, %cst_85 {dimension_numbers = #tpu.dot_dimension_numbers<[1], [0], [0], [1], [0, 0, 1, 1], [], []>} : vector<4x120xf32>, vector<120x48xf32>, vector<4x48xf32> -> vector<4x48xf32>
    %85 = arith.addf %79, %84 : vector<4x48xf32>
    %c0_86 = arith.constant 0 : index
    %c3_87 = arith.constant 3 : index
    %c1_88 = arith.constant 1 : index
    %c0_89 = arith.constant 0 : index
    %86 = vector.load %arg1[%c0_86, %c3_87, %c1_88, %c0_89] : memref<1x4x5x120xf32, #tpu.memory_space<vmem>>, vector<1x1x4x120xf32>
    %87 = vector.shape_cast %86 : vector<1x1x4x120xf32> to vector<4x120xf32>
    %c5_90 = arith.constant 5 : index
    %c0_91 = arith.constant 0 : index
    %c0_92 = arith.constant 0 : index
    %88 = vector.load %arg2[%c5_90, %c0_91, %c0_92] : memref<12x120x48xf32, #tpu.memory_space<vmem>>, vector<1x120x48xf32>
    %89 = vector.shape_cast %88 : vector<1x120x48xf32> to vector<120x48xf32>
    %cst_93 = arith.constant dense<0.000000e+00> : vector<4x48xf32>
    %90 = tpu.matmul %87, %89, %cst_93 {dimension_numbers = #tpu.dot_dimension_numbers<[1], [0], [0], [1], [0, 0, 1, 1], [], []>} : vector<4x120xf32>, vector<120x48xf32>, vector<4x48xf32> -> vector<4x48xf32>
    %91 = arith.addf %85, %90 : vector<4x48xf32>
    %92 = arith.maximumf %62, %91 : vector<4x48xf32>
    %cst_94 = arith.constant 0.000000e+00 : f32
    %93 = vector.broadcast %cst_94 : f32 to vector<4x48xf32>
    %c6_95 = arith.constant 6 : index
    %c0_96 = arith.constant 0 : index
    %c0_97 = arith.constant 0 : index
    %94 = vector.load %arg2[%c6_95, %c0_96, %c0_97] : memref<12x120x48xf32, #tpu.memory_space<vmem>>, vector<1x120x48xf32>
    %95 = vector.shape_cast %94 : vector<1x120x48xf32> to vector<120x48xf32>
    %cst_98 = arith.constant dense<0.000000e+00> : vector<4x48xf32>
    %96 = tpu.matmul %14, %95, %cst_98 {dimension_numbers = #tpu.dot_dimension_numbers<[1], [0], [0], [1], [0, 0, 1, 1], [], []>} : vector<4x120xf32>, vector<120x48xf32>, vector<4x48xf32> -> vector<4x48xf32>
    %97 = arith.addf %93, %96 : vector<4x48xf32>
    %c7_99 = arith.constant 7 : index
    %c0_100 = arith.constant 0 : index
    %c0_101 = arith.constant 0 : index
    %98 = vector.load %arg2[%c7_99, %c0_100, %c0_101] : memref<12x120x48xf32, #tpu.memory_space<vmem>>, vector<1x120x48xf32>
    %99 = vector.shape_cast %98 : vector<1x120x48xf32> to vector<120x48xf32>
    %cst_102 = arith.constant dense<0.000000e+00> : vector<4x48xf32>
    %100 = tpu.matmul %20, %99, %cst_102 {dimension_numbers = #tpu.dot_dimension_numbers<[1], [0], [0], [1], [0, 0, 1, 1], [], []>} : vector<4x120xf32>, vector<120x48xf32>, vector<4x48xf32> -> vector<4x48xf32>
    %101 = arith.addf %97, %100 : vector<4x48xf32>
    %c8_103 = arith.constant 8 : index
    %c0_104 = arith.constant 0 : index
    %c0_105 = arith.constant 0 : index
    %102 = vector.load %arg2[%c8_103, %c0_104, %c0_105] : memref<12x120x48xf32, #tpu.memory_space<vmem>>, vector<1x120x48xf32>
    %103 = vector.shape_cast %102 : vector<1x120x48xf32> to vector<120x48xf32>
    %cst_106 = arith.constant dense<0.000000e+00> : vector<4x48xf32>
    %104 = tpu.matmul %26, %103, %cst_106 {dimension_numbers = #tpu.dot_dimension_numbers<[1], [0], [0], [1], [0, 0, 1, 1], [], []>} : vector<4x120xf32>, vector<120x48xf32>, vector<4x48xf32> -> vector<4x48xf32>
    %105 = arith.addf %101, %104 : vector<4x48xf32>
    %c9_107 = arith.constant 9 : index
    %c0_108 = arith.constant 0 : index
    %c0_109 = arith.constant 0 : index
    %106 = vector.load %arg2[%c9_107, %c0_108, %c0_109] : memref<12x120x48xf32, #tpu.memory_space<vmem>>, vector<1x120x48xf32>
    %107 = vector.shape_cast %106 : vector<1x120x48xf32> to vector<120x48xf32>
    %cst_110 = arith.constant dense<0.000000e+00> : vector<4x48xf32>
    %108 = tpu.matmul %32, %107, %cst_110 {dimension_numbers = #tpu.dot_dimension_numbers<[1], [0], [0], [1], [0, 0, 1, 1], [], []>} : vector<4x120xf32>, vector<120x48xf32>, vector<4x48xf32> -> vector<4x48xf32>
    %109 = arith.addf %105, %108 : vector<4x48xf32>
    %c10_111 = arith.constant 10 : index
    %c0_112 = arith.constant 0 : index
    %c0_113 = arith.constant 0 : index
    %110 = vector.load %arg2[%c10_111, %c0_112, %c0_113] : memref<12x120x48xf32, #tpu.memory_space<vmem>>, vector<1x120x48xf32>
    %111 = vector.shape_cast %110 : vector<1x120x48xf32> to vector<120x48xf32>
    %cst_114 = arith.constant dense<0.000000e+00> : vector<4x48xf32>
    %112 = tpu.matmul %81, %111, %cst_114 {dimension_numbers = #tpu.dot_dimension_numbers<[1], [0], [0], [1], [0, 0, 1, 1], [], []>} : vector<4x120xf32>, vector<120x48xf32>, vector<4x48xf32> -> vector<4x48xf32>
    %113 = arith.addf %109, %112 : vector<4x48xf32>
    %c11_115 = arith.constant 11 : index
    %c0_116 = arith.constant 0 : index
    %c0_117 = arith.constant 0 : index
    %114 = vector.load %arg2[%c11_115, %c0_116, %c0_117] : memref<12x120x48xf32, #tpu.memory_space<vmem>>, vector<1x120x48xf32>
    %115 = vector.shape_cast %114 : vector<1x120x48xf32> to vector<120x48xf32>
    %cst_118 = arith.constant dense<0.000000e+00> : vector<4x48xf32>
    %116 = tpu.matmul %87, %115, %cst_118 {dimension_numbers = #tpu.dot_dimension_numbers<[1], [0], [0], [1], [0, 0, 1, 1], [], []>} : vector<4x120xf32>, vector<120x48xf32>, vector<4x48xf32> -> vector<4x48xf32>
    %117 = arith.addf %113, %116 : vector<4x48xf32>
    %118 = arith.maximumf %92, %117 : vector<4x48xf32>
    %c0_119 = arith.constant 0 : index
    %c0_120 = arith.constant 0 : index
    %119 = vector.load %arg3[%c0_119, %c0_120] : memref<1x48xf32, #tpu.memory_space<vmem>>, vector<1x48xf32>
    %120 = vector.broadcast %119 : vector<1x48xf32> to vector<4x48xf32>
    %121 = arith.addf %118, %120 : vector<4x48xf32>
    %cst_121 = arith.constant 0.000000e+00 : f32
    %122 = vector.broadcast %cst_121 : f32 to vector<4x48xf32>
    %123 = arith.maximumf %121, %122 : vector<4x48xf32>
    %c0_122 = arith.constant 0 : index
    %c0_123 = arith.constant 0 : index
    %c0_124 = arith.constant 0 : index
    %124 = vector.load %arg4[%c0_122, %c0_123, %c0_124] : memref<1x4x48xf32, #tpu.memory_space<vmem>>, vector<1x4x48xf32>
    %125 = vector.shape_cast %124 : vector<1x4x48xf32> to vector<4x48xf32>
    %126 = vector.shape_cast %123 : vector<4x48xf32> to vector<1x4x48xf32>
    tpu.vector_store %arg4[%c0_122, %c0_123, %c0_124], %126 {strides = array<i32>} : memref<1x4x48xf32, #tpu.memory_space<vmem>>, vector<1x4x48xf32>,
    return
  }
  func.func @transform_0(%arg0: i32) -> (i32, i32, i32, i32) {
    %c0_i32 = arith.constant 0 : i32
    %c0_i32_0 = arith.constant 0 : i32
    %c0_i32_1 = arith.constant 0 : i32
    %c0_i32_2 = arith.constant 0 : i32
    return %arg0, %c0_i32, %c0_i32_0, %c0_i32_1 : i32, i32, i32, i32
  }
  func.func @transform_1(%arg0: i32) -> (i32, i32, i32) {
    %c0_i32 = arith.constant 0 : i32
    %c0_i32_0 = arith.constant 0 : i32
    %c0_i32_1 = arith.constant 0 : i32
    %c0_i32_2 = arith.constant 0 : i32
    return %c0_i32, %c0_i32_0, %c0_i32_1 : i32, i32, i32
  }
  func.func @transform_2(%arg0: i32) -> (i32, i32) {
    %c0_i32 = arith.constant 0 : i32
    %c0_i32_0 = arith.constant 0 : i32
    %c0_i32_1 = arith.constant 0 : i32
    return %c0_i32, %c0_i32_0 : i32, i32
  }
  func.func @transform_3(%arg0: i32) -> (i32, i32, i32) {
    %c0_i32 = arith.constant 0 : i32
    %c0_i32_0 = arith.constant 0 : i32
    %c0_i32_1 = arith.constant 0 : i32
    return %arg0, %c0_i32, %c0_i32_0 : i32, i32, i32
  }
}

module attributes {stable_mosaic.version = 11 : i64} {
  func.func @_fc_stack_kernel(%arg0: i32, %arg1: memref<2x192xf32, #tpu.memory_space<vmem>>, %arg2: memref<192x128xf32, #tpu.memory_space<vmem>>, %arg3: memref<1x128xf32, #tpu.memory_space<vmem>>, %arg4: memref<128x84xf32, #tpu.memory_space<vmem>>, %arg5: memref<1x84xf32, #tpu.memory_space<vmem>>, %arg6: memref<84x10xf32, #tpu.memory_space<vmem>>, %arg7: memref<1x10xf32, #tpu.memory_space<vmem>>, %arg8: memref<2x10xf32, #tpu.memory_space<vmem>>) attributes {dimension_semantics = [#tpu.dimension_semantics<arbitrary>], iteration_bounds = array<i64: 1>, scalar_prefetch = 0 : i64, scratch_operands = 0 : i64, tpu.core_type = #tpu.core_type<tc>, window_params = [{pipeline_mode = #tpu.pipeline_mode<synchronous>, transform_indices = @transform_0, window_bounds = array<i64: 2, 192>}, {pipeline_mode = #tpu.pipeline_mode<synchronous>, transform_indices = @transform_1, window_bounds = array<i64: 192, 128>}, {pipeline_mode = #tpu.pipeline_mode<synchronous>, transform_indices = @transform_2, window_bounds = array<i64: 1, 128>}, {pipeline_mode = #tpu.pipeline_mode<synchronous>, transform_indices = @transform_3, window_bounds = array<i64: 128, 84>}, {pipeline_mode = #tpu.pipeline_mode<synchronous>, transform_indices = @transform_4, window_bounds = array<i64: 1, 84>}, {pipeline_mode = #tpu.pipeline_mode<synchronous>, transform_indices = @transform_5, window_bounds = array<i64: 84, 10>}, {pipeline_mode = #tpu.pipeline_mode<synchronous>, transform_indices = @transform_6, window_bounds = array<i64: 1, 10>}, {pipeline_mode = #tpu.pipeline_mode<synchronous>, transform_indices = @transform_7, window_bounds = array<i64: 2, 10>}]} {
    %c0 = arith.constant 0 : index
    %c0_0 = arith.constant 0 : index
    %0 = vector.load %arg1[%c0, %c0_0] : memref<2x192xf32, #tpu.memory_space<vmem>>, vector<2x192xf32>
    %c0_1 = arith.constant 0 : index
    %c0_2 = arith.constant 0 : index
    %1 = vector.load %arg2[%c0_1, %c0_2] : memref<192x128xf32, #tpu.memory_space<vmem>>, vector<192x128xf32>
    %cst = arith.constant dense<0.000000e+00> : vector<2x128xf32>
    %2 = tpu.matmul %0, %1, %cst {dimension_numbers = #tpu.dot_dimension_numbers<[1], [0], [0], [1], [0, 0, 1, 1], [], []>} : vector<2x192xf32>, vector<192x128xf32>, vector<2x128xf32> -> vector<2x128xf32>
    %c0_3 = arith.constant 0 : index
    %c0_4 = arith.constant 0 : index
    %3 = vector.load %arg3[%c0_3, %c0_4] : memref<1x128xf32, #tpu.memory_space<vmem>>, vector<1x128xf32>
    %4 = vector.broadcast %3 : vector<1x128xf32> to vector<2x128xf32>
    %5 = arith.addf %2, %4 : vector<2x128xf32>
    %cst_5 = arith.constant 0.000000e+00 : f32
    %6 = vector.broadcast %cst_5 : f32 to vector<2x128xf32>
    %7 = arith.maximumf %5, %6 : vector<2x128xf32>
    %c0_6 = arith.constant 0 : index
    %c0_7 = arith.constant 0 : index
    %8 = vector.load %arg4[%c0_6, %c0_7] : memref<128x84xf32, #tpu.memory_space<vmem>>, vector<128x84xf32>
    %cst_8 = arith.constant dense<0.000000e+00> : vector<2x84xf32>
    %9 = tpu.matmul %7, %8, %cst_8 {dimension_numbers = #tpu.dot_dimension_numbers<[1], [0], [0], [1], [0, 0, 1, 1], [], []>} : vector<2x128xf32>, vector<128x84xf32>, vector<2x84xf32> -> vector<2x84xf32>
    %c0_9 = arith.constant 0 : index
    %c0_10 = arith.constant 0 : index
    %10 = vector.load %arg5[%c0_9, %c0_10] : memref<1x84xf32, #tpu.memory_space<vmem>>, vector<1x84xf32>
    %11 = vector.broadcast %10 : vector<1x84xf32> to vector<2x84xf32>
    %12 = arith.addf %9, %11 : vector<2x84xf32>
    %cst_11 = arith.constant 0.000000e+00 : f32
    %13 = vector.broadcast %cst_11 : f32 to vector<2x84xf32>
    %14 = arith.maximumf %12, %13 : vector<2x84xf32>
    %c0_12 = arith.constant 0 : index
    %c0_13 = arith.constant 0 : index
    %15 = vector.load %arg6[%c0_12, %c0_13] : memref<84x10xf32, #tpu.memory_space<vmem>>, vector<84x10xf32>
    %cst_14 = arith.constant dense<0.000000e+00> : vector<2x10xf32>
    %16 = tpu.matmul %14, %15, %cst_14 {dimension_numbers = #tpu.dot_dimension_numbers<[1], [0], [0], [1], [0, 0, 1, 1], [], []>} : vector<2x84xf32>, vector<84x10xf32>, vector<2x10xf32> -> vector<2x10xf32>
    %c0_15 = arith.constant 0 : index
    %c0_16 = arith.constant 0 : index
    %17 = vector.load %arg7[%c0_15, %c0_16] : memref<1x10xf32, #tpu.memory_space<vmem>>, vector<1x10xf32>
    %18 = vector.broadcast %17 : vector<1x10xf32> to vector<2x10xf32>
    %19 = arith.addf %16, %18 : vector<2x10xf32>
    %c0_17 = arith.constant 0 : index
    %c0_18 = arith.constant 0 : index
    %20 = vector.load %arg8[%c0_17, %c0_18] : memref<2x10xf32, #tpu.memory_space<vmem>>, vector<2x10xf32>
    tpu.vector_store %arg8[%c0_17, %c0_18], %19 {strides = array<i32>} : memref<2x10xf32, #tpu.memory_space<vmem>>, vector<2x10xf32>,
    return
  }
  func.func @transform_0(%arg0: i32) -> (i32, i32) {
    %c0_i32 = arith.constant 0 : i32
    %c0_i32_0 = arith.constant 0 : i32
    %c0_i32_1 = arith.constant 0 : i32
    return %c0_i32, %c0_i32_0 : i32, i32
  }
  func.func @transform_1(%arg0: i32) -> (i32, i32) {
    %c0_i32 = arith.constant 0 : i32
    %c0_i32_0 = arith.constant 0 : i32
    %c0_i32_1 = arith.constant 0 : i32
    return %c0_i32, %c0_i32_0 : i32, i32
  }
  func.func @transform_2(%arg0: i32) -> (i32, i32) {
    %c0_i32 = arith.constant 0 : i32
    %c0_i32_0 = arith.constant 0 : i32
    %c0_i32_1 = arith.constant 0 : i32
    return %c0_i32, %c0_i32_0 : i32, i32
  }
  func.func @transform_3(%arg0: i32) -> (i32, i32) {
    %c0_i32 = arith.constant 0 : i32
    %c0_i32_0 = arith.constant 0 : i32
    %c0_i32_1 = arith.constant 0 : i32
    return %c0_i32, %c0_i32_0 : i32, i32
  }
  func.func @transform_4(%arg0: i32) -> (i32, i32) {
    %c0_i32 = arith.constant 0 : i32
    %c0_i32_0 = arith.constant 0 : i32
    %c0_i32_1 = arith.constant 0 : i32
    return %c0_i32, %c0_i32_0 : i32, i32
  }
  func.func @transform_5(%arg0: i32) -> (i32, i32) {
    %c0_i32 = arith.constant 0 : i32
    %c0_i32_0 = arith.constant 0 : i32
    %c0_i32_1 = arith.constant 0 : i32
    return %c0_i32, %c0_i32_0 : i32, i32
  }
  func.func @transform_6(%arg0: i32) -> (i32, i32) {
    %c0_i32 = arith.constant 0 : i32
    %c0_i32_0 = arith.constant 0 : i32
    %c0_i32_1 = arith.constant 0 : i32
    return %c0_i32, %c0_i32_0 : i32, i32
  }
  func.func @transform_7(%arg0: i32) -> (i32, i32) {
    %c0_i32 = arith.constant 0 : i32
    %c0_i32_0 = arith.constant 0 : i32
    %c0_i32_1 = arith.constant 0 : i32
    return %c0_i32, %c0_i32_0 : i32, i32
  }
}

</mosaic_0001>

<llo_original>
// kernel: dainet3_forward.4
$region0: #{dainet3_forward.4}
  #allocation0 [shape = 'u32[]', space=smem, size = 0x4, offset = 0x4, fixed_abs, tag = 'smem constant byte address 0x4 - core index']
  #allocation1 [shape = 'u32[144,128]{1,0:T(1,128)}', space=vmem, size = 0x12000, scoped, tag = 'internal scratch']
  %s0 = inlined_call_operand.vmem [shape: f32[2,4,18,54], index: 0, kind: input, shape index: {}]
  %s1 = inlined_call_operand.vmem [shape: f32[20,54,192], index: 1, kind: input, shape index: {}]
  %s2 = inlined_call_operand.vmem [shape: f32[1,192], index: 2, kind: input, shape index: {}]
  %s3 = inlined_call_operand.vmem [shape: f32[2,16,192], index: 3, kind: output, shape index: {}]
  %s4 = sld [smem:[#allocation0]]
  $region45: #{dainet3_forward.4} parent=0
    _
  %s6 = ssub.s32 1, %s4
  %s7 = scalar_select 0, %s6, %s4
  loop: start=0, step=1, limit=4
  $region2: #{dainet3_forward.4} parent=0 // loop_pre_header
    _
  $region3: #{dainet3_forward.4} parent=0 // loop_header
    %s9 = sphi 0, %s13
    %p10 = scmp.ge.s32.totalorder %s9, 4
    %s19 = sphi 0, %s21
    %s22 = sphi 0, %s19
    %s23 = sphi 0, %s22
    %s39 = sphi 0, %s23
    %s43 = sphi 0, %s43
    %s45 = sphi 0, %s43
    %s46 = sphi 0, %s45
    %s60 = sphi 0, %s46
    %s64 = sphi 0, %s64
    %s66 = sphi 0, %s64
    %s67 = sphi 0, %s66
    %s81 = sphi 0, %s67
    %s87 = sphi 0, %s89
    %s90 = sphi 0, %s87
    %s91 = sphi 0, %s90
    %s107 = sphi 0, %s91
  $region4: #{dainet3_forward.4} parent=0 // loop_header_branch
    %12 = sbr.rel (%p10) target = $region8
  $region5: #{dainet3_forward.4} parent=0 // loop_body
    %s14 = ssub.s32 %s9, 1
    %s15 = ssub.s32 %s9, 2
    %s16 = sadd.s32 %s9, 1
    %s17 = ssub.s32 %s9, %s16
    %p18 = scmp.eq.s32.totalorder %s17, 0
    %s20 = sadd.s32 %s19, 1
    %s21 = scalar_select %p18, %s19, %s20
    %p24 = pneg %p18
    %p25 = scmp.eq.s32.totalorder %s9, 1
    %p26 = por %p24, %p25
    %p27 = scmp.ne.s32.totalorder %s19, %s22
    %p28 = scmp.eq.s32.totalorder %s9, 0
    %p29 = por %p27, %p28
    %p30 = scmp.ne.s32.totalorder %s19, %s22
    %p31 = scmp.eq.s32.totalorder %s14, 1
    %p32 = por %p30, %p31
    %p33 = scmp.ne.s32.totalorder %s22, %s23
    %p34 = scmp.eq.s32.totalorder %s14, 0
    %p35 = por %p33, %p34
    %p36 = scmp.ne.s32.totalorder %s22, %s23
    %p37 = scmp.eq.s32.totalorder %s15, 1
    %p38 = por %p36, %p37
    %p40 = scmp.ne.s32.totalorder %s23, %s39
    %p41 = scmp.eq.s32.totalorder %s15, 0
    %p42 = por %p40, %p41
    %s44 = sadd.s32 %s43, 1
    %p47 = scmp.eq.s32.totalorder %s9, 1
    %p48 = scmp.ne.s32.totalorder %s43, %s45
    %p49 = scmp.eq.s32.totalorder %s9, 0
    %p50 = por %p48, %p49
    %p51 = scmp.ne.s32.totalorder %s43, %s45
    %p52 = scmp.eq.s32.totalorder %s14, 1
    %p53 = por %p51, %p52
    %p54 = scmp.ne.s32.totalorder %s45, %s46
    %p55 = scmp.eq.s32.totalorder %s14, 0
    %p56 = por %p54, %p55
    %p57 = scmp.ne.s32.totalorder %s45, %s46
    %p58 = scmp.eq.s32.totalorder %s15, 1
    %p59 = por %p57, %p58
    %p61 = scmp.ne.s32.totalorder %s46, %s60
    %p62 = scmp.eq.s32.totalorder %s15, 0
    %p63 = por %p61, %p62
    %s65 = sadd.s32 %s64, 1
    %p68 = scmp.eq.s32.totalorder %s9, 1
    %p69 = scmp.ne.s32.totalorder %s64, %s66
    %p70 = scmp.eq.s32.totalorder %s9, 0
    %p71 = por %p69, %p70
    %p72 = scmp.ne.s32.totalorder %s64, %s66
    %p73 = scmp.eq.s32.totalorder %s14, 1
    %p74 = por %p72, %p73
    %p75 = scmp.ne.s32.totalorder %s66, %s67
    %p76 = scmp.eq.s32.totalorder %s14, 0
    %p77 = por %p75, %p76
    %p78 = scmp.ne.s32.totalorder %s66, %s67
    %p79 = scmp.eq.s32.totalorder %s15, 1
    %p80 = por %p78, %p79
    %p82 = scmp.ne.s32.totalorder %s67, %s81
    %p83 = scmp.eq.s32.totalorder %s15, 0
    %p84 = por %p82, %p83
    %s85 = ssub.s32 %s9, %s16
    %p86 = scmp.eq.s32.totalorder %s85, 0
    %s88 = sadd.s32 %s87, 1
    %s89 = scalar_select %p86, %s87, %s88
    %p92 = pneg %p86
    %p93 = scmp.eq.s32.totalorder %s9, 1
    %p94 = por %p92, %p93
    %p95 = scmp.ne.s32.totalorder %s87, %s90
    %p96 = scmp.eq.s32.totalorder %s9, 0
    %p97 = por %p95, %p96
    %p98 = scmp.ne.s32.totalorder %s87, %s90
    %p99 = scmp.eq.s32.totalorder %s14, 1
    %p100 = por %p98, %p99
    %p101 = scmp.ne.s32.totalorder %s90, %s91
    %p102 = scmp.eq.s32.totalorder %s14, 0
    %p103 = por %p101, %p102
    %p104 = scmp.ne.s32.totalorder %s90, %s91
    %p105 = scmp.eq.s32.totalorder %s15, 1
    %p106 = por %p104, %p105
    %p108 = scmp.ne.s32.totalorder %s91, %s107
    %p109 = scmp.eq.s32.totalorder %s15, 0
    %p110 = por %p108, %p109
    %p111 = scmp.le.s32.totalorder 1, %s9
    %p112 = scmp.lt.s32.totalorder %s9, 3
    %p113 = pnand %p111, %p112
    %p114 = pneg %p113
    // Predicated region
    $region9: #{dainet3_forward.4} parent=5 // pred_check
      _
    $region10: #{dainet3_forward.4} parent=5 // pred_check_branch
      %116 = sbr.rel (%p113) target = $region12
    $region11: #{dainet3_forward.4} parent=5 // pred_region
      %s117 = ssub.s32 %s9, 1
      // Predicated region
      $region13: #{dainet3_forward.4} parent=11 // pred_check
        %p118 = pneg %p56
      $region14: #{dainet3_forward.4} parent=11 // pred_check_branch
        %120 = sbr.rel (%p118) target = $region16
      $region15: #{dainet3_forward.4} parent=11 // pred_region
        _
      $region16: #{dainet3_forward.4} parent=11 // pred_fallthru
        _
      // Predicated region
      $region17: #{dainet3_forward.4} parent=11 // pred_check
        %p121 = pneg %p77
      $region18: #{dainet3_forward.4} parent=11 // pred_check_branch
        %123 = sbr.rel (%p121) target = $region20
      $region19: #{dainet3_forward.4} parent=11 // pred_region
        _
      $region20: #{dainet3_forward.4} parent=11 // pred_fallthru
        _
    $region12: #{dainet3_forward.4} parent=5 // pred_fallthru
      _
    %p124 = scmp.lt.s32.totalorder %s9, 2
    // Predicated region
    $region21: #{dainet3_forward.4} parent=5 // pred_check
      %p125 = pneg %p124
    $region22: #{dainet3_forward.4} parent=5 // pred_check_branch
      %127 = sbr.rel (%p125) target = $region24
    $region23: #{dainet3_forward.4} parent=5 // pred_region
      // Predicated region
      $region25: #{dainet3_forward.4} parent=23 // pred_check
        %p128 = pneg %p29
      $region26: #{dainet3_forward.4} parent=23 // pred_check_branch
        %130 = sbr.rel (%p128) target = $region28
      $region27: #{dainet3_forward.4} parent=23 // pred_region
        %p131 = scmp.lt.s32.totalorder %s9, 1
        %s132 = scalar_select %p131, %s9, 1
        %s133 = smul.addr %s132, 12
        %s134 = smul.addr %s133, 8
        %s135 = scalar_lea.vmem %s0, %s134
      $region28: #{dainet3_forward.4} parent=23 // pred_fallthru
        _
    $region24: #{dainet3_forward.4} parent=5 // pred_fallthru
      _
    %p136 = scmp.le.s32.totalorder 1, %s9
    %p137 = scmp.lt.s32.totalorder %s9, 3
    %p138 = pnand %p136, %p137
    %p139 = pneg %p138
    // Predicated region
    $region29: #{dainet3_forward.4} parent=5 // pred_check
      _
    $region30: #{dainet3_forward.4} parent=5 // pred_check_branch
      %141 = sbr.rel (%p138) target = $region32
    $region31: #{dainet3_forward.4} parent=5 // pred_region
      %s142 = ssub.s32 %s9, 1
      %p143 = scmp.lt.s32.totalorder %s14, 1
      %s144 = scalar_select %p143, %s14, 1
      %s145 = smul.addr %s144, 12
      %s146 = smul.addr %s145, 8
      %s147 = scalar_lea.vmem %s0, %s146
      %p148 = pneg %p35
      %p149 = pneg %p32
      %p150 = pneg %p56
      %p151 = pneg %p53
      %p152 = pneg %p77
      %p153 = pneg %p74
      %p154 = pneg %p103
      %p155 = pneg %p100
      %p156 = scmp.lt.s32.totalorder %s14, 1
      %s157 = scalar_select %p156, %s14, 1
      %s158 = smul.addr %s157, 4
      %s159 = smul.addr %s158, 8
      %s160 = scalar_lea.vmem %s3, %s159
      %p161 = scmp.lt.s32.totalorder %s14, 1
      %s162 = scalar_select %p161, %s14, 1
      %s163 = smul.addr %s162, 12
      %s164 = smul.addr %s163, 8
      %s165 = scalar_lea.vmem %s0, %s164
      %p166 = scmp.lt.s32.totalorder %s14, 1
      %s167 = scalar_select %p166, %s14, 1
      %s168 = smul.addr %s167, 4
      %s169 = smul.addr %s168, 8
      %s170 = scalar_lea.vmem %s3, %s169
      %v171 = vld [vmem:[%s165] sm:$0xff]
      %v172 = vld [vmem:[%s165 + $0x8] sm:$0xff]
      %v173 = vld [vmem:[%s1] sm:$0xff]
      %v174 = vld [vmem:[%s1 + $0x8] sm:$0xff]
      %v175 = vld [vmem:[%s1 + $0x10] sm:$0xff]
      %v176 = vld [vmem:[%s1 + $0x18] sm:$0xff]
      %v177 = vld [vmem:[%s1 + $0x20] sm:$0xff]
      %v178 = vld [vmem:[%s1 + $0x28] sm:$0xff]
      %v179 = vld [vmem:[%s1 + $0x30] sm:$0xff]
      %v180 = vld [vmem:[%s1 + $0x38] sm:$0xff]
      %v181 = vld [vmem:[%s1 + $0x40] sm:$0xff]
      %v182 = vld [vmem:[%s1 + $0x48] sm:$0xff]
      %v183 = vld [vmem:[%s1 + $0x50] sm:$0xff]
      %v184 = vld [vmem:[%s1 + $0x58] sm:$0xff]
      %v185 = vld [vmem:[%s1 + $0x60] sm:$0x3f]
      %v186 = vld [vmem:[%s1 + $0x68] sm:$0x3f]
      %s187 = scalar_lea.vmem %s165, 24
      %v188 = vld [vmem:[%s187] sm:$0xff]
      %v189 = vld [vmem:[%s187 + $0x8] sm:$0xff]
      %s190 = scalar_lea.vmem %s1, 112
      %v191 = vld [vmem:[%s190] sm:$0xff]
      %v192 = vld [vmem:[%s190 + $0x8] sm:$0xff]
      %v193 = vld [vmem:[%s190 + $0x10] sm:$0xff]
      %v194 = vld [vmem:[%s190 + $0x18] sm:$0xff]
      %v195 = vld [vmem:[%s190 + $0x20] sm:$0xff]
      %v196 = vld [vmem:[%s190 + $0x28] sm:$0xff]
      %v197 = vld [vmem:[%s190 + $0x30] sm:$0xff]
      %v198 = vld [vmem:[%s190 + $0x38] sm:$0xff]
      %v199 = vld [vmem:[%s190 + $0x40] sm:$0xff]
      %v200 = vld [vmem:[%s190 + $0x48] sm:$0xff]
      %v201 = vld [vmem:[%s190 + $0x50] sm:$0xff]
      %v202 = vld [vmem:[%s190 + $0x58] sm:$0xff]
      %v203 = vld [vmem:[%s190 + $0x60] sm:$0x3f]
      %v204 = vld [vmem:[%s190 + $0x68] sm:$0x3f]
      %vm205 = vcmask 441344
      %v207 = vsel %vm205, %v188, 0
      %v210 = vsel %vm205, %v189, 0
      %vm212 = vcmask 1045504
      %v214 = vsel %vm212, %v203, 0
      %v217 = vsel %vm212, %v204, 0
      %219 = vmatprep.subr.mxu0 %v192
      %220 = vmatpush1.msra.mxu0 %v191
      %221 = vmatprep.subr.mxu0 %v194
      %222 = vmatpush1.msra.mxu0 %v193
      %223 = vmatprep.subr.mxu0 %v196
      %224 = vmatpush1.msra.mxu0 %v195
      %225 = vmatprep.subr.mxu0 %v198
      %226 = vmatpush1.msra.mxu0 %v197
      %227 = vmatprep.subr.mxu0 %v200
      %228 = vmatpush1.msra.mxu0 %v199
      %229 = vmatprep.subr.mxu0 %v202
      %230 = vmatpush1.msra.mxu0 %v201
      %231 = vmatprep.subr.mxu0 %v217
      %232 = vmatpush1.msra.mxu0 %v214
      %233 = vmatprep.subr.mxu0 0.0
      %234 = vmatpush1.msra.mxu0 0.0
      %235 = vmatprep.subr.mxu0 0.0
      %236 = vmatpush1.msra.mxu0 0.0
      %237 = vmatprep.subr.mxu0 0.0
      %238 = vmatpush1.msra.mxu0 0.0
      %239 = vmatprep.subr.mxu0 0.0
      %240 = vmatpush1.msra.mxu0 0.0
      %241 = vmatprep.subr.mxu0 0.0
      %242 = vmatpush1.msra.mxu0 0.0
      %243 = vmatprep.subr.mxu0 0.0
      %244 = vmatpush1.msra.mxu0 0.0
      %245 = vmatprep.subr.mxu0 0.0
      %246 = vmatpush1.msra.mxu0 0.0
      %247 = vmatprep.subr.mxu0 0.0
      %248 = vmatpush1.msra.mxu0 0.0
      %249 = vmatprep.subr.mxu0 0.0
      %250 = vmatpush1.msra.mxu0 0.0
      %251 = vmatprep.subr.mxu0 0.0
      %252 = vmatpush1.msra.mxu0 0.0
      %253 = vmatprep.subr.mxu0 0.0
      %254 = vmatpush1.msra.mxu0 0.0
      %255 = vmatprep.subr.mxu0 0.0
      %256 = vmatpush1.msra.mxu0 0.0
      %257 = vmatprep.subr.mxu0 0.0
      %258 = vmatpush1.msra.mxu0 0.0
      %259 = vmatprep.subr.mxu0 0.0
      %260 = vmatpush1.msra.mxu0 0.0
      %261 = vmatprep.subr.mxu0 0.0
      %262 = vmatpush1.msra.mxu0 0.0
      %263 = vmatprep.subr.mxu0 0.0
      %264 = vmatpush1.msra.mxu0 0.0
      %265 = vmatprep.subr.mxu0 0.0
      %266 = vmatpush1.msra.mxu0 0.0
      %267 = vmatprep.subr.mxu0 0.0
      %268 = vmatpush1.msra.mxu0 0.0
      %269 = vmatprep.subr.mxu0 0.0
      %270 = vmatpush1.msra.mxu0 0.0
      %271 = vmatprep.subr.mxu0 0.0
      %272 = vmatpush1.msra.mxu0 0.0
      %273 = vmatprep.subr.mxu0 0.0
      %274 = vmatpush1.msra.mxu0 0.0
      %275 = vmatprep.subr.mxu0 0.0
      %276 = vmatpush1.msra.mxu0 0.0
      %277 = vmatprep.subr.mxu0 0.0
      %278 = vmatpush1.msra.mxu0 0.0
      %279 = vmatprep.subr.mxu0 0.0
      %280 = vmatpush1.msra.mxu0 0.0
      %281 = vmatprep.subr.mxu0 0.0
      %282 = vmatpush1.msra.mxu0 0.0
      %283 = vmatprep.mubr.f32.mxu0 0.0
      %284 = vmatmul.mubr.f32.gmra.mrb[0].mxu0 %v207
      %v285 = vpop.f32.mrb[0].mxu0
      %v286 = vadd.f32 0.0, %v285
      %v287 = vpop.f32.mrb[0].mxu0
      %v288 = vadd.f32 0.0, %v287
      %289 = vmatprep.mubr.f32.mxu0 0.0
      %290 = vmatmul.mubr.f32.gmra.mrb[0].mxu0 %v210
      %v291 = vpop.f32.mrb[0].mxu0
      %v292 = vadd.f32 0.0, %v291
      %v293 = vpop.f32.mrb[0].mxu0
      %v294 = vadd.f32 0.0, %v293
      %295 = vdwg.mxu0
      %v297 = vsel %vm205, %v171, 0
      %v300 = vsel %vm205, %v172, 0
      %v303 = vsel %vm212, %v185, 0
      %v306 = vsel %vm212, %v186, 0
      %308 = vmatprep.subr.mxu0 %v174
      %309 = vmatpush1.msra.mxu0 %v173
      %310 = vmatprep.subr.mxu0 %v176
      %311 = vmatpush1.msra.mxu0 %v175
      %312 = vmatprep.subr.mxu0 %v178
      %313 = vmatpush1.msra.mxu0 %v177
      %314 = vmatprep.subr.mxu0 %v180
      %315 = vmatpush1.msra.mxu0 %v179
      %316 = vmatprep.subr.mxu0 %v182
      %317 = vmatpush1.msra.mxu0 %v181
      %318 = vmatprep.subr.mxu0 %v184
      %319 = vmatpush1.msra.mxu0 %v183
      %320 = vmatprep.subr.mxu0 %v306
      %321 = vmatpush1.msra.mxu0 %v303
      %322 = vmatprep.subr.mxu0 0.0
      %323 = vmatpush1.msra.mxu0 0.0
      %324 = vmatprep.subr.mxu0 0.0
      %325 = vmatpush1.msra.mxu0 0.0
      %326 = vmatprep.subr.mxu0 0.0
      %327 = vmatpush1.msra.mxu0 0.0
      %328 = vmatprep.subr.mxu0 0.0
      %329 = vmatpush1.msra.mxu0 0.0
      %330 = vmatprep.subr.mxu0 0.0
      %331 = vmatpush1.msra.mxu0 0.0
      %332 = vmatprep.subr.mxu0 0.0
      %333 = vmatpush1.msra.mxu0 0.0
      %334 = vmatprep.subr.mxu0 0.0
      %335 = vmatpush1.msra.mxu0 0.0
      %336 = vmatprep.subr.mxu0 0.0
      %337 = vmatpush1.msra.mxu0 0.0
      %338 = vmatprep.subr.mxu0 0.0
      %339 = vmatpush1.msra.mxu0 0.0
      %340 = vmatprep.subr.mxu0 0.0
      %341 = vmatpush1.msra.mxu0 0.0
      %342 = vmatprep.subr.mxu0 0.0
      %343 = vmatpush1.msra.mxu0 0.0
      %344 = vmatprep.subr.mxu0 0.0
      %345 = vmatpush1.msra.mxu0 0.0
      %346 = vmatprep.subr.mxu0 0.0
      %347 = vmatpush1.msra.mxu0 0.0
      %348 = vmatprep.subr.mxu0 0.0
      %349 = vmatpush1.msra.mxu0 0.0
      %350 = vmatprep.subr.mxu0 0.0
      %351 = vmatpush1.msra.mxu0 0.0
      %352 = vmatprep.subr.mxu0 0.0
      %353 = vmatpush1.msra.mxu0 0.0
      %354 = vmatprep.subr.mxu0 0.0
      %355 = vmatpush1.msra.mxu0 0.0
      %356 = vmatprep.subr.mxu0 0.0
      %357 = vmatpush1.msra.mxu0 0.0
      %358 = vmatprep.subr.mxu0 0.0
      %359 = vmatpush1.msra.mxu0 0.0
      %360 = vmatprep.subr.mxu0 0.0
      %361 = vmatpush1.msra.mxu0 0.0
      %362 = vmatprep.subr.mxu0 0.0
      %363 = vmatpush1.msra.mxu0 0.0
      %364 = vmatprep.subr.mxu0 0.0
      %365 = vmatpush1.msra.mxu0 0.0
      %366 = vmatprep.subr.mxu0 0.0
      %367 = vmatpush1.msra.mxu0 0.0
      %368 = vmatprep.subr.mxu0 0.0
      %369 = vmatpush1.msra.mxu0 0.0
      %370 = vmatprep.subr.mxu0 0.0
      %371 = vmatpush1.msra.mxu0 0.0
      %372 = vmatprep.mubr.f32.mxu0 0.0
      %373 = vmatmul.mubr.f32.gmra.mrb[0].mxu0 %v297
      %v374 = vpop.f32.mrb[0].mxu0
      %v375 = vadd.f32 %v286, %v374
      %v376 = vpop.f32.mrb[0].mxu0
      %v377 = vadd.f32 %v288, %v376
      %378 = vmatprep.mubr.f32.mxu0 0.0
      %379 = vmatmul.mubr.f32.gmra.mrb[0].mxu0 %v300
      %v380 = vpop.f32.mrb[0].mxu0
      %v381 = vadd.f32 %v292, %v380
      %v382 = vpop.f32.mrb[0].mxu0
      %v383 = vadd.f32 %v294, %v382
      %384 = vdwg.mxu0
      %s385 = scalar_lea.vmem %s165, 48
      %v386 = vld [vmem:[%s385] sm:$0xff]
      %v387 = vld [vmem:[%s385 + $0x8] sm:$0xff]
      %s388 = scalar_lea.vmem %s1, 224
      %v389 = vld [vmem:[%s388] sm:$0xff]
      %v390 = vld [vmem:[%s388 + $0x8] sm:$0xff]
      %v391 = vld [vmem:[%s388 + $0x10] sm:$0xff]
      %v392 = vld [vmem:[%s388 + $0x18] sm:$0xff]
      %v393 = vld [vmem:[%s388 + $0x20] sm:$0xff]
      %v394 = vld [vmem:[%s388 + $0x28] sm:$0xff]
      %v395 = vld [vmem:[%s388 + $0x30] sm:$0xff]
      %v396 = vld [vmem:[%s388 + $0x38] sm:$0xff]
      %v397 = vld [vmem:[%s388 + $0x40] sm:$0xff]
      %v398 = vld [vmem:[%s388 + $0x48] sm:$0xff]
      %v399 = vld [vmem:[%s388 + $0x50] sm:$0xff]
      %v400 = vld [vmem:[%s388 + $0x58] sm:$0xff]
      %v401 = vld [vmem:[%s388 + $0x60] sm:$0x3f]
      %v402 = vld [vmem:[%s388 + $0x68] sm:$0x3f]
      %v404 = vsel %vm205, %v386, 0
      %v407 = vsel %vm205, %v387, 0
      %v410 = vsel %vm212, %v401, 0
      %v413 = vsel %vm212, %v402, 0
      %415 = vmatprep.subr.mxu0 %v390
      %416 = vmatpush1.msra.mxu0 %v389
      %417 = vmatprep.subr.mxu0 %v392
      %418 = vmatpush1.msra.mxu0 %v391
      %419 = vmatprep.subr.mxu0 %v394
      %420 = vmatpush1.msra.mxu0 %v393
      %421 = vmatprep.subr.mxu0 %v396
      %422 = vmatpush1.msra.mxu0 %v395
      %423 = vmatprep.subr.mxu0 %v398
      %424 = vmatpush1.msra.mxu0 %v397
      %425 = vmatprep.subr.mxu0 %v400
      %426 = vmatpush1.msra.mxu0 %v399
      %427 = vmatprep.subr.mxu0 %v413
      %428 = vmatpush1.msra.mxu0 %v410
      %429 = vmatprep.subr.mxu0 0.0
      %430 = vmatpush1.msra.mxu0 0.0
      %431 = vmatprep.subr.mxu0 0.0
      %432 = vmatpush1.msra.mxu0 0.0
      %433 = vmatprep.subr.mxu0 0.0
      %434 = vmatpush1.msra.mxu0 0.0
      %435 = vmatprep.subr.mxu0 0.0
      %436 = vmatpush1.msra.mxu0 0.0
      %437 = vmatprep.subr.mxu0 0.0
      %438 = vmatpush1.msra.mxu0 0.0
      %439 = vmatprep.subr.mxu0 0.0
      %440 = vmatpush1.msra.mxu0 0.0
      %441 = vmatprep.subr.mxu0 0.0
      %442 = vmatpush1.msra.mxu0 0.0
      %443 = vmatprep.subr.mxu0 0.0
      %444 = vmatpush1.msra.mxu0 0.0
      %445 = vmatprep.subr.mxu0 0.0
      %446 = vmatpush1.msra.mxu0 0.0
      %447 = vmatprep.subr.mxu0 0.0
      %448 = vmatpush1.msra.mxu0 0.0
      %449 = vmatprep.subr.mxu0 0.0
      %450 = vmatpush1.msra.mxu0 0.0
      %451 = vmatprep.subr.mxu0 0.0
      %452 = vmatpush1.msra.mxu0 0.0
      %453 = vmatprep.subr.mxu0 0.0
      %454 = vmatpush1.msra.mxu0 0.0
      %455 = vmatprep.subr.mxu0 0.0
      %456 = vmatpush1.msra.mxu0 0.0
      %457 = vmatprep.subr.mxu0 0.0
      %458 = vmatpush1.msra.mxu0 0.0
      %459 = vmatprep.subr.mxu0 0.0
      %460 = vmatpush1.msra.mxu0 0.0
      %461 = vmatprep.subr.mxu0 0.0
      %462 = vmatpush1.msra.mxu0 0.0
      %463 = vmatprep.subr.mxu0 0.0
      %464 = vmatpush1.msra.mxu0 0.0
      %465 = vmatprep.subr.mxu0 0.0
      %466 = vmatpush1.msra.mxu0 0.0
      %467 = vmatprep.subr.mxu0 0.0
      %468 = vmatpush1.msra.mxu0 0.0
      %469 = vmatprep.subr.mxu0 0.0
      %470 = vmatpush1.msra.mxu0 0.0
      %471 = vmatprep.subr.mxu0 0.0
      %472 = vmatpush1.msra.mxu0 0.0
      %473 = vmatprep.subr.mxu0 0.0
      %474 = vmatpush1.msra.mxu0 0.0
      %475 = vmatprep.subr.mxu0 0.0
      %476 = vmatpush1.msra.mxu0 0.0
      %477 = vmatprep.subr.mxu0 0.0
      %478 = vmatpush1.msra.mxu0 0.0
      %479 = vmatprep.mubr.f32.mxu0 0.0
      %480 = vmatmul.mubr.f32.gmra.mrb[0].mxu0 %v404
      %v481 = vpop.f32.mrb[0].mxu0
      %v482 = vadd.f32 0.0, %v481
      %v483 = vpop.f32.mrb[0].mxu0
      %v484 = vadd.f32 0.0, %v483
      %485 = vmatprep.mubr.f32.mxu0 0.0
      %486 = vmatmul.mubr.f32.gmra.mrb[0].mxu0 %v407
      %v487 = vpop.f32.mrb[0].mxu0
      %v488 = vadd.f32 0.0, %v487
      %v489 = vpop.f32.mrb[0].mxu0
      %v490 = vadd.f32 0.0, %v489
      %491 = vdwg.mxu0
      %v492 = vadd.f32 %v375, %v482
      %v493 = vadd.f32 %v377, %v484
      %v494 = vadd.f32 %v381, %v488
      %v495 = vadd.f32 %v383, %v490
      %s496 = scalar_lea.vmem %s165, 72
      %v497 = vld [vmem:[%s496] sm:$0xff]
      %v498 = vld [vmem:[%s496 + $0x8] sm:$0xff]
      %s499 = scalar_lea.vmem %s1, 336
      %v500 = vld [vmem:[%s499] sm:$0xff]
      %v501 = vld [vmem:[%s499 + $0x8] sm:$0xff]
      %v502 = vld [vmem:[%s499 + $0x10] sm:$0xff]
      %v503 = vld [vmem:[%s499 + $0x18] sm:$0xff]
      %v504 = vld [vmem:[%s499 + $0x20] sm:$0xff]
      %v505 = vld [vmem:[%s499 + $0x28] sm:$0xff]
      %v506 = vld [vmem:[%s499 + $0x30] sm:$0xff]
      %v507 = vld [vmem:[%s499 + $0x38] sm:$0xff]
      %v508 = vld [vmem:[%s499 + $0x40] sm:$0xff]
      %v509 = vld [vmem:[%s499 + $0x48] sm:$0xff]
      %v510 = vld [vmem:[%s499 + $0x50] sm:$0xff]
      %v511 = vld [vmem:[%s499 + $0x58] sm:$0xff]
      %v512 = vld [vmem:[%s499 + $0x60] sm:$0x3f]
      %v513 = vld [vmem:[%s499 + $0x68] sm:$0x3f]
      %v515 = vsel %vm205, %v497, 0
      %v518 = vsel %vm205, %v498, 0
      %v521 = vsel %vm212, %v512, 0
      %v524 = vsel %vm212, %v513, 0
      %526 = vmatprep.subr.mxu0 %v501
      %527 = vmatpush1.msra.mxu0 %v500
      %528 = vmatprep.subr.mxu0 %v503
      %529 = vmatpush1.msra.mxu0 %v502
      %530 = vmatprep.subr.mxu0 %v505
      %531 = vmatpush1.msra.mxu0 %v504
      %532 = vmatprep.subr.mxu0 %v507
      %533 = vmatpush1.msra.mxu0 %v506
      %534 = vmatprep.subr.mxu0 %v509
      %535 = vmatpush1.msra.mxu0 %v508
      %536 = vmatprep.subr.mxu0 %v511
      %537 = vmatpush1.msra.mxu0 %v510
      %538 = vmatprep.subr.mxu0 %v524
      %539 = vmatpush1.msra.mxu0 %v521
      %540 = vmatprep.subr.mxu0 0.0
      %541 = vmatpush1.msra.mxu0 0.0
      %542 = vmatprep.subr.mxu0 0.0
      %543 = vmatpush1.msra.mxu0 0.0
      %544 = vmatprep.subr.mxu0 0.0
      %545 = vmatpush1.msra.mxu0 0.0
      %546 = vmatprep.subr.mxu0 0.0
      %547 = vmatpush1.msra.mxu0 0.0
      %548 = vmatprep.subr.mxu0 0.0
      %549 = vmatpush1.msra.mxu0 0.0
      %550 = vmatprep.subr.mxu0 0.0
      %551 = vmatpush1.msra.mxu0 0.0
      %552 = vmatprep.subr.mxu0 0.0
      %553 = vmatpush1.msra.mxu0 0.0
      %554 = vmatprep.subr.mxu0 0.0
      %555 = vmatpush1.msra.mxu0 0.0
      %556 = vmatprep.subr.mxu0 0.0
      %557 = vmatpush1.msra.mxu0 0.0
      %558 = vmatprep.subr.mxu0 0.0
      %559 = vmatpush1.msra.mxu0 0.0
      %560 = vmatprep.subr.mxu0 0.0
      %561 = vmatpush1.msra.mxu0 0.0
      %562 = vmatprep.subr.mxu0 0.0
      %563 = vmatpush1.msra.mxu0 0.0
      %564 = vmatprep.subr.mxu0 0.0
      %565 = vmatpush1.msra.mxu0 0.0
      %566 = vmatprep.subr.mxu0 0.0
      %567 = vmatpush1.msra.mxu0 0.0
      %568 = vmatprep.subr.mxu0 0.0
      %569 = vmatpush1.msra.mxu0 0.0
      %570 = vmatprep.subr.mxu0 0.0
      %571 = vmatpush1.msra.mxu0 0.0
      %572 = vmatprep.subr.mxu0 0.0
      %573 = vmatpush1.msra.mxu0 0.0
      %574 = vmatprep.subr.mxu0 0.0
      %575 = vmatpush1.msra.mxu0 0.0
      %576 = vmatprep.subr.mxu0 0.0
      %577 = vmatpush1.msra.mxu0 0.0
      %578 = vmatprep.subr.mxu0 0.0
      %579 = vmatpush1.msra.mxu0 0.0
      %580 = vmatprep.subr.mxu0 0.0
      %581 = vmatpush1.msra.mxu0 0.0
      %582 = vmatprep.subr.mxu0 0.0
      %583 = vmatpush1.msra.mxu0 0.0
      %584 = vmatprep.subr.mxu0 0.0
      %585 = vmatpush1.msra.mxu0 0.0
      %586 = vmatprep.subr.mxu0 0.0
      %587 = vmatpush1.msra.mxu0 0.0
      %588 = vmatprep.subr.mxu0 0.0
      %589 = vmatpush1.msra.mxu0 0.0
      %590 = vmatprep.mubr.f32.mxu0 0.0
      %591 = vmatmul.mubr.f32.gmra.mrb[0].mxu0 %v515
      %v592 = vpop.f32.mrb[0].mxu0
      %v593 = vadd.f32 0.0, %v592
      %v594 = vpop.f32.mrb[0].mxu0
      %v595 = vadd.f32 0.0, %v594
      %596 = vmatprep.mubr.f32.mxu0 0.0
      %597 = vmatmul.mubr.f32.gmra.mrb[0].mxu0 %v518
      %v598 = vpop.f32.mrb[0].mxu0
      %v599 = vadd.f32 0.0, %v598
      %v600 = vpop.f32.mrb[0].mxu0
      %v601 = vadd.f32 0.0, %v600
      %602 = vdwg.mxu0
      %v603 = vadd.f32 %v492, %v593
      %v604 = vadd.f32 %v493, %v595
      %v605 = vadd.f32 %v494, %v599
      %v606 = vadd.f32 %v495, %v601
      %v607 = vld [vmem:[%s165 + $0x1] sm:$0xff]
      %v608 = vld [vmem:[%s165 + $0x9] sm:$0xff]
      %s609 = scalar_lea.vmem %s1, 448
      %v610 = vld [vmem:[%s609] sm:$0xff]
      %v611 = vld [vmem:[%s609 + $0x8] sm:$0xff]
      %v612 = vld [vmem:[%s609 + $0x10] sm:$0xff]
      %v613 = vld [vmem:[%s609 + $0x18] sm:$0xff]
      %v614 = vld [vmem:[%s609 + $0x20] sm:$0xff]
      %v615 = vld [vmem:[%s609 + $0x28] sm:$0xff]
      %v616 = vld [vmem:[%s609 + $0x30] sm:$0xff]
      %v617 = vld [vmem:[%s609 + $0x38] sm:$0xff]
      %v618 = vld [vmem:[%s609 + $0x40] sm:$0xff]
      %v619 = vld [vmem:[%s609 + $0x48] sm:$0xff]
      %v620 = vld [vmem:[%s609 + $0x50] sm:$0xff]
      %v621 = vld [vmem:[%s609 + $0x58] sm:$0xff]
      %v622 = vld [vmem:[%s609 + $0x60] sm:$0x3f]
      %v623 = vld [vmem:[%s609 + $0x68] sm:$0x3f]
      %v625 = vsel %vm205, %v607, 0
      %v628 = vsel %vm205, %v608, 0
      %v631 = vsel %vm212, %v622, 0
      %v634 = vsel %vm212, %v623, 0
      %636 = vmatprep.subr.mxu0 %v611
      %637 = vmatpush1.msra.mxu0 %v610
      %638 = vmatprep.subr.mxu0 %v613
      %639 = vmatpush1.msra.mxu0 %v612
      %640 = vmatprep.subr.mxu0 %v615
      %641 = vmatpush1.msra.mxu0 %v614
      %642 = vmatprep.subr.mxu0 %v617
      %643 = vmatpush1.msra.mxu0 %v616
      %644 = vmatprep.subr.mxu0 %v619
      %645 = vmatpush1.msra.mxu0 %v618
      %646 = vmatprep.subr.mxu0 %v621
      %647 = vmatpush1.msra.mxu0 %v620
      %648 = vmatprep.subr.mxu0 %v634
      %649 = vmatpush1.msra.mxu0 %v631
      %650 = vmatprep.subr.mxu0 0.0
      %651 = vmatpush1.msra.mxu0 0.0
      %652 = vmatprep.subr.mxu0 0.0
      %653 = vmatpush1.msra.mxu0 0.0
      %654 = vmatprep.subr.mxu0 0.0
      %655 = vmatpush1.msra.mxu0 0.0
      %656 = vmatprep.subr.mxu0 0.0
      %657 = vmatpush1.msra.mxu0 0.0
      %658 = vmatprep.subr.mxu0 0.0
      %659 = vmatpush1.msra.mxu0 0.0
      %660 = vmatprep.subr.mxu0 0.0
      %661 = vmatpush1.msra.mxu0 0.0
      %662 = vmatprep.subr.mxu0 0.0
      %663 = vmatpush1.msra.mxu0 0.0
      %664 = vmatprep.subr.mxu0 0.0
      %665 = vmatpush1.msra.mxu0 0.0
      %666 = vmatprep.subr.mxu0 0.0
      %667 = vmatpush1.msra.mxu0 0.0
      %668 = vmatprep.subr.mxu0 0.0
      %669 = vmatpush1.msra.mxu0 0.0
      %670 = vmatprep.subr.mxu0 0.0
      %671 = vmatpush1.msra.mxu0 0.0
      %672 = vmatprep.subr.mxu0 0.0
      %673 = vmatpush1.msra.mxu0 0.0
      %674 = vmatprep.subr.mxu0 0.0
      %675 = vmatpush1.msra.mxu0 0.0
      %676 = vmatprep.subr.mxu0 0.0
      %677 = vmatpush1.msra.mxu0 0.0
      %678 = vmatprep.subr.mxu0 0.0
      %679 = vmatpush1.msra.mxu0 0.0
      %680 = vmatprep.subr.mxu0 0.0
      %681 = vmatpush1.msra.mxu0 0.0
      %682 = vmatprep.subr.mxu0 0.0
      %683 = vmatpush1.msra.mxu0 0.0
      %684 = vmatprep.subr.mxu0 0.0
      %685 = vmatpush1.msra.mxu0 0.0
      %686 = vmatprep.subr.mxu0 0.0
      %687 = vmatpush1.msra.mxu0 0.0
      %688 = vmatprep.subr.mxu0 0.0
      %689 = vmatpush1.msra.mxu0 0.0
      %690 = vmatprep.subr.mxu0 0.0
      %691 = vmatpush1.msra.mxu0 0.0
      %692 = vmatprep.subr.mxu0 0.0
      %693 = vmatpush1.msra.mxu0 0.0
      %694 = vmatprep.subr.mxu0 0.0
      %695 = vmatpush1.msra.mxu0 0.0
      %696 = vmatprep.subr.mxu0 0.0
      %697 = vmatpush1.msra.mxu0 0.0
      %698 = vmatprep.subr.mxu0 0.0
      %699 = vmatpush1.msra.mxu0 0.0
      %700 = vmatprep.mubr.f32.mxu0 0.0
      %701 = vmatmul.mubr.f32.gmra.mrb[0].mxu0 %v625
      %v702 = vpop.f32.mrb[0].mxu0
      %v703 = vadd.f32 0.0, %v702
      %v704 = vpop.f32.mrb[0].mxu0
      %v705 = vadd.f32 0.0, %v704
      %706 = vmatprep.mubr.f32.mxu0 0.0
      %707 = vmatmul.mubr.f32.gmra.mrb[0].mxu0 %v628
      %v708 = vpop.f32.mrb[0].mxu0
      %v709 = vadd.f32 0.0, %v708
      %v710 = vpop.f32.mrb[0].mxu0
      %v711 = vadd.f32 0.0, %v710
      %712 = vdwg.mxu0
      %v713 = vadd.f32 %v603, %v703
      %v714 = vadd.f32 %v604, %v705
      %v715 = vadd.f32 %v605, %v709
      %v716 = vadd.f32 %v606, %v711
      %v717 = vld [vmem:[%s187 + $0x1] sm:$0xff]
      %v718 = vld [vmem:[%s187 + $0x9] sm:$0xff]
      %s719 = scalar_lea.vmem %s1, 560
      %v720 = vld [vmem:[%s719] sm:$0xff]
      %v721 = vld [vmem:[%s719 + $0x8] sm:$0xff]
      %v722 = vld [vmem:[%s719 + $0x10] sm:$0xff]
      %v723 = vld [vmem:[%s719 + $0x18] sm:$0xff]
      %v724 = vld [vmem:[%s719 + $0x20] sm:$0xff]
      %v725 = vld [vmem:[%s719 + $0x28] sm:$0xff]
      %v726 = vld [vmem:[%s719 + $0x30] sm:$0xff]
      %v727 = vld [vmem:[%s719 + $0x38] sm:$0xff]
      %v728 = vld [vmem:[%s719 + $0x40] sm:$0xff]
      %v729 = vld [vmem:[%s719 + $0x48] sm:$0xff]
      %v730 = vld [vmem:[%s719 + $0x50] sm:$0xff]
      %v731 = vld [vmem:[%s719 + $0x58] sm:$0xff]
      %v732 = vld [vmem:[%s719 + $0x60] sm:$0x3f]
      %v733 = vld [vmem:[%s719 + $0x68] sm:$0x3f]
      %v735 = vsel %vm205, %v717, 0
      %v738 = vsel %vm205, %v718, 0
      %v741 = vsel %vm212, %v732, 0
      %v744 = vsel %vm212, %v733, 0
      %746 = vmatprep.subr.mxu0 %v721
      %747 = vmatpush1.msra.mxu0 %v720
      %748 = vmatprep.subr.mxu0 %v723
      %749 = vmatpush1.msra.mxu0 %v722
      %750 = vmatprep.subr.mxu0 %v725
      %751 = vmatpush1.msra.mxu0 %v724
      %752 = vmatprep.subr.mxu0 %v727
      %753 = vmatpush1.msra.mxu0 %v726
      %754 = vmatprep.subr.mxu0 %v729
      %755 = vmatpush1.msra.mxu0 %v728
      %756 = vmatprep.subr.mxu0 %v731
      %757 = vmatpush1.msra.mxu0 %v730
      %758 = vmatprep.subr.mxu0 %v744
      %759 = vmatpush1.msra.mxu0 %v741
      %760 = vmatprep.subr.mxu0 0.0
      %761 = vmatpush1.msra.mxu0 0.0
      %762 = vmatprep.subr.mxu0 0.0
      %763 = vmatpush1.msra.mxu0 0.0
      %764 = vmatprep.subr.mxu0 0.0
      %765 = vmatpush1.msra.mxu0 0.0
      %766 = vmatprep.subr.mxu0 0.0
      %767 = vmatpush1.msra.mxu0 0.0
      %768 = vmatprep.subr.mxu0 0.0
      %769 = vmatpush1.msra.mxu0 0.0
      %770 = vmatprep.subr.mxu0 0.0
      %771 = vmatpush1.msra.mxu0 0.0
      %772 = vmatprep.subr.mxu0 0.0
      %773 = vmatpush1.msra.mxu0 0.0
      %774 = vmatprep.subr.mxu0 0.0
      %775 = vmatpush1.msra.mxu0 0.0
      %776 = vmatprep.subr.mxu0 0.0
      %777 = vmatpush1.msra.mxu0 0.0
      %778 = vmatprep.subr.mxu0 0.0
      %779 = vmatpush1.msra.mxu0 0.0
      %780 = vmatprep.subr.mxu0 0.0
      %781 = vmatpush1.msra.mxu0 0.0
      %782 = vmatprep.subr.mxu0 0.0
      %783 = vmatpush1.msra.mxu0 0.0
      %784 = vmatprep.subr.mxu0 0.0
      %785 = vmatpush1.msra.mxu0 0.0
      %786 = vmatprep.subr.mxu0 0.0
      %787 = vmatpush1.msra.mxu0 0.0
      %788 = vmatprep.subr.mxu0 0.0
      %789 = vmatpush1.msra.mxu0 0.0
      %790 = vmatprep.subr.mxu0 0.0
      %791 = vmatpush1.msra.mxu0 0.0
      %792 = vmatprep.subr.mxu0 0.0
      %793 = vmatpush1.msra.mxu0 0.0
      %794 = vmatprep.subr.mxu0 0.0
      %795 = vmatpush1.msra.mxu0 0.0
      %796 = vmatprep.subr.mxu0 0.0
      %797 = vmatpush1.msra.mxu0 0.0
      %798 = vmatprep.subr.mxu0 0.0
      %799 = vmatpush1.msra.mxu0 0.0
      %800 = vmatprep.subr.mxu0 0.0
      %801 = vmatpush1.msra.mxu0 0.0
      %802 = vmatprep.subr.mxu0 0.0
      %803 = vmatpush1.msra.mxu0 0.0
      %804 = vmatprep.subr.mxu0 0.0
      %805 = vmatpush1.msra.mxu0 0.0
      %806 = vmatprep.subr.mxu0 0.0
      %807 = vmatpush1.msra.mxu0 0.0
      %808 = vmatprep.subr.mxu0 0.0
      %809 = vmatpush1.msra.mxu0 0.0
      %810 = vmatprep.mubr.f32.mxu0 0.0
      %811 = vmatmul.mubr.f32.gmra.mrb[0].mxu0 %v735
      %v812 = vpop.f32.mrb[0].mxu0
      %v813 = vadd.f32 0.0, %v812
      %v814 = vpop.f32.mrb[0].mxu0
      %v815 = vadd.f32 0.0, %v814
      %816 = vmatprep.mubr.f32.mxu0 0.0
      %817 = vmatmul.mubr.f32.gmra.mrb[0].mxu0 %v738
      %v818 = vpop.f32.mrb[0].mxu0
      %v819 = vadd.f32 0.0, %v818
      %v820 = vpop.f32.mrb[0].mxu0
      %v821 = vadd.f32 0.0, %v820
      %822 = vdwg.mxu0
      %v823 = vadd.f32 %v713, %v813
      %v824 = vadd.f32 %v714, %v815
      %v825 = vadd.f32 %v715, %v819
      %v826 = vadd.f32 %v716, %v821
      %v827 = vld [vmem:[%s385 + $0x1] sm:$0xff]
      %v828 = vld [vmem:[%s385 + $0x9] sm:$0xff]
      %s829 = scalar_lea.vmem %s1, 672
      %v830 = vld [vmem:[%s829] sm:$0xff]
      %v831 = vld [vmem:[%s829 + $0x8] sm:$0xff]
      %v832 = vld [vmem:[%s829 + $0x10] sm:$0xff]
      %v833 = vld [vmem:[%s829 + $0x18] sm:$0xff]
      %v834 = vld [vmem:[%s829 + $0x20] sm:$0xff]
      %v835 = vld [vmem:[%s829 + $0x28] sm:$0xff]
      %v836 = vld [vmem:[%s829 + $0x30] sm:$0xff]
      %v837 = vld [vmem:[%s829 + $0x38] sm:$0xff]
      %v838 = vld [vmem:[%s829 + $0x40] sm:$0xff]
      %v839 = vld [vmem:[%s829 + $0x48] sm:$0xff]
      %v840 = vld [vmem:[%s829 + $0x50] sm:$0xff]
      %v841 = vld [vmem:[%s829 + $0x58] sm:$0xff]
      %v842 = vld [vmem:[%s829 + $0x60] sm:$0x3f]
      %v843 = vld [vmem:[%s829 + $0x68] sm:$0x3f]
      %v845 = vsel %vm205, %v827, 0
      %v848 = vsel %vm205, %v828, 0
      %v851 = vsel %vm212, %v842, 0
      %v854 = vsel %vm212, %v843, 0
      %856 = vmatprep.subr.mxu0 %v831
      %857 = vmatpush1.msra.mxu0 %v830
      %858 = vmatprep.subr.mxu0 %v833
      %859 = vmatpush1.msra.mxu0 %v832
      %860 = vmatprep.subr.mxu0 %v835
      %861 = vmatpush1.msra.mxu0 %v834
      %862 = vmatprep.subr.mxu0 %v837
      %863 = vmatpush1.msra.mxu0 %v836
      %864 = vmatprep.subr.mxu0 %v839
      %865 = vmatpush1.msra.mxu0 %v838
      %866 = vmatprep.subr.mxu0 %v841
      %867 = vmatpush1.msra.mxu0 %v840
      %868 = vmatprep.subr.mxu0 %v854
      %869 = vmatpush1.msra.mxu0 %v851
      %870 = vmatprep.subr.mxu0 0.0
      %871 = vmatpush1.msra.mxu0 0.0
      %872 = vmatprep.subr.mxu0 0.0
      %873 = vmatpush1.msra.mxu0 0.0
      %874 = vmatprep.subr.mxu0 0.0
      %875 = vmatpush1.msra.mxu0 0.0
      %876 = vmatprep.subr.mxu0 0.0
      %877 = vmatpush1.msra.mxu0 0.0
      %878 = vmatprep.subr.mxu0 0.0
      %879 = vmatpush1.msra.mxu0 0.0
      %880 = vmatprep.subr.mxu0 0.0
      %881 = vmatpush1.msra.mxu0 0.0
      %882 = vmatprep.subr.mxu0 0.0
      %883 = vmatpush1.msra.mxu0 0.0
      %884 = vmatprep.subr.mxu0 0.0
      %885 = vmatpush1.msra.mxu0 0.0
      %886 = vmatprep.subr.mxu0 0.0
      %887 = vmatpush1.msra.mxu0 0.0
      %888 = vmatprep.subr.mxu0 0.0
      %889 = vmatpush1.msra.mxu0 0.0
      %890 = vmatprep.subr.mxu0 0.0
      %891 = vmatpush1.msra.mxu0 0.0
      %892 = vmatprep.subr.mxu0 0.0
      %893 = vmatpush1.msra.mxu0 0.0
      %894 = vmatprep.subr.mxu0 0.0
      %895 = vmatpush1.msra.mxu0 0.0
      %896 = vmatprep.subr.mxu0 0.0
      %897 = vmatpush1.msra.mxu0 0.0
      %898 = vmatprep.subr.mxu0 0.0
      %899 = vmatpush1.msra.mxu0 0.0
      %900 = vmatprep.subr.mxu0 0.0
      %901 = vmatpush1.msra.mxu0 0.0
      %902 = vmatprep.subr.mxu0 0.0
      %903 = vmatpush1.msra.mxu0 0.0
      %904 = vmatprep.subr.mxu0 0.0
      %905 = vmatpush1.msra.mxu0 0.0
      %906 = vmatprep.subr.mxu0 0.0
      %907 = vmatpush1.msra.mxu0 0.0
      %908 = vmatprep.subr.mxu0 0.0
      %909 = vmatpush1.msra.mxu0 0.0
      %910 = vmatprep.subr.mxu0 0.0
      %911 = vmatpush1.msra.mxu0 0.0
      %912 = vmatprep.subr.mxu0 0.0
      %913 = vmatpush1.msra.mxu0 0.0
      %914 = vmatprep.subr.mxu0 0.0
      %915 = vmatpush1.msra.mxu0 0.0
      %916 = vmatprep.subr.mxu0 0.0
      %917 = vmatpush1.msra.mxu0 0.0
      %918 = vmatprep.subr.mxu0 0.0
      %919 = vmatpush1.msra.mxu0 0.0
      %920 = vmatprep.mubr.f32.mxu0 0.0
      %921 = vmatmul.mubr.f32.gmra.mrb[0].mxu0 %v845
      %v922 = vpop.f32.mrb[0].mxu0
      %v923 = vadd.f32 0.0, %v922
      %v924 = vpop.f32.mrb[0].mxu0
      %v925 = vadd.f32 0.0, %v924
      %926 = vmatprep.mubr.f32.mxu0 0.0
      %927 = vmatmul.mubr.f32.gmra.mrb[0].mxu0 %v848
      %v928 = vpop.f32.mrb[0].mxu0
      %v929 = vadd.f32 0.0, %v928
      %v930 = vpop.f32.mrb[0].mxu0
      %v931 = vadd.f32 0.0, %v930
      %932 = vdwg.mxu0
      %v933 = vadd.f32 %v823, %v923
      %v934 = vadd.f32 %v824, %v925
      %v935 = vadd.f32 %v825, %v929
      %v936 = vadd.f32 %v826, %v931
      %v937 = vld [vmem:[%s496 + $0x1] sm:$0xff]
      %v938 = vld [vmem:[%s496 + $0x9] sm:$0xff]
      %s939 = scalar_lea.vmem %s1, 784
      %v940 = vld [vmem:[%s939] sm:$0xff]
      %v941 = vld [vmem:[%s939 + $0x8] sm:$0xff]
      %v942 = vld [vmem:[%s939 + $0x10] sm:$0xff]
      %v943 = vld [vmem:[%s939 + $0x18] sm:$0xff]
      %v944 = vld [vmem:[%s939 + $0x20] sm:$0xff]
      %v945 = vld [vmem:[%s939 + $0x28] sm:$0xff]
      %v946 = vld [vmem:[%s939 + $0x30] sm:$0xff]
      %v947 = vld [vmem:[%s939 + $0x38] sm:$0xff]
      %v948 = vld [vmem:[%s939 + $0x40] sm:$0xff]
      %v949 = vld [vmem:[%s939 + $0x48] sm:$0xff]
      %v950 = vld [vmem:[%s939 + $0x50] sm:$0xff]
      %v951 = vld [vmem:[%s939 + $0x58] sm:$0xff]
      %v952 = vld [vmem:[%s939 + $0x60] sm:$0x3f]
      %v953 = vld [vmem:[%s939 + $0x68] sm:$0x3f]
      %v955 = vsel %vm205, %v937, 0
      %v958 = vsel %vm205, %v938, 0
      %v961 = vsel %vm212, %v952, 0
      %v964 = vsel %vm212, %v953, 0
      %966 = vmatprep.subr.mxu0 %v941
      %967 = vmatpush1.msra.mxu0 %v940
      %968 = vmatprep.subr.mxu0 %v943
      %969 = vmatpush1.msra.mxu0 %v942
      %970 = vmatprep.subr.mxu0 %v945
      %971 = vmatpush1.msra.mxu0 %v944
      %972 = vmatprep.subr.mxu0 %v947
      %973 = vmatpush1.msra.mxu0 %v946
      %974 = vmatprep.subr.mxu0 %v949
      %975 = vmatpush1.msra.mxu0 %v948
      %976 = vmatprep.subr.mxu0 %v951
      %977 = vmatpush1.msra.mxu0 %v950
      %978 = vmatprep.subr.mxu0 %v964
      %979 = vmatpush1.msra.mxu0 %v961
      %980 = vmatprep.subr.mxu0 0.0
      %981 = vmatpush1.msra.mxu0 0.0
      %982 = vmatprep.subr.mxu0 0.0
      %983 = vmatpush1.msra.mxu0 0.0
      %984 = vmatprep.subr.mxu0 0.0
      %985 = vmatpush1.msra.mxu0 0.0
      %986 = vmatprep.subr.mxu0 0.0
      %987 = vmatpush1.msra.mxu0 0.0
      %988 = vmatprep.subr.mxu0 0.0
      %989 = vmatpush1.msra.mxu0 0.0
      %990 = vmatprep.subr.mxu0 0.0
      %991 = vmatpush1.msra.mxu0 0.0
      %992 = vmatprep.subr.mxu0 0.0
      %993 = vmatpush1.msra.mxu0 0.0
      %994 = vmatprep.subr.mxu0 0.0
      %995 = vmatpush1.msra.mxu0 0.0
      %996 = vmatprep.subr.mxu0 0.0
      %997 = vmatpush1.msra.mxu0 0.0
      %998 = vmatprep.subr.mxu0 0.0
      %999 = vmatpush1.msra.mxu0 0.0
      %1000 = vmatprep.subr.mxu0 0.0
      %1001 = vmatpush1.msra.mxu0 0.0
      %1002 = vmatprep.subr.mxu0 0.0
      %1003 = vmatpush1.msra.mxu0 0.0
      %1004 = vmatprep.subr.mxu0 0.0
      %1005 = vmatpush1.msra.mxu0 0.0
      %1006 = vmatprep.subr.mxu0 0.0
      %1007 = vmatpush1.msra.mxu0 0.0
      %1008 = vmatprep.subr.mxu0 0.0
      %1009 = vmatpush1.msra.mxu0 0.0
      %1010 = vmatprep.subr.mxu0 0.0
      %1011 = vmatpush1.msra.mxu0 0.0
      %1012 = vmatprep.subr.mxu0 0.0
      %1013 = vmatpush1.msra.mxu0 0.0
      %1014 = vmatprep.subr.mxu0 0.0
      %1015 = vmatpush1.msra.mxu0 0.0
      %1016 = vmatprep.subr.mxu0 0.0
      %1017 = vmatpush1.msra.mxu0 0.0
      %1018 = vmatprep.subr.mxu0 0.0
      %1019 = vmatpush1.msra.mxu0 0.0
      %1020 = vmatprep.subr.mxu0 0.0
      %1021 = vmatpush1.msra.mxu0 0.0
      %1022 = vmatprep.subr.mxu0 0.0
      %1023 = vmatpush1.msra.mxu0 0.0
      %1024 = vmatprep.subr.mxu0 0.0
      %1025 = vmatpush1.msra.mxu0 0.0
      %1026 = vmatprep.subr.mxu0 0.0
      %1027 = vmatpush1.msra.mxu0 0.0
      %1028 = vmatprep.subr.mxu0 0.0
      %1029 = vmatpush1.msra.mxu0 0.0
      %1030 = vmatprep.mubr.f32.mxu0 0.0
      %1031 = vmatmul.mubr.f32.gmra.mrb[0].mxu0 %v955
      %v1032 = vpop.f32.mrb[0].mxu0
      %v1033 = vadd.f32 0.0, %v1032
      %v1034 = vpop.f32.mrb[0].mxu0
      %v1035 = vadd.f32 0.0, %v1034
      %1036 = vmatprep.mubr.f32.mxu0 0.0
      %1037 = vmatmul.mubr.f32.gmra.mrb[0].mxu0 %v958
      %v1038 = vpop.f32.mrb[0].mxu0
      %v1039 = vadd.f32 0.0, %v1038
      %v1040 = vpop.f32.mrb[0].mxu0
      %v1041 = vadd.f32 0.0, %v1040
      %1042 = vdwg.mxu0
      %v1043 = vadd.f32 %v933, %v1033
      %v1044 = vadd.f32 %v934, %v1035
      %v1045 = vadd.f32 %v935, %v1039
      %v1046 = vadd.f32 %v936, %v1041
      %v1047 = vld [vmem:[%s165 + $0x2] sm:$0xff]
      %v1048 = vld [vmem:[%s165 + $0xa] sm:$0xff]
      %s1049 = scalar_lea.vmem %s1, 896
      %v1050 = vld [vmem:[%s1049] sm:$0xff]
      %v1051 = vld [vmem:[%s1049 + $0x8] sm:$0xff]
      %v1052 = vld [vmem:[%s1049 + $0x10] sm:$0xff]
      %v1053 = vld [vmem:[%s1049 + $0x18] sm:$0xff]
      %v1054 = vld [vmem:[%s1049 + $0x20] sm:$0xff]
      %v1055 = vld [vmem:[%s1049 + $0x28] sm:$0xff]
      %v1056 = vld [vmem:[%s1049 + $0x30] sm:$0xff]
      %v1057 = vld [vmem:[%s1049 + $0x38] sm:$0xff]
      %v1058 = vld [vmem:[%s1049 + $0x40] sm:$0xff]
      %v1059 = vld [vmem:[%s1049 + $0x48] sm:$0xff]
      %v1060 = vld [vmem:[%s1049 + $0x50] sm:$0xff]
      %v1061 = vld [vmem:[%s1049 + $0x58] sm:$0xff]
      %v1062 = vld [vmem:[%s1049 + $0x60] sm:$0x3f]
      %v1063 = vld [vmem:[%s1049 + $0x68] sm:$0x3f]
      %v1065 = vsel %vm205, %v1047, 0
      %v1068 = vsel %vm205, %v1048, 0
      %v1071 = vsel %vm212, %v1062, 0
      %v1074 = vsel %vm212, %v1063, 0
      %1076 = vmatprep.subr.mxu0 %v1051
      %1077 = vmatpush1.msra.mxu0 %v1050
      %1078 = vmatprep.subr.mxu0 %v1053
      %1079 = vmatpush1.msra.mxu0 %v1052
      %1080 = vmatprep.subr.mxu0 %v1055
      %1081 = vmatpush1.msra.mxu0 %v1054
      %1082 = vmatprep.subr.mxu0 %v1057
      %1083 = vmatpush1.msra.mxu0 %v1056
      %1084 = vmatprep.subr.mxu0 %v1059
      %1085 = vmatpush1.msra.mxu0 %v1058
      %1086 = vmatprep.subr.mxu0 %v1061
      %1087 = vmatpush1.msra.mxu0 %v1060
      %1088 = vmatprep.subr.mxu0 %v1074
      %1089 = vmatpush1.msra.mxu0 %v1071
      %1090 = vmatprep.subr.mxu0 0.0
      %1091 = vmatpush1.msra.mxu0 0.0
      %1092 = vmatprep.subr.mxu0 0.0
      %1093 = vmatpush1.msra.mxu0 0.0
      %1094 = vmatprep.subr.mxu0 0.0
      %1095 = vmatpush1.msra.mxu0 0.0
      %1096 = vmatprep.subr.mxu0 0.0
      %1097 = vmatpush1.msra.mxu0 0.0
      %1098 = vmatprep.subr.mxu0 0.0
      %1099 = vmatpush1.msra.mxu0 0.0
      %1100 = vmatprep.subr.mxu0 0.0
      %1101 = vmatpush1.msra.mxu0 0.0
      %1102 = vmatprep.subr.mxu0 0.0
      %1103 = vmatpush1.msra.mxu0 0.0
      %1104 = vmatprep.subr.mxu0 0.0
      %1105 = vmatpush1.msra.mxu0 0.0
      %1106 = vmatprep.subr.mxu0 0.0
      %1107 = vmatpush1.msra.mxu0 0.0
      %1108 = vmatprep.subr.mxu0 0.0
      %1109 = vmatpush1.msra.mxu0 0.0
      %1110 = vmatprep.subr.mxu0 0.0
      %1111 = vmatpush1.msra.mxu0 0.0
      %1112 = vmatprep.subr.mxu0 0.0
      %1113 = vmatpush1.msra.mxu0 0.0
      %1114 = vmatprep.subr.mxu0 0.0
      %1115 = vmatpush1.msra.mxu0 0.0
      %1116 = vmatprep.subr.mxu0 0.0
      %1117 = vmatpush1.msra.mxu0 0.0
      %1118 = vmatprep.subr.mxu0 0.0
      %1119 = vmatpush1.msra.mxu0 0.0
      %1120 = vmatprep.subr.mxu0 0.0
      %1121 = vmatpush1.msra.mxu0 0.0
      %1122 = vmatprep.subr.mxu0 0.0
      %1123 = vmatpush1.msra.mxu0 0.0
      %1124 = vmatprep.subr.mxu0 0.0
      %1125 = vmatpush1.msra.mxu0 0.0
      %1126 = vmatprep.subr.mxu0 0.0
      %1127 = vmatpush1.msra.mxu0 0.0
      %1128 = vmatprep.subr.mxu0 0.0
      %1129 = vmatpush1.msra.mxu0 0.0
      %1130 = vmatprep.subr.mxu0 0.0
      %1131 = vmatpush1.msra.mxu0 0.0
      %1132 = vmatprep.subr.mxu0 0.0
      %1133 = vmatpush1.msra.mxu0 0.0
      %1134 = vmatprep.subr.mxu0 0.0
      %1135 = vmatpush1.msra.mxu0 0.0
      %1136 = vmatprep.subr.mxu0 0.0
      %1137 = vmatpush1.msra.mxu0 0.0
      %1138 = vmatprep.subr.mxu0 0.0
      %1139 = vmatpush1.msra.mxu0 0.0
      %1140 = vmatprep.mubr.f32.mxu0 0.0
      %1141 = vmatmul.mubr.f32.gmra.mrb[0].mxu0 %v1065
      %v1142 = vpop.f32.mrb[0].mxu0
      %v1143 = vadd.f32 0.0, %v1142
      %v1144 = vpop.f32.mrb[0].mxu0
      %v1145 = vadd.f32 0.0, %v1144
      %1146 = vmatprep.mubr.f32.mxu0 0.0
      %1147 = vmatmul.mubr.f32.gmra.mrb[0].mxu0 %v1068
      %v1148 = vpop.f32.mrb[0].mxu0
      %v1149 = vadd.f32 0.0, %v1148
      %v1150 = vpop.f32.mrb[0].mxu0
      %v1151 = vadd.f32 0.0, %v1150
      %1152 = vdwg.mxu0
      %v1153 = vadd.f32 %v1043, %v1143
      %v1154 = vadd.f32 %v1044, %v1145
      %v1155 = vadd.f32 %v1045, %v1149
      %v1156 = vadd.f32 %v1046, %v1151
      %v1157 = vld [vmem:[%s187 + $0x2] sm:$0xff]
      %v1158 = vld [vmem:[%s187 + $0xa] sm:$0xff]
      %s1159 = scalar_lea.vmem %s1, 1008
      %v1160 = vld [vmem:[%s1159] sm:$0xff]
      %v1161 = vld [vmem:[%s1159 + $0x8] sm:$0xff]
      %v1162 = vld [vmem:[%s1159 + $0x10] sm:$0xff]
      %v1163 = vld [vmem:[%s1159 + $0x18] sm:$0xff]
      %v1164 = vld [vmem:[%s1159 + $0x20] sm:$0xff]
      %v1165 = vld [vmem:[%s1159 + $0x28] sm:$0xff]
      %v1166 = vld [vmem:[%s1159 + $0x30] sm:$0xff]
      %v1167 = vld [vmem:[%s1159 + $0x38] sm:$0xff]
      %v1168 = vld [vmem:[%s1159 + $0x40] sm:$0xff]
      %v1169 = vld [vmem:[%s1159 + $0x48] sm:$0xff]
      %v1170 = vld [vmem:[%s1159 + $0x50] sm:$0xff]
      %v1171 = vld [vmem:[%s1159 + $0x58] sm:$0xff]
      %v1172 = vld [vmem:[%s1159 + $0x60] sm:$0x3f]
      %v1173 = vld [vmem:[%s1159 + $0x68] sm:$0x3f]
      %v1175 = vsel %vm205, %v1157, 0
      %v1178 = vsel %vm205, %v1158, 0
      %v1181 = vsel %vm212, %v1172, 0
      %v1184 = vsel %vm212, %v1173, 0
      %1186 = vmatprep.subr.mxu0 %v1161
      %1187 = vmatpush1.msra.mxu0 %v1160
      %1188 = vmatprep.subr.mxu0 %v1163
      %1189 = vmatpush1.msra.mxu0 %v1162
      %1190 = vmatprep.subr.mxu0 %v1165
      %1191 = vmatpush1.msra.mxu0 %v1164
      %1192 = vmatprep.subr.mxu0 %v1167
      %1193 = vmatpush1.msra.mxu0 %v1166
      %1194 = vmatprep.subr.mxu0 %v1169
      %1195 = vmatpush1.msra.mxu0 %v1168
      %1196 = vmatprep.subr.mxu0 %v1171
      %1197 = vmatpush1.msra.mxu0 %v1170
      %1198 = vmatprep.subr.mxu0 %v1184
      %1199 = vmatpush1.msra.mxu0 %v1181
      %1200 = vmatprep.subr.mxu0 0.0
      %1201 = vmatpush1.msra.mxu0 0.0
      %1202 = vmatprep.subr.mxu0 0.0
      %1203 = vmatpush1.msra.mxu0 0.0
      %1204 = vmatprep.subr.mxu0 0.0
      %1205 = vmatpush1.msra.mxu0 0.0
      %1206 = vmatprep.subr.mxu0 0.0
      %1207 = vmatpush1.msra.mxu0 0.0
      %1208 = vmatprep.subr.mxu0 0.0
      %1209 = vmatpush1.msra.mxu0 0.0
      %1210 = vmatprep.subr.mxu0 0.0
      %1211 = vmatpush1.msra.mxu0 0.0
      %1212 = vmatprep.subr.mxu0 0.0
      %1213 = vmatpush1.msra.mxu0 0.0
      %1214 = vmatprep.subr.mxu0 0.0
      %1215 = vmatpush1.msra.mxu0 0.0
      %1216 = vmatprep.subr.mxu0 0.0
      %1217 = vmatpush1.msra.mxu0 0.0
      %1218 = vmatprep.subr.mxu0 0.0
      %1219 = vmatpush1.msra.mxu0 0.0
      %1220 = vmatprep.subr.mxu0 0.0
      %1221 = vmatpush1.msra.mxu0 0.0
      %1222 = vmatprep.subr.mxu0 0.0
      %1223 = vmatpush1.msra.mxu0 0.0
      %1224 = vmatprep.subr.mxu0 0.0
      %1225 = vmatpush1.msra.mxu0 0.0
      %1226 = vmatprep.subr.mxu0 0.0
      %1227 = vmatpush1.msra.mxu0 0.0
      %1228 = vmatprep.subr.mxu0 0.0
      %1229 = vmatpush1.msra.mxu0 0.0
      %1230 = vmatprep.subr.mxu0 0.0
      %1231 = vmatpush1.msra.mxu0 0.0
      %1232 = vmatprep.subr.mxu0 0.0
      %1233 = vmatpush1.msra.mxu0 0.0
      %1234 = vmatprep.subr.mxu0 0.0
      %1235 = vmatpush1.msra.mxu0 0.0
      %1236 = vmatprep.subr.mxu0 0.0
      %1237 = vmatpush1.msra.mxu0 0.0
      %1238 = vmatprep.subr.mxu0 0.0
      %1239 = vmatpush1.msra.mxu0 0.0
      %1240 = vmatprep.subr.mxu0 0.0
      %1241 = vmatpush1.msra.mxu0 0.0
      %1242 = vmatprep.subr.mxu0 0.0
      %1243 = vmatpush1.msra.mxu0 0.0
      %1244 = vmatprep.subr.mxu0 0.0
      %1245 = vmatpush1.msra.mxu0 0.0
      %1246 = vmatprep.subr.mxu0 0.0
      %1247 = vmatpush1.msra.mxu0 0.0
      %1248 = vmatprep.subr.mxu0 0.0
      %1249 = vmatpush1.msra.mxu0 0.0
      %1250 = vmatprep.mubr.f32.mxu0 0.0
      %1251 = vmatmul.mubr.f32.gmra.mrb[0].mxu0 %v1175
      %v1252 = vpop.f32.mrb[0].mxu0
      %v1253 = vadd.f32 0.0, %v1252
      %v1254 = vpop.f32.mrb[0].mxu0
      %v1255 = vadd.f32 0.0, %v1254
      %1256 = vmatprep.mubr.f32.mxu0 0.0
      %1257 = vmatmul.mubr.f32.gmra.mrb[0].mxu0 %v1178
      %v1258 = vpop.f32.mrb[0].mxu0
      %v1259 = vadd.f32 0.0, %v1258
      %v1260 = vpop.f32.mrb[0].mxu0
      %v1261 = vadd.f32 0.0, %v1260
      %1262 = vdwg.mxu0
      %v1263 = vadd.f32 %v1153, %v1253
      %v1264 = vadd.f32 %v1154, %v1255
      %v1265 = vadd.f32 %v1155, %v1259
      %v1266 = vadd.f32 %v1156, %v1261
      %s1267 = scalar_lea.vmem %s1, 1120
      %v1268 = vld [vmem:[%s1267] sm:$0xff]
      %v1269 = vld [vmem:[%s1267 + $0x8] sm:$0xff]
      %v1270 = vld [vmem:[%s1267 + $0x10] sm:$0xff]
      %v1271 = vld [vmem:[%s1267 + $0x18] sm:$0xff]
      %v1272 = vld [vmem:[%s1267 + $0x20] sm:$0xff]
      %v1273 = vld [vmem:[%s1267 + $0x28] sm:$0xff]
      %v1274 = vld [vmem:[%s1267 + $0x30] sm:$0xff]
      %v1275 = vld [vmem:[%s1267 + $0x38] sm:$0xff]
      %v1276 = vld [vmem:[%s1267 + $0x40] sm:$0xff]
      %v1277 = vld [vmem:[%s1267 + $0x48] sm:$0xff]
      %v1278 = vld [vmem:[%s1267 + $0x50] sm:$0xff]
      %v1279 = vld [vmem:[%s1267 + $0x58] sm:$0xff]
      %v1280 = vld [vmem:[%s1267 + $0x60] sm:$0x3f]
      %v1281 = vld [vmem:[%s1267 + $0x68] sm:$0x3f]
      %s1282 = scalar_lea.vmem %s1, 1232
      %v1283 = vld [vmem:[%s1282] sm:$0xff]
      %v1284 = vld [vmem:[%s1282 + $0x8] sm:$0xff]
      %v1285 = vld [vmem:[%s1282 + $0x10] sm:$0xff]
      %v1286 = vld [vmem:[%s1282 + $0x18] sm:$0xff]
      %v1287 = vld [vmem:[%s1282 + $0x20] sm:$0xff]
      %v1288 = vld [vmem:[%s1282 + $0x28] sm:$0xff]
      %v1289 = vld [vmem:[%s1282 + $0x30] sm:$0xff]
      %v1290 = vld [vmem:[%s1282 + $0x38] sm:$0xff]
      %v1291 = vld [vmem:[%s1282 + $0x40] sm:$0xff]
      %v1292 = vld [vmem:[%s1282 + $0x48] sm:$0xff]
      %v1293 = vld [vmem:[%s1282 + $0x50] sm:$0xff]
      %v1294 = vld [vmem:[%s1282 + $0x58] sm:$0xff]
      %v1295 = vld [vmem:[%s1282 + $0x60] sm:$0x3f]
      %v1296 = vld [vmem:[%s1282 + $0x68] sm:$0x3f]
      %v1298 = vsel %vm212, %v1295, 0
      %v1301 = vsel %vm212, %v1296, 0
      %1303 = vmatprep.subr.mxu0 %v1284
      %1304 = vmatpush1.msra.mxu0 %v1283
      %1305 = vmatprep.subr.mxu0 %v1286
      %1306 = vmatpush1.msra.mxu0 %v1285
      %1307 = vmatprep.subr.mxu0 %v1288
      %1308 = vmatpush1.msra.mxu0 %v1287
      %1309 = vmatprep.subr.mxu0 %v1290
      %1310 = vmatpush1.msra.mxu0 %v1289
      %1311 = vmatprep.subr.mxu0 %v1292
      %1312 = vmatpush1.msra.mxu0 %v1291
      %1313 = vmatprep.subr.mxu0 %v1294
      %1314 = vmatpush1.msra.mxu0 %v1293
      %1315 = vmatprep.subr.mxu0 %v1301
      %1316 = vmatpush1.msra.mxu0 %v1298
      %1317 = vmatprep.subr.mxu0 0.0
      %1318 = vmatpush1.msra.mxu0 0.0
      %1319 = vmatprep.subr.mxu0 0.0
      %1320 = vmatpush1.msra.mxu0 0.0
      %1321 = vmatprep.subr.mxu0 0.0
      %1322 = vmatpush1.msra.mxu0 0.0
      %1323 = vmatprep.subr.mxu0 0.0
      %1324 = vmatpush1.msra.mxu0 0.0
      %1325 = vmatprep.subr.mxu0 0.0
      %1326 = vmatpush1.msra.mxu0 0.0
      %1327 = vmatprep.subr.mxu0 0.0
      %1328 = vmatpush1.msra.mxu0 0.0
      %1329 = vmatprep.subr.mxu0 0.0
      %1330 = vmatpush1.msra.mxu0 0.0
      %1331 = vmatprep.subr.mxu0 0.0
      %1332 = vmatpush1.msra.mxu0 0.0
      %1333 = vmatprep.subr.mxu0 0.0
      %1334 = vmatpush1.msra.mxu0 0.0
      %1335 = vmatprep.subr.mxu0 0.0
      %1336 = vmatpush1.msra.mxu0 0.0
      %1337 = vmatprep.subr.mxu0 0.0
      %1338 = vmatpush1.msra.mxu0 0.0
      %1339 = vmatprep.subr.mxu0 0.0
      %1340 = vmatpush1.msra.mxu0 0.0
      %1341 = vmatprep.subr.mxu0 0.0
      %1342 = vmatpush1.msra.mxu0 0.0
      %1343 = vmatprep.subr.mxu0 0.0
      %1344 = vmatpush1.msra.mxu0 0.0
      %1345 = vmatprep.subr.mxu0 0.0
      %1346 = vmatpush1.msra.mxu0 0.0
      %1347 = vmatprep.subr.mxu0 0.0
      %1348 = vmatpush1.msra.mxu0 0.0
      %1349 = vmatprep.subr.mxu0 0.0
      %1350 = vmatpush1.msra.mxu0 0.0
      %1351 = vmatprep.subr.mxu0 0.0
      %1352 = vmatpush1.msra.mxu0 0.0
      %1353 = vmatprep.subr.mxu0 0.0
      %1354 = vmatpush1.msra.mxu0 0.0
      %1355 = vmatprep.subr.mxu0 0.0
      %1356 = vmatpush1.msra.mxu0 0.0
      %1357 = vmatprep.subr.mxu0 0.0
      %1358 = vmatpush1.msra.mxu0 0.0
      %1359 = vmatprep.subr.mxu0 0.0
      %1360 = vmatpush1.msra.mxu0 0.0
      %1361 = vmatprep.subr.mxu0 0.0
      %1362 = vmatpush1.msra.mxu0 0.0
      %1363 = vmatprep.subr.mxu0 0.0
      %1364 = vmatpush1.msra.mxu0 0.0
      %1365 = vmatprep.subr.mxu0 0.0
      %1366 = vmatpush1.msra.mxu0 0.0
      %1367 = vmatprep.mubr.f32.mxu0 0.0
      %1368 = vmatmul.mubr.f32.gmra.mrb[0].mxu0 %v207
      %v1369 = vpop.f32.mrb[0].mxu0
      %v1370 = vadd.f32 0.0, %v1369
      %v1371 = vpop.f32.mrb[0].mxu0
      %v1372 = vadd.f32 0.0, %v1371
      %1373 = vmatprep.mubr.f32.mxu0 0.0
      %1374 = vmatmul.mubr.f32.gmra.mrb[0].mxu0 %v210
      %v1375 = vpop.f32.mrb[0].mxu0
      %v1376 = vadd.f32 0.0, %v1375
      %v1377 = vpop.f32.mrb[0].mxu0
      %v1378 = vadd.f32 0.0, %v1377
      %1379 = vdwg.mxu0
      %v1381 = vsel %vm212, %v1280, 0
      %v1384 = vsel %vm212, %v1281, 0
      %1386 = vmatprep.subr.mxu0 %v1269
      %1387 = vmatpush1.msra.mxu0 %v1268
      %1388 = vmatprep.subr.mxu0 %v1271
      %1389 = vmatpush1.msra.mxu0 %v1270
      %1390 = vmatprep.subr.mxu0 %v1273
      %1391 = vmatpush1.msra.mxu0 %v1272
      %1392 = vmatprep.subr.mxu0 %v1275
      %1393 = vmatpush1.msra.mxu0 %v1274
      %1394 = vmatprep.subr.mxu0 %v1277
      %1395 = vmatpush1.msra.mxu0 %v1276
      %1396 = vmatprep.subr.mxu0 %v1279
      %1397 = vmatpush1.msra.mxu0 %v1278
      %1398 = vmatprep.subr.mxu0 %v1384
      %1399 = vmatpush1.msra.mxu0 %v1381
      %1400 = vmatprep.subr.mxu0 0.0
      %1401 = vmatpush1.msra.mxu0 0.0
      %1402 = vmatprep.subr.mxu0 0.0
      %1403 = vmatpush1.msra.mxu0 0.0
      %1404 = vmatprep.subr.mxu0 0.0
      %1405 = vmatpush1.msra.mxu0 0.0
      %1406 = vmatprep.subr.mxu0 0.0
      %1407 = vmatpush1.msra.mxu0 0.0
      %1408 = vmatprep.subr.mxu0 0.0
      %1409 = vmatpush1.msra.mxu0 0.0
      %1410 = vmatprep.subr.mxu0 0.0
      %1411 = vmatpush1.msra.mxu0 0.0
      %1412 = vmatprep.subr.mxu0 0.0
      %1413 = vmatpush1.msra.mxu0 0.0
      %1414 = vmatprep.subr.mxu0 0.0
      %1415 = vmatpush1.msra.mxu0 0.0
      %1416 = vmatprep.subr.mxu0 0.0
      %1417 = vmatpush1.msra.mxu0 0.0
      %1418 = vmatprep.subr.mxu0 0.0
      %1419 = vmatpush1.msra.mxu0 0.0
      %1420 = vmatprep.subr.mxu0 0.0
      %1421 = vmatpush1.msra.mxu0 0.0
      %1422 = vmatprep.subr.mxu0 0.0
      %1423 = vmatpush1.msra.mxu0 0.0
      %1424 = vmatprep.subr.mxu0 0.0
      %1425 = vmatpush1.msra.mxu0 0.0
      %1426 = vmatprep.subr.mxu0 0.0
      %1427 = vmatpush1.msra.mxu0 0.0
      %1428 = vmatprep.subr.mxu0 0.0
      %1429 = vmatpush1.msra.mxu0 0.0
      %1430 = vmatprep.subr.mxu0 0.0
      %1431 = vmatpush1.msra.mxu0 0.0
      %1432 = vmatprep.subr.mxu0 0.0
      %1433 = vmatpush1.msra.mxu0 0.0
      %1434 = vmatprep.subr.mxu0 0.0
      %1435 = vmatpush1.msra.mxu0 0.0
      %1436 = vmatprep.subr.mxu0 0.0
      %1437 = vmatpush1.msra.mxu0 0.0
      %1438 = vmatprep.subr.mxu0 0.0
      %1439 = vmatpush1.msra.mxu0 0.0
      %1440 = vmatprep.subr.mxu0 0.0
      %1441 = vmatpush1.msra.mxu0 0.0
      %1442 = vmatprep.subr.mxu0 0.0
      %1443 = vmatpush1.msra.mxu0 0.0
      %1444 = vmatprep.subr.mxu0 0.0
      %1445 = vmatpush1.msra.mxu0 0.0
      %1446 = vmatprep.subr.mxu0 0.0
      %1447 = vmatpush1.msra.mxu0 0.0
      %1448 = vmatprep.subr.mxu0 0.0
      %1449 = vmatpush1.msra.mxu0 0.0
      %1450 = vmatprep.mubr.f32.mxu0 0.0
      %1451 = vmatmul.mubr.f32.gmra.mrb[0].mxu0 %v297
      %v1452 = vpop.f32.mrb[0].mxu0
      %v1453 = vadd.f32 %v1370, %v1452
      %v1454 = vpop.f32.mrb[0].mxu0
      %v1455 = vadd.f32 %v1372, %v1454
      %1456 = vmatprep.mubr.f32.mxu0 0.0
      %1457 = vmatmul.mubr.f32.gmra.mrb[0].mxu0 %v300
      %v1458 = vpop.f32.mrb[0].mxu0
      %v1459 = vadd.f32 %v1376, %v1458
      %v1460 = vpop.f32.mrb[0].mxu0
      %v1461 = vadd.f32 %v1378, %v1460
      %1462 = vdwg.mxu0
      %s1463 = scalar_lea.vmem %s1, 1344
      %v1464 = vld [vmem:[%s1463] sm:$0xff]
      %v1465 = vld [vmem:[%s1463 + $0x8] sm:$0xff]
      %v1466 = vld [vmem:[%s1463 + $0x10] sm:$0xff]
      %v1467 = vld [vmem:[%s1463 + $0x18] sm:$0xff]
      %v1468 = vld [vmem:[%s1463 + $0x20] sm:$0xff]
      %v1469 = vld [vmem:[%s1463 + $0x28] sm:$0xff]
      %v1470 = vld [vmem:[%s1463 + $0x30] sm:$0xff]
      %v1471 = vld [vmem:[%s1463 + $0x38] sm:$0xff]
      %v1472 = vld [vmem:[%s1463 + $0x40] sm:$0xff]
      %v1473 = vld [vmem:[%s1463 + $0x48] sm:$0xff]
      %v1474 = vld [vmem:[%s1463 + $0x50] sm:$0xff]
      %v1475 = vld [vmem:[%s1463 + $0x58] sm:$0xff]
      %v1476 = vld [vmem:[%s1463 + $0x60] sm:$0x3f]
      %v1477 = vld [vmem:[%s1463 + $0x68] sm:$0x3f]
      %v1479 = vsel %vm212, %v1476, 0
      %v1482 = vsel %vm212, %v1477, 0
      %1484 = vmatprep.subr.mxu0 %v1465
      %1485 = vmatpush1.msra.mxu0 %v1464
      %1486 = vmatprep.subr.mxu0 %v1467
      %1487 = vmatpush1.msra.mxu0 %v1466
      %1488 = vmatprep.subr.mxu0 %v1469
      %1489 = vmatpush1.msra.mxu0 %v1468
      %1490 = vmatprep.subr.mxu0 %v1471
      %1491 = vmatpush1.msra.mxu0 %v1470
      %1492 = vmatprep.subr.mxu0 %v1473
      %1493 = vmatpush1.msra.mxu0 %v1472
      %1494 = vmatprep.subr.mxu0 %v1475
      %1495 = vmatpush1.msra.mxu0 %v1474
      %1496 = vmatprep.subr.mxu0 %v1482
      %1497 = vmatpush1.msra.mxu0 %v1479
      %1498 = vmatprep.subr.mxu0 0.0
      %1499 = vmatpush1.msra.mxu0 0.0
      %1500 = vmatprep.subr.mxu0 0.0
      %1501 = vmatpush1.msra.mxu0 0.0
      %1502 = vmatprep.subr.mxu0 0.0
      %1503 = vmatpush1.msra.mxu0 0.0
      %1504 = vmatprep.subr.mxu0 0.0
      %1505 = vmatpush1.msra.mxu0 0.0
      %1506 = vmatprep.subr.mxu0 0.0
      %1507 = vmatpush1.msra.mxu0 0.0
      %1508 = vmatprep.subr.mxu0 0.0
      %1509 = vmatpush1.msra.mxu0 0.0
      %1510 = vmatprep.subr.mxu0 0.0
      %1511 = vmatpush1.msra.mxu0 0.0
      %1512 = vmatprep.subr.mxu0 0.0
      %1513 = vmatpush1.msra.mxu0 0.0
      %1514 = vmatprep.subr.mxu0 0.0
      %1515 = vmatpush1.msra.mxu0 0.0
      %1516 = vmatprep.subr.mxu0 0.0
      %1517 = vmatpush1.msra.mxu0 0.0
      %1518 = vmatprep.subr.mxu0 0.0
      %1519 = vmatpush1.msra.mxu0 0.0
      %1520 = vmatprep.subr.mxu0 0.0
      %1521 = vmatpush1.msra.mxu0 0.0
      %1522 = vmatprep.subr.mxu0 0.0
      %1523 = vmatpush1.msra.mxu0 0.0
      %1524 = vmatprep.subr.mxu0 0.0
      %1525 = vmatpush1.msra.mxu0 0.0
      %1526 = vmatprep.subr.mxu0 0.0
      %1527 = vmatpush1.msra.mxu0 0.0
      %1528 = vmatprep.subr.mxu0 0.0
      %1529 = vmatpush1.msra.mxu0 0.0
      %1530 = vmatprep.subr.mxu0 0.0
      %1531 = vmatpush1.msra.mxu0 0.0
      %1532 = vmatprep.subr.mxu0 0.0
      %1533 = vmatpush1.msra.mxu0 0.0
      %1534 = vmatprep.subr.mxu0 0.0
      %1535 = vmatpush1.msra.mxu0 0.0
      %1536 = vmatprep.subr.mxu0 0.0
      %1537 = vmatpush1.msra.mxu0 0.0
      %1538 = vmatprep.subr.mxu0 0.0
      %1539 = vmatpush1.msra.mxu0 0.0
      %1540 = vmatprep.subr.mxu0 0.0
      %1541 = vmatpush1.msra.mxu0 0.0
      %1542 = vmatprep.subr.mxu0 0.0
      %1543 = vmatpush1.msra.mxu0 0.0
      %1544 = vmatprep.subr.mxu0 0.0
      %1545 = vmatpush1.msra.mxu0 0.0
      %1546 = vmatprep.subr.mxu0 0.0
      %1547 = vmatpush1.msra.mxu0 0.0
      %1548 = vmatprep.mubr.f32.mxu0 0.0
      %1549 = vmatmul.mubr.f32.gmra.mrb[0].mxu0 %v404
      %v1550 = vpop.f32.mrb[0].mxu0
      %v1551 = vadd.f32 0.0, %v1550
      %v1552 = vpop.f32.mrb[0].mxu0
      %v1553 = vadd.f32 0.0, %v1552
      %1554 = vmatprep.mubr.f32.mxu0 0.0
      %1555 = vmatmul.mubr.f32.gmra.mrb[0].mxu0 %v407
      %v1556 = vpop.f32.mrb[0].mxu0
      %v1557 = vadd.f32 0.0, %v1556
      %v1558 = vpop.f32.mrb[0].mxu0
      %v1559 = vadd.f32 0.0, %v1558
      %1560 = vdwg.mxu0
      %v1561 = vadd.f32 %v1453, %v1551
      %v1562 = vadd.f32 %v1455, %v1553
      %v1563 = vadd.f32 %v1459, %v1557
      %v1564 = vadd.f32 %v1461, %v1559
      %s1565 = scalar_lea.vmem %s1, 1456
      %v1566 = vld [vmem:[%s1565] sm:$0xff]
      %v1567 = vld [vmem:[%s1565 + $0x8] sm:$0xff]
      %v1568 = vld [vmem:[%s1565 + $0x10] sm:$0xff]
      %v1569 = vld [vmem:[%s1565 + $0x18] sm:$0xff]
      %v1570 = vld [vmem:[%s1565 + $0x20] sm:$0xff]
      %v1571 = vld [vmem:[%s1565 + $0x28] sm:$0xff]
      %v1572 = vld [vmem:[%s1565 + $0x30] sm:$0xff]
      %v1573 = vld [vmem:[%s1565 + $0x38] sm:$0xff]
      %v1574 = vld [vmem:[%s1565 + $0x40] sm:$0xff]
      %v1575 = vld [vmem:[%s1565 + $0x48] sm:$0xff]
      %v1576 = vld [vmem:[%s1565 + $0x50] sm:$0xff]
      %v1577 = vld [vmem:[%s1565 + $0x58] sm:$0xff]
      %v1578 = vld [vmem:[%s1565 + $0x60] sm:$0x3f]
      %v1579 = vld [vmem:[%s1565 + $0x68] sm:$0x3f]
      %v1581 = vsel %vm212, %v1578, 0
      %v1584 = vsel %vm212, %v1579, 0
      %1586 = vmatprep.subr.mxu0 %v1567
      %1587 = vmatpush1.msra.mxu0 %v1566
      %1588 = vmatprep.subr.mxu0 %v1569
      %1589 = vmatpush1.msra.mxu0 %v1568
      %1590 = vmatprep.subr.mxu0 %v1571
      %1591 = vmatpush1.msra.mxu0 %v1570
      %1592 = vmatprep.subr.mxu0 %v1573
      %1593 = vmatpush1.msra.mxu0 %v1572
      %1594 = vmatprep.subr.mxu0 %v1575
      %1595 = vmatpush1.msra.mxu0 %v1574
      %1596 = vmatprep.subr.mxu0 %v1577
      %1597 = vmatpush1.msra.mxu0 %v1576
      %1598 = vmatprep.subr.mxu0 %v1584
      %1599 = vmatpush1.msra.mxu0 %v1581
      %1600 = vmatprep.subr.mxu0 0.0
      %1601 = vmatpush1.msra.mxu0 0.0
      %1602 = vmatprep.subr.mxu0 0.0
      %1603 = vmatpush1.msra.mxu0 0.0
      %1604 = vmatprep.subr.mxu0 0.0
      %1605 = vmatpush1.msra.mxu0 0.0
      %1606 = vmatprep.subr.mxu0 0.0
      %1607 = vmatpush1.msra.mxu0 0.0
      %1608 = vmatprep.subr.mxu0 0.0
      %1609 = vmatpush1.msra.mxu0 0.0
      %1610 = vmatprep.subr.mxu0 0.0
      %1611 = vmatpush1.msra.mxu0 0.0
      %1612 = vmatprep.subr.mxu0 0.0
      %1613 = vmatpush1.msra.mxu0 0.0
      %1614 = vmatprep.subr.mxu0 0.0
      %1615 = vmatpush1.msra.mxu0 0.0
      %1616 = vmatprep.subr.mxu0 0.0
      %1617 = vmatpush1.msra.mxu0 0.0
      %1618 = vmatprep.subr.mxu0 0.0
      %1619 = vmatpush1.msra.mxu0 0.0
      %1620 = vmatprep.subr.mxu0 0.0
      %1621 = vmatpush1.msra.mxu0 0.0
      %1622 = vmatprep.subr.mxu0 0.0
      %1623 = vmatpush1.msra.mxu0 0.0
      %1624 = vmatprep.subr.mxu0 0.0
      %1625 = vmatpush1.msra.mxu0 0.0
      %1626 = vmatprep.subr.mxu0 0.0
      %1627 = vmatpush1.msra.mxu0 0.0
      %1628 = vmatprep.subr.mxu0 0.0
      %1629 = vmatpush1.msra.mxu0 0.0
      %1630 = vmatprep.subr.mxu0 0.0
      %1631 = vmatpush1.msra.mxu0 0.0
      %1632 = vmatprep.subr.mxu0 0.0
      %1633 = vmatpush1.msra.mxu0 0.0
      %1634 = vmatprep.subr.mxu0 0.0
      %1635 = vmatpush1.msra.mxu0 0.0
      %1636 = vmatprep.subr.mxu0 0.0
      %1637 = vmatpush1.msra.mxu0 0.0
      %1638 = vmatprep.subr.mxu0 0.0
      %1639 = vmatpush1.msra.mxu0 0.0
      %1640 = vmatprep.subr.mxu0 0.0
      %1641 = vmatpush1.msra.mxu0 0.0
      %1642 = vmatprep.subr.mxu0 0.0
      %1643 = vmatpush1.msra.mxu0 0.0
      %1644 = vmatprep.subr.mxu0 0.0
      %1645 = vmatpush1.msra.mxu0 0.0
      %1646 = vmatprep.subr.mxu0 0.0
      %1647 = vmatpush1.msra.mxu0 0.0
      %1648 = vmatprep.subr.mxu0 0.0
      %1649 = vmatpush1.msra.mxu0 0.0
      %1650 = vmatprep.mubr.f32.mxu0 0.0
      %1651 = vmatmul.mubr.f32.gmra.mrb[0].mxu0 %v515
      %v1652 = vpop.f32.mrb[0].mxu0
      %v1653 = vadd.f32 0.0, %v1652
      %v1654 = vpop.f32.mrb[0].mxu0
      %v1655 = vadd.f32 0.0, %v1654
      %1656 = vmatprep.mubr.f32.mxu0 0.0
      %1657 = vmatmul.mubr.f32.gmra.mrb[0].mxu0 %v518
      %v1658 = vpop.f32.mrb[0].mxu0
      %v1659 = vadd.f32 0.0, %v1658
      %v1660 = vpop.f32.mrb[0].mxu0
      %v1661 = vadd.f32 0.0, %v1660
      %1662 = vdwg.mxu0
      %v1663 = vadd.f32 %v1561, %v1653
      %v1664 = vadd.f32 %v1562, %v1655
      %v1665 = vadd.f32 %v1563, %v1659
      %v1666 = vadd.f32 %v1564, %v1661
      %s1667 = scalar_lea.vmem %s1, 1568
      %v1668 = vld [vmem:[%s1667] sm:$0xff]
      %v1669 = vld [vmem:[%s1667 + $0x8] sm:$0xff]
      %v1670 = vld [vmem:[%s1667 + $0x10] sm:$0xff]
      %v1671 = vld [vmem:[%s1667 + $0x18] sm:$0xff]
      %v1672 = vld [vmem:[%s1667 + $0x20] sm:$0xff]
      %v1673 = vld [vmem:[%s1667 + $0x28] sm:$0xff]
      %v1674 = vld [vmem:[%s1667 + $0x30] sm:$0xff]
      %v1675 = vld [vmem:[%s1667 + $0x38] sm:$0xff]
      %v1676 = vld [vmem:[%s1667 + $0x40] sm:$0xff]
      %v1677 = vld [vmem:[%s1667 + $0x48] sm:$0xff]
      %v1678 = vld [vmem:[%s1667 + $0x50] sm:$0xff]
      %v1679 = vld [vmem:[%s1667 + $0x58] sm:$0xff]
      %v1680 = vld [vmem:[%s1667 + $0x60] sm:$0x3f]
      %v1681 = vld [vmem:[%s1667 + $0x68] sm:$0x3f]
      %v1683 = vsel %vm212, %v1680, 0
      %v1686 = vsel %vm212, %v1681, 0
      %1688 = vmatprep.subr.mxu0 %v1669
      %1689 = vmatpush1.msra.mxu0 %v1668
      %1690 = vmatprep.subr.mxu0 %v1671
      %1691 = vmatpush1.msra.mxu0 %v1670
      %1692 = vmatprep.subr.mxu0 %v1673
      %1693 = vmatpush1.msra.mxu0 %v1672
      %1694 = vmatprep.subr.mxu0 %v1675
      %1695 = vmatpush1.msra.mxu0 %v1674
      %1696 = vmatprep.subr.mxu0 %v1677
      %1697 = vmatpush1.msra.mxu0 %v1676
      %1698 = vmatprep.subr.mxu0 %v1679
      %1699 = vmatpush1.msra.mxu0 %v1678
      %1700 = vmatprep.subr.mxu0 %v1686
      %1701 = vmatpush1.msra.mxu0 %v1683
      %1702 = vmatprep.subr.mxu0 0.0
      %1703 = vmatpush1.msra.mxu0 0.0
      %1704 = vmatprep.subr.mxu0 0.0
      %1705 = vmatpush1.msra.mxu0 0.0
      %1706 = vmatprep.subr.mxu0 0.0
      %1707 = vmatpush1.msra.mxu0 0.0
      %1708 = vmatprep.subr.mxu0 0.0
      %1709 = vmatpush1.msra.mxu0 0.0
      %1710 = vmatprep.subr.mxu0 0.0
      %1711 = vmatpush1.msra.mxu0 0.0
      %1712 = vmatprep.subr.mxu0 0.0
      %1713 = vmatpush1.msra.mxu0 0.0
      %1714 = vmatprep.subr.mxu0 0.0
      %1715 = vmatpush1.msra.mxu0 0.0
      %1716 = vmatprep.subr.mxu0 0.0
      %1717 = vmatpush1.msra.mxu0 0.0
      %1718 = vmatprep.subr.mxu0 0.0
      %1719 = vmatpush1.msra.mxu0 0.0
      %1720 = vmatprep.subr.mxu0 0.0
      %1721 = vmatpush1.msra.mxu0 0.0
      %1722 = vmatprep.subr.mxu0 0.0
      %1723 = vmatpush1.msra.mxu0 0.0
      %1724 = vmatprep.subr.mxu0 0.0
      %1725 = vmatpush1.msra.mxu0 0.0
      %1726 = vmatprep.subr.mxu0 0.0
      %1727 = vmatpush1.msra.mxu0 0.0
      %1728 = vmatprep.subr.mxu0 0.0
      %1729 = vmatpush1.msra.mxu0 0.0
      %1730 = vmatprep.subr.mxu0 0.0
      %1731 = vmatpush1.msra.mxu0 0.0
      %1732 = vmatprep.subr.mxu0 0.0
      %1733 = vmatpush1.msra.mxu0 0.0
      %1734 = vmatprep.subr.mxu0 0.0
      %1735 = vmatpush1.msra.mxu0 0.0
      %1736 = vmatprep.subr.mxu0 0.0
      %1737 = vmatpush1.msra.mxu0 0.0
      %1738 = vmatprep.subr.mxu0 0.0
      %1739 = vmatpush1.msra.mxu0 0.0
      %1740 = vmatprep.subr.mxu0 0.0
      %1741 = vmatpush1.msra.mxu0 0.0
      %1742 = vmatprep.subr.mxu0 0.0
      %1743 = vmatpush1.msra.mxu0 0.0
      %1744 = vmatprep.subr.mxu0 0.0
      %1745 = vmatpush1.msra.mxu0 0.0
      %1746 = vmatprep.subr.mxu0 0.0
      %1747 = vmatpush1.msra.mxu0 0.0
      %1748 = vmatprep.subr.mxu0 0.0
      %1749 = vmatpush1.msra.mxu0 0.0
      %1750 = vmatprep.subr.mxu0 0.0
      %1751 = vmatpush1.msra.mxu0 0.0
      %1752 = vmatprep.mubr.f32.mxu0 0.0
      %1753 = vmatmul.mubr.f32.gmra.mrb[0].mxu0 %v625
      %v1754 = vpop.f32.mrb[0].mxu0
      %v1755 = vadd.f32 0.0, %v1754
      %v1756 = vpop.f32.mrb[0].mxu0
      %v1757 = vadd.f32 0.0, %v1756
      %1758 = vmatprep.mubr.f32.mxu0 0.0
      %1759 = vmatmul.mubr.f32.gmra.mrb[0].mxu0 %v628
      %v1760 = vpop.f32.mrb[0].mxu0
      %v1761 = vadd.f32 0.0, %v1760
      %v1762 = vpop.f32.mrb[0].mxu0
      %v1763 = vadd.f32 0.0, %v1762
      %1764 = vdwg.mxu0
      %v1765 = vadd.f32 %v1663, %v1755
      %v1766 = vadd.f32 %v1664, %v1757
      %v1767 = vadd.f32 %v1665, %v1761
      %v1768 = vadd.f32 %v1666, %v1763
      %s1769 = scalar_lea.vmem %s1, 1680
      %v1770 = vld [vmem:[%s1769] sm:$0xff]
      %v1771 = vld [vmem:[%s1769 + $0x8] sm:$0xff]
      %v1772 = vld [vmem:[%s1769 + $0x10] sm:$0xff]
      %v1773 = vld [vmem:[%s1769 + $0x18] sm:$0xff]
      %v1774 = vld [vmem:[%s1769 + $0x20] sm:$0xff]
      %v1775 = vld [vmem:[%s1769 + $0x28] sm:$0xff]
      %v1776 = vld [vmem:[%s1769 + $0x30] sm:$0xff]
      %v1777 = vld [vmem:[%s1769 + $0x38] sm:$0xff]
      %v1778 = vld [vmem:[%s1769 + $0x40] sm:$0xff]
      %v1779 = vld [vmem:[%s1769 + $0x48] sm:$0xff]
      %v1780 = vld [vmem:[%s1769 + $0x50] sm:$0xff]
      %v1781 = vld [vmem:[%s1769 + $0x58] sm:$0xff]
      %v1782 = vld [vmem:[%s1769 + $0x60] sm:$0x3f]
      %v1783 = vld [vmem:[%s1769 + $0x68] sm:$0x3f]
      %v1785 = vsel %vm212, %v1782, 0
      %v1788 = vsel %vm212, %v1783, 0
      %1790 = vmatprep.subr.mxu0 %v1771
      %1791 = vmatpush1.msra.mxu0 %v1770
      %1792 = vmatprep.subr.mxu0 %v1773
      %1793 = vmatpush1.msra.mxu0 %v1772
      %1794 = vmatprep.subr.mxu0 %v1775
      %1795 = vmatpush1.msra.mxu0 %v1774
      %1796 = vmatprep.subr.mxu0 %v1777
      %1797 = vmatpush1.msra.mxu0 %v1776
      %1798 = vmatprep.subr.mxu0 %v1779
      %1799 = vmatpush1.msra.mxu0 %v1778
      %1800 = vmatprep.subr.mxu0 %v1781
      %1801 = vmatpush1.msra.mxu0 %v1780
      %1802 = vmatprep.subr.mxu0 %v1788
      %1803 = vmatpush1.msra.mxu0 %v1785
      %1804 = vmatprep.subr.mxu0 0.0
      %1805 = vmatpush1.msra.mxu0 0.0
      %1806 = vmatprep.subr.mxu0 0.0
      %1807 = vmatpush1.msra.mxu0 0.0
      %1808 = vmatprep.subr.mxu0 0.0
      %1809 = vmatpush1.msra.mxu0 0.0
      %1810 = vmatprep.subr.mxu0 0.0
      %1811 = vmatpush1.msra.mxu0 0.0
      %1812 = vmatprep.subr.mxu0 0.0
      %1813 = vmatpush1.msra.mxu0 0.0
      %1814 = vmatprep.subr.mxu0 0.0
      %1815 = vmatpush1.msra.mxu0 0.0
      %1816 = vmatprep.subr.mxu0 0.0
      %1817 = vmatpush1.msra.mxu0 0.0
      %1818 = vmatprep.subr.mxu0 0.0
      %1819 = vmatpush1.msra.mxu0 0.0
      %1820 = vmatprep.subr.mxu0 0.0
      %1821 = vmatpush1.msra.mxu0 0.0
      %1822 = vmatprep.subr.mxu0 0.0
      %1823 = vmatpush1.msra.mxu0 0.0
      %1824 = vmatprep.subr.mxu0 0.0
      %1825 = vmatpush1.msra.mxu0 0.0
      %1826 = vmatprep.subr.mxu0 0.0
      %1827 = vmatpush1.msra.mxu0 0.0
      %1828 = vmatprep.subr.mxu0 0.0
      %1829 = vmatpush1.msra.mxu0 0.0
      %1830 = vmatprep.subr.mxu0 0.0
      %1831 = vmatpush1.msra.mxu0 0.0
      %1832 = vmatprep.subr.mxu0 0.0
      %1833 = vmatpush1.msra.mxu0 0.0
      %1834 = vmatprep.subr.mxu0 0.0
      %1835 = vmatpush1.msra.mxu0 0.0
      %1836 = vmatprep.subr.mxu0 0.0
      %1837 = vmatpush1.msra.mxu0 0.0
      %1838 = vmatprep.subr.mxu0 0.0
      %1839 = vmatpush1.msra.mxu0 0.0
      %1840 = vmatprep.subr.mxu0 0.0
      %1841 = vmatpush1.msra.mxu0 0.0
      %1842 = vmatprep.subr.mxu0 0.0
      %1843 = vmatpush1.msra.mxu0 0.0
      %1844 = vmatprep.subr.mxu0 0.0
      %1845 = vmatpush1.msra.mxu0 0.0
      %1846 = vmatprep.subr.mxu0 0.0
      %1847 = vmatpush1.msra.mxu0 0.0
      %1848 = vmatprep.subr.mxu0 0.0
      %1849 = vmatpush1.msra.mxu0 0.0
      %1850 = vmatprep.subr.mxu0 0.0
      %1851 = vmatpush1.msra.mxu0 0.0
      %1852 = vmatprep.subr.mxu0 0.0
      %1853 = vmatpush1.msra.mxu0 0.0
      %1854 = vmatprep.mubr.f32.mxu0 0.0
      %1855 = vmatmul.mubr.f32.gmra.mrb[0].mxu0 %v735
      %v1856 = vpop.f32.mrb[0].mxu0
      %v1857 = vadd.f32 0.0, %v1856
      %v1858 = vpop.f32.mrb[0].mxu0
      %v1859 = vadd.f32 0.0, %v1858
      %1860 = vmatprep.mubr.f32.mxu0 0.0
      %1861 = vmatmul.mubr.f32.gmra.mrb[0].mxu0 %v738
      %v1862 = vpop.f32.mrb[0].mxu0
      %v1863 = vadd.f32 0.0, %v1862
      %v1864 = vpop.f32.mrb[0].mxu0
      %v1865 = vadd.f32 0.0, %v1864
      %1866 = vdwg.mxu0
      %v1867 = vadd.f32 %v1765, %v1857
      %v1868 = vadd.f32 %v1766, %v1859
      %v1869 = vadd.f32 %v1767, %v1863
      %v1870 = vadd.f32 %v1768, %v1865
      %s1871 = scalar_lea.vmem %s1, 1792
      %v1872 = vld [vmem:[%s1871] sm:$0xff]
      %v1873 = vld [vmem:[%s1871 + $0x8] sm:$0xff]
      %v1874 = vld [vmem:[%s1871 + $0x10] sm:$0xff]
      %v1875 = vld [vmem:[%s1871 + $0x18] sm:$0xff]
      %v1876 = vld [vmem:[%s1871 + $0x20] sm:$0xff]
      %v1877 = vld [vmem:[%s1871 + $0x28] sm:$0xff]
      %v1878 = vld [vmem:[%s1871 + $0x30] sm:$0xff]
      %v1879 = vld [vmem:[%s1871 + $0x38] sm:$0xff]
      %v1880 = vld [vmem:[%s1871 + $0x40] sm:$0xff]
      %v1881 = vld [vmem:[%s1871 + $0x48] sm:$0xff]
      %v1882 = vld [vmem:[%s1871 + $0x50] sm:$0xff]
      %v1883 = vld [vmem:[%s1871 + $0x58] sm:$0xff]
      %v1884 = vld [vmem:[%s1871 + $0x60] sm:$0x3f]
      %v1885 = vld [vmem:[%s1871 + $0x68] sm:$0x3f]
      %v1887 = vsel %vm212, %v1884, 0
      %v1890 = vsel %vm212, %v1885, 0
      %1892 = vmatprep.subr.mxu0 %v1873
      %1893 = vmatpush1.msra.mxu0 %v1872
      %1894 = vmatprep.subr.mxu0 %v1875
      %1895 = vmatpush1.msra.mxu0 %v1874
      %1896 = vmatprep.subr.mxu0 %v1877
      %1897 = vmatpush1.msra.mxu0 %v1876
      %1898 = vmatprep.subr.mxu0 %v1879
      %1899 = vmatpush1.msra.mxu0 %v1878
      %1900 = vmatprep.subr.mxu0 %v1881
      %1901 = vmatpush1.msra.mxu0 %v1880
      %1902 = vmatprep.subr.mxu0 %v1883
      %1903 = vmatpush1.msra.mxu0 %v1882
      %1904 = vmatprep.subr.mxu0 %v1890
      %1905 = vmatpush1.msra.mxu0 %v1887
      %1906 = vmatprep.subr.mxu0 0.0
      %1907 = vmatpush1.msra.mxu0 0.0
      %1908 = vmatprep.subr.mxu0 0.0
      %1909 = vmatpush1.msra.mxu0 0.0
      %1910 = vmatprep.subr.mxu0 0.0
      %1911 = vmatpush1.msra.mxu0 0.0
      %1912 = vmatprep.subr.mxu0 0.0
      %1913 = vmatpush1.msra.mxu0 0.0
      %1914 = vmatprep.subr.mxu0 0.0
      %1915 = vmatpush1.msra.mxu0 0.0
      %1916 = vmatprep.subr.mxu0 0.0
      %1917 = vmatpush1.msra.mxu0 0.0
      %1918 = vmatprep.subr.mxu0 0.0
      %1919 = vmatpush1.msra.mxu0 0.0
      %1920 = vmatprep.subr.mxu0 0.0
      %1921 = vmatpush1.msra.mxu0 0.0
      %1922 = vmatprep.subr.mxu0 0.0
      %1923 = vmatpush1.msra.mxu0 0.0
      %1924 = vmatprep.subr.mxu0 0.0
      %1925 = vmatpush1.msra.mxu0 0.0
      %1926 = vmatprep.subr.mxu0 0.0
      %1927 = vmatpush1.msra.mxu0 0.0
      %1928 = vmatprep.subr.mxu0 0.0
      %1929 = vmatpush1.msra.mxu0 0.0
      %1930 = vmatprep.subr.mxu0 0.0
      %1931 = vmatpush1.msra.mxu0 0.0
      %1932 = vmatprep.subr.mxu0 0.0
      %1933 = vmatpush1.msra.mxu0 0.0
      %1934 = vmatprep.subr.mxu0 0.0
      %1935 = vmatpush1.msra.mxu0 0.0
      %1936 = vmatprep.subr.mxu0 0.0
      %1937 = vmatpush1.msra.mxu0 0.0
      %1938 = vmatprep.subr.mxu0 0.0
      %1939 = vmatpush1.msra.mxu0 0.0
      %1940 = vmatprep.subr.mxu0 0.0
      %1941 = vmatpush1.msra.mxu0 0.0
      %1942 = vmatprep.subr.mxu0 0.0
      %1943 = vmatpush1.msra.mxu0 0.0
      %1944 = vmatprep.subr.mxu0 0.0
      %1945 = vmatpush1.msra.mxu0 0.0
      %1946 = vmatprep.subr.mxu0 0.0
      %1947 = vmatpush1.msra.mxu0 0.0
      %1948 = vmatprep.subr.mxu0 0.0
      %1949 = vmatpush1.msra.mxu0 0.0
      %1950 = vmatprep.subr.mxu0 0.0
      %1951 = vmatpush1.msra.mxu0 0.0
      %1952 = vmatprep.subr.mxu0 0.0
      %1953 = vmatpush1.msra.mxu0 0.0
      %1954 = vmatprep.subr.mxu0 0.0
      %1955 = vmatpush1.msra.mxu0 0.0
      %1956 = vmatprep.mubr.f32.mxu0 0.0
      %1957 = vmatmul.mubr.f32.gmra.mrb[0].mxu0 %v845
      %v1958 = vpop.f32.mrb[0].mxu0
      %v1959 = vadd.f32 0.0, %v1958
      %v1960 = vpop.f32.mrb[0].mxu0
      %v1961 = vadd.f32 0.0, %v1960
      %1962 = vmatprep.mubr.f32.mxu0 0.0
      %1963 = vmatmul.mubr.f32.gmra.mrb[0].mxu0 %v848
      %v1964 = vpop.f32.mrb[0].mxu0
      %v1965 = vadd.f32 0.0, %v1964
      %v1966 = vpop.f32.mrb[0].mxu0
      %v1967 = vadd.f32 0.0, %v1966
      %1968 = vdwg.mxu0
      %v1969 = vadd.f32 %v1867, %v1959
      %v1970 = vadd.f32 %v1868, %v1961
      %v1971 = vadd.f32 %v1869, %v1965
      %v1972 = vadd.f32 %v1870, %v1967
      %s1973 = scalar_lea.vmem %s1, 1904
      %v1974 = vld [vmem:[%s1973] sm:$0xff]
      %v1975 = vld [vmem:[%s1973 + $0x8] sm:$0xff]
      %v1976 = vld [vmem:[%s1973 + $0x10] sm:$0xff]
      %v1977 = vld [vmem:[%s1973 + $0x18] sm:$0xff]
      %v1978 = vld [vmem:[%s1973 + $0x20] sm:$0xff]
      %v1979 = vld [vmem:[%s1973 + $0x28] sm:$0xff]
      %v1980 = vld [vmem:[%s1973 + $0x30] sm:$0xff]
      %v1981 = vld [vmem:[%s1973 + $0x38] sm:$0xff]
      %v1982 = vld [vmem:[%s1973 + $0x40] sm:$0xff]
      %v1983 = vld [vmem:[%s1973 + $0x48] sm:$0xff]
      %v1984 = vld [vmem:[%s1973 + $0x50] sm:$0xff]
      %v1985 = vld [vmem:[%s1973 + $0x58] sm:$0xff]
      %v1986 = vld [vmem:[%s1973 + $0x60] sm:$0x3f]
      %v1987 = vld [vmem:[%s1973 + $0x68] sm:$0x3f]
      %v1989 = vsel %vm212, %v1986, 0
      %v1992 = vsel %vm212, %v1987, 0
      %1994 = vmatprep.subr.mxu0 %v1975
      %1995 = vmatpush1.msra.mxu0 %v1974
      %1996 = vmatprep.subr.mxu0 %v1977
      %1997 = vmatpush1.msra.mxu0 %v1976
      %1998 = vmatprep.subr.mxu0 %v1979
      %1999 = vmatpush1.msra.mxu0 %v1978
      %2000 = vmatprep.subr.mxu0 %v1981
      %2001 = vmatpush1.msra.mxu0 %v1980
      %2002 = vmatprep.subr.mxu0 %v1983
      %2003 = vmatpush1.msra.mxu0 %v1982
      %2004 = vmatprep.subr.mxu0 %v1985
      %2005 = vmatpush1.msra.mxu0 %v1984
      %2006 = vmatprep.subr.mxu0 %v1992
      %2007 = vmatpush1.msra.mxu0 %v1989
      %2008 = vmatprep.subr.mxu0 0.0
      %2009 = vmatpush1.msra.mxu0 0.0
      %2010 = vmatprep.subr.mxu0 0.0
      %2011 = vmatpush1.msra.mxu0 0.0
      %2012 = vmatprep.subr.mxu0 0.0
      %2013 = vmatpush1.msra.mxu0 0.0
      %2014 = vmatprep.subr.mxu0 0.0
      %2015 = vmatpush1.msra.mxu0 0.0
      %2016 = vmatprep.subr.mxu0 0.0
      %2017 = vmatpush1.msra.mxu0 0.0
      %2018 = vmatprep.subr.mxu0 0.0
      %2019 = vmatpush1.msra.mxu0 0.0
      %2020 = vmatprep.subr.mxu0 0.0
      %2021 = vmatpush1.msra.mxu0 0.0
      %2022 = vmatprep.subr.mxu0 0.0
      %2023 = vmatpush1.msra.mxu0 0.0
      %2024 = vmatprep.subr.mxu0 0.0
      %2025 = vmatpush1.msra.mxu0 0.0
      %2026 = vmatprep.subr.mxu0 0.0
      %2027 = vmatpush1.msra.mxu0 0.0
      %2028 = vmatprep.subr.mxu0 0.0
      %2029 = vmatpush1.msra.mxu0 0.0
      %2030 = vmatprep.subr.mxu0 0.0
      %2031 = vmatpush1.msra.mxu0 0.0
      %2032 = vmatprep.subr.mxu0 0.0
      %2033 = vmatpush1.msra.mxu0 0.0
      %2034 = vmatprep.subr.mxu0 0.0
      %2035 = vmatpush1.msra.mxu0 0.0
      %2036 = vmatprep.subr.mxu0 0.0
      %2037 = vmatpush1.msra.mxu0 0.0
      %2038 = vmatprep.subr.mxu0 0.0
      %2039 = vmatpush1.msra.mxu0 0.0
      %2040 = vmatprep.subr.mxu0 0.0
      %2041 = vmatpush1.msra.mxu0 0.0
      %2042 = vmatprep.subr.mxu0 0.0
      %2043 = vmatpush1.msra.mxu0 0.0
      %2044 = vmatprep.subr.mxu0 0.0
      %2045 = vmatpush1.msra.mxu0 0.0
      %2046 = vmatprep.subr.mxu0 0.0
      %2047 = vmatpush1.msra.mxu0 0.0
      %2048 = vmatprep.subr.mxu0 0.0
      %2049 = vmatpush1.msra.mxu0 0.0
      %2050 = vmatprep.subr.mxu0 0.0
      %2051 = vmatpush1.msra.mxu0 0.0
      %2052 = vmatprep.subr.mxu0 0.0
      %2053 = vmatpush1.msra.mxu0 0.0
      %2054 = vmatprep.subr.mxu0 0.0
      %2055 = vmatpush1.msra.mxu0 0.0
      %2056 = vmatprep.subr.mxu0 0.0
      %2057 = vmatpush1.msra.mxu0 0.0
      %2058 = vmatprep.mubr.f32.mxu0 0.0
      %2059 = vmatmul.mubr.f32.gmra.mrb[0].mxu0 %v955
      %v2060 = vpop.f32.mrb[0].mxu0
      %v2061 = vadd.f32 0.0, %v2060
      %v2062 = vpop.f32.mrb[0].mxu0
      %v2063 = vadd.f32 0.0, %v2062
      %2064 = vmatprep.mubr.f32.mxu0 0.0
      %2065 = vmatmul.mubr.f32.gmra.mrb[0].mxu0 %v958
      %v2066 = vpop.f32.mrb[0].mxu0
      %v2067 = vadd.f32 0.0, %v2066
      %v2068 = vpop.f32.mrb[0].mxu0
      %v2069 = vadd.f32 0.0, %v2068
      %2070 = vdwg.mxu0
      %v2071 = vadd.f32 %v1969, %v2061
      %v2072 = vadd.f32 %v1970, %v2063
      %v2073 = vadd.f32 %v1971, %v2067
      %v2074 = vadd.f32 %v1972, %v2069
      %s2075 = scalar_lea.vmem %s1, 2016
      %v2076 = vld [vmem:[%s2075] sm:$0xff]
      %v2077 = vld [vmem:[%s2075 + $0x8] sm:$0xff]
      %v2078 = vld [vmem:[%s2075 + $0x10] sm:$0xff]
      %v2079 = vld [vmem:[%s2075 + $0x18] sm:$0xff]
      %v2080 = vld [vmem:[%s2075 + $0x20] sm:$0xff]
      %v2081 = vld [vmem:[%s2075 + $0x28] sm:$0xff]
      %v2082 = vld [vmem:[%s2075 + $0x30] sm:$0xff]
      %v2083 = vld [vmem:[%s2075 + $0x38] sm:$0xff]
      %v2084 = vld [vmem:[%s2075 + $0x40] sm:$0xff]
      %v2085 = vld [vmem:[%s2075 + $0x48] sm:$0xff]
      %v2086 = vld [vmem:[%s2075 + $0x50] sm:$0xff]
      %v2087 = vld [vmem:[%s2075 + $0x58] sm:$0xff]
      %v2088 = vld [vmem:[%s2075 + $0x60] sm:$0x3f]
      %v2089 = vld [vmem:[%s2075 + $0x68] sm:$0x3f]
      %v2091 = vsel %vm212, %v2088, 0
      %v2094 = vsel %vm212, %v2089, 0
      %2096 = vmatprep.subr.mxu0 %v2077
      %2097 = vmatpush1.msra.mxu0 %v2076
      %2098 = vmatprep.subr.mxu0 %v2079
      %2099 = vmatpush1.msra.mxu0 %v2078
      %2100 = vmatprep.subr.mxu0 %v2081
      %2101 = vmatpush1.msra.mxu0 %v2080
      %2102 = vmatprep.subr.mxu0 %v2083
      %2103 = vmatpush1.msra.mxu0 %v2082
      %2104 = vmatprep.subr.mxu0 %v2085
      %2105 = vmatpush1.msra.mxu0 %v2084
      %2106 = vmatprep.subr.mxu0 %v2087
      %2107 = vmatpush1.msra.mxu0 %v2086
      %2108 = vmatprep.subr.mxu0 %v2094
      %2109 = vmatpush1.msra.mxu0 %v2091
      %2110 = vmatprep.subr.mxu0 0.0
      %2111 = vmatpush1.msra.mxu0 0.0
      %2112 = vmatprep.subr.mxu0 0.0
      %2113 = vmatpush1.msra.mxu0 0.0
      %2114 = vmatprep.subr.mxu0 0.0
      %2115 = vmatpush1.msra.mxu0 0.0
      %2116 = vmatprep.subr.mxu0 0.0
      %2117 = vmatpush1.msra.mxu0 0.0
      %2118 = vmatprep.subr.mxu0 0.0
      %2119 = vmatpush1.msra.mxu0 0.0
      %2120 = vmatprep.subr.mxu0 0.0
      %2121 = vmatpush1.msra.mxu0 0.0
      %2122 = vmatprep.subr.mxu0 0.0
      %2123 = vmatpush1.msra.mxu0 0.0
      %2124 = vmatprep.subr.mxu0 0.0
      %2125 = vmatpush1.msra.mxu0 0.0
      %2126 = vmatprep.subr.mxu0 0.0
      %2127 = vmatpush1.msra.mxu0 0.0
      %2128 = vmatprep.subr.mxu0 0.0
      %2129 = vmatpush1.msra.mxu0 0.0
      %2130 = vmatprep.subr.mxu0 0.0
      %2131 = vmatpush1.msra.mxu0 0.0
      %2132 = vmatprep.subr.mxu0 0.0
      %2133 = vmatpush1.msra.mxu0 0.0
      %2134 = vmatprep.subr.mxu0 0.0
      %2135 = vmatpush1.msra.mxu0 0.0
      %2136 = vmatprep.subr.mxu0 0.0
      %2137 = vmatpush1.msra.mxu0 0.0
      %2138 = vmatprep.subr.mxu0 0.0
      %2139 = vmatpush1.msra.mxu0 0.0
      %2140 = vmatprep.subr.mxu0 0.0
      %2141 = vmatpush1.msra.mxu0 0.0
      %2142 = vmatprep.subr.mxu0 0.0
      %2143 = vmatpush1.msra.mxu0 0.0
      %2144 = vmatprep.subr.mxu0 0.0
      %2145 = vmatpush1.msra.mxu0 0.0
      %2146 = vmatprep.subr.mxu0 0.0
      %2147 = vmatpush1.msra.mxu0 0.0
      %2148 = vmatprep.subr.mxu0 0.0
      %2149 = vmatpush1.msra.mxu0 0.0
      %2150 = vmatprep.subr.mxu0 0.0
      %2151 = vmatpush1.msra.mxu0 0.0
      %2152 = vmatprep.subr.mxu0 0.0
      %2153 = vmatpush1.msra.mxu0 0.0
      %2154 = vmatprep.subr.mxu0 0.0
      %2155 = vmatpush1.msra.mxu0 0.0
      %2156 = vmatprep.subr.mxu0 0.0
      %2157 = vmatpush1.msra.mxu0 0.0
      %2158 = vmatprep.subr.mxu0 0.0
      %2159 = vmatpush1.msra.mxu0 0.0
      %2160 = vmatprep.mubr.f32.mxu0 0.0
      %2161 = vmatmul.mubr.f32.gmra.mrb[0].mxu0 %v1065
      %v2162 = vpop.f32.mrb[0].mxu0
      %v2163 = vadd.f32 0.0, %v2162
      %v2164 = vpop.f32.mrb[0].mxu0
      %v2165 = vadd.f32 0.0, %v2164
      %2166 = vmatprep.mubr.f32.mxu0 0.0
      %2167 = vmatmul.mubr.f32.gmra.mrb[0].mxu0 %v1068
      %v2168 = vpop.f32.mrb[0].mxu0
      %v2169 = vadd.f32 0.0, %v2168
      %v2170 = vpop.f32.mrb[0].mxu0
      %v2171 = vadd.f32 0.0, %v2170
      %2172 = vdwg.mxu0
      %v2173 = vadd.f32 %v2071, %v2163
      %v2174 = vadd.f32 %v2072, %v2165
      %v2175 = vadd.f32 %v2073, %v2169
      %v2176 = vadd.f32 %v2074, %v2171
      %s2177 = scalar_lea.vmem %s1, 2128
      %v2178 = vld [vmem:[%s2177] sm:$0xff]
      %v2179 = vld [vmem:[%s2177 + $0x8] sm:$0xff]
      %v2180 = vld [vmem:[%s2177 + $0x10] sm:$0xff]
      %v2181 = vld [vmem:[%s2177 + $0x18] sm:$0xff]
      %v2182 = vld [vmem:[%s2177 + $0x20] sm:$0xff]
      %v2183 = vld [vmem:[%s2177 + $0x28] sm:$0xff]
      %v2184 = vld [vmem:[%s2177 + $0x30] sm:$0xff]
      %v2185 = vld [vmem:[%s2177 + $0x38] sm:$0xff]
      %v2186 = vld [vmem:[%s2177 + $0x40] sm:$0xff]
      %v2187 = vld [vmem:[%s2177 + $0x48] sm:$0xff]
      %v2188 = vld [vmem:[%s2177 + $0x50] sm:$0xff]
      %v2189 = vld [vmem:[%s2177 + $0x58] sm:$0xff]
      %v2190 = vld [vmem:[%s2177 + $0x60] sm:$0x3f]
      %v2191 = vld [vmem:[%s2177 + $0x68] sm:$0x3f]
      %v2193 = vsel %vm212, %v2190, 0
      %v2196 = vsel %vm212, %v2191, 0
      %2198 = vmatprep.subr.mxu0 %v2179
      %2199 = vmatpush1.msra.mxu0 %v2178
      %2200 = vmatprep.subr.mxu0 %v2181
      %2201 = vmatpush1.msra.mxu0 %v2180
      %2202 = vmatprep.subr.mxu0 %v2183
      %2203 = vmatpush1.msra.mxu0 %v2182
      %2204 = vmatprep.subr.mxu0 %v2185
      %2205 = vmatpush1.msra.mxu0 %v2184
      %2206 = vmatprep.subr.mxu0 %v2187
      %2207 = vmatpush1.msra.mxu0 %v2186
      %2208 = vmatprep.subr.mxu0 %v2189
      %2209 = vmatpush1.msra.mxu0 %v2188
      %2210 = vmatprep.subr.mxu0 %v2196
      %2211 = vmatpush1.msra.mxu0 %v2193
      %2212 = vmatprep.subr.mxu0 0.0
      %2213 = vmatpush1.msra.mxu0 0.0
      %2214 = vmatprep.subr.mxu0 0.0
      %2215 = vmatpush1.msra.mxu0 0.0
      %2216 = vmatprep.subr.mxu0 0.0
      %2217 = vmatpush1.msra.mxu0 0.0
      %2218 = vmatprep.subr.mxu0 0.0
      %2219 = vmatpush1.msra.mxu0 0.0
      %2220 = vmatprep.subr.mxu0 0.0
      %2221 = vmatpush1.msra.mxu0 0.0
      %2222 = vmatprep.subr.mxu0 0.0
      %2223 = vmatpush1.msra.mxu0 0.0
      %2224 = vmatprep.subr.mxu0 0.0
      %2225 = vmatpush1.msra.mxu0 0.0
      %2226 = vmatprep.subr.mxu0 0.0
      %2227 = vmatpush1.msra.mxu0 0.0
      %2228 = vmatprep.subr.mxu0 0.0
      %2229 = vmatpush1.msra.mxu0 0.0
      %2230 = vmatprep.subr.mxu0 0.0
      %2231 = vmatpush1.msra.mxu0 0.0
      %2232 = vmatprep.subr.mxu0 0.0
      %2233 = vmatpush1.msra.mxu0 0.0
      %2234 = vmatprep.subr.mxu0 0.0
      %2235 = vmatpush1.msra.mxu0 0.0
      %2236 = vmatprep.subr.mxu0 0.0
      %2237 = vmatpush1.msra.mxu0 0.0
      %2238 = vmatprep.subr.mxu0 0.0
      %2239 = vmatpush1.msra.mxu0 0.0
      %2240 = vmatprep.subr.mxu0 0.0
      %2241 = vmatpush1.msra.mxu0 0.0
      %2242 = vmatprep.subr.mxu0 0.0
      %2243 = vmatpush1.msra.mxu0 0.0
      %2244 = vmatprep.subr.mxu0 0.0
      %2245 = vmatpush1.msra.mxu0 0.0
      %2246 = vmatprep.subr.mxu0 0.0
      %2247 = vmatpush1.msra.mxu0 0.0
      %2248 = vmatprep.subr.mxu0 0.0
      %2249 = vmatpush1.msra.mxu0 0.0
      %2250 = vmatprep.subr.mxu0 0.0
      %2251 = vmatpush1.msra.mxu0 0.0
      %2252 = vmatprep.subr.mxu0 0.0
      %2253 = vmatpush1.msra.mxu0 0.0
      %2254 = vmatprep.subr.mxu0 0.0
      %2255 = vmatpush1.msra.mxu0 0.0
      %2256 = vmatprep.subr.mxu0 0.0
      %2257 = vmatpush1.msra.mxu0 0.0
      %2258 = vmatprep.subr.mxu0 0.0
      %2259 = vmatpush1.msra.mxu0 0.0
      %2260 = vmatprep.subr.mxu0 0.0
      %2261 = vmatpush1.msra.mxu0 0.0
      %2262 = vmatprep.mubr.f32.mxu0 0.0
      %2263 = vmatmul.mubr.f32.gmra.mrb[0].mxu0 %v1175
      %v2264 = vpop.f32.mrb[0].mxu0
      %v2265 = vadd.f32 0.0, %v2264
      %v2266 = vpop.f32.mrb[0].mxu0
      %v2267 = vadd.f32 0.0, %v2266
      %2268 = vmatprep.mubr.f32.mxu0 0.0
      %2269 = vmatmul.mubr.f32.gmra.mrb[0].mxu0 %v1178
      %v2270 = vpop.f32.mrb[0].mxu0
      %v2271 = vadd.f32 0.0, %v2270
      %v2272 = vpop.f32.mrb[0].mxu0
      %v2273 = vadd.f32 0.0, %v2272
      %2274 = vdwg.mxu0
      %v2275 = vadd.f32 %v2173, %v2265
      %v2276 = vadd.f32 %v2174, %v2267
      %v2277 = vadd.f32 %v2175, %v2271
      %v2278 = vadd.f32 %v2176, %v2273
      %v2279 = vmax.f32 %v1263, %v2275
      %v2280 = vmax.f32 %v1264, %v2276
      %v2281 = vmax.f32 %v1265, %v2277
      %v2282 = vmax.f32 %v1266, %v2278
      %2283 = vmatprep.subr.mxu0 %v192
      %2284 = vmatpush1.msra.mxu0 %v191
      %2285 = vmatprep.subr.mxu0 %v194
      %2286 = vmatpush1.msra.mxu0 %v193
      %2287 = vmatprep.subr.mxu0 %v196
      %2288 = vmatpush1.msra.mxu0 %v195
      %2289 = vmatprep.subr.mxu0 %v198
      %2290 = vmatpush1.msra.mxu0 %v197
      %2291 = vmatprep.subr.mxu0 %v200
      %2292 = vmatpush1.msra.mxu0 %v199
      %2293 = vmatprep.subr.mxu0 %v202
      %2294 = vmatpush1.msra.mxu0 %v201
      %2295 = vmatprep.subr.mxu0 %v217
      %2296 = vmatpush1.msra.mxu0 %v214
      %2297 = vmatprep.subr.mxu0 0.0
      %2298 = vmatpush1.msra.mxu0 0.0
      %2299 = vmatprep.subr.mxu0 0.0
      %2300 = vmatpush1.msra.mxu0 0.0
      %2301 = vmatprep.subr.mxu0 0.0
      %2302 = vmatpush1.msra.mxu0 0.0
      %2303 = vmatprep.subr.mxu0 0.0
      %2304 = vmatpush1.msra.mxu0 0.0
      %2305 = vmatprep.subr.mxu0 0.0
      %2306 = vmatpush1.msra.mxu0 0.0
      %2307 = vmatprep.subr.mxu0 0.0
      %2308 = vmatpush1.msra.mxu0 0.0
      %2309 = vmatprep.subr.mxu0 0.0
      %2310 = vmatpush1.msra.mxu0 0.0
      %2311 = vmatprep.subr.mxu0 0.0
      %2312 = vmatpush1.msra.mxu0 0.0
      %2313 = vmatprep.subr.mxu0 0.0
      %2314 = vmatpush1.msra.mxu0 0.0
      %2315 = vmatprep.subr.mxu0 0.0
      %2316 = vmatpush1.msra.mxu0 0.0
      %2317 = vmatprep.subr.mxu0 0.0
      %2318 = vmatpush1.msra.mxu0 0.0
      %2319 = vmatprep.subr.mxu0 0.0
      %2320 = vmatpush1.msra.mxu0 0.0
      %2321 = vmatprep.subr.mxu0 0.0
      %2322 = vmatpush1.msra.mxu0 0.0
      %2323 = vmatprep.subr.mxu0 0.0
      %2324 = vmatpush1.msra.mxu0 0.0
      %2325 = vmatprep.subr.mxu0 0.0
      %2326 = vmatpush1.msra.mxu0 0.0
      %2327 = vmatprep.subr.mxu0 0.0
      %2328 = vmatpush1.msra.mxu0 0.0
      %2329 = vmatprep.subr.mxu0 0.0
      %2330 = vmatpush1.msra.mxu0 0.0
      %2331 = vmatprep.subr.mxu0 0.0
      %2332 = vmatpush1.msra.mxu0 0.0
      %2333 = vmatprep.subr.mxu0 0.0
      %2334 = vmatpush1.msra.mxu0 0.0
      %2335 = vmatprep.subr.mxu0 0.0
      %2336 = vmatpush1.msra.mxu0 0.0
      %2337 = vmatprep.subr.mxu0 0.0
      %2338 = vmatpush1.msra.mxu0 0.0
      %2339 = vmatprep.subr.mxu0 0.0
      %2340 = vmatpush1.msra.mxu0 0.0
      %2341 = vmatprep.subr.mxu0 0.0
      %2342 = vmatpush1.msra.mxu0 0.0
      %2343 = vmatprep.subr.mxu0 0.0
      %2344 = vmatpush1.msra.mxu0 0.0
      %2345 = vmatprep.subr.mxu0 0.0
      %2346 = vmatpush1.msra.mxu0 0.0
      %2347 = vmatprep.mubr.f32.mxu0 0.0
      %2348 = vmatmul.mubr.f32.gmra.mrb[0].mxu0 %v515
      %v2349 = vpop.f32.mrb[0].mxu0
      %v2350 = vadd.f32 0.0, %v2349
      %v2351 = vpop.f32.mrb[0].mxu0
      %v2352 = vadd.f32 0.0, %v2351
      %2353 = vmatprep.mubr.f32.mxu0 0.0
      %2354 = vmatmul.mubr.f32.gmra.mrb[0].mxu0 %v518
      %v2355 = vpop.f32.mrb[0].mxu0
      %v2356 = vadd.f32 0.0, %v2355
      %v2357 = vpop.f32.mrb[0].mxu0
      %v2358 = vadd.f32 0.0, %v2357
      %2359 = vdwg.mxu0
      %2360 = vmatprep.subr.mxu0 %v174
      %2361 = vmatpush1.msra.mxu0 %v173
      %2362 = vmatprep.subr.mxu0 %v176
      %2363 = vmatpush1.msra.mxu0 %v175
      %2364 = vmatprep.subr.mxu0 %v178
      %2365 = vmatpush1.msra.mxu0 %v177
      %2366 = vmatprep.subr.mxu0 %v180
      %2367 = vmatpush1.msra.mxu0 %v179
      %2368 = vmatprep.subr.mxu0 %v182
      %2369 = vmatpush1.msra.mxu0 %v181
      %2370 = vmatprep.subr.mxu0 %v184
      %2371 = vmatpush1.msra.mxu0 %v183
      %2372 = vmatprep.subr.mxu0 %v306
      %2373 = vmatpush1.msra.mxu0 %v303
      %2374 = vmatprep.subr.mxu0 0.0
      %2375 = vmatpush1.msra.mxu0 0.0
      %2376 = vmatprep.subr.mxu0 0.0
      %2377 = vmatpush1.msra.mxu0 0.0
      %2378 = vmatprep.subr.mxu0 0.0
      %2379 = vmatpush1.msra.mxu0 0.0
      %2380 = vmatprep.subr.mxu0 0.0
      %2381 = vmatpush1.msra.mxu0 0.0
      %2382 = vmatprep.subr.mxu0 0.0
      %2383 = vmatpush1.msra.mxu0 0.0
      %2384 = vmatprep.subr.mxu0 0.0
      %2385 = vmatpush1.msra.mxu0 0.0
      %2386 = vmatprep.subr.mxu0 0.0
      %2387 = vmatpush1.msra.mxu0 0.0
      %2388 = vmatprep.subr.mxu0 0.0
      %2389 = vmatpush1.msra.mxu0 0.0
      %2390 = vmatprep.subr.mxu0 0.0
      %2391 = vmatpush1.msra.mxu0 0.0
      %2392 = vmatprep.subr.mxu0 0.0
      %2393 = vmatpush1.msra.mxu0 0.0
      %2394 = vmatprep.subr.mxu0 0.0
      %2395 = vmatpush1.msra.mxu0 0.0
      %2396 = vmatprep.subr.mxu0 0.0
      %2397 = vmatpush1.msra.mxu0 0.0
      %2398 = vmatprep.subr.mxu0 0.0
      %2399 = vmatpush1.msra.mxu0 0.0
      %2400 = vmatprep.subr.mxu0 0.0
      %2401 = vmatpush1.msra.mxu0 0.0
      %2402 = vmatprep.subr.mxu0 0.0
      %2403 = vmatpush1.msra.mxu0 0.0
      %2404 = vmatprep.subr.mxu0 0.0
      %2405 = vmatpush1.msra.mxu0 0.0
      %2406 = vmatprep.subr.mxu0 0.0
      %2407 = vmatpush1.msra.mxu0 0.0
      %2408 = vmatprep.subr.mxu0 0.0
      %2409 = vmatpush1.msra.mxu0 0.0
      %2410 = vmatprep.subr.mxu0 0.0
      %2411 = vmatpush1.msra.mxu0 0.0
      %2412 = vmatprep.subr.mxu0 0.0
      %2413 = vmatpush1.msra.mxu0 0.0
      %2414 = vmatprep.subr.mxu0 0.0
      %2415 = vmatpush1.msra.mxu0 0.0
      %2416 = vmatprep.subr.mxu0 0.0
      %2417 = vmatpush1.msra.mxu0 0.0
      %2418 = vmatprep.subr.mxu0 0.0
      %2419 = vmatpush1.msra.mxu0 0.0
      %2420 = vmatprep.subr.mxu0 0.0
      %2421 = vmatpush1.msra.mxu0 0.0
      %2422 = vmatprep.subr.mxu0 0.0
      %2423 = vmatpush1.msra.mxu0 0.0
      %2424 = vmatprep.mubr.f32.mxu0 0.0
      %2425 = vmatmul.mubr.f32.gmra.mrb[0].mxu0 %v404
      %v2426 = vpop.f32.mrb[0].mxu0
      %v2427 = vadd.f32 %v2350, %v2426
      %v2428 = vpop.f32.mrb[0].mxu0
      %v2429 = vadd.f32 %v2352, %v2428
      %2430 = vmatprep.mubr.f32.mxu0 0.0
      %2431 = vmatmul.mubr.f32.gmra.mrb[0].mxu0 %v407
      %v2432 = vpop.f32.mrb[0].mxu0
      %v2433 = vadd.f32 %v2356, %v2432
      %v2434 = vpop.f32.mrb[0].mxu0
      %v2435 = vadd.f32 %v2358, %v2434
      %2436 = vdwg.mxu0
      %2437 = vmatprep.subr.mxu0 %v390
      %2438 = vmatpush1.msra.mxu0 %v389
      %2439 = vmatprep.subr.mxu0 %v392
      %2440 = vmatpush1.msra.mxu0 %v391
      %2441 = vmatprep.subr.mxu0 %v394
      %2442 = vmatpush1.msra.mxu0 %v393
      %2443 = vmatprep.subr.mxu0 %v396
      %2444 = vmatpush1.msra.mxu0 %v395
      %2445 = vmatprep.subr.mxu0 %v398
      %2446 = vmatpush1.msra.mxu0 %v397
      %2447 = vmatprep.subr.mxu0 %v400
      %2448 = vmatpush1.msra.mxu0 %v399
      %2449 = vmatprep.subr.mxu0 %v413
      %2450 = vmatpush1.msra.mxu0 %v410
      %2451 = vmatprep.subr.mxu0 0.0
      %2452 = vmatpush1.msra.mxu0 0.0
      %2453 = vmatprep.subr.mxu0 0.0
      %2454 = vmatpush1.msra.mxu0 0.0
      %2455 = vmatprep.subr.mxu0 0.0
      %2456 = vmatpush1.msra.mxu0 0.0
      %2457 = vmatprep.subr.mxu0 0.0
      %2458 = vmatpush1.msra.mxu0 0.0
      %2459 = vmatprep.subr.mxu0 0.0
      %2460 = vmatpush1.msra.mxu0 0.0
      %2461 = vmatprep.subr.mxu0 0.0
      %2462 = vmatpush1.msra.mxu0 0.0
      %2463 = vmatprep.subr.mxu0 0.0
      %2464 = vmatpush1.msra.mxu0 0.0
      %2465 = vmatprep.subr.mxu0 0.0
      %2466 = vmatpush1.msra.mxu0 0.0
      %2467 = vmatprep.subr.mxu0 0.0
      %2468 = vmatpush1.msra.mxu0 0.0
      %2469 = vmatprep.subr.mxu0 0.0
      %2470 = vmatpush1.msra.mxu0 0.0
      %2471 = vmatprep.subr.mxu0 0.0
      %2472 = vmatpush1.msra.mxu0 0.0
      %2473 = vmatprep.subr.mxu0 0.0
      %2474 = vmatpush1.msra.mxu0 0.0
      %2475 = vmatprep.subr.mxu0 0.0
      %2476 = vmatpush1.msra.mxu0 0.0
      %2477 = vmatprep.subr.mxu0 0.0
      %2478 = vmatpush1.msra.mxu0 0.0
      %2479 = vmatprep.subr.mxu0 0.0
      %2480 = vmatpush1.msra.mxu0 0.0
      %2481 = vmatprep.subr.mxu0 0.0
      %2482 = vmatpush1.msra.mxu0 0.0
      %2483 = vmatprep.subr.mxu0 0.0
      %2484 = vmatpush1.msra.mxu0 0.0
      %2485 = vmatprep.subr.mxu0 0.0
      %2486 = vmatpush1.msra.mxu0 0.0
      %2487 = vmatprep.subr.mxu0 0.0
      %2488 = vmatpush1.msra.mxu0 0.0
      %2489 = vmatprep.subr.mxu0 0.0
      %2490 = vmatpush1.msra.mxu0 0.0
      %2491 = vmatprep.subr.mxu0 0.0
      %2492 = vmatpush1.msra.mxu0 0.0
      %2493 = vmatprep.subr.mxu0 0.0
      %2494 = vmatpush1.msra.mxu0 0.0
      %2495 = vmatprep.subr.mxu0 0.0
      %2496 = vmatpush1.msra.mxu0 0.0
      %2497 = vmatprep.subr.mxu0 0.0
      %2498 = vmatpush1.msra.mxu0 0.0
      %2499 = vmatprep.subr.mxu0 0.0
      %2500 = vmatpush1.msra.mxu0 0.0
      %2501 = vmatprep.mubr.f32.mxu0 0.0
      %2502 = vmatmul.mubr.f32.gmra.mrb[0].mxu0 %v625
      %v2503 = vpop.f32.mrb[0].mxu0
      %v2504 = vadd.f32 0.0, %v2503
      %v2505 = vpop.f32.mrb[0].mxu0
      %v2506 = vadd.f32 0.0, %v2505
      %2507 = vmatprep.mubr.f32.mxu0 0.0
      %2508 = vmatmul.mubr.f32.gmra.mrb[0].mxu0 %v628
      %v2509 = vpop.f32.mrb[0].mxu0
      %v2510 = vadd.f32 0.0, %v2509
      %v2511 = vpop.f32.mrb[0].mxu0
      %v2512 = vadd.f32 0.0, %v2511
      %2513 = vdwg.mxu0
      %v2514 = vadd.f32 %v2427, %v2504
      %v2515 = vadd.f32 %v2429, %v2506
      %v2516 = vadd.f32 %v2433, %v2510
      %v2517 = vadd.f32 %v2435, %v2512
      %2518 = vmatprep.subr.mxu0 %v501
      %2519 = vmatpush1.msra.mxu0 %v500
      %2520 = vmatprep.subr.mxu0 %v503
      %2521 = vmatpush1.msra.mxu0 %v502
      %2522 = vmatprep.subr.mxu0 %v505
      %2523 = vmatpush1.msra.mxu0 %v504
      %2524 = vmatprep.subr.mxu0 %v507
      %2525 = vmatpush1.msra.mxu0 %v506
      %2526 = vmatprep.subr.mxu0 %v509
      %2527 = vmatpush1.msra.mxu0 %v508
      %2528 = vmatprep.subr.mxu0 %v511
      %2529 = vmatpush1.msra.mxu0 %v510
      %2530 = vmatprep.subr.mxu0 %v524
      %2531 = vmatpush1.msra.mxu0 %v521
      %2532 = vmatprep.subr.mxu0 0.0
      %2533 = vmatpush1.msra.mxu0 0.0
      %2534 = vmatprep.subr.mxu0 0.0
      %2535 = vmatpush1.msra.mxu0 0.0
      %2536 = vmatprep.subr.mxu0 0.0
      %2537 = vmatpush1.msra.mxu0 0.0
      %2538 = vmatprep.subr.mxu0 0.0
      %2539 = vmatpush1.msra.mxu0 0.0
      %2540 = vmatprep.subr.mxu0 0.0
      %2541 = vmatpush1.msra.mxu0 0.0
      %2542 = vmatprep.subr.mxu0 0.0
      %2543 = vmatpush1.msra.mxu0 0.0
      %2544 = vmatprep.subr.mxu0 0.0
      %2545 = vmatpush1.msra.mxu0 0.0
      %2546 = vmatprep.subr.mxu0 0.0
      %2547 = vmatpush1.msra.mxu0 0.0
      %2548 = vmatprep.subr.mxu0 0.0
      %2549 = vmatpush1.msra.mxu0 0.0
      %2550 = vmatprep.subr.mxu0 0.0
      %2551 = vmatpush1.msra.mxu0 0.0
      %2552 = vmatprep.subr.mxu0 0.0
      %2553 = vmatpush1.msra.mxu0 0.0
      %2554 = vmatprep.subr.mxu0 0.0
      %2555 = vmatpush1.msra.mxu0 0.0
      %2556 = vmatprep.subr.mxu0 0.0
      %2557 = vmatpush1.msra.mxu0 0.0
      %2558 = vmatprep.subr.mxu0 0.0
      %2559 = vmatpush1.msra.mxu0 0.0
      %2560 = vmatprep.subr.mxu0 0.0
      %2561 = vmatpush1.msra.mxu0 0.0
      %2562 = vmatprep.subr.mxu0 0.0
      %2563 = vmatpush1.msra.mxu0 0.0
      %2564 = vmatprep.subr.mxu0 0.0
      %2565 = vmatpush1.msra.mxu0 0.0
      %2566 = vmatprep.subr.mxu0 0.0
      %2567 = vmatpush1.msra.mxu0 0.0
      %2568 = vmatprep.subr.mxu0 0.0
      %2569 = vmatpush1.msra.mxu0 0.0
      %2570 = vmatprep.subr.mxu0 0.0
      %2571 = vmatpush1.msra.mxu0 0.0
      %2572 = vmatprep.subr.mxu0 0.0
      %2573 = vmatpush1.msra.mxu0 0.0
      %2574 = vmatprep.subr.mxu0 0.0
      %2575 = vmatpush1.msra.mxu0 0.0
      %2576 = vmatprep.subr.mxu0 0.0
      %2577 = vmatpush1.msra.mxu0 0.0
      %2578 = vmatprep.subr.mxu0 0.0
      %2579 = vmatpush1.msra.mxu0 0.0
      %2580 = vmatprep.subr.mxu0 0.0
      %2581 = vmatpush1.msra.mxu0 0.0
      %2582 = vmatprep.mubr.f32.mxu0 0.0
      %2583 = vmatmul.mubr.f32.gmra.mrb[0].mxu0 %v735
      %v2584 = vpop.f32.mrb[0].mxu0
      %v2585 = vadd.f32 0.0, %v2584
      %v2586 = vpop.f32.mrb[0].mxu0
      %v2587 = vadd.f32 0.0, %v2586
      %2588 = vmatprep.mubr.f32.mxu0 0.0
      %2589 = vmatmul.mubr.f32.gmra.mrb[0].mxu0 %v738
      %v2590 = vpop.f32.mrb[0].mxu0
      %v2591 = vadd.f32 0.0, %v2590
      %v2592 = vpop.f32.mrb[0].mxu0
      %v2593 = vadd.f32 0.0, %v2592
      %2594 = vdwg.mxu0
      %v2595 = vadd.f32 %v2514, %v2585
      %v2596 = vadd.f32 %v2515, %v2587
      %v2597 = vadd.f32 %v2516, %v2591
      %v2598 = vadd.f32 %v2517, %v2593
      %2599 = vmatprep.subr.mxu0 %v611
      %2600 = vmatpush1.msra.mxu0 %v610
      %2601 = vmatprep.subr.mxu0 %v613
      %2602 = vmatpush1.msra.mxu0 %v612
      %2603 = vmatprep.subr.mxu0 %v615
      %2604 = vmatpush1.msra.mxu0 %v614
      %2605 = vmatprep.subr.mxu0 %v617
      %2606 = vmatpush1.msra.mxu0 %v616
      %2607 = vmatprep.subr.mxu0 %v619
      %2608 = vmatpush1.msra.mxu0 %v618
      %2609 = vmatprep.subr.mxu0 %v621
      %2610 = vmatpush1.msra.mxu0 %v620
      %2611 = vmatprep.subr.mxu0 %v634
      %2612 = vmatpush1.msra.mxu0 %v631
      %2613 = vmatprep.subr.mxu0 0.0
      %2614 = vmatpush1.msra.mxu0 0.0
      %2615 = vmatprep.subr.mxu0 0.0
      %2616 = vmatpush1.msra.mxu0 0.0
      %2617 = vmatprep.subr.mxu0 0.0
      %2618 = vmatpush1.msra.mxu0 0.0
      %2619 = vmatprep.subr.mxu0 0.0
      %2620 = vmatpush1.msra.mxu0 0.0
      %2621 = vmatprep.subr.mxu0 0.0
      %2622 = vmatpush1.msra.mxu0 0.0
      %2623 = vmatprep.subr.mxu0 0.0
      %2624 = vmatpush1.msra.mxu0 0.0
      %2625 = vmatprep.subr.mxu0 0.0
      %2626 = vmatpush1.msra.mxu0 0.0
      %2627 = vmatprep.subr.mxu0 0.0
      %2628 = vmatpush1.msra.mxu0 0.0
      %2629 = vmatprep.subr.mxu0 0.0
      %2630 = vmatpush1.msra.mxu0 0.0
      %2631 = vmatprep.subr.mxu0 0.0
      %2632 = vmatpush1.msra.mxu0 0.0
      %2633 = vmatprep.subr.mxu0 0.0
      %2634 = vmatpush1.msra.mxu0 0.0
      %2635 = vmatprep.subr.mxu0 0.0
      %2636 = vmatpush1.msra.mxu0 0.0
      %2637 = vmatprep.subr.mxu0 0.0
      %2638 = vmatpush1.msra.mxu0 0.0
      %2639 = vmatprep.subr.mxu0 0.0
      %2640 = vmatpush1.msra.mxu0 0.0
      %2641 = vmatprep.subr.mxu0 0.0
      %2642 = vmatpush1.msra.mxu0 0.0
      %2643 = vmatprep.subr.mxu0 0.0
      %2644 = vmatpush1.msra.mxu0 0.0
      %2645 = vmatprep.subr.mxu0 0.0
      %2646 = vmatpush1.msra.mxu0 0.0
      %2647 = vmatprep.subr.mxu0 0.0
      %2648 = vmatpush1.msra.mxu0 0.0
      %2649 = vmatprep.subr.mxu0 0.0
      %2650 = vmatpush1.msra.mxu0 0.0
      %2651 = vmatprep.subr.mxu0 0.0
      %2652 = vmatpush1.msra.mxu0 0.0
      %2653 = vmatprep.subr.mxu0 0.0
      %2654 = vmatpush1.msra.mxu0 0.0
      %2655 = vmatprep.subr.mxu0 0.0
      %2656 = vmatpush1.msra.mxu0 0.0
      %2657 = vmatprep.subr.mxu0 0.0
      %2658 = vmatpush1.msra.mxu0 0.0
      %2659 = vmatprep.subr.mxu0 0.0
      %2660 = vmatpush1.msra.mxu0 0.0
      %2661 = vmatprep.subr.mxu0 0.0
      %2662 = vmatpush1.msra.mxu0 0.0
      %2663 = vmatprep.mubr.f32.mxu0 0.0
      %2664 = vmatmul.mubr.f32.gmra.mrb[0].mxu0 %v845
      %v2665 = vpop.f32.mrb[0].mxu0
      %v2666 = vadd.f32 0.0, %v2665
      %v2667 = vpop.f32.mrb[0].mxu0
      %v2668 = vadd.f32 0.0, %v2667
      %2669 = vmatprep.mubr.f32.mxu0 0.0
      %2670 = vmatmul.mubr.f32.gmra.mrb[0].mxu0 %v848
      %v2671 = vpop.f32.mrb[0].mxu0
      %v2672 = vadd.f32 0.0, %v2671
      %v2673 = vpop.f32.mrb[0].mxu0
      %v2674 = vadd.f32 0.0, %v2673
      %2675 = vdwg.mxu0
      %v2676 = vadd.f32 %v2595, %v2666
      %v2677 = vadd.f32 %v2596, %v2668
      %v2678 = vadd.f32 %v2597, %v2672
      %v2679 = vadd.f32 %v2598, %v2674
      %2680 = vmatprep.subr.mxu0 %v721
      %2681 = vmatpush1.msra.mxu0 %v720
      %2682 = vmatprep.subr.mxu0 %v723
      %2683 = vmatpush1.msra.mxu0 %v722
      %2684 = vmatprep.subr.mxu0 %v725
      %2685 = vmatpush1.msra.mxu0 %v724
      %2686 = vmatprep.subr.mxu0 %v727
      %2687 = vmatpush1.msra.mxu0 %v726
      %2688 = vmatprep.subr.mxu0 %v729
      %2689 = vmatpush1.msra.mxu0 %v728
      %2690 = vmatprep.subr.mxu0 %v731
      %2691 = vmatpush1.msra.mxu0 %v730
      %2692 = vmatprep.subr.mxu0 %v744
      %2693 = vmatpush1.msra.mxu0 %v741
      %2694 = vmatprep.subr.mxu0 0.0
      %2695 = vmatpush1.msra.mxu0 0.0
      %2696 = vmatprep.subr.mxu0 0.0
      %2697 = vmatpush1.msra.mxu0 0.0
      %2698 = vmatprep.subr.mxu0 0.0
      %2699 = vmatpush1.msra.mxu0 0.0
      %2700 = vmatprep.subr.mxu0 0.0
      %2701 = vmatpush1.msra.mxu0 0.0
      %2702 = vmatprep.subr.mxu0 0.0
      %2703 = vmatpush1.msra.mxu0 0.0
      %2704 = vmatprep.subr.mxu0 0.0
      %2705 = vmatpush1.msra.mxu0 0.0
      %2706 = vmatprep.subr.mxu0 0.0
      %2707 = vmatpush1.msra.mxu0 0.0
      %2708 = vmatprep.subr.mxu0 0.0
      %2709 = vmatpush1.msra.mxu0 0.0
      %2710 = vmatprep.subr.mxu0 0.0
      %2711 = vmatpush1.msra.mxu0 0.0
      %2712 = vmatprep.subr.mxu0 0.0
      %2713 = vmatpush1.msra.mxu0 0.0
      %2714 = vmatprep.subr.mxu0 0.0
      %2715 = vmatpush1.msra.mxu0 0.0
      %2716 = vmatprep.subr.mxu0 0.0
      %2717 = vmatpush1.msra.mxu0 0.0
      %2718 = vmatprep.subr.mxu0 0.0
      %2719 = vmatpush1.msra.mxu0 0.0
      %2720 = vmatprep.subr.mxu0 0.0
      %2721 = vmatpush1.msra.mxu0 0.0
      %2722 = vmatprep.subr.mxu0 0.0
      %2723 = vmatpush1.msra.mxu0 0.0
      %2724 = vmatprep.subr.mxu0 0.0
      %2725 = vmatpush1.msra.mxu0 0.0
      %2726 = vmatprep.subr.mxu0 0.0
      %2727 = vmatpush1.msra.mxu0 0.0
      %2728 = vmatprep.subr.mxu0 0.0
      %2729 = vmatpush1.msra.mxu0 0.0
      %2730 = vmatprep.subr.mxu0 0.0
      %2731 = vmatpush1.msra.mxu0 0.0
      %2732 = vmatprep.subr.mxu0 0.0
      %2733 = vmatpush1.msra.mxu0 0.0
      %2734 = vmatprep.subr.mxu0 0.0
      %2735 = vmatpush1.msra.mxu0 0.0
      %2736 = vmatprep.subr.mxu0 0.0
      %2737 = vmatpush1.msra.mxu0 0.0
      %2738 = vmatprep.subr.mxu0 0.0
      %2739 = vmatpush1.msra.mxu0 0.0
      %2740 = vmatprep.subr.mxu0 0.0
      %2741 = vmatpush1.msra.mxu0 0.0
      %2742 = vmatprep.subr.mxu0 0.0
      %2743 = vmatpush1.msra.mxu0 0.0
      %2744 = vmatprep.mubr.f32.mxu0 0.0
      %2745 = vmatmul.mubr.f32.gmra.mrb[0].mxu0 %v955
      %v2746 = vpop.f32.mrb[0].mxu0
      %v2747 = vadd.f32 0.0, %v2746
      %v2748 = vpop.f32.mrb[0].mxu0
      %v2749 = vadd.f32 0.0, %v2748
      %2750 = vmatprep.mubr.f32.mxu0 0.0
      %2751 = vmatmul.mubr.f32.gmra.mrb[0].mxu0 %v958
      %v2752 = vpop.f32.mrb[0].mxu0
      %v2753 = vadd.f32 0.0, %v2752
      %v2754 = vpop.f32.mrb[0].mxu0
      %v2755 = vadd.f32 0.0, %v2754
      %2756 = vdwg.mxu0
      %v2757 = vadd.f32 %v2676, %v2747
      %v2758 = vadd.f32 %v2677, %v2749
      %v2759 = vadd.f32 %v2678, %v2753
      %v2760 = vadd.f32 %v2679, %v2755
      %2761 = vmatprep.subr.mxu0 %v831
      %2762 = vmatpush1.msra.mxu0 %v830
      %2763 = vmatprep.subr.mxu0 %v833
      %2764 = vmatpush1.msra.mxu0 %v832
      %2765 = vmatprep.subr.mxu0 %v835
      %2766 = vmatpush1.msra.mxu0 %v834
      %2767 = vmatprep.subr.mxu0 %v837
      %2768 = vmatpush1.msra.mxu0 %v836
      %2769 = vmatprep.subr.mxu0 %v839
      %2770 = vmatpush1.msra.mxu0 %v838
      %2771 = vmatprep.subr.mxu0 %v841
      %2772 = vmatpush1.msra.mxu0 %v840
      %2773 = vmatprep.subr.mxu0 %v854
      %2774 = vmatpush1.msra.mxu0 %v851
      %2775 = vmatprep.subr.mxu0 0.0
      %2776 = vmatpush1.msra.mxu0 0.0
      %2777 = vmatprep.subr.mxu0 0.0
      %2778 = vmatpush1.msra.mxu0 0.0
      %2779 = vmatprep.subr.mxu0 0.0
      %2780 = vmatpush1.msra.mxu0 0.0
      %2781 = vmatprep.subr.mxu0 0.0
      %2782 = vmatpush1.msra.mxu0 0.0
      %2783 = vmatprep.subr.mxu0 0.0
      %2784 = vmatpush1.msra.mxu0 0.0
      %2785 = vmatprep.subr.mxu0 0.0
      %2786 = vmatpush1.msra.mxu0 0.0
      %2787 = vmatprep.subr.mxu0 0.0
      %2788 = vmatpush1.msra.mxu0 0.0
      %2789 = vmatprep.subr.mxu0 0.0
      %2790 = vmatpush1.msra.mxu0 0.0
      %2791 = vmatprep.subr.mxu0 0.0
      %2792 = vmatpush1.msra.mxu0 0.0
      %2793 = vmatprep.subr.mxu0 0.0
      %2794 = vmatpush1.msra.mxu0 0.0
      %2795 = vmatprep.subr.mxu0 0.0
      %2796 = vmatpush1.msra.mxu0 0.0
      %2797 = vmatprep.subr.mxu0 0.0
      %2798 = vmatpush1.msra.mxu0 0.0
      %2799 = vmatprep.subr.mxu0 0.0
      %2800 = vmatpush1.msra.mxu0 0.0
      %2801 = vmatprep.subr.mxu0 0.0
      %2802 = vmatpush1.msra.mxu0 0.0
      %2803 = vmatprep.subr.mxu0 0.0
      %2804 = vmatpush1.msra.mxu0 0.0
      %2805 = vmatprep.subr.mxu0 0.0
      %2806 = vmatpush1.msra.mxu0 0.0
      %2807 = vmatprep.subr.mxu0 0.0
      %2808 = vmatpush1.msra.mxu0 0.0
      %2809 = vmatprep.subr.mxu0 0.0
      %2810 = vmatpush1.msra.mxu0 0.0
      %2811 = vmatprep.subr.mxu0 0.0
      %2812 = vmatpush1.msra.mxu0 0.0
      %2813 = vmatprep.subr.mxu0 0.0
      %2814 = vmatpush1.msra.mxu0 0.0
      %2815 = vmatprep.subr.mxu0 0.0
      %2816 = vmatpush1.msra.mxu0 0.0
      %2817 = vmatprep.subr.mxu0 0.0
      %2818 = vmatpush1.msra.mxu0 0.0
      %2819 = vmatprep.subr.mxu0 0.0
      %2820 = vmatpush1.msra.mxu0 0.0
      %2821 = vmatprep.subr.mxu0 0.0
      %2822 = vmatpush1.msra.mxu0 0.0
      %2823 = vmatprep.subr.mxu0 0.0
      %2824 = vmatpush1.msra.mxu0 0.0
      %2825 = vmatprep.mubr.f32.mxu0 0.0
      %2826 = vmatmul.mubr.f32.gmra.mrb[0].mxu0 %v1065
      %v2827 = vpop.f32.mrb[0].mxu0
      %v2828 = vadd.f32 0.0, %v2827
      %v2829 = vpop.f32.mrb[0].mxu0
      %v2830 = vadd.f32 0.0, %v2829
      %2831 = vmatprep.mubr.f32.mxu0 0.0
      %2832 = vmatmul.mubr.f32.gmra.mrb[0].mxu0 %v1068
      %v2833 = vpop.f32.mrb[0].mxu0
      %v2834 = vadd.f32 0.0, %v2833
      %v2835 = vpop.f32.mrb[0].mxu0
      %v2836 = vadd.f32 0.0, %v2835
      %2837 = vdwg.mxu0
      %v2838 = vadd.f32 %v2757, %v2828
      %v2839 = vadd.f32 %v2758, %v2830
      %v2840 = vadd.f32 %v2759, %v2834
      %v2841 = vadd.f32 %v2760, %v2836
      %2842 = vmatprep.subr.mxu0 %v941
      %2843 = vmatpush1.msra.mxu0 %v940
      %2844 = vmatprep.subr.mxu0 %v943
      %2845 = vmatpush1.msra.mxu0 %v942
      %2846 = vmatprep.subr.mxu0 %v945
      %2847 = vmatpush1.msra.mxu0 %v944
      %2848 = vmatprep.subr.mxu0 %v947
      %2849 = vmatpush1.msra.mxu0 %v946
      %2850 = vmatprep.subr.mxu0 %v949
      %2851 = vmatpush1.msra.mxu0 %v948
      %2852 = vmatprep.subr.mxu0 %v951
      %2853 = vmatpush1.msra.mxu0 %v950
      %2854 = vmatprep.subr.mxu0 %v964
      %2855 = vmatpush1.msra.mxu0 %v961
      %2856 = vmatprep.subr.mxu0 0.0
      %2857 = vmatpush1.msra.mxu0 0.0
      %2858 = vmatprep.subr.mxu0 0.0
      %2859 = vmatpush1.msra.mxu0 0.0
      %2860 = vmatprep.subr.mxu0 0.0
      %2861 = vmatpush1.msra.mxu0 0.0
      %2862 = vmatprep.subr.mxu0 0.0
      %2863 = vmatpush1.msra.mxu0 0.0
      %2864 = vmatprep.subr.mxu0 0.0
      %2865 = vmatpush1.msra.mxu0 0.0
      %2866 = vmatprep.subr.mxu0 0.0
      %2867 = vmatpush1.msra.mxu0 0.0
      %2868 = vmatprep.subr.mxu0 0.0
      %2869 = vmatpush1.msra.mxu0 0.0
      %2870 = vmatprep.subr.mxu0 0.0
      %2871 = vmatpush1.msra.mxu0 0.0
      %2872 = vmatprep.subr.mxu0 0.0
      %2873 = vmatpush1.msra.mxu0 0.0
      %2874 = vmatprep.subr.mxu0 0.0
      %2875 = vmatpush1.msra.mxu0 0.0
      %2876 = vmatprep.subr.mxu0 0.0
      %2877 = vmatpush1.msra.mxu0 0.0
      %2878 = vmatprep.subr.mxu0 0.0
      %2879 = vmatpush1.msra.mxu0 0.0
      %2880 = vmatprep.subr.mxu0 0.0
      %2881 = vmatpush1.msra.mxu0 0.0
      %2882 = vmatprep.subr.mxu0 0.0
      %2883 = vmatpush1.msra.mxu0 0.0
      %2884 = vmatprep.subr.mxu0 0.0
      %2885 = vmatpush1.msra.mxu0 0.0
      %2886 = vmatprep.subr.mxu0 0.0
      %2887 = vmatpush1.msra.mxu0 0.0
      %2888 = vmatprep.subr.mxu0 0.0
      %2889 = vmatpush1.msra.mxu0 0.0
      %2890 = vmatprep.subr.mxu0 0.0
      %2891 = vmatpush1.msra.mxu0 0.0
      %2892 = vmatprep.subr.mxu0 0.0
      %2893 = vmatpush1.msra.mxu0 0.0
      %2894 = vmatprep.subr.mxu0 0.0
      %2895 = vmatpush1.msra.mxu0 0.0
      %2896 = vmatprep.subr.mxu0 0.0
      %2897 = vmatpush1.msra.mxu0 0.0
      %2898 = vmatprep.subr.mxu0 0.0
      %2899 = vmatpush1.msra.mxu0 0.0
      %2900 = vmatprep.subr.mxu0 0.0
      %2901 = vmatpush1.msra.mxu0 0.0
      %2902 = vmatprep.subr.mxu0 0.0
      %2903 = vmatpush1.msra.mxu0 0.0
      %2904 = vmatprep.subr.mxu0 0.0
      %2905 = vmatpush1.msra.mxu0 0.0
      %2906 = vmatprep.mubr.f32.mxu0 0.0
      %2907 = vmatmul.mubr.f32.gmra.mrb[0].mxu0 %v1175
      %v2908 = vpop.f32.mrb[0].mxu0
      %v2909 = vadd.f32 0.0, %v2908
      %v2910 = vpop.f32.mrb[0].mxu0
      %v2911 = vadd.f32 0.0, %v2910
      %2912 = vmatprep.mubr.f32.mxu0 0.0
      %2913 = vmatmul.mubr.f32.gmra.mrb[0].mxu0 %v1178
      %v2914 = vpop.f32.mrb[0].mxu0
      %v2915 = vadd.f32 0.0, %v2914
      %v2916 = vpop.f32.mrb[0].mxu0
      %v2917 = vadd.f32 0.0, %v2916
      %2918 = vdwg.mxu0
      %v2919 = vadd.f32 %v2838, %v2909
      %v2920 = vadd.f32 %v2839, %v2911
      %v2921 = vadd.f32 %v2840, %v2915
      %v2922 = vadd.f32 %v2841, %v2917
      %v2923 = vld [vmem:[%s385 + $0x2] sm:$0xff]
      %v2924 = vld [vmem:[%s385 + $0xa] sm:$0xff]
      %v2926 = vsel %vm205, %v2923, 0
      %v2929 = vsel %vm205, %v2924, 0
      %2931 = vmatprep.subr.mxu0 %v1051
      %2932 = vmatpush1.msra.mxu0 %v1050
      %2933 = vmatprep.subr.mxu0 %v1053
      %2934 = vmatpush1.msra.mxu0 %v1052
      %2935 = vmatprep.subr.mxu0 %v1055
      %2936 = vmatpush1.msra.mxu0 %v1054
      %2937 = vmatprep.subr.mxu0 %v1057
      %2938 = vmatpush1.msra.mxu0 %v1056
      %2939 = vmatprep.subr.mxu0 %v1059
      %2940 = vmatpush1.msra.mxu0 %v1058
      %2941 = vmatprep.subr.mxu0 %v1061
      %2942 = vmatpush1.msra.mxu0 %v1060
      %2943 = vmatprep.subr.mxu0 %v1074
      %2944 = vmatpush1.msra.mxu0 %v1071
      %2945 = vmatprep.subr.mxu0 0.0
      %2946 = vmatpush1.msra.mxu0 0.0
      %2947 = vmatprep.subr.mxu0 0.0
      %2948 = vmatpush1.msra.mxu0 0.0
      %2949 = vmatprep.subr.mxu0 0.0
      %2950 = vmatpush1.msra.mxu0 0.0
      %2951 = vmatprep.subr.mxu0 0.0
      %2952 = vmatpush1.msra.mxu0 0.0
      %2953 = vmatprep.subr.mxu0 0.0
      %2954 = vmatpush1.msra.mxu0 0.0
      %2955 = vmatprep.subr.mxu0 0.0
      %2956 = vmatpush1.msra.mxu0 0.0
      %2957 = vmatprep.subr.mxu0 0.0
      %2958 = vmatpush1.msra.mxu0 0.0
      %2959 = vmatprep.subr.mxu0 0.0
      %2960 = vmatpush1.msra.mxu0 0.0
      %2961 = vmatprep.subr.mxu0 0.0
      %2962 = vmatpush1.msra.mxu0 0.0
      %2963 = vmatprep.subr.mxu0 0.0
      %2964 = vmatpush1.msra.mxu0 0.0
      %2965 = vmatprep.subr.mxu0 0.0
      %2966 = vmatpush1.msra.mxu0 0.0
      %2967 = vmatprep.subr.mxu0 0.0
      %2968 = vmatpush1.msra.mxu0 0.0
      %2969 = vmatprep.subr.mxu0 0.0
      %2970 = vmatpush1.msra.mxu0 0.0
      %2971 = vmatprep.subr.mxu0 0.0
      %2972 = vmatpush1.msra.mxu0 0.0
      %2973 = vmatprep.subr.mxu0 0.0
      %2974 = vmatpush1.msra.mxu0 0.0
      %2975 = vmatprep.subr.mxu0 0.0
      %2976 = vmatpush1.msra.mxu0 0.0
      %2977 = vmatprep.subr.mxu0 0.0
      %2978 = vmatpush1.msra.mxu0 0.0
      %2979 = vmatprep.subr.mxu0 0.0
      %2980 = vmatpush1.msra.mxu0 0.0
      %2981 = vmatprep.subr.mxu0 0.0
      %2982 = vmatpush1.msra.mxu0 0.0
      %2983 = vmatprep.subr.mxu0 0.0
      %2984 = vmatpush1.msra.mxu0 0.0
      %2985 = vmatprep.subr.mxu0 0.0
      %2986 = vmatpush1.msra.mxu0 0.0
      %2987 = vmatprep.subr.mxu0 0.0
      %2988 = vmatpush1.msra.mxu0 0.0
      %2989 = vmatprep.subr.mxu0 0.0
      %2990 = vmatpush1.msra.mxu0 0.0
      %2991 = vmatprep.subr.mxu0 0.0
      %2992 = vmatpush1.msra.mxu0 0.0
      %2993 = vmatprep.subr.mxu0 0.0
      %2994 = vmatpush1.msra.mxu0 0.0
      %2995 = vmatprep.mubr.f32.mxu0 0.0
      %2996 = vmatmul.mubr.f32.gmra.mrb[0].mxu0 %v2926
      %v2997 = vpop.f32.mrb[0].mxu0
      %v2998 = vadd.f32 0.0, %v2997
      %v2999 = vpop.f32.mrb[0].mxu0
      %v3000 = vadd.f32 0.0, %v2999
      %3001 = vmatprep.mubr.f32.mxu0 0.0
      %3002 = vmatmul.mubr.f32.gmra.mrb[0].mxu0 %v2929
      %v3003 = vpop.f32.mrb[0].mxu0
      %v3004 = vadd.f32 0.0, %v3003
      %v3005 = vpop.f32.mrb[0].mxu0
      %v3006 = vadd.f32 0.0, %v3005
      %3007 = vdwg.mxu0
      %v3008 = vadd.f32 %v2919, %v2998
      %v3009 = vadd.f32 %v2920, %v3000
      %v3010 = vadd.f32 %v2921, %v3004
      %v3011 = vadd.f32 %v2922, %v3006
      %v3012 = vld [vmem:[%s496 + $0x2] sm:$0xff]
      %v3013 = vld [vmem:[%s496 + $0xa] sm:$0xff]
      %v3015 = vsel %vm205, %v3012, 0
      %v3018 = vsel %vm205, %v3013, 0
      %3020 = vmatprep.subr.mxu0 %v1161
      %3021 = vmatpush1.msra.mxu0 %v1160
      %3022 = vmatprep.subr.mxu0 %v1163
      %3023 = vmatpush1.msra.mxu0 %v1162
      %3024 = vmatprep.subr.mxu0 %v1165
      %3025 = vmatpush1.msra.mxu0 %v1164
      %3026 = vmatprep.subr.mxu0 %v1167
      %3027 = vmatpush1.msra.mxu0 %v1166
      %3028 = vmatprep.subr.mxu0 %v1169
      %3029 = vmatpush1.msra.mxu0 %v1168
      %3030 = vmatprep.subr.mxu0 %v1171
      %3031 = vmatpush1.msra.mxu0 %v1170
      %3032 = vmatprep.subr.mxu0 %v1184
      %3033 = vmatpush1.msra.mxu0 %v1181
      %3034 = vmatprep.subr.mxu0 0.0
      %3035 = vmatpush1.msra.mxu0 0.0
      %3036 = vmatprep.subr.mxu0 0.0
      %3037 = vmatpush1.msra.mxu0 0.0
      %3038 = vmatprep.subr.mxu0 0.0
      %3039 = vmatpush1.msra.mxu0 0.0
      %3040 = vmatprep.subr.mxu0 0.0
      %3041 = vmatpush1.msra.mxu0 0.0
      %3042 = vmatprep.subr.mxu0 0.0
      %3043 = vmatpush1.msra.mxu0 0.0
      %3044 = vmatprep.subr.mxu0 0.0
      %3045 = vmatpush1.msra.mxu0 0.0
      %3046 = vmatprep.subr.mxu0 0.0
      %3047 = vmatpush1.msra.mxu0 0.0
      %3048 = vmatprep.subr.mxu0 0.0
      %3049 = vmatpush1.msra.mxu0 0.0
      %3050 = vmatprep.subr.mxu0 0.0
      %3051 = vmatpush1.msra.mxu0 0.0
      %3052 = vmatprep.subr.mxu0 0.0
      %3053 = vmatpush1.msra.mxu0 0.0
      %3054 = vmatprep.subr.mxu0 0.0
      %3055 = vmatpush1.msra.mxu0 0.0
      %3056 = vmatprep.subr.mxu0 0.0
      %3057 = vmatpush1.msra.mxu0 0.0
      %3058 = vmatprep.subr.mxu0 0.0
      %3059 = vmatpush1.msra.mxu0 0.0
      %3060 = vmatprep.subr.mxu0 0.0
      %3061 = vmatpush1.msra.mxu0 0.0
      %3062 = vmatprep.subr.mxu0 0.0
      %3063 = vmatpush1.msra.mxu0 0.0
      %3064 = vmatprep.subr.mxu0 0.0
      %3065 = vmatpush1.msra.mxu0 0.0
      %3066 = vmatprep.subr.mxu0 0.0
      %3067 = vmatpush1.msra.mxu0 0.0
      %3068 = vmatprep.subr.mxu0 0.0
      %3069 = vmatpush1.msra.mxu0 0.0
      %3070 = vmatprep.subr.mxu0 0.0
      %3071 = vmatpush1.msra.mxu0 0.0
      %3072 = vmatprep.subr.mxu0 0.0
      %3073 = vmatpush1.msra.mxu0 0.0
      %3074 = vmatprep.subr.mxu0 0.0
      %3075 = vmatpush1.msra.mxu0 0.0
      %3076 = vmatprep.subr.mxu0 0.0
      %3077 = vmatpush1.msra.mxu0 0.0
      %3078 = vmatprep.subr.mxu0 0.0
      %3079 = vmatpush1.msra.mxu0 0.0
      %3080 = vmatprep.subr.mxu0 0.0
      %3081 = vmatpush1.msra.mxu0 0.0
      %3082 = vmatprep.subr.mxu0 0.0
      %3083 = vmatpush1.msra.mxu0 0.0
      %3084 = vmatprep.mubr.f32.mxu0 0.0
      %3085 = vmatmul.mubr.f32.gmra.mrb[0].mxu0 %v3015
      %v3086 = vpop.f32.mrb[0].mxu0
      %v3087 = vadd.f32 0.0, %v3086
      %v3088 = vpop.f32.mrb[0].mxu0
      %v3089 = vadd.f32 0.0, %v3088
      %3090 = vmatprep.mubr.f32.mxu0 0.0
      %3091 = vmatmul.mubr.f32.gmra.mrb[0].mxu0 %v3018
      %v3092 = vpop.f32.mrb[0].mxu0
      %v3093 = vadd.f32 0.0, %v3092
      %v3094 = vpop.f32.mrb[0].mxu0
      %v3095 = vadd.f32 0.0, %v3094
      %3096 = vdwg.mxu0
      %v3097 = vadd.f32 %v3008, %v3087
      %v3098 = vadd.f32 %v3009, %v3089
      %v3099 = vadd.f32 %v3010, %v3093
      %v3100 = vadd.f32 %v3011, %v3095
      %v3101 = vmax.f32 %v2279, %v3097
      %v3102 = vmax.f32 %v2280, %v3098
      %v3103 = vmax.f32 %v2281, %v3099
      %v3104 = vmax.f32 %v2282, %v3100
      %3105 = vmatprep.subr.mxu0 %v1284
      %3106 = vmatpush1.msra.mxu0 %v1283
      %3107 = vmatprep.subr.mxu0 %v1286
      %3108 = vmatpush1.msra.mxu0 %v1285
      %3109 = vmatprep.subr.mxu0 %v1288
      %3110 = vmatpush1.msra.mxu0 %v1287
      %3111 = vmatprep.subr.mxu0 %v1290
      %3112 = vmatpush1.msra.mxu0 %v1289
      %3113 = vmatprep.subr.mxu0 %v1292
      %3114 = vmatpush1.msra.mxu0 %v1291
      %3115 = vmatprep.subr.mxu0 %v1294
      %3116 = vmatpush1.msra.mxu0 %v1293
      %3117 = vmatprep.subr.mxu0 %v1301
      %3118 = vmatpush1.msra.mxu0 %v1298
      %3119 = vmatprep.subr.mxu0 0.0
      %3120 = vmatpush1.msra.mxu0 0.0
      %3121 = vmatprep.subr.mxu0 0.0
      %3122 = vmatpush1.msra.mxu0 0.0
      %3123 = vmatprep.subr.mxu0 0.0
      %3124 = vmatpush1.msra.mxu0 0.0
      %3125 = vmatprep.subr.mxu0 0.0
      %3126 = vmatpush1.msra.mxu0 0.0
      %3127 = vmatprep.subr.mxu0 0.0
      %3128 = vmatpush1.msra.mxu0 0.0
      %3129 = vmatprep.subr.mxu0 0.0
      %3130 = vmatpush1.msra.mxu0 0.0
      %3131 = vmatprep.subr.mxu0 0.0
      %3132 = vmatpush1.msra.mxu0 0.0
      %3133 = vmatprep.subr.mxu0 0.0
      %3134 = vmatpush1.msra.mxu0 0.0
      %3135 = vmatprep.subr.mxu0 0.0
      %3136 = vmatpush1.msra.mxu0 0.0
      %3137 = vmatprep.subr.mxu0 0.0
      %3138 = vmatpush1.msra.mxu0 0.0
      %3139 = vmatprep.subr.mxu0 0.0
      %3140 = vmatpush1.msra.mxu0 0.0
      %3141 = vmatprep.subr.mxu0 0.0
      %3142 = vmatpush1.msra.mxu0 0.0
      %3143 = vmatprep.subr.mxu0 0.0
      %3144 = vmatpush1.msra.mxu0 0.0
      %3145 = vmatprep.subr.mxu0 0.0
      %3146 = vmatpush1.msra.mxu0 0.0
      %3147 = vmatprep.subr.mxu0 0.0
      %3148 = vmatpush1.msra.mxu0 0.0
      %3149 = vmatprep.subr.mxu0 0.0
      %3150 = vmatpush1.msra.mxu0 0.0
      %3151 = vmatprep.subr.mxu0 0.0
      %3152 = vmatpush1.msra.mxu0 0.0
      %3153 = vmatprep.subr.mxu0 0.0
      %3154 = vmatpush1.msra.mxu0 0.0
      %3155 = vmatprep.subr.mxu0 0.0
      %3156 = vmatpush1.msra.mxu0 0.0
      %3157 = vmatprep.subr.mxu0 0.0
      %3158 = vmatpush1.msra.mxu0 0.0
      %3159 = vmatprep.subr.mxu0 0.0
      %3160 = vmatpush1.msra.mxu0 0.0
      %3161 = vmatprep.subr.mxu0 0.0
      %3162 = vmatpush1.msra.mxu0 0.0
      %3163 = vmatprep.subr.mxu0 0.0
      %3164 = vmatpush1.msra.mxu0 0.0
      %3165 = vmatprep.subr.mxu0 0.0
      %3166 = vmatpush1.msra.mxu0 0.0
      %3167 = vmatprep.subr.mxu0 0.0
      %3168 = vmatpush1.msra.mxu0 0.0
      %3169 = vmatprep.mubr.f32.mxu0 0.0
      %3170 = vmatmul.mubr.f32.gmra.mrb[0].mxu0 %v515
      %v3171 = vpop.f32.mrb[0].mxu0
      %v3172 = vadd.f32 0.0, %v3171
      %v3173 = vpop.f32.mrb[0].mxu0
      %v3174 = vadd.f32 0.0, %v3173
      %3175 = vmatprep.mubr.f32.mxu0 0.0
      %3176 = vmatmul.mubr.f32.gmra.mrb[0].mxu0 %v518
      %v3177 = vpop.f32.mrb[0].mxu0
      %v3178 = vadd.f32 0.0, %v3177
      %v3179 = vpop.f32.mrb[0].mxu0
      %v3180 = vadd.f32 0.0, %v3179
      %3181 = vdwg.mxu0
      %3182 = vmatprep.subr.mxu0 %v1269
      %3183 = vmatpush1.msra.mxu0 %v1268
      %3184 = vmatprep.subr.mxu0 %v1271
      %3185 = vmatpush1.msra.mxu0 %v1270
      %3186 = vmatprep.subr.mxu0 %v1273
      %3187 = vmatpush1.msra.mxu0 %v1272
      %3188 = vmatprep.subr.mxu0 %v1275
      %3189 = vmatpush1.msra.mxu0 %v1274
      %3190 = vmatprep.subr.mxu0 %v1277
      %3191 = vmatpush1.msra.mxu0 %v1276
      %3192 = vmatprep.subr.mxu0 %v1279
      %3193 = vmatpush1.msra.mxu0 %v1278
      %3194 = vmatprep.subr.mxu0 %v1384
      %3195 = vmatpush1.msra.mxu0 %v1381
      %3196 = vmatprep.subr.mxu0 0.0
      %3197 = vmatpush1.msra.mxu0 0.0
      %3198 = vmatprep.subr.mxu0 0.0
      %3199 = vmatpush1.msra.mxu0 0.0
      %3200 = vmatprep.subr.mxu0 0.0
      %3201 = vmatpush1.msra.mxu0 0.0
      %3202 = vmatprep.subr.mxu0 0.0
      %3203 = vmatpush1.msra.mxu0 0.0
      %3204 = vmatprep.subr.mxu0 0.0
      %3205 = vmatpush1.msra.mxu0 0.0
      %3206 = vmatprep.subr.mxu0 0.0
      %3207 = vmatpush1.msra.mxu0 0.0
      %3208 = vmatprep.subr.mxu0 0.0
      %3209 = vmatpush1.msra.mxu0 0.0
      %3210 = vmatprep.subr.mxu0 0.0
      %3211 = vmatpush1.msra.mxu0 0.0
      %3212 = vmatprep.subr.mxu0 0.0
      %3213 = vmatpush1.msra.mxu0 0.0
      %3214 = vmatprep.subr.mxu0 0.0
      %3215 = vmatpush1.msra.mxu0 0.0
      %3216 = vmatprep.subr.mxu0 0.0
      %3217 = vmatpush1.msra.mxu0 0.0
      %3218 = vmatprep.subr.mxu0 0.0
      %3219 = vmatpush1.msra.mxu0 0.0
      %3220 = vmatprep.subr.mxu0 0.0
      %3221 = vmatpush1.msra.mxu0 0.0
      %3222 = vmatprep.subr.mxu0 0.0
      %3223 = vmatpush1.msra.mxu0 0.0
      %3224 = vmatprep.subr.mxu0 0.0
      %3225 = vmatpush1.msra.mxu0 0.0
      %3226 = vmatprep.subr.mxu0 0.0
      %3227 = vmatpush1.msra.mxu0 0.0
      %3228 = vmatprep.subr.mxu0 0.0
      %3229 = vmatpush1.msra.mxu0 0.0
      %3230 = vmatprep.subr.mxu0 0.0
      %3231 = vmatpush1.msra.mxu0 0.0
      %3232 = vmatprep.subr.mxu0 0.0
      %3233 = vmatpush1.msra.mxu0 0.0
      %3234 = vmatprep.subr.mxu0 0.0
      %3235 = vmatpush1.msra.mxu0 0.0
      %3236 = vmatprep.subr.mxu0 0.0
      %3237 = vmatpush1.msra.mxu0 0.0
      %3238 = vmatprep.subr.mxu0 0.0
      %3239 = vmatpush1.msra.mxu0 0.0
      %3240 = vmatprep.subr.mxu0 0.0
      %3241 = vmatpush1.msra.mxu0 0.0
      %3242 = vmatprep.subr.mxu0 0.0
      %3243 = vmatpush1.msra.mxu0 0.0
      %3244 = vmatprep.subr.mxu0 0.0
      %3245 = vmatpush1.msra.mxu0 0.0
      %3246 = vmatprep.mubr.f32.mxu0 0.0
      %3247 = vmatmul.mubr.f32.gmra.mrb[0].mxu0 %v404
      %v3248 = vpop.f32.mrb[0].mxu0
      %v3249 = vadd.f32 %v3172, %v3248
      %v3250 = vpop.f32.mrb[0].mxu0
      %v3251 = vadd.f32 %v3174, %v3250
      %3252 = vmatprep.mubr.f32.mxu0 0.0
      %3253 = vmatmul.mubr.f32.gmra.mrb[0].mxu0 %v407
      %v3254 = vpop.f32.mrb[0].mxu0
      %v3255 = vadd.f32 %v3178, %v3254
      %v3256 = vpop.f32.mrb[0].mxu0
      %v3257 = vadd.f32 %v3180, %v3256
      %3258 = vdwg.mxu0
      %3259 = vmatprep.subr.mxu0 %v1465
      %3260 = vmatpush1.msra.mxu0 %v1464
      %3261 = vmatprep.subr.mxu0 %v1467
      %3262 = vmatpush1.msra.mxu0 %v1466
      %3263 = vmatprep.subr.mxu0 %v1469
      %3264 = vmatpush1.msra.mxu0 %v1468
      %3265 = vmatprep.subr.mxu0 %v1471
      %3266 = vmatpush1.msra.mxu0 %v1470
      %3267 = vmatprep.subr.mxu0 %v1473
      %3268 = vmatpush1.msra.mxu0 %v1472
      %3269 = vmatprep.subr.mxu0 %v1475
      %3270 = vmatpush1.msra.mxu0 %v1474
      %3271 = vmatprep.subr.mxu0 %v1482
      %3272 = vmatpush1.msra.mxu0 %v1479
      %3273 = vmatprep.subr.mxu0 0.0
      %3274 = vmatpush1.msra.mxu0 0.0
      %3275 = vmatprep.subr.mxu0 0.0
      %3276 = vmatpush1.msra.mxu0 0.0
      %3277 = vmatprep.subr.mxu0 0.0
      %3278 = vmatpush1.msra.mxu0 0.0
      %3279 = vmatprep.subr.mxu0 0.0
      %3280 = vmatpush1.msra.mxu0 0.0
      %3281 = vmatprep.subr.mxu0 0.0
      %3282 = vmatpush1.msra.mxu0 0.0
      %3283 = vmatprep.subr.mxu0 0.0
      %3284 = vmatpush1.msra.mxu0 0.0
      %3285 = vmatprep.subr.mxu0 0.0
      %3286 = vmatpush1.msra.mxu0 0.0
      %3287 = vmatprep.subr.mxu0 0.0
      %3288 = vmatpush1.msra.mxu0 0.0
      %3289 = vmatprep.subr.mxu0 0.0
      %3290 = vmatpush1.msra.mxu0 0.0
      %3291 = vmatprep.subr.mxu0 0.0
      %3292 = vmatpush1.msra.mxu0 0.0
      %3293 = vmatprep.subr.mxu0 0.0
      %3294 = vmatpush1.msra.mxu0 0.0
      %3295 = vmatprep.subr.mxu0 0.0
      %3296 = vmatpush1.msra.mxu0 0.0
      %3297 = vmatprep.subr.mxu0 0.0
      %3298 = vmatpush1.msra.mxu0 0.0
      %3299 = vmatprep.subr.mxu0 0.0
      %3300 = vmatpush1.msra.mxu0 0.0
      %3301 = vmatprep.subr.mxu0 0.0
      %3302 = vmatpush1.msra.mxu0 0.0
      %3303 = vmatprep.subr.mxu0 0.0
      %3304 = vmatpush1.msra.mxu0 0.0
      %3305 = vmatprep.subr.mxu0 0.0
      %3306 = vmatpush1.msra.mxu0 0.0
      %3307 = vmatprep.subr.mxu0 0.0
      %3308 = vmatpush1.msra.mxu0 0.0
      %3309 = vmatprep.subr.mxu0 0.0
      %3310 = vmatpush1.msra.mxu0 0.0
      %3311 = vmatprep.subr.mxu0 0.0
      %3312 = vmatpush1.msra.mxu0 0.0
      %3313 = vmatprep.subr.mxu0 0.0
      %3314 = vmatpush1.msra.mxu0 0.0
      %3315 = vmatprep.subr.mxu0 0.0
      %3316 = vmatpush1.msra.mxu0 0.0
      %3317 = vmatprep.subr.mxu0 0.0
      %3318 = vmatpush1.msra.mxu0 0.0
      %3319 = vmatprep.subr.mxu0 0.0
      %3320 = vmatpush1.msra.mxu0 0.0
      %3321 = vmatprep.subr.mxu0 0.0
      %3322 = vmatpush1.msra.mxu0 0.0
      %3323 = vmatprep.mubr.f32.mxu0 0.0
      %3324 = vmatmul.mubr.f32.gmra.mrb[0].mxu0 %v625
      %v3325 = vpop.f32.mrb[0].mxu0
      %v3326 = vadd.f32 0.0, %v3325
      %v3327 = vpop.f32.mrb[0].mxu0
      %v3328 = vadd.f32 0.0, %v3327
      %3329 = vmatprep.mubr.f32.mxu0 0.0
      %3330 = vmatmul.mubr.f32.gmra.mrb[0].mxu0 %v628
      %v3331 = vpop.f32.mrb[0].mxu0
      %v3332 = vadd.f32 0.0, %v3331
      %v3333 = vpop.f32.mrb[0].mxu0
      %v3334 = vadd.f32 0.0, %v3333
      %3335 = vdwg.mxu0
      %v3336 = vadd.f32 %v3249, %v3326
      %v3337 = vadd.f32 %v3251, %v3328
      %v3338 = vadd.f32 %v3255, %v3332
      %v3339 = vadd.f32 %v3257, %v3334
      %3340 = vmatprep.subr.mxu0 %v1567
      %3341 = vmatpush1.msra.mxu0 %v1566
      %3342 = vmatprep.subr.mxu0 %v1569
      %3343 = vmatpush1.msra.mxu0 %v1568
      %3344 = vmatprep.subr.mxu0 %v1571
      %3345 = vmatpush1.msra.mxu0 %v1570
      %3346 = vmatprep.subr.mxu0 %v1573
      %3347 = vmatpush1.msra.mxu0 %v1572
      %3348 = vmatprep.subr.mxu0 %v1575
      %3349 = vmatpush1.msra.mxu0 %v1574
      %3350 = vmatprep.subr.mxu0 %v1577
      %3351 = vmatpush1.msra.mxu0 %v1576
      %3352 = vmatprep.subr.mxu0 %v1584
      %3353 = vmatpush1.msra.mxu0 %v1581
      %3354 = vmatprep.subr.mxu0 0.0
      %3355 = vmatpush1.msra.mxu0 0.0
      %3356 = vmatprep.subr.mxu0 0.0
      %3357 = vmatpush1.msra.mxu0 0.0
      %3358 = vmatprep.subr.mxu0 0.0
      %3359 = vmatpush1.msra.mxu0 0.0
      %3360 = vmatprep.subr.mxu0 0.0
      %3361 = vmatpush1.msra.mxu0 0.0
      %3362 = vmatprep.subr.mxu0 0.0
      %3363 = vmatpush1.msra.mxu0 0.0
      %3364 = vmatprep.subr.mxu0 0.0
      %3365 = vmatpush1.msra.mxu0 0.0
      %3366 = vmatprep.subr.mxu0 0.0
      %3367 = vmatpush1.msra.mxu0 0.0
      %3368 = vmatprep.subr.mxu0 0.0
      %3369 = vmatpush1.msra.mxu0 0.0
      %3370 = vmatprep.subr.mxu0 0.0
      %3371 = vmatpush1.msra.mxu0 0.0
      %3372 = vmatprep.subr.mxu0 0.0
      %3373 = vmatpush1.msra.mxu0 0.0
      %3374 = vmatprep.subr.mxu0 0.0
      %3375 = vmatpush1.msra.mxu0 0.0
      %3376 = vmatprep.subr.mxu0 0.0
      %3377 = vmatpush1.msra.mxu0 0.0
      %3378 = vmatprep.subr.mxu0 0.0
      %3379 = vmatpush1.msra.mxu0 0.0
      %3380 = vmatprep.subr.mxu0 0.0
      %3381 = vmatpush1.msra.mxu0 0.0
      %3382 = vmatprep.subr.mxu0 0.0
      %3383 = vmatpush1.msra.mxu0 0.0
      %3384 = vmatprep.subr.mxu0 0.0
      %3385 = vmatpush1.msra.mxu0 0.0
      %3386 = vmatprep.subr.mxu0 0.0
      %3387 = vmatpush1.msra.mxu0 0.0
      %3388 = vmatprep.subr.mxu0 0.0
      %3389 = vmatpush1.msra.mxu0 0.0
      %3390 = vmatprep.subr.mxu0 0.0
      %3391 = vmatpush1.msra.mxu0 0.0
      %3392 = vmatprep.subr.mxu0 0.0
      %3393 = vmatpush1.msra.mxu0 0.0
      %3394 = vmatprep.subr.mxu0 0.0
      %3395 = vmatpush1.msra.mxu0 0.0
      %3396 = vmatprep.subr.mxu0 0.0
      %3397 = vmatpush1.msra.mxu0 0.0
      %3398 = vmatprep.subr.mxu0 0.0
      %3399 = vmatpush1.msra.mxu0 0.0
      %3400 = vmatprep.subr.mxu0 0.0
      %3401 = vmatpush1.msra.mxu0 0.0
      %3402 = vmatprep.subr.mxu0 0.0
      %3403 = vmatpush1.msra.mxu0 0.0
      %3404 = vmatprep.mubr.f32.mxu0 0.0
      %3405 = vmatmul.mubr.f32.gmra.mrb[0].mxu0 %v735
      %v3406 = vpop.f32.mrb[0].mxu0
      %v3407 = vadd.f32 0.0, %v3406
      %v3408 = vpop.f32.mrb[0].mxu0
      %v3409 = vadd.f32 0.0, %v3408
      %3410 = vmatprep.mubr.f32.mxu0 0.0
      %3411 = vmatmul.mubr.f32.gmra.mrb[0].mxu0 %v738
      %v3412 = vpop.f32.mrb[0].mxu0
      %v3413 = vadd.f32 0.0, %v3412
      %v3414 = vpop.f32.mrb[0].mxu0
      %v3415 = vadd.f32 0.0, %v3414
      %3416 = vdwg.mxu0
      %v3417 = vadd.f32 %v3336, %v3407
      %v3418 = vadd.f32 %v3337, %v3409
      %v3419 = vadd.f32 %v3338, %v3413
      %v3420 = vadd.f32 %v3339, %v3415
      %3421 = vmatprep.subr.mxu0 %v1669
      %3422 = vmatpush1.msra.mxu0 %v1668
      %3423 = vmatprep.subr.mxu0 %v1671
      %3424 = vmatpush1.msra.mxu0 %v1670
      %3425 = vmatprep.subr.mxu0 %v1673
      %3426 = vmatpush1.msra.mxu0 %v1672
      %3427 = vmatprep.subr.mxu0 %v1675
      %3428 = vmatpush1.msra.mxu0 %v1674
      %3429 = vmatprep.subr.mxu0 %v1677
      %3430 = vmatpush1.msra.mxu0 %v1676
      %3431 = vmatprep.subr.mxu0 %v1679
      %3432 = vmatpush1.msra.mxu0 %v1678
      %3433 = vmatprep.subr.mxu0 %v1686
      %3434 = vmatpush1.msra.mxu0 %v1683
      %3435 = vmatprep.subr.mxu0 0.0
      %3436 = vmatpush1.msra.mxu0 0.0
      %3437 = vmatprep.subr.mxu0 0.0
      %3438 = vmatpush1.msra.mxu0 0.0
      %3439 = vmatprep.subr.mxu0 0.0
      %3440 = vmatpush1.msra.mxu0 0.0
      %3441 = vmatprep.subr.mxu0 0.0
      %3442 = vmatpush1.msra.mxu0 0.0
      %3443 = vmatprep.subr.mxu0 0.0
      %3444 = vmatpush1.msra.mxu0 0.0
      %3445 = vmatprep.subr.mxu0 0.0
      %3446 = vmatpush1.msra.mxu0 0.0
      %3447 = vmatprep.subr.mxu0 0.0
      %3448 = vmatpush1.msra.mxu0 0.0
      %3449 = vmatprep.subr.mxu0 0.0
      %3450 = vmatpush1.msra.mxu0 0.0
      %3451 = vmatprep.subr.mxu0 0.0
      %3452 = vmatpush1.msra.mxu0 0.0
      %3453 = vmatprep.subr.mxu0 0.0
      %3454 = vmatpush1.msra.mxu0 0.0
      %3455 = vmatprep.subr.mxu0 0.0
      %3456 = vmatpush1.msra.mxu0 0.0
      %3457 = vmatprep.subr.mxu0 0.0
      %3458 = vmatpush1.msra.mxu0 0.0
      %3459 = vmatprep.subr.mxu0 0.0
      %3460 = vmatpush1.msra.mxu0 0.0
      %3461 = vmatprep.subr.mxu0 0.0
      %3462 = vmatpush1.msra.mxu0 0.0
      %3463 = vmatprep.subr.mxu0 0.0
      %3464 = vmatpush1.msra.mxu0 0.0
      %3465 = vmatprep.subr.mxu0 0.0
      %3466 = vmatpush1.msra.mxu0 0.0
      %3467 = vmatprep.subr.mxu0 0.0
      %3468 = vmatpush1.msra.mxu0 0.0
      %3469 = vmatprep.subr.mxu0 0.0
      %3470 = vmatpush1.msra.mxu0 0.0
      %3471 = vmatprep.subr.mxu0 0.0
      %3472 = vmatpush1.msra.mxu0 0.0
      %3473 = vmatprep.subr.mxu0 0.0
      %3474 = vmatpush1.msra.mxu0 0.0
      %3475 = vmatprep.subr.mxu0 0.0
      %3476 = vmatpush1.msra.mxu0 0.0
      %3477 = vmatprep.subr.mxu0 0.0
      %3478 = vmatpush1.msra.mxu0 0.0
      %3479 = vmatprep.subr.mxu0 0.0
      %3480 = vmatpush1.msra.mxu0 0.0
      %3481 = vmatprep.subr.mxu0 0.0
      %3482 = vmatpush1.msra.mxu0 0.0
      %3483 = vmatprep.subr.mxu0 0.0
      %3484 = vmatpush1.msra.mxu0 0.0
      %3485 = vmatprep.mubr.f32.mxu0 0.0
      %3486 = vmatmul.mubr.f32.gmra.mrb[0].mxu0 %v845
      %v3487 = vpop.f32.mrb[0].mxu0
      %v3488 = vadd.f32 0.0, %v3487
      %v3489 = vpop.f32.mrb[0].mxu0
      %v3490 = vadd.f32 0.0, %v3489
      %3491 = vmatprep.mubr.f32.mxu0 0.0
      %3492 = vmatmul.mubr.f32.gmra.mrb[0].mxu0 %v848
      %v3493 = vpop.f32.mrb[0].mxu0
      %v3494 = vadd.f32 0.0, %v3493
      %v3495 = vpop.f32.mrb[0].mxu0
      %v3496 = vadd.f32 0.0, %v3495
      %3497 = vdwg.mxu0
      %v3498 = vadd.f32 %v3417, %v3488
      %v3499 = vadd.f32 %v3418, %v3490
      %v3500 = vadd.f32 %v3419, %v3494
      %v3501 = vadd.f32 %v3420, %v3496
      %3502 = vmatprep.subr.mxu0 %v1771
      %3503 = vmatpush1.msra.mxu0 %v1770
      %3504 = vmatprep.subr.mxu0 %v1773
      %3505 = vmatpush1.msra.mxu0 %v1772
      %3506 = vmatprep.subr.mxu0 %v1775
      %3507 = vmatpush1.msra.mxu0 %v1774
      %3508 = vmatprep.subr.mxu0 %v1777
      %3509 = vmatpush1.msra.mxu0 %v1776
      %3510 = vmatprep.subr.mxu0 %v1779
      %3511 = vmatpush1.msra.mxu0 %v1778
      %3512 = vmatprep.subr.mxu0 %v1781
      %3513 = vmatpush1.msra.mxu0 %v1780
      %3514 = vmatprep.subr.mxu0 %v1788
      %3515 = vmatpush1.msra.mxu0 %v1785
      %3516 = vmatprep.subr.mxu0 0.0
      %3517 = vmatpush1.msra.mxu0 0.0
      %3518 = vmatprep.subr.mxu0 0.0
      %3519 = vmatpush1.msra.mxu0 0.0
      %3520 = vmatprep.subr.mxu0 0.0
      %3521 = vmatpush1.msra.mxu0 0.0
      %3522 = vmatprep.subr.mxu0 0.0
      %3523 = vmatpush1.msra.mxu0 0.0
      %3524 = vmatprep.subr.mxu0 0.0
      %3525 = vmatpush1.msra.mxu0 0.0
      %3526 = vmatprep.subr.mxu0 0.0
      %3527 = vmatpush1.msra.mxu0 0.0
      %3528 = vmatprep.subr.mxu0 0.0
      %3529 = vmatpush1.msra.mxu0 0.0
      %3530 = vmatprep.subr.mxu0 0.0
      %3531 = vmatpush1.msra.mxu0 0.0
      %3532 = vmatprep.subr.mxu0 0.0
      %3533 = vmatpush1.msra.mxu0 0.0
      %3534 = vmatprep.subr.mxu0 0.0
      %3535 = vmatpush1.msra.mxu0 0.0
      %3536 = vmatprep.subr.mxu0 0.0
      %3537 = vmatpush1.msra.mxu0 0.0
      %3538 = vmatprep.subr.mxu0 0.0
      %3539 = vmatpush1.msra.mxu0 0.0
      %3540 = vmatprep.subr.mxu0 0.0
      %3541 = vmatpush1.msra.mxu0 0.0
      %3542 = vmatprep.subr.mxu0 0.0
      %3543 = vmatpush1.msra.mxu0 0.0
      %3544 = vmatprep.subr.mxu0 0.0
      %3545 = vmatpush1.msra.mxu0 0.0
      %3546 = vmatprep.subr.mxu0 0.0
      %3547 = vmatpush1.msra.mxu0 0.0
      %3548 = vmatprep.subr.mxu0 0.0
      %3549 = vmatpush1.msra.mxu0 0.0
      %3550 = vmatprep.subr.mxu0 0.0
      %3551 = vmatpush1.msra.mxu0 0.0
      %3552 = vmatprep.subr.mxu0 0.0
      %3553 = vmatpush1.msra.mxu0 0.0
      %3554 = vmatprep.subr.mxu0 0.0
      %3555 = vmatpush1.msra.mxu0 0.0
      %3556 = vmatprep.subr.mxu0 0.0
      %3557 = vmatpush1.msra.mxu0 0.0
      %3558 = vmatprep.subr.mxu0 0.0
      %3559 = vmatpush1.msra.mxu0 0.0
      %3560 = vmatprep.subr.mxu0 0.0
      %3561 = vmatpush1.msra.mxu0 0.0
      %3562 = vmatprep.subr.mxu0 0.0
      %3563 = vmatpush1.msra.mxu0 0.0
      %3564 = vmatprep.subr.mxu0 0.0
      %3565 = vmatpush1.msra.mxu0 0.0
      %3566 = vmatprep.mubr.f32.mxu0 0.0
      %3567 = vmatmul.mubr.f32.gmra.mrb[0].mxu0 %v955
      %v3568 = vpop.f32.mrb[0].mxu0
      %v3569 = vadd.f32 0.0, %v3568
      %v3570 = vpop.f32.mrb[0].mxu0
      %v3571 = vadd.f32 0.0, %v3570
      %3572 = vmatprep.mubr.f32.mxu0 0.0
      %3573 = vmatmul.mubr.f32.gmra.mrb[0].mxu0 %v958
      %v3574 = vpop.f32.mrb[0].mxu0
      %v3575 = vadd.f32 0.0, %v3574
      %v3576 = vpop.f32.mrb[0].mxu0
      %v3577 = vadd.f32 0.0, %v3576
      %3578 = vdwg.mxu0
      %v3579 = vadd.f32 %v3498, %v3569
      %v3580 = vadd.f32 %v3499, %v3571
      %v3581 = vadd.f32 %v3500, %v3575
      %v3582 = vadd.f32 %v3501, %v3577
      %3583 = vmatprep.subr.mxu0 %v1873
      %3584 = vmatpush1.msra.mxu0 %v1872
      %3585 = vmatprep.subr.mxu0 %v1875
      %3586 = vmatpush1.msra.mxu0 %v1874
      %3587 = vmatprep.subr.mxu0 %v1877
      %3588 = vmatpush1.msra.mxu0 %v1876
      %3589 = vmatprep.subr.mxu0 %v1879
      %3590 = vmatpush1.msra.mxu0 %v1878
      %3591 = vmatprep.subr.mxu0 %v1881
      %3592 = vmatpush1.msra.mxu0 %v1880
      %3593 = vmatprep.subr.mxu0 %v1883
      %3594 = vmatpush1.msra.mxu0 %v1882
      %3595 = vmatprep.subr.mxu0 %v1890
      %3596 = vmatpush1.msra.mxu0 %v1887
      %3597 = vmatprep.subr.mxu0 0.0
      %3598 = vmatpush1.msra.mxu0 0.0
      %3599 = vmatprep.subr.mxu0 0.0
      %3600 = vmatpush1.msra.mxu0 0.0
      %3601 = vmatprep.subr.mxu0 0.0
      %3602 = vmatpush1.msra.mxu0 0.0
      %3603 = vmatprep.subr.mxu0 0.0
      %3604 = vmatpush1.msra.mxu0 0.0
      %3605 = vmatprep.subr.mxu0 0.0
      %3606 = vmatpush1.msra.mxu0 0.0
      %3607 = vmatprep.subr.mxu0 0.0
      %3608 = vmatpush1.msra.mxu0 0.0
      %3609 = vmatprep.subr.mxu0 0.0
      %3610 = vmatpush1.msra.mxu0 0.0
      %3611 = vmatprep.subr.mxu0 0.0
      %3612 = vmatpush1.msra.mxu0 0.0
      %3613 = vmatprep.subr.mxu0 0.0
      %3614 = vmatpush1.msra.mxu0 0.0
      %3615 = vmatprep.subr.mxu0 0.0
      %3616 = vmatpush1.msra.mxu0 0.0
      %3617 = vmatprep.subr.mxu0 0.0
      %3618 = vmatpush1.msra.mxu0 0.0
      %3619 = vmatprep.subr.mxu0 0.0
      %3620 = vmatpush1.msra.mxu0 0.0
      %3621 = vmatprep.subr.mxu0 0.0
      %3622 = vmatpush1.msra.mxu0 0.0
      %3623 = vmatprep.subr.mxu0 0.0
      %3624 = vmatpush1.msra.mxu0 0.0
      %3625 = vmatprep.subr.mxu0 0.0
      %3626 = vmatpush1.msra.mxu0 0.0
      %3627 = vmatprep.subr.mxu0 0.0
      %3628 = vmatpush1.msra.mxu0 0.0
      %3629 = vmatprep.subr.mxu0 0.0
      %3630 = vmatpush1.msra.mxu0 0.0
      %3631 = vmatprep.subr.mxu0 0.0
      %3632 = vmatpush1.msra.mxu0 0.0
      %3633 = vmatprep.subr.mxu0 0.0
      %3634 = vmatpush1.msra.mxu0 0.0
      %3635 = vmatprep.subr.mxu0 0.0
      %3636 = vmatpush1.msra.mxu0 0.0
      %3637 = vmatprep.subr.mxu0 0.0
      %3638 = vmatpush1.msra.mxu0 0.0
      %3639 = vmatprep.subr.mxu0 0.0
      %3640 = vmatpush1.msra.mxu0 0.0
      %3641 = vmatprep.subr.mxu0 0.0
      %3642 = vmatpush1.msra.mxu0 0.0
      %3643 = vmatprep.subr.mxu0 0.0
      %3644 = vmatpush1.msra.mxu0 0.0
      %3645 = vmatprep.subr.mxu0 0.0
      %3646 = vmatpush1.msra.mxu0 0.0
      %3647 = vmatprep.mubr.f32.mxu0 0.0
      %3648 = vmatmul.mubr.f32.gmra.mrb[0].mxu0 %v1065
      %v3649 = vpop.f32.mrb[0].mxu0
      %v3650 = vadd.f32 0.0, %v3649
      %v3651 = vpop.f32.mrb[0].mxu0
      %v3652 = vadd.f32 0.0, %v3651
      %3653 = vmatprep.mubr.f32.mxu0 0.0
      %3654 = vmatmul.mubr.f32.gmra.mrb[0].mxu0 %v1068
      %v3655 = vpop.f32.mrb[0].mxu0
      %v3656 = vadd.f32 0.0, %v3655
      %v3657 = vpop.f32.mrb[0].mxu0
      %v3658 = vadd.f32 0.0, %v3657
      %3659 = vdwg.mxu0
      %v3660 = vadd.f32 %v3579, %v3650
      %v3661 = vadd.f32 %v3580, %v3652
      %v3662 = vadd.f32 %v3581, %v3656
      %v3663 = vadd.f32 %v3582, %v3658
      %3664 = vmatprep.subr.mxu0 %v1975
      %3665 = vmatpush1.msra.mxu0 %v1974
      %3666 = vmatprep.subr.mxu0 %v1977
      %3667 = vmatpush1.msra.mxu0 %v1976
      %3668 = vmatprep.subr.mxu0 %v1979
      %3669 = vmatpush1.msra.mxu0 %v1978
      %3670 = vmatprep.subr.mxu0 %v1981
      %3671 = vmatpush1.msra.mxu0 %v1980
      %3672 = vmatprep.subr.mxu0 %v1983
      %3673 = vmatpush1.msra.mxu0 %v1982
      %3674 = vmatprep.subr.mxu0 %v1985
      %3675 = vmatpush1.msra.mxu0 %v1984
      %3676 = vmatprep.subr.mxu0 %v1992
      %3677 = vmatpush1.msra.mxu0 %v1989
      %3678 = vmatprep.subr.mxu0 0.0
      %3679 = vmatpush1.msra.mxu0 0.0
      %3680 = vmatprep.subr.mxu0 0.0
      %3681 = vmatpush1.msra.mxu0 0.0
      %3682 = vmatprep.subr.mxu0 0.0
      %3683 = vmatpush1.msra.mxu0 0.0
      %3684 = vmatprep.subr.mxu0 0.0
      %3685 = vmatpush1.msra.mxu0 0.0
      %3686 = vmatprep.subr.mxu0 0.0
      %3687 = vmatpush1.msra.mxu0 0.0
      %3688 = vmatprep.subr.mxu0 0.0
      %3689 = vmatpush1.msra.mxu0 0.0
      %3690 = vmatprep.subr.mxu0 0.0
      %3691 = vmatpush1.msra.mxu0 0.0
      %3692 = vmatprep.subr.mxu0 0.0
      %3693 = vmatpush1.msra.mxu0 0.0
      %3694 = vmatprep.subr.mxu0 0.0
      %3695 = vmatpush1.msra.mxu0 0.0
      %3696 = vmatprep.subr.mxu0 0.0
      %3697 = vmatpush1.msra.mxu0 0.0
      %3698 = vmatprep.subr.mxu0 0.0
      %3699 = vmatpush1.msra.mxu0 0.0
      %3700 = vmatprep.subr.mxu0 0.0
      %3701 = vmatpush1.msra.mxu0 0.0
      %3702 = vmatprep.subr.mxu0 0.0
      %3703 = vmatpush1.msra.mxu0 0.0
      %3704 = vmatprep.subr.mxu0 0.0
      %3705 = vmatpush1.msra.mxu0 0.0
      %3706 = vmatprep.subr.mxu0 0.0
      %3707 = vmatpush1.msra.mxu0 0.0
      %3708 = vmatprep.subr.mxu0 0.0
      %3709 = vmatpush1.msra.mxu0 0.0
      %3710 = vmatprep.subr.mxu0 0.0
      %3711 = vmatpush1.msra.mxu0 0.0
      %3712 = vmatprep.subr.mxu0 0.0
      %3713 = vmatpush1.msra.mxu0 0.0
      %3714 = vmatprep.subr.mxu0 0.0
      %3715 = vmatpush1.msra.mxu0 0.0
      %3716 = vmatprep.subr.mxu0 0.0
      %3717 = vmatpush1.msra.mxu0 0.0
      %3718 = vmatprep.subr.mxu0 0.0
      %3719 = vmatpush1.msra.mxu0 0.0
      %3720 = vmatprep.subr.mxu0 0.0
      %3721 = vmatpush1.msra.mxu0 0.0
      %3722 = vmatprep.subr.mxu0 0.0
      %3723 = vmatpush1.msra.mxu0 0.0
      %3724 = vmatprep.subr.mxu0 0.0
      %3725 = vmatpush1.msra.mxu0 0.0
      %3726 = vmatprep.subr.mxu0 0.0
      %3727 = vmatpush1.msra.mxu0 0.0
      %3728 = vmatprep.mubr.f32.mxu0 0.0
      %3729 = vmatmul.mubr.f32.gmra.mrb[0].mxu0 %v1175
      %v3730 = vpop.f32.mrb[0].mxu0
      %v3731 = vadd.f32 0.0, %v3730
      %v3732 = vpop.f32.mrb[0].mxu0
      %v3733 = vadd.f32 0.0, %v3732
      %3734 = vmatprep.mubr.f32.mxu0 0.0
      %3735 = vmatmul.mubr.f32.gmra.mrb[0].mxu0 %v1178
      %v3736 = vpop.f32.mrb[0].mxu0
      %v3737 = vadd.f32 0.0, %v3736
      %v3738 = vpop.f32.mrb[0].mxu0
      %v3739 = vadd.f32 0.0, %v3738
      %3740 = vdwg.mxu0
      %v3741 = vadd.f32 %v3660, %v3731
      %v3742 = vadd.f32 %v3661, %v3733
      %v3743 = vadd.f32 %v3662, %v3737
      %v3744 = vadd.f32 %v3663, %v3739
      %3745 = vmatprep.subr.mxu0 %v2077
      %3746 = vmatpush1.msra.mxu0 %v2076
      %3747 = vmatprep.subr.mxu0 %v2079
      %3748 = vmatpush1.msra.mxu0 %v2078
      %3749 = vmatprep.subr.mxu0 %v2081
      %3750 = vmatpush1.msra.mxu0 %v2080
      %3751 = vmatprep.subr.mxu0 %v2083
      %3752 = vmatpush1.msra.mxu0 %v2082
      %3753 = vmatprep.subr.mxu0 %v2085
      %3754 = vmatpush1.msra.mxu0 %v2084
      %3755 = vmatprep.subr.mxu0 %v2087
      %3756 = vmatpush1.msra.mxu0 %v2086
      %3757 = vmatprep.subr.mxu0 %v2094
      %3758 = vmatpush1.msra.mxu0 %v2091
      %3759 = vmatprep.subr.mxu0 0.0
      %3760 = vmatpush1.msra.mxu0 0.0
      %3761 = vmatprep.subr.mxu0 0.0
      %3762 = vmatpush1.msra.mxu0 0.0
      %3763 = vmatprep.subr.mxu0 0.0
      %3764 = vmatpush1.msra.mxu0 0.0
      %3765 = vmatprep.subr.mxu0 0.0
      %3766 = vmatpush1.msra.mxu0 0.0
      %3767 = vmatprep.subr.mxu0 0.0
      %3768 = vmatpush1.msra.mxu0 0.0
      %3769 = vmatprep.subr.mxu0 0.0
      %3770 = vmatpush1.msra.mxu0 0.0
      %3771 = vmatprep.subr.mxu0 0.0
      %3772 = vmatpush1.msra.mxu0 0.0
      %3773 = vmatprep.subr.mxu0 0.0
      %3774 = vmatpush1.msra.mxu0 0.0
      %3775 = vmatprep.subr.mxu0 0.0
      %3776 = vmatpush1.msra.mxu0 0.0
      %3777 = vmatprep.subr.mxu0 0.0
      %3778 = vmatpush1.msra.mxu0 0.0
      %3779 = vmatprep.subr.mxu0 0.0
      %3780 = vmatpush1.msra.mxu0 0.0
      %3781 = vmatprep.subr.mxu0 0.0
      %3782 = vmatpush1.msra.mxu0 0.0
      %3783 = vmatprep.subr.mxu0 0.0
      %3784 = vmatpush1.msra.mxu0 0.0
      %3785 = vmatprep.subr.mxu0 0.0
      %3786 = vmatpush1.msra.mxu0 0.0
      %3787 = vmatprep.subr.mxu0 0.0
      %3788 = vmatpush1.msra.mxu0 0.0
      %3789 = vmatprep.subr.mxu0 0.0
      %3790 = vmatpush1.msra.mxu0 0.0
      %3791 = vmatprep.subr.mxu0 0.0
      %3792 = vmatpush1.msra.mxu0 0.0
      %3793 = vmatprep.subr.mxu0 0.0
      %3794 = vmatpush1.msra.mxu0 0.0
      %3795 = vmatprep.subr.mxu0 0.0
      %3796 = vmatpush1.msra.mxu0 0.0
      %3797 = vmatprep.subr.mxu0 0.0
      %3798 = vmatpush1.msra.mxu0 0.0
      %3799 = vmatprep.subr.mxu0 0.0
      %3800 = vmatpush1.msra.mxu0 0.0
      %3801 = vmatprep.subr.mxu0 0.0
      %3802 = vmatpush1.msra.mxu0 0.0
      %3803 = vmatprep.subr.mxu0 0.0
      %3804 = vmatpush1.msra.mxu0 0.0
      %3805 = vmatprep.subr.mxu0 0.0
      %3806 = vmatpush1.msra.mxu0 0.0
      %3807 = vmatprep.subr.mxu0 0.0
      %3808 = vmatpush1.msra.mxu0 0.0
      %3809 = vmatprep.mubr.f32.mxu0 0.0
      %3810 = vmatmul.mubr.f32.gmra.mrb[0].mxu0 %v2926
      %v3811 = vpop.f32.mrb[0].mxu0
      %v3812 = vadd.f32 0.0, %v3811
      %v3813 = vpop.f32.mrb[0].mxu0
      %v3814 = vadd.f32 0.0, %v3813
      %3815 = vmatprep.mubr.f32.mxu0 0.0
      %3816 = vmatmul.mubr.f32.gmra.mrb[0].mxu0 %v2929
      %v3817 = vpop.f32.mrb[0].mxu0
      %v3818 = vadd.f32 0.0, %v3817
      %v3819 = vpop.f32.mrb[0].mxu0
      %v3820 = vadd.f32 0.0, %v3819
      %3821 = vdwg.mxu0
      %v3822 = vadd.f32 %v3741, %v3812
      %v3823 = vadd.f32 %v3742, %v3814
      %v3824 = vadd.f32 %v3743, %v3818
      %v3825 = vadd.f32 %v3744, %v3820
      %3826 = vmatprep.subr.mxu0 %v2179
      %3827 = vmatpush1.msra.mxu0 %v2178
      %3828 = vmatprep.subr.mxu0 %v2181
      %3829 = vmatpush1.msra.mxu0 %v2180
      %3830 = vmatprep.subr.mxu0 %v2183
      %3831 = vmatpush1.msra.mxu0 %v2182
      %3832 = vmatprep.subr.mxu0 %v2185
      %3833 = vmatpush1.msra.mxu0 %v2184
      %3834 = vmatprep.subr.mxu0 %v2187
      %3835 = vmatpush1.msra.mxu0 %v2186
      %3836 = vmatprep.subr.mxu0 %v2189
      %3837 = vmatpush1.msra.mxu0 %v2188
      %3838 = vmatprep.subr.mxu0 %v2196
      %3839 = vmatpush1.msra.mxu0 %v2193
      %3840 = vmatprep.subr.mxu0 0.0
      %3841 = vmatpush1.msra.mxu0 0.0
      %3842 = vmatprep.subr.mxu0 0.0
      %3843 = vmatpush1.msra.mxu0 0.0
      %3844 = vmatprep.subr.mxu0 0.0
      %3845 = vmatpush1.msra.mxu0 0.0
      %3846 = vmatprep.subr.mxu0 0.0
      %3847 = vmatpush1.msra.mxu0 0.0
      %3848 = vmatprep.subr.mxu0 0.0
      %3849 = vmatpush1.msra.mxu0 0.0
      %3850 = vmatprep.subr.mxu0 0.0
      %3851 = vmatpush1.msra.mxu0 0.0
      %3852 = vmatprep.subr.mxu0 0.0
      %3853 = vmatpush1.msra.mxu0 0.0
      %3854 = vmatprep.subr.mxu0 0.0
      %3855 = vmatpush1.msra.mxu0 0.0
      %3856 = vmatprep.subr.mxu0 0.0
      %3857 = vmatpush1.msra.mxu0 0.0
      %3858 = vmatprep.subr.mxu0 0.0
      %3859 = vmatpush1.msra.mxu0 0.0
      %3860 = vmatprep.subr.mxu0 0.0
      %3861 = vmatpush1.msra.mxu0 0.0
      %3862 = vmatprep.subr.mxu0 0.0
      %3863 = vmatpush1.msra.mxu0 0.0
      %3864 = vmatprep.subr.mxu0 0.0
      %3865 = vmatpush1.msra.mxu0 0.0
      %3866 = vmatprep.subr.mxu0 0.0
      %3867 = vmatpush1.msra.mxu0 0.0
      %3868 = vmatprep.subr.mxu0 0.0
      %3869 = vmatpush1.msra.mxu0 0.0
      %3870 = vmatprep.subr.mxu0 0.0
      %3871 = vmatpush1.msra.mxu0 0.0
      %3872 = vmatprep.subr.mxu0 0.0
      %3873 = vmatpush1.msra.mxu0 0.0
      %3874 = vmatprep.subr.mxu0 0.0
      %3875 = vmatpush1.msra.mxu0 0.0
      %3876 = vmatprep.subr.mxu0 0.0
      %3877 = vmatpush1.msra.mxu0 0.0
      %3878 = vmatprep.subr.mxu0 0.0
      %3879 = vmatpush1.msra.mxu0 0.0
      %3880 = vmatprep.subr.mxu0 0.0
      %3881 = vmatpush1.msra.mxu0 0.0
      %3882 = vmatprep.subr.mxu0 0.0
      %3883 = vmatpush1.msra.mxu0 0.0
      %3884 = vmatprep.subr.mxu0 0.0
      %3885 = vmatpush1.msra.mxu0 0.0
      %3886 = vmatprep.subr.mxu0 0.0
      %3887 = vmatpush1.msra.mxu0 0.0
      %3888 = vmatprep.subr.mxu0 0.0
      %3889 = vmatpush1.msra.mxu0 0.0
      %3890 = vmatprep.mubr.f32.mxu0 0.0
      %3891 = vmatmul.mubr.f32.gmra.mrb[0].mxu0 %v3015
      %v3892 = vpop.f32.mrb[0].mxu0
      %v3893 = vadd.f32 0.0, %v3892
      %v3894 = vpop.f32.mrb[0].mxu0
      %v3895 = vadd.f32 0.0, %v3894
      %3896 = vmatprep.mubr.f32.mxu0 0.0
      %3897 = vmatmul.mubr.f32.gmra.mrb[0].mxu0 %v3018
      %v3898 = vpop.f32.mrb[0].mxu0
      %v3899 = vadd.f32 0.0, %v3898
      %v3900 = vpop.f32.mrb[0].mxu0
      %v3901 = vadd.f32 0.0, %v3900
      %3902 = vdwg.mxu0
      %v3903 = vadd.f32 %v3822, %v3893
      %v3904 = vadd.f32 %v3823, %v3895
      %v3905 = vadd.f32 %v3824, %v3899
      %v3906 = vadd.f32 %v3825, %v3901
      %v3907 = vmax.f32 %v3101, %v3903
      %v3908 = vmax.f32 %v3102, %v3904
      %v3909 = vmax.f32 %v3103, %v3905
      %v3910 = vmax.f32 %v3104, %v3906
      %v3911 = vld [vmem:[%s2] sm:$0x3]
      %v3913 = vlaneseq
      %v3914 = vshrl.u32 %v3913, 7
      %v3915 = vsub.s32 0, %v3914
      %v3916 = vrot.slane %v3911, %v3915
      %v3917 = vlaneseq
      %v3918 = vshrl.u32 %v3917, 7
      %v3919 = vsub.s32 1, %v3918
      %v3920 = vrot.slane %v3911, %v3919
      %v3923 = vadd.f32 %v3907, %v3916
      %v3924 = vadd.f32 %v3908, %v3920
      %v3925 = vadd.f32 %v3909, %v3916
      %v3926 = vadd.f32 %v3910, %v3920
      %v3927 = vmax.f32 %v3923, 0.0
      %v3928 = vmax.f32 %v3924, 0.0
      %v3929 = vmax.f32 %v3925, 0.0
      %v3930 = vmax.f32 %v3926, 0.0
      %3931 = vst [vmem:[%s170] sm:$0xff] %v3927
      %vm3932 = vcmask 523264
      %3933 = vst.msk [vmem:[%s170 + $0x8] sm:$0xff] %vm3932, %v3928
      %3934 = vst [vmem:[%s170 + $0x10] sm:$0xff] %v3929
      %3935 = vst.msk [vmem:[%s170 + $0x18] sm:$0xff] %vm3932, %v3930
      %p3936 = scmp.lt.s32.totalorder %s14, 1
      %s3937 = scalar_select %p3936, %s14, 1
      %s3938 = smul.addr %s3937, 4
      %s3939 = smul.addr %s3938, 8
      %s3940 = scalar_lea.vmem %s3, %s3939
      // Predicated region
      $region33: #{dainet3_forward.4} parent=31 // pred_check
        %p3941 = pneg %p100
      $region34: #{dainet3_forward.4} parent=31 // pred_check_branch
        %3943 = sbr.rel (%p3941) target = $region36
      $region35: #{dainet3_forward.4} parent=31 // pred_region
        _
      $region36: #{dainet3_forward.4} parent=31 // pred_fallthru
        _
    $region32: #{dainet3_forward.4} parent=5 // pred_fallthru
      _
    %p3944 = scmp.le.s32.totalorder 2, %s9
    // Predicated region
    $region37: #{dainet3_forward.4} parent=5 // pred_check
      %p3945 = pneg %p3944
    $region38: #{dainet3_forward.4} parent=5 // pred_check_branch
      %3947 = sbr.rel (%p3945) target = $region40
    $region39: #{dainet3_forward.4} parent=5 // pred_region
      %s3948 = ssub.s32 %s9, 2
      // Predicated region
      $region41: #{dainet3_forward.4} parent=39 // pred_check
        %p3949 = pneg %p106
      $region42: #{dainet3_forward.4} parent=39 // pred_check_branch
        %3951 = sbr.rel (%p3949) target = $region44
      $region43: #{dainet3_forward.4} parent=39 // pred_region
        %p3952 = scmp.lt.s32.totalorder %s15, 1
        %s3953 = scalar_select %p3952, %s15, 1
        %s3954 = smul.addr %s3953, 4
        %s3955 = smul.addr %s3954, 8
        %s3956 = scalar_lea.vmem %s3, %s3955
      $region44: #{dainet3_forward.4} parent=39 // pred_fallthru
        _
    $region40: #{dainet3_forward.4} parent=5 // pred_fallthru
      _
  $region6: #{dainet3_forward.4} parent=0 // loop_footer
    %s13 = sadd.s32 1, %s9
  $region7: #{dainet3_forward.4} parent=0 // loop_footer_branch
    %8 = sbr.rel target = $region3
  $region8: #{dainet3_forward.4} parent=0 // loop_exit
    _

// kernel: dainet3_forward.5
$region0: #{dainet3_forward.5}
  #allocation0 [shape = 'u32[]', space=smem, size = 0x4, offset = 0x4, fixed_abs, tag = 'smem constant byte address 0x4 - core index']
  #allocation1 [shape = 'u32[144,128]{1,0:T(1,128)}', space=vmem, size = 0x12000, scoped, tag = 'internal scratch']
  %s0 = inlined_call_operand.vmem [shape: f32[2,4,9,108], index: 0, kind: input, shape index: {}]
  %s1 = inlined_call_operand.vmem [shape: f32[12,108,192], index: 1, kind: input, shape index: {}]
  %s2 = inlined_call_operand.vmem [shape: f32[1,192], index: 2, kind: input, shape index: {}]
  %s3 = inlined_call_operand.vmem [shape: f32[2,8,192], index: 3, kind: output, shape index: {}]
  %s4 = sld [smem:[#allocation0]]
  $region45: #{dainet3_forward.5} parent=0
    _
  %s6 = ssub.s32 1, %s4
  %s7 = scalar_select 0, %s6, %s4
  loop: start=0, step=1, limit=4
  $region2: #{dainet3_forward.5} parent=0 // loop_pre_header
    _
  $region3: #{dainet3_forward.5} parent=0 // loop_header
    %s9 = sphi 0, %s13
    %p10 = scmp.ge.s32.totalorder %s9, 4
    %s19 = sphi 0, %s21
    %s22 = sphi 0, %s19
    %s23 = sphi 0, %s22
    %s39 = sphi 0, %s23
    %s43 = sphi 0, %s43
    %s45 = sphi 0, %s43
    %s46 = sphi 0, %s45
    %s60 = sphi 0, %s46
    %s64 = sphi 0, %s64
    %s66 = sphi 0, %s64
    %s67 = sphi 0, %s66
    %s81 = sphi 0, %s67
    %s87 = sphi 0, %s89
    %s90 = sphi 0, %s87
    %s91 = sphi 0, %s90
    %s107 = sphi 0, %s91
  $region4: #{dainet3_forward.5} parent=0 // loop_header_branch
    %12 = sbr.rel (%p10) target = $region8
  $region5: #{dainet3_forward.5} parent=0 // loop_body
    %s14 = ssub.s32 %s9, 1
    %s15 = ssub.s32 %s9, 2
    %s16 = sadd.s32 %s9, 1
    %s17 = ssub.s32 %s9, %s16
    %p18 = scmp.eq.s32.totalorder %s17, 0
    %s20 = sadd.s32 %s19, 1
    %s21 = scalar_select %p18, %s19, %s20
    %p24 = pneg %p18
    %p25 = scmp.eq.s32.totalorder %s9, 1
    %p26 = por %p24, %p25
    %p27 = scmp.ne.s32.totalorder %s19, %s22
    %p28 = scmp.eq.s32.totalorder %s9, 0
    %p29 = por %p27, %p28
    %p30 = scmp.ne.s32.totalorder %s19, %s22
    %p31 = scmp.eq.s32.totalorder %s14, 1
    %p32 = por %p30, %p31
    %p33 = scmp.ne.s32.totalorder %s22, %s23
    %p34 = scmp.eq.s32.totalorder %s14, 0
    %p35 = por %p33, %p34
    %p36 = scmp.ne.s32.totalorder %s22, %s23
    %p37 = scmp.eq.s32.totalorder %s15, 1
    %p38 = por %p36, %p37
    %p40 = scmp.ne.s32.totalorder %s23, %s39
    %p41 = scmp.eq.s32.totalorder %s15, 0
    %p42 = por %p40, %p41
    %s44 = sadd.s32 %s43, 1
    %p47 = scmp.eq.s32.totalorder %s9, 1
    %p48 = scmp.ne.s32.totalorder %s43, %s45
    %p49 = scmp.eq.s32.totalorder %s9, 0
    %p50 = por %p48, %p49
    %p51 = scmp.ne.s32.totalorder %s43, %s45
    %p52 = scmp.eq.s32.totalorder %s14, 1
    %p53 = por %p51, %p52
    %p54 = scmp.ne.s32.totalorder %s45, %s46
    %p55 = scmp.eq.s32.totalorder %s14, 0
    %p56 = por %p54, %p55
    %p57 = scmp.ne.s32.totalorder %s45, %s46
    %p58 = scmp.eq.s32.totalorder %s15, 1
    %p59 = por %p57, %p58
    %p61 = scmp.ne.s32.totalorder %s46, %s60
    %p62 = scmp.eq.s32.totalorder %s15, 0
    %p63 = por %p61, %p62
    %s65 = sadd.s32 %s64, 1
    %p68 = scmp.eq.s32.totalorder %s9, 1
    %p69 = scmp.ne.s32.totalorder %s64, %s66
    %p70 = scmp.eq.s32.totalorder %s9, 0
    %p71 = por %p69, %p70
    %p72 = scmp.ne.s32.totalorder %s64, %s66
    %p73 = scmp.eq.s32.totalorder %s14, 1
    %p74 = por %p72, %p73
    %p75 = scmp.ne.s32.totalorder %s66, %s67
    %p76 = scmp.eq.s32.totalorder %s14, 0
    %p77 = por %p75, %p76
    %p78 = scmp.ne.s32.totalorder %s66, %s67
    %p79 = scmp.eq.s32.totalorder %s15, 1
    %p80 = por %p78, %p79
    %p82 = scmp.ne.s32.totalorder %s67, %s81
    %p83 = scmp.eq.s32.totalorder %s15, 0
    %p84 = por %p82, %p83
    %s85 = ssub.s32 %s9, %s16
    %p86 = scmp.eq.s32.totalorder %s85, 0
    %s88 = sadd.s32 %s87, 1
    %s89 = scalar_select %p86, %s87, %s88
    %p92 = pneg %p86
    %p93 = scmp.eq.s32.totalorder %s9, 1
    %p94 = por %p92, %p93
    %p95 = scmp.ne.s32.totalorder %s87, %s90
    %p96 = scmp.eq.s32.totalorder %s9, 0
    %p97 = por %p95, %p96
    %p98 = scmp.ne.s32.totalorder %s87, %s90
    %p99 = scmp.eq.s32.totalorder %s14, 1
    %p100 = por %p98, %p99
    %p101 = scmp.ne.s32.totalorder %s90, %s91
    %p102 = scmp.eq.s32.totalorder %s14, 0
    %p103 = por %p101, %p102
    %p104 = scmp.ne.s32.totalorder %s90, %s91
    %p105 = scmp.eq.s32.totalorder %s15, 1
    %p106 = por %p104, %p105
    %p108 = scmp.ne.s32.totalorder %s91, %s107
    %p109 = scmp.eq.s32.totalorder %s15, 0
    %p110 = por %p108, %p109
    %p111 = scmp.le.s32.totalorder 1, %s9
    %p112 = scmp.lt.s32.totalorder %s9, 3
    %p113 = pnand %p111, %p112
    %p114 = pneg %p113
    // Predicated region
    $region9: #{dainet3_forward.5} parent=5 // pred_check
      _
    $region10: #{dainet3_forward.5} parent=5 // pred_check_branch
      %116 = sbr.rel (%p113) target = $region12
    $region11: #{dainet3_forward.5} parent=5 // pred_region
      %s117 = ssub.s32 %s9, 1
      // Predicated region
      $region13: #{dainet3_forward.5} parent=11 // pred_check
        %p118 = pneg %p56
      $region14: #{dainet3_forward.5} parent=11 // pred_check_branch
        %120 = sbr.rel (%p118) target = $region16
      $region15: #{dainet3_forward.5} parent=11 // pred_region
        _
      $region16: #{dainet3_forward.5} parent=11 // pred_fallthru
        _
      // Predicated region
      $region17: #{dainet3_forward.5} parent=11 // pred_check
        %p121 = pneg %p77
      $region18: #{dainet3_forward.5} parent=11 // pred_check_branch
        %123 = sbr.rel (%p121) target = $region20
      $region19: #{dainet3_forward.5} parent=11 // pred_region
        _
      $region20: #{dainet3_forward.5} parent=11 // pred_fallthru
        _
    $region12: #{dainet3_forward.5} parent=5 // pred_fallthru
      _
    %p124 = scmp.lt.s32.totalorder %s9, 2
    // Predicated region
    $region21: #{dainet3_forward.5} parent=5 // pred_check
      %p125 = pneg %p124
    $region22: #{dainet3_forward.5} parent=5 // pred_check_branch
      %127 = sbr.rel (%p125) target = $region24
    $region23: #{dainet3_forward.5} parent=5 // pred_region
      // Predicated region
      $region25: #{dainet3_forward.5} parent=23 // pred_check
        %p128 = pneg %p29
      $region26: #{dainet3_forward.5} parent=23 // pred_check_branch
        %130 = sbr.rel (%p128) target = $region28
      $region27: #{dainet3_forward.5} parent=23 // pred_region
        %p131 = scmp.lt.s32.totalorder %s9, 1
        %s132 = scalar_select %p131, %s9, 1
        %s133 = smul.addr %s132, 8
        %s134 = smul.addr %s133, 8
        %s135 = scalar_lea.vmem %s0, %s134
      $region28: #{dainet3_forward.5} parent=23 // pred_fallthru
        _
    $region24: #{dainet3_forward.5} parent=5 // pred_fallthru
      _
    %p136 = scmp.le.s32.totalorder 1, %s9
    %p137 = scmp.lt.s32.totalorder %s9, 3
    %p138 = pnand %p136, %p137
    %p139 = pneg %p138
    // Predicated region
    $region29: #{dainet3_forward.5} parent=5 // pred_check
      _
    $region30: #{dainet3_forward.5} parent=5 // pred_check_branch
      %141 = sbr.rel (%p138) target = $region32
    $region31: #{dainet3_forward.5} parent=5 // pred_region
      %s142 = ssub.s32 %s9, 1
      %p143 = scmp.lt.s32.totalorder %s14, 1
      %s144 = scalar_select %p143, %s14, 1
      %s145 = smul.addr %s144, 8
      %s146 = smul.addr %s145, 8
      %s147 = scalar_lea.vmem %s0, %s146
      %p148 = pneg %p35
      %p149 = pneg %p32
      %p150 = pneg %p56
      %p151 = pneg %p53
      %p152 = pneg %p77
      %p153 = pneg %p74
      %p154 = pneg %p103
      %p155 = pneg %p100
      %p156 = scmp.lt.s32.totalorder %s14, 1
      %s157 = scalar_select %p156, %s14, 1
      %s158 = smul.addr %s157, 2
      %s159 = smul.addr %s158, 8
      %s160 = scalar_lea.vmem %s3, %s159
      %p161 = scmp.lt.s32.totalorder %s14, 1
      %s162 = scalar_select %p161, %s14, 1
      %s163 = smul.addr %s162, 8
      %s164 = smul.addr %s163, 8
      %s165 = scalar_lea.vmem %s0, %s164
      %p166 = scmp.lt.s32.totalorder %s14, 1
      %s167 = scalar_select %p166, %s14, 1
      %s168 = smul.addr %s167, 2
      %s169 = smul.addr %s168, 8
      %s170 = scalar_lea.vmem %s3, %s169
      %v171 = vld [vmem:[%s165] sm:$0xff]
      %v172 = vld [vmem:[%s1] sm:$0xff]
      %v173 = vld [vmem:[%s1 + $0x8] sm:$0xff]
      %v174 = vld [vmem:[%s1 + $0x10] sm:$0xff]
      %v175 = vld [vmem:[%s1 + $0x18] sm:$0xff]
      %v176 = vld [vmem:[%s1 + $0x20] sm:$0xff]
      %v177 = vld [vmem:[%s1 + $0x28] sm:$0xff]
      %v178 = vld [vmem:[%s1 + $0x30] sm:$0xff]
      %v179 = vld [vmem:[%s1 + $0x38] sm:$0xff]
      %v180 = vld [vmem:[%s1 + $0x40] sm:$0xff]
      %v181 = vld [vmem:[%s1 + $0x48] sm:$0xff]
      %v182 = vld [vmem:[%s1 + $0x50] sm:$0xff]
      %v183 = vld [vmem:[%s1 + $0x58] sm:$0xff]
      %v184 = vld [vmem:[%s1 + $0x60] sm:$0xff]
      %v185 = vld [vmem:[%s1 + $0x68] sm:$0xff]
      %v186 = vld [vmem:[%s1 + $0x70] sm:$0xff]
      %v187 = vld [vmem:[%s1 + $0x78] sm:$0xff]
      %v188 = vld [vmem:[%s1 + $0x80] sm:$0xff]
      %v189 = vld [vmem:[%s1 + $0x88] sm:$0xff]
      %v190 = vld [vmem:[%s1 + $0x90] sm:$0xff]
      %v191 = vld [vmem:[%s1 + $0x98] sm:$0xff]
      %v192 = vld [vmem:[%s1 + $0xa0] sm:$0xff]
      %v193 = vld [vmem:[%s1 + $0xa8] sm:$0xff]
      %v194 = vld [vmem:[%s1 + $0xb0] sm:$0xff]
      %v195 = vld [vmem:[%s1 + $0xb8] sm:$0xff]
      %v196 = vld [vmem:[%s1 + $0xc0] sm:$0xff]
      %v197 = vld [vmem:[%s1 + $0xc8] sm:$0xff]
      %v198 = vld [vmem:[%s1 + $0xd0] sm:$0xf]
      %v199 = vld [vmem:[%s1 + $0xd8] sm:$0xf]
      %s200 = scalar_lea.vmem %s165, 16
      %v201 = vld [vmem:[%s200] sm:$0xff]
      %s202 = scalar_lea.vmem %s1, 224
      %v203 = vld [vmem:[%s202] sm:$0xff]
      %v204 = vld [vmem:[%s202 + $0x8] sm:$0xff]
      %v205 = vld [vmem:[%s202 + $0x10] sm:$0xff]
      %v206 = vld [vmem:[%s202 + $0x18] sm:$0xff]
      %v207 = vld [vmem:[%s202 + $0x20] sm:$0xff]
      %v208 = vld [vmem:[%s202 + $0x28] sm:$0xff]
      %v209 = vld [vmem:[%s202 + $0x30] sm:$0xff]
      %v210 = vld [vmem:[%s202 + $0x38] sm:$0xff]
      %v211 = vld [vmem:[%s202 + $0x40] sm:$0xff]
      %v212 = vld [vmem:[%s202 + $0x48] sm:$0xff]
      %v213 = vld [vmem:[%s202 + $0x50] sm:$0xff]
      %v214 = vld [vmem:[%s202 + $0x58] sm:$0xff]
      %v215 = vld [vmem:[%s202 + $0x60] sm:$0xff]
      %v216 = vld [vmem:[%s202 + $0x68] sm:$0xff]
      %v217 = vld [vmem:[%s202 + $0x70] sm:$0xff]
      %v218 = vld [vmem:[%s202 + $0x78] sm:$0xff]
      %v219 = vld [vmem:[%s202 + $0x80] sm:$0xff]
      %v220 = vld [vmem:[%s202 + $0x88] sm:$0xff]
      %v221 = vld [vmem:[%s202 + $0x90] sm:$0xff]
      %v222 = vld [vmem:[%s202 + $0x98] sm:$0xff]
      %v223 = vld [vmem:[%s202 + $0xa0] sm:$0xff]
      %v224 = vld [vmem:[%s202 + $0xa8] sm:$0xff]
      %v225 = vld [vmem:[%s202 + $0xb0] sm:$0xff]
      %v226 = vld [vmem:[%s202 + $0xb8] sm:$0xff]
      %v227 = vld [vmem:[%s202 + $0xc0] sm:$0xff]
      %v228 = vld [vmem:[%s202 + $0xc8] sm:$0xff]
      %v229 = vld [vmem:[%s202 + $0xd0] sm:$0xf]
      %v230 = vld [vmem:[%s202 + $0xd8] sm:$0xf]
      %vm231 = vcmask 883712
      %v233 = vsel %vm231, %v201, 0
      %vm235 = vcmask 1043456
      %v237 = vsel %vm235, %v229, 0
      %v240 = vsel %vm235, %v230, 0
      %242 = vmatprep.subr.mxu0 %v204
      %243 = vmatpush1.msra.mxu0 %v203
      %244 = vmatprep.subr.mxu0 %v206
      %245 = vmatpush1.msra.mxu0 %v205
      %246 = vmatprep.subr.mxu0 %v208
      %247 = vmatpush1.msra.mxu0 %v207
      %248 = vmatprep.subr.mxu0 %v210
      %249 = vmatpush1.msra.mxu0 %v209
      %250 = vmatprep.subr.mxu0 %v212
      %251 = vmatpush1.msra.mxu0 %v211
      %252 = vmatprep.subr.mxu0 %v214
      %253 = vmatpush1.msra.mxu0 %v213
      %254 = vmatprep.subr.mxu0 %v216
      %255 = vmatpush1.msra.mxu0 %v215
      %256 = vmatprep.subr.mxu0 %v218
      %257 = vmatpush1.msra.mxu0 %v217
      %258 = vmatprep.subr.mxu0 %v220
      %259 = vmatpush1.msra.mxu0 %v219
      %260 = vmatprep.subr.mxu0 %v222
      %261 = vmatpush1.msra.mxu0 %v221
      %262 = vmatprep.subr.mxu0 %v224
      %263 = vmatpush1.msra.mxu0 %v223
      %264 = vmatprep.subr.mxu0 %v226
      %265 = vmatpush1.msra.mxu0 %v225
      %266 = vmatprep.subr.mxu0 %v228
      %267 = vmatpush1.msra.mxu0 %v227
      %268 = vmatprep.subr.mxu0 %v240
      %269 = vmatpush1.msra.mxu0 %v237
      %270 = vmatprep.subr.mxu0 0.0
      %271 = vmatpush1.msra.mxu0 0.0
      %272 = vmatprep.subr.mxu0 0.0
      %273 = vmatpush1.msra.mxu0 0.0
      %274 = vmatprep.subr.mxu0 0.0
      %275 = vmatpush1.msra.mxu0 0.0
      %276 = vmatprep.subr.mxu0 0.0
      %277 = vmatpush1.msra.mxu0 0.0
      %278 = vmatprep.subr.mxu0 0.0
      %279 = vmatpush1.msra.mxu0 0.0
      %280 = vmatprep.subr.mxu0 0.0
      %281 = vmatpush1.msra.mxu0 0.0
      %282 = vmatprep.subr.mxu0 0.0
      %283 = vmatpush1.msra.mxu0 0.0
      %284 = vmatprep.subr.mxu0 0.0
      %285 = vmatpush1.msra.mxu0 0.0
      %286 = vmatprep.subr.mxu0 0.0
      %287 = vmatpush1.msra.mxu0 0.0
      %288 = vmatprep.subr.mxu0 0.0
      %289 = vmatpush1.msra.mxu0 0.0
      %290 = vmatprep.subr.mxu0 0.0
      %291 = vmatpush1.msra.mxu0 0.0
      %292 = vmatprep.subr.mxu0 0.0
      %293 = vmatpush1.msra.mxu0 0.0
      %294 = vmatprep.subr.mxu0 0.0
      %295 = vmatpush1.msra.mxu0 0.0
      %296 = vmatprep.subr.mxu0 0.0
      %297 = vmatpush1.msra.mxu0 0.0
      %298 = vmatprep.subr.mxu0 0.0
      %299 = vmatpush1.msra.mxu0 0.0
      %300 = vmatprep.subr.mxu0 0.0
      %301 = vmatpush1.msra.mxu0 0.0
      %302 = vmatprep.subr.mxu0 0.0
      %303 = vmatpush1.msra.mxu0 0.0
      %304 = vmatprep.subr.mxu0 0.0
      %305 = vmatpush1.msra.mxu0 0.0
      %306 = vmatprep.mubr.f32.mxu0 0.0
      %307 = vmatmul.mubr.f32.gmra.mrb[0].mxu0 %v233
      %v308 = vpop.f32.mrb[0].mxu0
      %v309 = vadd.f32 0.0, %v308
      %v310 = vpop.f32.mrb[0].mxu0
      %v311 = vadd.f32 0.0, %v310
      %312 = vdwg.mxu0
      %v314 = vsel %vm231, %v171, 0
      %v317 = vsel %vm235, %v198, 0
      %v320 = vsel %vm235, %v199, 0
      %322 = vmatprep.subr.mxu0 %v173
      %323 = vmatpush1.msra.mxu0 %v172
      %324 = vmatprep.subr.mxu0 %v175
      %325 = vmatpush1.msra.mxu0 %v174
      %326 = vmatprep.subr.mxu0 %v177
      %327 = vmatpush1.msra.mxu0 %v176
      %328 = vmatprep.subr.mxu0 %v179
      %329 = vmatpush1.msra.mxu0 %v178
      %330 = vmatprep.subr.mxu0 %v181
      %331 = vmatpush1.msra.mxu0 %v180
      %332 = vmatprep.subr.mxu0 %v183
      %333 = vmatpush1.msra.mxu0 %v182
      %334 = vmatprep.subr.mxu0 %v185
      %335 = vmatpush1.msra.mxu0 %v184
      %336 = vmatprep.subr.mxu0 %v187
      %337 = vmatpush1.msra.mxu0 %v186
      %338 = vmatprep.subr.mxu0 %v189
      %339 = vmatpush1.msra.mxu0 %v188
      %340 = vmatprep.subr.mxu0 %v191
      %341 = vmatpush1.msra.mxu0 %v190
      %342 = vmatprep.subr.mxu0 %v193
      %343 = vmatpush1.msra.mxu0 %v192
      %344 = vmatprep.subr.mxu0 %v195
      %345 = vmatpush1.msra.mxu0 %v194
      %346 = vmatprep.subr.mxu0 %v197
      %347 = vmatpush1.msra.mxu0 %v196
      %348 = vmatprep.subr.mxu0 %v320
      %349 = vmatpush1.msra.mxu0 %v317
      %350 = vmatprep.subr.mxu0 0.0
      %351 = vmatpush1.msra.mxu0 0.0
      %352 = vmatprep.subr.mxu0 0.0
      %353 = vmatpush1.msra.mxu0 0.0
      %354 = vmatprep.subr.mxu0 0.0
      %355 = vmatpush1.msra.mxu0 0.0
      %356 = vmatprep.subr.mxu0 0.0
      %357 = vmatpush1.msra.mxu0 0.0
      %358 = vmatprep.subr.mxu0 0.0
      %359 = vmatpush1.msra.mxu0 0.0
      %360 = vmatprep.subr.mxu0 0.0
      %361 = vmatpush1.msra.mxu0 0.0
      %362 = vmatprep.subr.mxu0 0.0
      %363 = vmatpush1.msra.mxu0 0.0
      %364 = vmatprep.subr.mxu0 0.0
      %365 = vmatpush1.msra.mxu0 0.0
      %366 = vmatprep.subr.mxu0 0.0
      %367 = vmatpush1.msra.mxu0 0.0
      %368 = vmatprep.subr.mxu0 0.0
      %369 = vmatpush1.msra.mxu0 0.0
      %370 = vmatprep.subr.mxu0 0.0
      %371 = vmatpush1.msra.mxu0 0.0
      %372 = vmatprep.subr.mxu0 0.0
      %373 = vmatpush1.msra.mxu0 0.0
      %374 = vmatprep.subr.mxu0 0.0
      %375 = vmatpush1.msra.mxu0 0.0
      %376 = vmatprep.subr.mxu0 0.0
      %377 = vmatpush1.msra.mxu0 0.0
      %378 = vmatprep.subr.mxu0 0.0
      %379 = vmatpush1.msra.mxu0 0.0
      %380 = vmatprep.subr.mxu0 0.0
      %381 = vmatpush1.msra.mxu0 0.0
      %382 = vmatprep.subr.mxu0 0.0
      %383 = vmatpush1.msra.mxu0 0.0
      %384 = vmatprep.subr.mxu0 0.0
      %385 = vmatpush1.msra.mxu0 0.0
      %386 = vmatprep.mubr.f32.mxu0 0.0
      %387 = vmatmul.mubr.f32.gmra.mrb[0].mxu0 %v314
      %v388 = vpop.f32.mrb[0].mxu0
      %v389 = vadd.f32 %v309, %v388
      %v390 = vpop.f32.mrb[0].mxu0
      %v391 = vadd.f32 %v311, %v390
      %392 = vdwg.mxu0
      %s393 = scalar_lea.vmem %s165, 32
      %v394 = vld [vmem:[%s393] sm:$0xff]
      %s395 = scalar_lea.vmem %s1, 448
      %v396 = vld [vmem:[%s395] sm:$0xff]
      %v397 = vld [vmem:[%s395 + $0x8] sm:$0xff]
      %v398 = vld [vmem:[%s395 + $0x10] sm:$0xff]
      %v399 = vld [vmem:[%s395 + $0x18] sm:$0xff]
      %v400 = vld [vmem:[%s395 + $0x20] sm:$0xff]
      %v401 = vld [vmem:[%s395 + $0x28] sm:$0xff]
      %v402 = vld [vmem:[%s395 + $0x30] sm:$0xff]
      %v403 = vld [vmem:[%s395 + $0x38] sm:$0xff]
      %v404 = vld [vmem:[%s395 + $0x40] sm:$0xff]
      %v405 = vld [vmem:[%s395 + $0x48] sm:$0xff]
      %v406 = vld [vmem:[%s395 + $0x50] sm:$0xff]
      %v407 = vld [vmem:[%s395 + $0x58] sm:$0xff]
      %v408 = vld [vmem:[%s395 + $0x60] sm:$0xff]
      %v409 = vld [vmem:[%s395 + $0x68] sm:$0xff]
      %v410 = vld [vmem:[%s395 + $0x70] sm:$0xff]
      %v411 = vld [vmem:[%s395 + $0x78] sm:$0xff]
      %v412 = vld [vmem:[%s395 + $0x80] sm:$0xff]
      %v413 = vld [vmem:[%s395 + $0x88] sm:$0xff]
      %v414 = vld [vmem:[%s395 + $0x90] sm:$0xff]
      %v415 = vld [vmem:[%s395 + $0x98] sm:$0xff]
      %v416 = vld [vmem:[%s395 + $0xa0] sm:$0xff]
      %v417 = vld [vmem:[%s395 + $0xa8] sm:$0xff]
      %v418 = vld [vmem:[%s395 + $0xb0] sm:$0xff]
      %v419 = vld [vmem:[%s395 + $0xb8] sm:$0xff]
      %v420 = vld [vmem:[%s395 + $0xc0] sm:$0xff]
      %v421 = vld [vmem:[%s395 + $0xc8] sm:$0xff]
      %v422 = vld [vmem:[%s395 + $0xd0] sm:$0xf]
      %v423 = vld [vmem:[%s395 + $0xd8] sm:$0xf]
      %v425 = vsel %vm231, %v394, 0
      %v428 = vsel %vm235, %v422, 0
      %v431 = vsel %vm235, %v423, 0
      %433 = vmatprep.subr.mxu0 %v397
      %434 = vmatpush1.msra.mxu0 %v396
      %435 = vmatprep.subr.mxu0 %v399
      %436 = vmatpush1.msra.mxu0 %v398
      %437 = vmatprep.subr.mxu0 %v401
      %438 = vmatpush1.msra.mxu0 %v400
      %439 = vmatprep.subr.mxu0 %v403
      %440 = vmatpush1.msra.mxu0 %v402
      %441 = vmatprep.subr.mxu0 %v405
      %442 = vmatpush1.msra.mxu0 %v404
      %443 = vmatprep.subr.mxu0 %v407
      %444 = vmatpush1.msra.mxu0 %v406
      %445 = vmatprep.subr.mxu0 %v409
      %446 = vmatpush1.msra.mxu0 %v408
      %447 = vmatprep.subr.mxu0 %v411
      %448 = vmatpush1.msra.mxu0 %v410
      %449 = vmatprep.subr.mxu0 %v413
      %450 = vmatpush1.msra.mxu0 %v412
      %451 = vmatprep.subr.mxu0 %v415
      %452 = vmatpush1.msra.mxu0 %v414
      %453 = vmatprep.subr.mxu0 %v417
      %454 = vmatpush1.msra.mxu0 %v416
      %455 = vmatprep.subr.mxu0 %v419
      %456 = vmatpush1.msra.mxu0 %v418
      %457 = vmatprep.subr.mxu0 %v421
      %458 = vmatpush1.msra.mxu0 %v420
      %459 = vmatprep.subr.mxu0 %v431
      %460 = vmatpush1.msra.mxu0 %v428
      %461 = vmatprep.subr.mxu0 0.0
      %462 = vmatpush1.msra.mxu0 0.0
      %463 = vmatprep.subr.mxu0 0.0
      %464 = vmatpush1.msra.mxu0 0.0
      %465 = vmatprep.subr.mxu0 0.0
      %466 = vmatpush1.msra.mxu0 0.0
      %467 = vmatprep.subr.mxu0 0.0
      %468 = vmatpush1.msra.mxu0 0.0
      %469 = vmatprep.subr.mxu0 0.0
      %470 = vmatpush1.msra.mxu0 0.0
      %471 = vmatprep.subr.mxu0 0.0
      %472 = vmatpush1.msra.mxu0 0.0
      %473 = vmatprep.subr.mxu0 0.0
      %474 = vmatpush1.msra.mxu0 0.0
      %475 = vmatprep.subr.mxu0 0.0
      %476 = vmatpush1.msra.mxu0 0.0
      %477 = vmatprep.subr.mxu0 0.0
      %478 = vmatpush1.msra.mxu0 0.0
      %479 = vmatprep.subr.mxu0 0.0
      %480 = vmatpush1.msra.mxu0 0.0
      %481 = vmatprep.subr.mxu0 0.0
      %482 = vmatpush1.msra.mxu0 0.0
      %483 = vmatprep.subr.mxu0 0.0
      %484 = vmatpush1.msra.mxu0 0.0
      %485 = vmatprep.subr.mxu0 0.0
      %486 = vmatpush1.msra.mxu0 0.0
      %487 = vmatprep.subr.mxu0 0.0
      %488 = vmatpush1.msra.mxu0 0.0
      %489 = vmatprep.subr.mxu0 0.0
      %490 = vmatpush1.msra.mxu0 0.0
      %491 = vmatprep.subr.mxu0 0.0
      %492 = vmatpush1.msra.mxu0 0.0
      %493 = vmatprep.subr.mxu0 0.0
      %494 = vmatpush1.msra.mxu0 0.0
      %495 = vmatprep.subr.mxu0 0.0
      %496 = vmatpush1.msra.mxu0 0.0
      %497 = vmatprep.mubr.f32.mxu0 0.0
      %498 = vmatmul.mubr.f32.gmra.mrb[0].mxu0 %v425
      %v499 = vpop.f32.mrb[0].mxu0
      %v500 = vadd.f32 0.0, %v499
      %v501 = vpop.f32.mrb[0].mxu0
      %v502 = vadd.f32 0.0, %v501
      %503 = vdwg.mxu0
      %v504 = vadd.f32 %v389, %v500
      %v505 = vadd.f32 %v391, %v502
      %s506 = scalar_lea.vmem %s165, 48
      %v507 = vld [vmem:[%s506] sm:$0xff]
      %s508 = scalar_lea.vmem %s1, 672
      %v509 = vld [vmem:[%s508] sm:$0xff]
      %v510 = vld [vmem:[%s508 + $0x8] sm:$0xff]
      %v511 = vld [vmem:[%s508 + $0x10] sm:$0xff]
      %v512 = vld [vmem:[%s508 + $0x18] sm:$0xff]
      %v513 = vld [vmem:[%s508 + $0x20] sm:$0xff]
      %v514 = vld [vmem:[%s508 + $0x28] sm:$0xff]
      %v515 = vld [vmem:[%s508 + $0x30] sm:$0xff]
      %v516 = vld [vmem:[%s508 + $0x38] sm:$0xff]
      %v517 = vld [vmem:[%s508 + $0x40] sm:$0xff]
      %v518 = vld [vmem:[%s508 + $0x48] sm:$0xff]
      %v519 = vld [vmem:[%s508 + $0x50] sm:$0xff]
      %v520 = vld [vmem:[%s508 + $0x58] sm:$0xff]
      %v521 = vld [vmem:[%s508 + $0x60] sm:$0xff]
      %v522 = vld [vmem:[%s508 + $0x68] sm:$0xff]
      %v523 = vld [vmem:[%s508 + $0x70] sm:$0xff]
      %v524 = vld [vmem:[%s508 + $0x78] sm:$0xff]
      %v525 = vld [vmem:[%s508 + $0x80] sm:$0xff]
      %v526 = vld [vmem:[%s508 + $0x88] sm:$0xff]
      %v527 = vld [vmem:[%s508 + $0x90] sm:$0xff]
      %v528 = vld [vmem:[%s508 + $0x98] sm:$0xff]
      %v529 = vld [vmem:[%s508 + $0xa0] sm:$0xff]
      %v530 = vld [vmem:[%s508 + $0xa8] sm:$0xff]
      %v531 = vld [vmem:[%s508 + $0xb0] sm:$0xff]
      %v532 = vld [vmem:[%s508 + $0xb8] sm:$0xff]
      %v533 = vld [vmem:[%s508 + $0xc0] sm:$0xff]
      %v534 = vld [vmem:[%s508 + $0xc8] sm:$0xff]
      %v535 = vld [vmem:[%s508 + $0xd0] sm:$0xf]
      %v536 = vld [vmem:[%s508 + $0xd8] sm:$0xf]
      %v538 = vsel %vm231, %v507, 0
      %v541 = vsel %vm235, %v535, 0
      %v544 = vsel %vm235, %v536, 0
      %546 = vmatprep.subr.mxu0 %v510
      %547 = vmatpush1.msra.mxu0 %v509
      %548 = vmatprep.subr.mxu0 %v512
      %549 = vmatpush1.msra.mxu0 %v511
      %550 = vmatprep.subr.mxu0 %v514
      %551 = vmatpush1.msra.mxu0 %v513
      %552 = vmatprep.subr.mxu0 %v516
      %553 = vmatpush1.msra.mxu0 %v515
      %554 = vmatprep.subr.mxu0 %v518
      %555 = vmatpush1.msra.mxu0 %v517
      %556 = vmatprep.subr.mxu0 %v520
      %557 = vmatpush1.msra.mxu0 %v519
      %558 = vmatprep.subr.mxu0 %v522
      %559 = vmatpush1.msra.mxu0 %v521
      %560 = vmatprep.subr.mxu0 %v524
      %561 = vmatpush1.msra.mxu0 %v523
      %562 = vmatprep.subr.mxu0 %v526
      %563 = vmatpush1.msra.mxu0 %v525
      %564 = vmatprep.subr.mxu0 %v528
      %565 = vmatpush1.msra.mxu0 %v527
      %566 = vmatprep.subr.mxu0 %v530
      %567 = vmatpush1.msra.mxu0 %v529
      %568 = vmatprep.subr.mxu0 %v532
      %569 = vmatpush1.msra.mxu0 %v531
      %570 = vmatprep.subr.mxu0 %v534
      %571 = vmatpush1.msra.mxu0 %v533
      %572 = vmatprep.subr.mxu0 %v544
      %573 = vmatpush1.msra.mxu0 %v541
      %574 = vmatprep.subr.mxu0 0.0
      %575 = vmatpush1.msra.mxu0 0.0
      %576 = vmatprep.subr.mxu0 0.0
      %577 = vmatpush1.msra.mxu0 0.0
      %578 = vmatprep.subr.mxu0 0.0
      %579 = vmatpush1.msra.mxu0 0.0
      %580 = vmatprep.subr.mxu0 0.0
      %581 = vmatpush1.msra.mxu0 0.0
      %582 = vmatprep.subr.mxu0 0.0
      %583 = vmatpush1.msra.mxu0 0.0
      %584 = vmatprep.subr.mxu0 0.0
      %585 = vmatpush1.msra.mxu0 0.0
      %586 = vmatprep.subr.mxu0 0.0
      %587 = vmatpush1.msra.mxu0 0.0
      %588 = vmatprep.subr.mxu0 0.0
      %589 = vmatpush1.msra.mxu0 0.0
      %590 = vmatprep.subr.mxu0 0.0
      %591 = vmatpush1.msra.mxu0 0.0
      %592 = vmatprep.subr.mxu0 0.0
      %593 = vmatpush1.msra.mxu0 0.0
      %594 = vmatprep.subr.mxu0 0.0
      %595 = vmatpush1.msra.mxu0 0.0
      %596 = vmatprep.subr.mxu0 0.0
      %597 = vmatpush1.msra.mxu0 0.0
      %598 = vmatprep.subr.mxu0 0.0
      %599 = vmatpush1.msra.mxu0 0.0
      %600 = vmatprep.subr.mxu0 0.0
      %601 = vmatpush1.msra.mxu0 0.0
      %602 = vmatprep.subr.mxu0 0.0
      %603 = vmatpush1.msra.mxu0 0.0
      %604 = vmatprep.subr.mxu0 0.0
      %605 = vmatpush1.msra.mxu0 0.0
      %606 = vmatprep.subr.mxu0 0.0
      %607 = vmatpush1.msra.mxu0 0.0
      %608 = vmatprep.subr.mxu0 0.0
      %609 = vmatpush1.msra.mxu0 0.0
      %610 = vmatprep.mubr.f32.mxu0 0.0
      %611 = vmatmul.mubr.f32.gmra.mrb[0].mxu0 %v538
      %v612 = vpop.f32.mrb[0].mxu0
      %v613 = vadd.f32 0.0, %v612
      %v614 = vpop.f32.mrb[0].mxu0
      %v615 = vadd.f32 0.0, %v614
      %616 = vdwg.mxu0
      %v617 = vadd.f32 %v504, %v613
      %v618 = vadd.f32 %v505, %v615
      %v619 = vld [vmem:[%s165 + $0x1] sm:$0xff]
      %s620 = scalar_lea.vmem %s1, 896
      %v621 = vld [vmem:[%s620] sm:$0xff]
      %v622 = vld [vmem:[%s620 + $0x8] sm:$0xff]
      %v623 = vld [vmem:[%s620 + $0x10] sm:$0xff]
      %v624 = vld [vmem:[%s620 + $0x18] sm:$0xff]
      %v625 = vld [vmem:[%s620 + $0x20] sm:$0xff]
      %v626 = vld [vmem:[%s620 + $0x28] sm:$0xff]
      %v627 = vld [vmem:[%s620 + $0x30] sm:$0xff]
      %v628 = vld [vmem:[%s620 + $0x38] sm:$0xff]
      %v629 = vld [vmem:[%s620 + $0x40] sm:$0xff]
      %v630 = vld [vmem:[%s620 + $0x48] sm:$0xff]
      %v631 = vld [vmem:[%s620 + $0x50] sm:$0xff]
      %v632 = vld [vmem:[%s620 + $0x58] sm:$0xff]
      %v633 = vld [vmem:[%s620 + $0x60] sm:$0xff]
      %v634 = vld [vmem:[%s620 + $0x68] sm:$0xff]
      %v635 = vld [vmem:[%s620 + $0x70] sm:$0xff]
      %v636 = vld [vmem:[%s620 + $0x78] sm:$0xff]
      %v637 = vld [vmem:[%s620 + $0x80] sm:$0xff]
      %v638 = vld [vmem:[%s620 + $0x88] sm:$0xff]
      %v639 = vld [vmem:[%s620 + $0x90] sm:$0xff]
      %v640 = vld [vmem:[%s620 + $0x98] sm:$0xff]
      %v641 = vld [vmem:[%s620 + $0xa0] sm:$0xff]
      %v642 = vld [vmem:[%s620 + $0xa8] sm:$0xff]
      %v643 = vld [vmem:[%s620 + $0xb0] sm:$0xff]
      %v644 = vld [vmem:[%s620 + $0xb8] sm:$0xff]
      %v645 = vld [vmem:[%s620 + $0xc0] sm:$0xff]
      %v646 = vld [vmem:[%s620 + $0xc8] sm:$0xff]
      %v647 = vld [vmem:[%s620 + $0xd0] sm:$0xf]
      %v648 = vld [vmem:[%s620 + $0xd8] sm:$0xf]
      %v650 = vsel %vm231, %v619, 0
      %v653 = vsel %vm235, %v647, 0
      %v656 = vsel %vm235, %v648, 0
      %658 = vmatprep.subr.mxu0 %v622
      %659 = vmatpush1.msra.mxu0 %v621
      %660 = vmatprep.subr.mxu0 %v624
      %661 = vmatpush1.msra.mxu0 %v623
      %662 = vmatprep.subr.mxu0 %v626
      %663 = vmatpush1.msra.mxu0 %v625
      %664 = vmatprep.subr.mxu0 %v628
      %665 = vmatpush1.msra.mxu0 %v627
      %666 = vmatprep.subr.mxu0 %v630
      %667 = vmatpush1.msra.mxu0 %v629
      %668 = vmatprep.subr.mxu0 %v632
      %669 = vmatpush1.msra.mxu0 %v631
      %670 = vmatprep.subr.mxu0 %v634
      %671 = vmatpush1.msra.mxu0 %v633
      %672 = vmatprep.subr.mxu0 %v636
      %673 = vmatpush1.msra.mxu0 %v635
      %674 = vmatprep.subr.mxu0 %v638
      %675 = vmatpush1.msra.mxu0 %v637
      %676 = vmatprep.subr.mxu0 %v640
      %677 = vmatpush1.msra.mxu0 %v639
      %678 = vmatprep.subr.mxu0 %v642
      %679 = vmatpush1.msra.mxu0 %v641
      %680 = vmatprep.subr.mxu0 %v644
      %681 = vmatpush1.msra.mxu0 %v643
      %682 = vmatprep.subr.mxu0 %v646
      %683 = vmatpush1.msra.mxu0 %v645
      %684 = vmatprep.subr.mxu0 %v656
      %685 = vmatpush1.msra.mxu0 %v653
      %686 = vmatprep.subr.mxu0 0.0
      %687 = vmatpush1.msra.mxu0 0.0
      %688 = vmatprep.subr.mxu0 0.0
      %689 = vmatpush1.msra.mxu0 0.0
      %690 = vmatprep.subr.mxu0 0.0
      %691 = vmatpush1.msra.mxu0 0.0
      %692 = vmatprep.subr.mxu0 0.0
      %693 = vmatpush1.msra.mxu0 0.0
      %694 = vmatprep.subr.mxu0 0.0
      %695 = vmatpush1.msra.mxu0 0.0
      %696 = vmatprep.subr.mxu0 0.0
      %697 = vmatpush1.msra.mxu0 0.0
      %698 = vmatprep.subr.mxu0 0.0
      %699 = vmatpush1.msra.mxu0 0.0
      %700 = vmatprep.subr.mxu0 0.0
      %701 = vmatpush1.msra.mxu0 0.0
      %702 = vmatprep.subr.mxu0 0.0
      %703 = vmatpush1.msra.mxu0 0.0
      %704 = vmatprep.subr.mxu0 0.0
      %705 = vmatpush1.msra.mxu0 0.0
      %706 = vmatprep.subr.mxu0 0.0
      %707 = vmatpush1.msra.mxu0 0.0
      %708 = vmatprep.subr.mxu0 0.0
      %709 = vmatpush1.msra.mxu0 0.0
      %710 = vmatprep.subr.mxu0 0.0
      %711 = vmatpush1.msra.mxu0 0.0
      %712 = vmatprep.subr.mxu0 0.0
      %713 = vmatpush1.msra.mxu0 0.0
      %714 = vmatprep.subr.mxu0 0.0
      %715 = vmatpush1.msra.mxu0 0.0
      %716 = vmatprep.subr.mxu0 0.0
      %717 = vmatpush1.msra.mxu0 0.0
      %718 = vmatprep.subr.mxu0 0.0
      %719 = vmatpush1.msra.mxu0 0.0
      %720 = vmatprep.subr.mxu0 0.0
      %721 = vmatpush1.msra.mxu0 0.0
      %722 = vmatprep.mubr.f32.mxu0 0.0
      %723 = vmatmul.mubr.f32.gmra.mrb[0].mxu0 %v650
      %v724 = vpop.f32.mrb[0].mxu0
      %v725 = vadd.f32 0.0, %v724
      %v726 = vpop.f32.mrb[0].mxu0
      %v727 = vadd.f32 0.0, %v726
      %728 = vdwg.mxu0
      %v729 = vadd.f32 %v617, %v725
      %v730 = vadd.f32 %v618, %v727
      %v731 = vld [vmem:[%s200 + $0x1] sm:$0xff]
      %s732 = scalar_lea.vmem %s1, 1120
      %v733 = vld [vmem:[%s732] sm:$0xff]
      %v734 = vld [vmem:[%s732 + $0x8] sm:$0xff]
      %v735 = vld [vmem:[%s732 + $0x10] sm:$0xff]
      %v736 = vld [vmem:[%s732 + $0x18] sm:$0xff]
      %v737 = vld [vmem:[%s732 + $0x20] sm:$0xff]
      %v738 = vld [vmem:[%s732 + $0x28] sm:$0xff]
      %v739 = vld [vmem:[%s732 + $0x30] sm:$0xff]
      %v740 = vld [vmem:[%s732 + $0x38] sm:$0xff]
      %v741 = vld [vmem:[%s732 + $0x40] sm:$0xff]
      %v742 = vld [vmem:[%s732 + $0x48] sm:$0xff]
      %v743 = vld [vmem:[%s732 + $0x50] sm:$0xff]
      %v744 = vld [vmem:[%s732 + $0x58] sm:$0xff]
      %v745 = vld [vmem:[%s732 + $0x60] sm:$0xff]
      %v746 = vld [vmem:[%s732 + $0x68] sm:$0xff]
      %v747 = vld [vmem:[%s732 + $0x70] sm:$0xff]
      %v748 = vld [vmem:[%s732 + $0x78] sm:$0xff]
      %v749 = vld [vmem:[%s732 + $0x80] sm:$0xff]
      %v750 = vld [vmem:[%s732 + $0x88] sm:$0xff]
      %v751 = vld [vmem:[%s732 + $0x90] sm:$0xff]
      %v752 = vld [vmem:[%s732 + $0x98] sm:$0xff]
      %v753 = vld [vmem:[%s732 + $0xa0] sm:$0xff]
      %v754 = vld [vmem:[%s732 + $0xa8] sm:$0xff]
      %v755 = vld [vmem:[%s732 + $0xb0] sm:$0xff]
      %v756 = vld [vmem:[%s732 + $0xb8] sm:$0xff]
      %v757 = vld [vmem:[%s732 + $0xc0] sm:$0xff]
      %v758 = vld [vmem:[%s732 + $0xc8] sm:$0xff]
      %v759 = vld [vmem:[%s732 + $0xd0] sm:$0xf]
      %v760 = vld [vmem:[%s732 + $0xd8] sm:$0xf]
      %v762 = vsel %vm231, %v731, 0
      %v765 = vsel %vm235, %v759, 0
      %v768 = vsel %vm235, %v760, 0
      %770 = vmatprep.subr.mxu0 %v734
      %771 = vmatpush1.msra.mxu0 %v733
      %772 = vmatprep.subr.mxu0 %v736
      %773 = vmatpush1.msra.mxu0 %v735
      %774 = vmatprep.subr.mxu0 %v738
      %775 = vmatpush1.msra.mxu0 %v737
      %776 = vmatprep.subr.mxu0 %v740
      %777 = vmatpush1.msra.mxu0 %v739
      %778 = vmatprep.subr.mxu0 %v742
      %779 = vmatpush1.msra.mxu0 %v741
      %780 = vmatprep.subr.mxu0 %v744
      %781 = vmatpush1.msra.mxu0 %v743
      %782 = vmatprep.subr.mxu0 %v746
      %783 = vmatpush1.msra.mxu0 %v745
      %784 = vmatprep.subr.mxu0 %v748
      %785 = vmatpush1.msra.mxu0 %v747
      %786 = vmatprep.subr.mxu0 %v750
      %787 = vmatpush1.msra.mxu0 %v749
      %788 = vmatprep.subr.mxu0 %v752
      %789 = vmatpush1.msra.mxu0 %v751
      %790 = vmatprep.subr.mxu0 %v754
      %791 = vmatpush1.msra.mxu0 %v753
      %792 = vmatprep.subr.mxu0 %v756
      %793 = vmatpush1.msra.mxu0 %v755
      %794 = vmatprep.subr.mxu0 %v758
      %795 = vmatpush1.msra.mxu0 %v757
      %796 = vmatprep.subr.mxu0 %v768
      %797 = vmatpush1.msra.mxu0 %v765
      %798 = vmatprep.subr.mxu0 0.0
      %799 = vmatpush1.msra.mxu0 0.0
      %800 = vmatprep.subr.mxu0 0.0
      %801 = vmatpush1.msra.mxu0 0.0
      %802 = vmatprep.subr.mxu0 0.0
      %803 = vmatpush1.msra.mxu0 0.0
      %804 = vmatprep.subr.mxu0 0.0
      %805 = vmatpush1.msra.mxu0 0.0
      %806 = vmatprep.subr.mxu0 0.0
      %807 = vmatpush1.msra.mxu0 0.0
      %808 = vmatprep.subr.mxu0 0.0
      %809 = vmatpush1.msra.mxu0 0.0
      %810 = vmatprep.subr.mxu0 0.0
      %811 = vmatpush1.msra.mxu0 0.0
      %812 = vmatprep.subr.mxu0 0.0
      %813 = vmatpush1.msra.mxu0 0.0
      %814 = vmatprep.subr.mxu0 0.0
      %815 = vmatpush1.msra.mxu0 0.0
      %816 = vmatprep.subr.mxu0 0.0
      %817 = vmatpush1.msra.mxu0 0.0
      %818 = vmatprep.subr.mxu0 0.0
      %819 = vmatpush1.msra.mxu0 0.0
      %820 = vmatprep.subr.mxu0 0.0
      %821 = vmatpush1.msra.mxu0 0.0
      %822 = vmatprep.subr.mxu0 0.0
      %823 = vmatpush1.msra.mxu0 0.0
      %824 = vmatprep.subr.mxu0 0.0
      %825 = vmatpush1.msra.mxu0 0.0
      %826 = vmatprep.subr.mxu0 0.0
      %827 = vmatpush1.msra.mxu0 0.0
      %828 = vmatprep.subr.mxu0 0.0
      %829 = vmatpush1.msra.mxu0 0.0
      %830 = vmatprep.subr.mxu0 0.0
      %831 = vmatpush1.msra.mxu0 0.0
      %832 = vmatprep.subr.mxu0 0.0
      %833 = vmatpush1.msra.mxu0 0.0
      %834 = vmatprep.mubr.f32.mxu0 0.0
      %835 = vmatmul.mubr.f32.gmra.mrb[0].mxu0 %v762
      %v836 = vpop.f32.mrb[0].mxu0
      %v837 = vadd.f32 0.0, %v836
      %v838 = vpop.f32.mrb[0].mxu0
      %v839 = vadd.f32 0.0, %v838
      %840 = vdwg.mxu0
      %v841 = vadd.f32 %v729, %v837
      %v842 = vadd.f32 %v730, %v839
      %s843 = scalar_lea.vmem %s1, 1344
      %v844 = vld [vmem:[%s843] sm:$0xff]
      %v845 = vld [vmem:[%s843 + $0x8] sm:$0xff]
      %v846 = vld [vmem:[%s843 + $0x10] sm:$0xff]
      %v847 = vld [vmem:[%s843 + $0x18] sm:$0xff]
      %v848 = vld [vmem:[%s843 + $0x20] sm:$0xff]
      %v849 = vld [vmem:[%s843 + $0x28] sm:$0xff]
      %v850 = vld [vmem:[%s843 + $0x30] sm:$0xff]
      %v851 = vld [vmem:[%s843 + $0x38] sm:$0xff]
      %v852 = vld [vmem:[%s843 + $0x40] sm:$0xff]
      %v853 = vld [vmem:[%s843 + $0x48] sm:$0xff]
      %v854 = vld [vmem:[%s843 + $0x50] sm:$0xff]
      %v855 = vld [vmem:[%s843 + $0x58] sm:$0xff]
      %v856 = vld [vmem:[%s843 + $0x60] sm:$0xff]
      %v857 = vld [vmem:[%s843 + $0x68] sm:$0xff]
      %v858 = vld [vmem:[%s843 + $0x70] sm:$0xff]
      %v859 = vld [vmem:[%s843 + $0x78] sm:$0xff]
      %v860 = vld [vmem:[%s843 + $0x80] sm:$0xff]
      %v861 = vld [vmem:[%s843 + $0x88] sm:$0xff]
      %v862 = vld [vmem:[%s843 + $0x90] sm:$0xff]
      %v863 = vld [vmem:[%s843 + $0x98] sm:$0xff]
      %v864 = vld [vmem:[%s843 + $0xa0] sm:$0xff]
      %v865 = vld [vmem:[%s843 + $0xa8] sm:$0xff]
      %v866 = vld [vmem:[%s843 + $0xb0] sm:$0xff]
      %v867 = vld [vmem:[%s843 + $0xb8] sm:$0xff]
      %v868 = vld [vmem:[%s843 + $0xc0] sm:$0xff]
      %v869 = vld [vmem:[%s843 + $0xc8] sm:$0xff]
      %v870 = vld [vmem:[%s843 + $0xd0] sm:$0xf]
      %v871 = vld [vmem:[%s843 + $0xd8] sm:$0xf]
      %s872 = scalar_lea.vmem %s1, 1568
      %v873 = vld [vmem:[%s872] sm:$0xff]
      %v874 = vld [vmem:[%s872 + $0x8] sm:$0xff]
      %v875 = vld [vmem:[%s872 + $0x10] sm:$0xff]
      %v876 = vld [vmem:[%s872 + $0x18] sm:$0xff]
      %v877 = vld [vmem:[%s872 + $0x20] sm:$0xff]
      %v878 = vld [vmem:[%s872 + $0x28] sm:$0xff]
      %v879 = vld [vmem:[%s872 + $0x30] sm:$0xff]
      %v880 = vld [vmem:[%s872 + $0x38] sm:$0xff]
      %v881 = vld [vmem:[%s872 + $0x40] sm:$0xff]
      %v882 = vld [vmem:[%s872 + $0x48] sm:$0xff]
      %v883 = vld [vmem:[%s872 + $0x50] sm:$0xff]
      %v884 = vld [vmem:[%s872 + $0x58] sm:$0xff]
      %v885 = vld [vmem:[%s872 + $0x60] sm:$0xff]
      %v886 = vld [vmem:[%s872 + $0x68] sm:$0xff]
      %v887 = vld [vmem:[%s872 + $0x70] sm:$0xff]
      %v888 = vld [vmem:[%s872 + $0x78] sm:$0xff]
      %v889 = vld [vmem:[%s872 + $0x80] sm:$0xff]
      %v890 = vld [vmem:[%s872 + $0x88] sm:$0xff]
      %v891 = vld [vmem:[%s872 + $0x90] sm:$0xff]
      %v892 = vld [vmem:[%s872 + $0x98] sm:$0xff]
      %v893 = vld [vmem:[%s872 + $0xa0] sm:$0xff]
      %v894 = vld [vmem:[%s872 + $0xa8] sm:$0xff]
      %v895 = vld [vmem:[%s872 + $0xb0] sm:$0xff]
      %v896 = vld [vmem:[%s872 + $0xb8] sm:$0xff]
      %v897 = vld [vmem:[%s872 + $0xc0] sm:$0xff]
      %v898 = vld [vmem:[%s872 + $0xc8] sm:$0xff]
      %v899 = vld [vmem:[%s872 + $0xd0] sm:$0xf]
      %v900 = vld [vmem:[%s872 + $0xd8] sm:$0xf]
      %v902 = vsel %vm235, %v899, 0
      %v905 = vsel %vm235, %v900, 0
      %907 = vmatprep.subr.mxu0 %v874
      %908 = vmatpush1.msra.mxu0 %v873
      %909 = vmatprep.subr.mxu0 %v876
      %910 = vmatpush1.msra.mxu0 %v875
      %911 = vmatprep.subr.mxu0 %v878
      %912 = vmatpush1.msra.mxu0 %v877
      %913 = vmatprep.subr.mxu0 %v880
      %914 = vmatpush1.msra.mxu0 %v879
      %915 = vmatprep.subr.mxu0 %v882
      %916 = vmatpush1.msra.mxu0 %v881
      %917 = vmatprep.subr.mxu0 %v884
      %918 = vmatpush1.msra.mxu0 %v883
      %919 = vmatprep.subr.mxu0 %v886
      %920 = vmatpush1.msra.mxu0 %v885
      %921 = vmatprep.subr.mxu0 %v888
      %922 = vmatpush1.msra.mxu0 %v887
      %923 = vmatprep.subr.mxu0 %v890
      %924 = vmatpush1.msra.mxu0 %v889
      %925 = vmatprep.subr.mxu0 %v892
      %926 = vmatpush1.msra.mxu0 %v891
      %927 = vmatprep.subr.mxu0 %v894
      %928 = vmatpush1.msra.mxu0 %v893
      %929 = vmatprep.subr.mxu0 %v896
      %930 = vmatpush1.msra.mxu0 %v895
      %931 = vmatprep.subr.mxu0 %v898
      %932 = vmatpush1.msra.mxu0 %v897
      %933 = vmatprep.subr.mxu0 %v905
      %934 = vmatpush1.msra.mxu0 %v902
      %935 = vmatprep.subr.mxu0 0.0
      %936 = vmatpush1.msra.mxu0 0.0
      %937 = vmatprep.subr.mxu0 0.0
      %938 = vmatpush1.msra.mxu0 0.0
      %939 = vmatprep.subr.mxu0 0.0
      %940 = vmatpush1.msra.mxu0 0.0
      %941 = vmatprep.subr.mxu0 0.0
      %942 = vmatpush1.msra.mxu0 0.0
      %943 = vmatprep.subr.mxu0 0.0
      %944 = vmatpush1.msra.mxu0 0.0
      %945 = vmatprep.subr.mxu0 0.0
      %946 = vmatpush1.msra.mxu0 0.0
      %947 = vmatprep.subr.mxu0 0.0
      %948 = vmatpush1.msra.mxu0 0.0
      %949 = vmatprep.subr.mxu0 0.0
      %950 = vmatpush1.msra.mxu0 0.0
      %951 = vmatprep.subr.mxu0 0.0
      %952 = vmatpush1.msra.mxu0 0.0
      %953 = vmatprep.subr.mxu0 0.0
      %954 = vmatpush1.msra.mxu0 0.0
      %955 = vmatprep.subr.mxu0 0.0
      %956 = vmatpush1.msra.mxu0 0.0
      %957 = vmatprep.subr.mxu0 0.0
      %958 = vmatpush1.msra.mxu0 0.0
      %959 = vmatprep.subr.mxu0 0.0
      %960 = vmatpush1.msra.mxu0 0.0
      %961 = vmatprep.subr.mxu0 0.0
      %962 = vmatpush1.msra.mxu0 0.0
      %963 = vmatprep.subr.mxu0 0.0
      %964 = vmatpush1.msra.mxu0 0.0
      %965 = vmatprep.subr.mxu0 0.0
      %966 = vmatpush1.msra.mxu0 0.0
      %967 = vmatprep.subr.mxu0 0.0
      %968 = vmatpush1.msra.mxu0 0.0
      %969 = vmatprep.subr.mxu0 0.0
      %970 = vmatpush1.msra.mxu0 0.0
      %971 = vmatprep.mubr.f32.mxu0 0.0
      %972 = vmatmul.mubr.f32.gmra.mrb[0].mxu0 %v233
      %v973 = vpop.f32.mrb[0].mxu0
      %v974 = vadd.f32 0.0, %v973
      %v975 = vpop.f32.mrb[0].mxu0
      %v976 = vadd.f32 0.0, %v975
      %977 = vdwg.mxu0
      %v979 = vsel %vm235, %v870, 0
      %v982 = vsel %vm235, %v871, 0
      %984 = vmatprep.subr.mxu0 %v845
      %985 = vmatpush1.msra.mxu0 %v844
      %986 = vmatprep.subr.mxu0 %v847
      %987 = vmatpush1.msra.mxu0 %v846
      %988 = vmatprep.subr.mxu0 %v849
      %989 = vmatpush1.msra.mxu0 %v848
      %990 = vmatprep.subr.mxu0 %v851
      %991 = vmatpush1.msra.mxu0 %v850
      %992 = vmatprep.subr.mxu0 %v853
      %993 = vmatpush1.msra.mxu0 %v852
      %994 = vmatprep.subr.mxu0 %v855
      %995 = vmatpush1.msra.mxu0 %v854
      %996 = vmatprep.subr.mxu0 %v857
      %997 = vmatpush1.msra.mxu0 %v856
      %998 = vmatprep.subr.mxu0 %v859
      %999 = vmatpush1.msra.mxu0 %v858
      %1000 = vmatprep.subr.mxu0 %v861
      %1001 = vmatpush1.msra.mxu0 %v860
      %1002 = vmatprep.subr.mxu0 %v863
      %1003 = vmatpush1.msra.mxu0 %v862
      %1004 = vmatprep.subr.mxu0 %v865
      %1005 = vmatpush1.msra.mxu0 %v864
      %1006 = vmatprep.subr.mxu0 %v867
      %1007 = vmatpush1.msra.mxu0 %v866
      %1008 = vmatprep.subr.mxu0 %v869
      %1009 = vmatpush1.msra.mxu0 %v868
      %1010 = vmatprep.subr.mxu0 %v982
      %1011 = vmatpush1.msra.mxu0 %v979
      %1012 = vmatprep.subr.mxu0 0.0
      %1013 = vmatpush1.msra.mxu0 0.0
      %1014 = vmatprep.subr.mxu0 0.0
      %1015 = vmatpush1.msra.mxu0 0.0
      %1016 = vmatprep.subr.mxu0 0.0
      %1017 = vmatpush1.msra.mxu0 0.0
      %1018 = vmatprep.subr.mxu0 0.0
      %1019 = vmatpush1.msra.mxu0 0.0
      %1020 = vmatprep.subr.mxu0 0.0
      %1021 = vmatpush1.msra.mxu0 0.0
      %1022 = vmatprep.subr.mxu0 0.0
      %1023 = vmatpush1.msra.mxu0 0.0
      %1024 = vmatprep.subr.mxu0 0.0
      %1025 = vmatpush1.msra.mxu0 0.0
      %1026 = vmatprep.subr.mxu0 0.0
      %1027 = vmatpush1.msra.mxu0 0.0
      %1028 = vmatprep.subr.mxu0 0.0
      %1029 = vmatpush1.msra.mxu0 0.0
      %1030 = vmatprep.subr.mxu0 0.0
      %1031 = vmatpush1.msra.mxu0 0.0
      %1032 = vmatprep.subr.mxu0 0.0
      %1033 = vmatpush1.msra.mxu0 0.0
      %1034 = vmatprep.subr.mxu0 0.0
      %1035 = vmatpush1.msra.mxu0 0.0
      %1036 = vmatprep.subr.mxu0 0.0
      %1037 = vmatpush1.msra.mxu0 0.0
      %1038 = vmatprep.subr.mxu0 0.0
      %1039 = vmatpush1.msra.mxu0 0.0
      %1040 = vmatprep.subr.mxu0 0.0
      %1041 = vmatpush1.msra.mxu0 0.0
      %1042 = vmatprep.subr.mxu0 0.0
      %1043 = vmatpush1.msra.mxu0 0.0
      %1044 = vmatprep.subr.mxu0 0.0
      %1045 = vmatpush1.msra.mxu0 0.0
      %1046 = vmatprep.subr.mxu0 0.0
      %1047 = vmatpush1.msra.mxu0 0.0
      %1048 = vmatprep.mubr.f32.mxu0 0.0
      %1049 = vmatmul.mubr.f32.gmra.mrb[0].mxu0 %v314
      %v1050 = vpop.f32.mrb[0].mxu0
      %v1051 = vadd.f32 %v974, %v1050
      %v1052 = vpop.f32.mrb[0].mxu0
      %v1053 = vadd.f32 %v976, %v1052
      %1054 = vdwg.mxu0
      %s1055 = scalar_lea.vmem %s1, 1792
      %v1056 = vld [vmem:[%s1055] sm:$0xff]
      %v1057 = vld [vmem:[%s1055 + $0x8] sm:$0xff]
      %v1058 = vld [vmem:[%s1055 + $0x10] sm:$0xff]
      %v1059 = vld [vmem:[%s1055 + $0x18] sm:$0xff]
      %v1060 = vld [vmem:[%s1055 + $0x20] sm:$0xff]
      %v1061 = vld [vmem:[%s1055 + $0x28] sm:$0xff]
      %v1062 = vld [vmem:[%s1055 + $0x30] sm:$0xff]
      %v1063 = vld [vmem:[%s1055 + $0x38] sm:$0xff]
      %v1064 = vld [vmem:[%s1055 + $0x40] sm:$0xff]
      %v1065 = vld [vmem:[%s1055 + $0x48] sm:$0xff]
      %v1066 = vld [vmem:[%s1055 + $0x50] sm:$0xff]
      %v1067 = vld [vmem:[%s1055 + $0x58] sm:$0xff]
      %v1068 = vld [vmem:[%s1055 + $0x60] sm:$0xff]
      %v1069 = vld [vmem:[%s1055 + $0x68] sm:$0xff]
      %v1070 = vld [vmem:[%s1055 + $0x70] sm:$0xff]
      %v1071 = vld [vmem:[%s1055 + $0x78] sm:$0xff]
      %v1072 = vld [vmem:[%s1055 + $0x80] sm:$0xff]
      %v1073 = vld [vmem:[%s1055 + $0x88] sm:$0xff]
      %v1074 = vld [vmem:[%s1055 + $0x90] sm:$0xff]
      %v1075 = vld [vmem:[%s1055 + $0x98] sm:$0xff]
      %v1076 = vld [vmem:[%s1055 + $0xa0] sm:$0xff]
      %v1077 = vld [vmem:[%s1055 + $0xa8] sm:$0xff]
      %v1078 = vld [vmem:[%s1055 + $0xb0] sm:$0xff]
      %v1079 = vld [vmem:[%s1055 + $0xb8] sm:$0xff]
      %v1080 = vld [vmem:[%s1055 + $0xc0] sm:$0xff]
      %v1081 = vld [vmem:[%s1055 + $0xc8] sm:$0xff]
      %v1082 = vld [vmem:[%s1055 + $0xd0] sm:$0xf]
      %v1083 = vld [vmem:[%s1055 + $0xd8] sm:$0xf]
      %v1085 = vsel %vm235, %v1082, 0
      %v1088 = vsel %vm235, %v1083, 0
      %1090 = vmatprep.subr.mxu0 %v1057
      %1091 = vmatpush1.msra.mxu0 %v1056
      %1092 = vmatprep.subr.mxu0 %v1059
      %1093 = vmatpush1.msra.mxu0 %v1058
      %1094 = vmatprep.subr.mxu0 %v1061
      %1095 = vmatpush1.msra.mxu0 %v1060
      %1096 = vmatprep.subr.mxu0 %v1063
      %1097 = vmatpush1.msra.mxu0 %v1062
      %1098 = vmatprep.subr.mxu0 %v1065
      %1099 = vmatpush1.msra.mxu0 %v1064
      %1100 = vmatprep.subr.mxu0 %v1067
      %1101 = vmatpush1.msra.mxu0 %v1066
      %1102 = vmatprep.subr.mxu0 %v1069
      %1103 = vmatpush1.msra.mxu0 %v1068
      %1104 = vmatprep.subr.mxu0 %v1071
      %1105 = vmatpush1.msra.mxu0 %v1070
      %1106 = vmatprep.subr.mxu0 %v1073
      %1107 = vmatpush1.msra.mxu0 %v1072
      %1108 = vmatprep.subr.mxu0 %v1075
      %1109 = vmatpush1.msra.mxu0 %v1074
      %1110 = vmatprep.subr.mxu0 %v1077
      %1111 = vmatpush1.msra.mxu0 %v1076
      %1112 = vmatprep.subr.mxu0 %v1079
      %1113 = vmatpush1.msra.mxu0 %v1078
      %1114 = vmatprep.subr.mxu0 %v1081
      %1115 = vmatpush1.msra.mxu0 %v1080
      %1116 = vmatprep.subr.mxu0 %v1088
      %1117 = vmatpush1.msra.mxu0 %v1085
      %1118 = vmatprep.subr.mxu0 0.0
      %1119 = vmatpush1.msra.mxu0 0.0
      %1120 = vmatprep.subr.mxu0 0.0
      %1121 = vmatpush1.msra.mxu0 0.0
      %1122 = vmatprep.subr.mxu0 0.0
      %1123 = vmatpush1.msra.mxu0 0.0
      %1124 = vmatprep.subr.mxu0 0.0
      %1125 = vmatpush1.msra.mxu0 0.0
      %1126 = vmatprep.subr.mxu0 0.0
      %1127 = vmatpush1.msra.mxu0 0.0
      %1128 = vmatprep.subr.mxu0 0.0
      %1129 = vmatpush1.msra.mxu0 0.0
      %1130 = vmatprep.subr.mxu0 0.0
      %1131 = vmatpush1.msra.mxu0 0.0
      %1132 = vmatprep.subr.mxu0 0.0
      %1133 = vmatpush1.msra.mxu0 0.0
      %1134 = vmatprep.subr.mxu0 0.0
      %1135 = vmatpush1.msra.mxu0 0.0
      %1136 = vmatprep.subr.mxu0 0.0
      %1137 = vmatpush1.msra.mxu0 0.0
      %1138 = vmatprep.subr.mxu0 0.0
      %1139 = vmatpush1.msra.mxu0 0.0
      %1140 = vmatprep.subr.mxu0 0.0
      %1141 = vmatpush1.msra.mxu0 0.0
      %1142 = vmatprep.subr.mxu0 0.0
      %1143 = vmatpush1.msra.mxu0 0.0
      %1144 = vmatprep.subr.mxu0 0.0
      %1145 = vmatpush1.msra.mxu0 0.0
      %1146 = vmatprep.subr.mxu0 0.0
      %1147 = vmatpush1.msra.mxu0 0.0
      %1148 = vmatprep.subr.mxu0 0.0
      %1149 = vmatpush1.msra.mxu0 0.0
      %1150 = vmatprep.subr.mxu0 0.0
      %1151 = vmatpush1.msra.mxu0 0.0
      %1152 = vmatprep.subr.mxu0 0.0
      %1153 = vmatpush1.msra.mxu0 0.0
      %1154 = vmatprep.mubr.f32.mxu0 0.0
      %1155 = vmatmul.mubr.f32.gmra.mrb[0].mxu0 %v425
      %v1156 = vpop.f32.mrb[0].mxu0
      %v1157 = vadd.f32 0.0, %v1156
      %v1158 = vpop.f32.mrb[0].mxu0
      %v1159 = vadd.f32 0.0, %v1158
      %1160 = vdwg.mxu0
      %v1161 = vadd.f32 %v1051, %v1157
      %v1162 = vadd.f32 %v1053, %v1159
      %s1163 = scalar_lea.vmem %s1, 2016
      %v1164 = vld [vmem:[%s1163] sm:$0xff]
      %v1165 = vld [vmem:[%s1163 + $0x8] sm:$0xff]
      %v1166 = vld [vmem:[%s1163 + $0x10] sm:$0xff]
      %v1167 = vld [vmem:[%s1163 + $0x18] sm:$0xff]
      %v1168 = vld [vmem:[%s1163 + $0x20] sm:$0xff]
      %v1169 = vld [vmem:[%s1163 + $0x28] sm:$0xff]
      %v1170 = vld [vmem:[%s1163 + $0x30] sm:$0xff]
      %v1171 = vld [vmem:[%s1163 + $0x38] sm:$0xff]
      %v1172 = vld [vmem:[%s1163 + $0x40] sm:$0xff]
      %v1173 = vld [vmem:[%s1163 + $0x48] sm:$0xff]
      %v1174 = vld [vmem:[%s1163 + $0x50] sm:$0xff]
      %v1175 = vld [vmem:[%s1163 + $0x58] sm:$0xff]
      %v1176 = vld [vmem:[%s1163 + $0x60] sm:$0xff]
      %v1177 = vld [vmem:[%s1163 + $0x68] sm:$0xff]
      %v1178 = vld [vmem:[%s1163 + $0x70] sm:$0xff]
      %v1179 = vld [vmem:[%s1163 + $0x78] sm:$0xff]
      %v1180 = vld [vmem:[%s1163 + $0x80] sm:$0xff]
      %v1181 = vld [vmem:[%s1163 + $0x88] sm:$0xff]
      %v1182 = vld [vmem:[%s1163 + $0x90] sm:$0xff]
      %v1183 = vld [vmem:[%s1163 + $0x98] sm:$0xff]
      %v1184 = vld [vmem:[%s1163 + $0xa0] sm:$0xff]
      %v1185 = vld [vmem:[%s1163 + $0xa8] sm:$0xff]
      %v1186 = vld [vmem:[%s1163 + $0xb0] sm:$0xff]
      %v1187 = vld [vmem:[%s1163 + $0xb8] sm:$0xff]
      %v1188 = vld [vmem:[%s1163 + $0xc0] sm:$0xff]
      %v1189 = vld [vmem:[%s1163 + $0xc8] sm:$0xff]
      %v1190 = vld [vmem:[%s1163 + $0xd0] sm:$0xf]
      %v1191 = vld [vmem:[%s1163 + $0xd8] sm:$0xf]
      %v1193 = vsel %vm235, %v1190, 0
      %v1196 = vsel %vm235, %v1191, 0
      %1198 = vmatprep.subr.mxu0 %v1165
      %1199 = vmatpush1.msra.mxu0 %v1164
      %1200 = vmatprep.subr.mxu0 %v1167
      %1201 = vmatpush1.msra.mxu0 %v1166
      %1202 = vmatprep.subr.mxu0 %v1169
      %1203 = vmatpush1.msra.mxu0 %v1168
      %1204 = vmatprep.subr.mxu0 %v1171
      %1205 = vmatpush1.msra.mxu0 %v1170
      %1206 = vmatprep.subr.mxu0 %v1173
      %1207 = vmatpush1.msra.mxu0 %v1172
      %1208 = vmatprep.subr.mxu0 %v1175
      %1209 = vmatpush1.msra.mxu0 %v1174
      %1210 = vmatprep.subr.mxu0 %v1177
      %1211 = vmatpush1.msra.mxu0 %v1176
      %1212 = vmatprep.subr.mxu0 %v1179
      %1213 = vmatpush1.msra.mxu0 %v1178
      %1214 = vmatprep.subr.mxu0 %v1181
      %1215 = vmatpush1.msra.mxu0 %v1180
      %1216 = vmatprep.subr.mxu0 %v1183
      %1217 = vmatpush1.msra.mxu0 %v1182
      %1218 = vmatprep.subr.mxu0 %v1185
      %1219 = vmatpush1.msra.mxu0 %v1184
      %1220 = vmatprep.subr.mxu0 %v1187
      %1221 = vmatpush1.msra.mxu0 %v1186
      %1222 = vmatprep.subr.mxu0 %v1189
      %1223 = vmatpush1.msra.mxu0 %v1188
      %1224 = vmatprep.subr.mxu0 %v1196
      %1225 = vmatpush1.msra.mxu0 %v1193
      %1226 = vmatprep.subr.mxu0 0.0
      %1227 = vmatpush1.msra.mxu0 0.0
      %1228 = vmatprep.subr.mxu0 0.0
      %1229 = vmatpush1.msra.mxu0 0.0
      %1230 = vmatprep.subr.mxu0 0.0
      %1231 = vmatpush1.msra.mxu0 0.0
      %1232 = vmatprep.subr.mxu0 0.0
      %1233 = vmatpush1.msra.mxu0 0.0
      %1234 = vmatprep.subr.mxu0 0.0
      %1235 = vmatpush1.msra.mxu0 0.0
      %1236 = vmatprep.subr.mxu0 0.0
      %1237 = vmatpush1.msra.mxu0 0.0
      %1238 = vmatprep.subr.mxu0 0.0
      %1239 = vmatpush1.msra.mxu0 0.0
      %1240 = vmatprep.subr.mxu0 0.0
      %1241 = vmatpush1.msra.mxu0 0.0
      %1242 = vmatprep.subr.mxu0 0.0
      %1243 = vmatpush1.msra.mxu0 0.0
      %1244 = vmatprep.subr.mxu0 0.0
      %1245 = vmatpush1.msra.mxu0 0.0
      %1246 = vmatprep.subr.mxu0 0.0
      %1247 = vmatpush1.msra.mxu0 0.0
      %1248 = vmatprep.subr.mxu0 0.0
      %1249 = vmatpush1.msra.mxu0 0.0
      %1250 = vmatprep.subr.mxu0 0.0
      %1251 = vmatpush1.msra.mxu0 0.0
      %1252 = vmatprep.subr.mxu0 0.0
      %1253 = vmatpush1.msra.mxu0 0.0
      %1254 = vmatprep.subr.mxu0 0.0
      %1255 = vmatpush1.msra.mxu0 0.0
      %1256 = vmatprep.subr.mxu0 0.0
      %1257 = vmatpush1.msra.mxu0 0.0
      %1258 = vmatprep.subr.mxu0 0.0
      %1259 = vmatpush1.msra.mxu0 0.0
      %1260 = vmatprep.subr.mxu0 0.0
      %1261 = vmatpush1.msra.mxu0 0.0
      %1262 = vmatprep.mubr.f32.mxu0 0.0
      %1263 = vmatmul.mubr.f32.gmra.mrb[0].mxu0 %v538
      %v1264 = vpop.f32.mrb[0].mxu0
      %v1265 = vadd.f32 0.0, %v1264
      %v1266 = vpop.f32.mrb[0].mxu0
      %v1267 = vadd.f32 0.0, %v1266
      %1268 = vdwg.mxu0
      %v1269 = vadd.f32 %v1161, %v1265
      %v1270 = vadd.f32 %v1162, %v1267
      %s1271 = scalar_lea.vmem %s1, 2240
      %v1272 = vld [vmem:[%s1271] sm:$0xff]
      %v1273 = vld [vmem:[%s1271 + $0x8] sm:$0xff]
      %v1274 = vld [vmem:[%s1271 + $0x10] sm:$0xff]
      %v1275 = vld [vmem:[%s1271 + $0x18] sm:$0xff]
      %v1276 = vld [vmem:[%s1271 + $0x20] sm:$0xff]
      %v1277 = vld [vmem:[%s1271 + $0x28] sm:$0xff]
      %v1278 = vld [vmem:[%s1271 + $0x30] sm:$0xff]
      %v1279 = vld [vmem:[%s1271 + $0x38] sm:$0xff]
      %v1280 = vld [vmem:[%s1271 + $0x40] sm:$0xff]
      %v1281 = vld [vmem:[%s1271 + $0x48] sm:$0xff]
      %v1282 = vld [vmem:[%s1271 + $0x50] sm:$0xff]
      %v1283 = vld [vmem:[%s1271 + $0x58] sm:$0xff]
      %v1284 = vld [vmem:[%s1271 + $0x60] sm:$0xff]
      %v1285 = vld [vmem:[%s1271 + $0x68] sm:$0xff]
      %v1286 = vld [vmem:[%s1271 + $0x70] sm:$0xff]
      %v1287 = vld [vmem:[%s1271 + $0x78] sm:$0xff]
      %v1288 = vld [vmem:[%s1271 + $0x80] sm:$0xff]
      %v1289 = vld [vmem:[%s1271 + $0x88] sm:$0xff]
      %v1290 = vld [vmem:[%s1271 + $0x90] sm:$0xff]
      %v1291 = vld [vmem:[%s1271 + $0x98] sm:$0xff]
      %v1292 = vld [vmem:[%s1271 + $0xa0] sm:$0xff]
      %v1293 = vld [vmem:[%s1271 + $0xa8] sm:$0xff]
      %v1294 = vld [vmem:[%s1271 + $0xb0] sm:$0xff]
      %v1295 = vld [vmem:[%s1271 + $0xb8] sm:$0xff]
      %v1296 = vld [vmem:[%s1271 + $0xc0] sm:$0xff]
      %v1297 = vld [vmem:[%s1271 + $0xc8] sm:$0xff]
      %v1298 = vld [vmem:[%s1271 + $0xd0] sm:$0xf]
      %v1299 = vld [vmem:[%s1271 + $0xd8] sm:$0xf]
      %v1301 = vsel %vm235, %v1298, 0
      %v1304 = vsel %vm235, %v1299, 0
      %1306 = vmatprep.subr.mxu0 %v1273
      %1307 = vmatpush1.msra.mxu0 %v1272
      %1308 = vmatprep.subr.mxu0 %v1275
      %1309 = vmatpush1.msra.mxu0 %v1274
      %1310 = vmatprep.subr.mxu0 %v1277
      %1311 = vmatpush1.msra.mxu0 %v1276
      %1312 = vmatprep.subr.mxu0 %v1279
      %1313 = vmatpush1.msra.mxu0 %v1278
      %1314 = vmatprep.subr.mxu0 %v1281
      %1315 = vmatpush1.msra.mxu0 %v1280
      %1316 = vmatprep.subr.mxu0 %v1283
      %1317 = vmatpush1.msra.mxu0 %v1282
      %1318 = vmatprep.subr.mxu0 %v1285
      %1319 = vmatpush1.msra.mxu0 %v1284
      %1320 = vmatprep.subr.mxu0 %v1287
      %1321 = vmatpush1.msra.mxu0 %v1286
      %1322 = vmatprep.subr.mxu0 %v1289
      %1323 = vmatpush1.msra.mxu0 %v1288
      %1324 = vmatprep.subr.mxu0 %v1291
      %1325 = vmatpush1.msra.mxu0 %v1290
      %1326 = vmatprep.subr.mxu0 %v1293
      %1327 = vmatpush1.msra.mxu0 %v1292
      %1328 = vmatprep.subr.mxu0 %v1295
      %1329 = vmatpush1.msra.mxu0 %v1294
      %1330 = vmatprep.subr.mxu0 %v1297
      %1331 = vmatpush1.msra.mxu0 %v1296
      %1332 = vmatprep.subr.mxu0 %v1304
      %1333 = vmatpush1.msra.mxu0 %v1301
      %1334 = vmatprep.subr.mxu0 0.0
      %1335 = vmatpush1.msra.mxu0 0.0
      %1336 = vmatprep.subr.mxu0 0.0
      %1337 = vmatpush1.msra.mxu0 0.0
      %1338 = vmatprep.subr.mxu0 0.0
      %1339 = vmatpush1.msra.mxu0 0.0
      %1340 = vmatprep.subr.mxu0 0.0
      %1341 = vmatpush1.msra.mxu0 0.0
      %1342 = vmatprep.subr.mxu0 0.0
      %1343 = vmatpush1.msra.mxu0 0.0
      %1344 = vmatprep.subr.mxu0 0.0
      %1345 = vmatpush1.msra.mxu0 0.0
      %1346 = vmatprep.subr.mxu0 0.0
      %1347 = vmatpush1.msra.mxu0 0.0
      %1348 = vmatprep.subr.mxu0 0.0
      %1349 = vmatpush1.msra.mxu0 0.0
      %1350 = vmatprep.subr.mxu0 0.0
      %1351 = vmatpush1.msra.mxu0 0.0
      %1352 = vmatprep.subr.mxu0 0.0
      %1353 = vmatpush1.msra.mxu0 0.0
      %1354 = vmatprep.subr.mxu0 0.0
      %1355 = vmatpush1.msra.mxu0 0.0
      %1356 = vmatprep.subr.mxu0 0.0
      %1357 = vmatpush1.msra.mxu0 0.0
      %1358 = vmatprep.subr.mxu0 0.0
      %1359 = vmatpush1.msra.mxu0 0.0
      %1360 = vmatprep.subr.mxu0 0.0
      %1361 = vmatpush1.msra.mxu0 0.0
      %1362 = vmatprep.subr.mxu0 0.0
      %1363 = vmatpush1.msra.mxu0 0.0
      %1364 = vmatprep.subr.mxu0 0.0
      %1365 = vmatpush1.msra.mxu0 0.0
      %1366 = vmatprep.subr.mxu0 0.0
      %1367 = vmatpush1.msra.mxu0 0.0
      %1368 = vmatprep.subr.mxu0 0.0
      %1369 = vmatpush1.msra.mxu0 0.0
      %1370 = vmatprep.mubr.f32.mxu0 0.0
      %1371 = vmatmul.mubr.f32.gmra.mrb[0].mxu0 %v650
      %v1372 = vpop.f32.mrb[0].mxu0
      %v1373 = vadd.f32 0.0, %v1372
      %v1374 = vpop.f32.mrb[0].mxu0
      %v1375 = vadd.f32 0.0, %v1374
      %1376 = vdwg.mxu0
      %v1377 = vadd.f32 %v1269, %v1373
      %v1378 = vadd.f32 %v1270, %v1375
      %s1379 = scalar_lea.vmem %s1, 2464
      %v1380 = vld [vmem:[%s1379] sm:$0xff]
      %v1381 = vld [vmem:[%s1379 + $0x8] sm:$0xff]
      %v1382 = vld [vmem:[%s1379 + $0x10] sm:$0xff]
      %v1383 = vld [vmem:[%s1379 + $0x18] sm:$0xff]
      %v1384 = vld [vmem:[%s1379 + $0x20] sm:$0xff]
      %v1385 = vld [vmem:[%s1379 + $0x28] sm:$0xff]
      %v1386 = vld [vmem:[%s1379 + $0x30] sm:$0xff]
      %v1387 = vld [vmem:[%s1379 + $0x38] sm:$0xff]
      %v1388 = vld [vmem:[%s1379 + $0x40] sm:$0xff]
      %v1389 = vld [vmem:[%s1379 + $0x48] sm:$0xff]
      %v1390 = vld [vmem:[%s1379 + $0x50] sm:$0xff]
      %v1391 = vld [vmem:[%s1379 + $0x58] sm:$0xff]
      %v1392 = vld [vmem:[%s1379 + $0x60] sm:$0xff]
      %v1393 = vld [vmem:[%s1379 + $0x68] sm:$0xff]
      %v1394 = vld [vmem:[%s1379 + $0x70] sm:$0xff]
      %v1395 = vld [vmem:[%s1379 + $0x78] sm:$0xff]
      %v1396 = vld [vmem:[%s1379 + $0x80] sm:$0xff]
      %v1397 = vld [vmem:[%s1379 + $0x88] sm:$0xff]
      %v1398 = vld [vmem:[%s1379 + $0x90] sm:$0xff]
      %v1399 = vld [vmem:[%s1379 + $0x98] sm:$0xff]
      %v1400 = vld [vmem:[%s1379 + $0xa0] sm:$0xff]
      %v1401 = vld [vmem:[%s1379 + $0xa8] sm:$0xff]
      %v1402 = vld [vmem:[%s1379 + $0xb0] sm:$0xff]
      %v1403 = vld [vmem:[%s1379 + $0xb8] sm:$0xff]
      %v1404 = vld [vmem:[%s1379 + $0xc0] sm:$0xff]
      %v1405 = vld [vmem:[%s1379 + $0xc8] sm:$0xff]
      %v1406 = vld [vmem:[%s1379 + $0xd0] sm:$0xf]
      %v1407 = vld [vmem:[%s1379 + $0xd8] sm:$0xf]
      %v1409 = vsel %vm235, %v1406, 0
      %v1412 = vsel %vm235, %v1407, 0
      %1414 = vmatprep.subr.mxu0 %v1381
      %1415 = vmatpush1.msra.mxu0 %v1380
      %1416 = vmatprep.subr.mxu0 %v1383
      %1417 = vmatpush1.msra.mxu0 %v1382
      %1418 = vmatprep.subr.mxu0 %v1385
      %1419 = vmatpush1.msra.mxu0 %v1384
      %1420 = vmatprep.subr.mxu0 %v1387
      %1421 = vmatpush1.msra.mxu0 %v1386
      %1422 = vmatprep.subr.mxu0 %v1389
      %1423 = vmatpush1.msra.mxu0 %v1388
      %1424 = vmatprep.subr.mxu0 %v1391
      %1425 = vmatpush1.msra.mxu0 %v1390
      %1426 = vmatprep.subr.mxu0 %v1393
      %1427 = vmatpush1.msra.mxu0 %v1392
      %1428 = vmatprep.subr.mxu0 %v1395
      %1429 = vmatpush1.msra.mxu0 %v1394
      %1430 = vmatprep.subr.mxu0 %v1397
      %1431 = vmatpush1.msra.mxu0 %v1396
      %1432 = vmatprep.subr.mxu0 %v1399
      %1433 = vmatpush1.msra.mxu0 %v1398
      %1434 = vmatprep.subr.mxu0 %v1401
      %1435 = vmatpush1.msra.mxu0 %v1400
      %1436 = vmatprep.subr.mxu0 %v1403
      %1437 = vmatpush1.msra.mxu0 %v1402
      %1438 = vmatprep.subr.mxu0 %v1405
      %1439 = vmatpush1.msra.mxu0 %v1404
      %1440 = vmatprep.subr.mxu0 %v1412
      %1441 = vmatpush1.msra.mxu0 %v1409
      %1442 = vmatprep.subr.mxu0 0.0
      %1443 = vmatpush1.msra.mxu0 0.0
      %1444 = vmatprep.subr.mxu0 0.0
      %1445 = vmatpush1.msra.mxu0 0.0
      %1446 = vmatprep.subr.mxu0 0.0
      %1447 = vmatpush1.msra.mxu0 0.0
      %1448 = vmatprep.subr.mxu0 0.0
      %1449 = vmatpush1.msra.mxu0 0.0
      %1450 = vmatprep.subr.mxu0 0.0
      %1451 = vmatpush1.msra.mxu0 0.0
      %1452 = vmatprep.subr.mxu0 0.0
      %1453 = vmatpush1.msra.mxu0 0.0
      %1454 = vmatprep.subr.mxu0 0.0
      %1455 = vmatpush1.msra.mxu0 0.0
      %1456 = vmatprep.subr.mxu0 0.0
      %1457 = vmatpush1.msra.mxu0 0.0
      %1458 = vmatprep.subr.mxu0 0.0
      %1459 = vmatpush1.msra.mxu0 0.0
      %1460 = vmatprep.subr.mxu0 0.0
      %1461 = vmatpush1.msra.mxu0 0.0
      %1462 = vmatprep.subr.mxu0 0.0
      %1463 = vmatpush1.msra.mxu0 0.0
      %1464 = vmatprep.subr.mxu0 0.0
      %1465 = vmatpush1.msra.mxu0 0.0
      %1466 = vmatprep.subr.mxu0 0.0
      %1467 = vmatpush1.msra.mxu0 0.0
      %1468 = vmatprep.subr.mxu0 0.0
      %1469 = vmatpush1.msra.mxu0 0.0
      %1470 = vmatprep.subr.mxu0 0.0
      %1471 = vmatpush1.msra.mxu0 0.0
      %1472 = vmatprep.subr.mxu0 0.0
      %1473 = vmatpush1.msra.mxu0 0.0
      %1474 = vmatprep.subr.mxu0 0.0
      %1475 = vmatpush1.msra.mxu0 0.0
      %1476 = vmatprep.subr.mxu0 0.0
      %1477 = vmatpush1.msra.mxu0 0.0
      %1478 = vmatprep.mubr.f32.mxu0 0.0
      %1479 = vmatmul.mubr.f32.gmra.mrb[0].mxu0 %v762
      %v1480 = vpop.f32.mrb[0].mxu0
      %v1481 = vadd.f32 0.0, %v1480
      %v1482 = vpop.f32.mrb[0].mxu0
      %v1483 = vadd.f32 0.0, %v1482
      %1484 = vdwg.mxu0
      %v1485 = vadd.f32 %v1377, %v1481
      %v1486 = vadd.f32 %v1378, %v1483
      %v1487 = vmax.f32 %v841, %v1485
      %v1488 = vmax.f32 %v842, %v1486
      %1489 = vmatprep.subr.mxu0 %v204
      %1490 = vmatpush1.msra.mxu0 %v203
      %1491 = vmatprep.subr.mxu0 %v206
      %1492 = vmatpush1.msra.mxu0 %v205
      %1493 = vmatprep.subr.mxu0 %v208
      %1494 = vmatpush1.msra.mxu0 %v207
      %1495 = vmatprep.subr.mxu0 %v210
      %1496 = vmatpush1.msra.mxu0 %v209
      %1497 = vmatprep.subr.mxu0 %v212
      %1498 = vmatpush1.msra.mxu0 %v211
      %1499 = vmatprep.subr.mxu0 %v214
      %1500 = vmatpush1.msra.mxu0 %v213
      %1501 = vmatprep.subr.mxu0 %v216
      %1502 = vmatpush1.msra.mxu0 %v215
      %1503 = vmatprep.subr.mxu0 %v218
      %1504 = vmatpush1.msra.mxu0 %v217
      %1505 = vmatprep.subr.mxu0 %v220
      %1506 = vmatpush1.msra.mxu0 %v219
      %1507 = vmatprep.subr.mxu0 %v222
      %1508 = vmatpush1.msra.mxu0 %v221
      %1509 = vmatprep.subr.mxu0 %v224
      %1510 = vmatpush1.msra.mxu0 %v223
      %1511 = vmatprep.subr.mxu0 %v226
      %1512 = vmatpush1.msra.mxu0 %v225
      %1513 = vmatprep.subr.mxu0 %v228
      %1514 = vmatpush1.msra.mxu0 %v227
      %1515 = vmatprep.subr.mxu0 %v240
      %1516 = vmatpush1.msra.mxu0 %v237
      %1517 = vmatprep.subr.mxu0 0.0
      %1518 = vmatpush1.msra.mxu0 0.0
      %1519 = vmatprep.subr.mxu0 0.0
      %1520 = vmatpush1.msra.mxu0 0.0
      %1521 = vmatprep.subr.mxu0 0.0
      %1522 = vmatpush1.msra.mxu0 0.0
      %1523 = vmatprep.subr.mxu0 0.0
      %1524 = vmatpush1.msra.mxu0 0.0
      %1525 = vmatprep.subr.mxu0 0.0
      %1526 = vmatpush1.msra.mxu0 0.0
      %1527 = vmatprep.subr.mxu0 0.0
      %1528 = vmatpush1.msra.mxu0 0.0
      %1529 = vmatprep.subr.mxu0 0.0
      %1530 = vmatpush1.msra.mxu0 0.0
      %1531 = vmatprep.subr.mxu0 0.0
      %1532 = vmatpush1.msra.mxu0 0.0
      %1533 = vmatprep.subr.mxu0 0.0
      %1534 = vmatpush1.msra.mxu0 0.0
      %1535 = vmatprep.subr.mxu0 0.0
      %1536 = vmatpush1.msra.mxu0 0.0
      %1537 = vmatprep.subr.mxu0 0.0
      %1538 = vmatpush1.msra.mxu0 0.0
      %1539 = vmatprep.subr.mxu0 0.0
      %1540 = vmatpush1.msra.mxu0 0.0
      %1541 = vmatprep.subr.mxu0 0.0
      %1542 = vmatpush1.msra.mxu0 0.0
      %1543 = vmatprep.subr.mxu0 0.0
      %1544 = vmatpush1.msra.mxu0 0.0
      %1545 = vmatprep.subr.mxu0 0.0
      %1546 = vmatpush1.msra.mxu0 0.0
      %1547 = vmatprep.subr.mxu0 0.0
      %1548 = vmatpush1.msra.mxu0 0.0
      %1549 = vmatprep.subr.mxu0 0.0
      %1550 = vmatpush1.msra.mxu0 0.0
      %1551 = vmatprep.subr.mxu0 0.0
      %1552 = vmatpush1.msra.mxu0 0.0
      %1553 = vmatprep.mubr.f32.mxu0 0.0
      %1554 = vmatmul.mubr.f32.gmra.mrb[0].mxu0 %v538
      %v1555 = vpop.f32.mrb[0].mxu0
      %v1556 = vadd.f32 0.0, %v1555
      %v1557 = vpop.f32.mrb[0].mxu0
      %v1558 = vadd.f32 0.0, %v1557
      %1559 = vdwg.mxu0
      %1560 = vmatprep.subr.mxu0 %v173
      %1561 = vmatpush1.msra.mxu0 %v172
      %1562 = vmatprep.subr.mxu0 %v175
      %1563 = vmatpush1.msra.mxu0 %v174
      %1564 = vmatprep.subr.mxu0 %v177
      %1565 = vmatpush1.msra.mxu0 %v176
      %1566 = vmatprep.subr.mxu0 %v179
      %1567 = vmatpush1.msra.mxu0 %v178
      %1568 = vmatprep.subr.mxu0 %v181
      %1569 = vmatpush1.msra.mxu0 %v180
      %1570 = vmatprep.subr.mxu0 %v183
      %1571 = vmatpush1.msra.mxu0 %v182
      %1572 = vmatprep.subr.mxu0 %v185
      %1573 = vmatpush1.msra.mxu0 %v184
      %1574 = vmatprep.subr.mxu0 %v187
      %1575 = vmatpush1.msra.mxu0 %v186
      %1576 = vmatprep.subr.mxu0 %v189
      %1577 = vmatpush1.msra.mxu0 %v188
      %1578 = vmatprep.subr.mxu0 %v191
      %1579 = vmatpush1.msra.mxu0 %v190
      %1580 = vmatprep.subr.mxu0 %v193
      %1581 = vmatpush1.msra.mxu0 %v192
      %1582 = vmatprep.subr.mxu0 %v195
      %1583 = vmatpush1.msra.mxu0 %v194
      %1584 = vmatprep.subr.mxu0 %v197
      %1585 = vmatpush1.msra.mxu0 %v196
      %1586 = vmatprep.subr.mxu0 %v320
      %1587 = vmatpush1.msra.mxu0 %v317
      %1588 = vmatprep.subr.mxu0 0.0
      %1589 = vmatpush1.msra.mxu0 0.0
      %1590 = vmatprep.subr.mxu0 0.0
      %1591 = vmatpush1.msra.mxu0 0.0
      %1592 = vmatprep.subr.mxu0 0.0
      %1593 = vmatpush1.msra.mxu0 0.0
      %1594 = vmatprep.subr.mxu0 0.0
      %1595 = vmatpush1.msra.mxu0 0.0
      %1596 = vmatprep.subr.mxu0 0.0
      %1597 = vmatpush1.msra.mxu0 0.0
      %1598 = vmatprep.subr.mxu0 0.0
      %1599 = vmatpush1.msra.mxu0 0.0
      %1600 = vmatprep.subr.mxu0 0.0
      %1601 = vmatpush1.msra.mxu0 0.0
      %1602 = vmatprep.subr.mxu0 0.0
      %1603 = vmatpush1.msra.mxu0 0.0
      %1604 = vmatprep.subr.mxu0 0.0
      %1605 = vmatpush1.msra.mxu0 0.0
      %1606 = vmatprep.subr.mxu0 0.0
      %1607 = vmatpush1.msra.mxu0 0.0
      %1608 = vmatprep.subr.mxu0 0.0
      %1609 = vmatpush1.msra.mxu0 0.0
      %1610 = vmatprep.subr.mxu0 0.0
      %1611 = vmatpush1.msra.mxu0 0.0
      %1612 = vmatprep.subr.mxu0 0.0
      %1613 = vmatpush1.msra.mxu0 0.0
      %1614 = vmatprep.subr.mxu0 0.0
      %1615 = vmatpush1.msra.mxu0 0.0
      %1616 = vmatprep.subr.mxu0 0.0
      %1617 = vmatpush1.msra.mxu0 0.0
      %1618 = vmatprep.subr.mxu0 0.0
      %1619 = vmatpush1.msra.mxu0 0.0
      %1620 = vmatprep.subr.mxu0 0.0
      %1621 = vmatpush1.msra.mxu0 0.0
      %1622 = vmatprep.subr.mxu0 0.0
      %1623 = vmatpush1.msra.mxu0 0.0
      %1624 = vmatprep.mubr.f32.mxu0 0.0
      %1625 = vmatmul.mubr.f32.gmra.mrb[0].mxu0 %v425
      %v1626 = vpop.f32.mrb[0].mxu0
      %v1627 = vadd.f32 %v1556, %v1626
      %v1628 = vpop.f32.mrb[0].mxu0
      %v1629 = vadd.f32 %v1558, %v1628
      %1630 = vdwg.mxu0
      %1631 = vmatprep.subr.mxu0 %v397
      %1632 = vmatpush1.msra.mxu0 %v396
      %1633 = vmatprep.subr.mxu0 %v399
      %1634 = vmatpush1.msra.mxu0 %v398
      %1635 = vmatprep.subr.mxu0 %v401
      %1636 = vmatpush1.msra.mxu0 %v400
      %1637 = vmatprep.subr.mxu0 %v403
      %1638 = vmatpush1.msra.mxu0 %v402
      %1639 = vmatprep.subr.mxu0 %v405
      %1640 = vmatpush1.msra.mxu0 %v404
      %1641 = vmatprep.subr.mxu0 %v407
      %1642 = vmatpush1.msra.mxu0 %v406
      %1643 = vmatprep.subr.mxu0 %v409
      %1644 = vmatpush1.msra.mxu0 %v408
      %1645 = vmatprep.subr.mxu0 %v411
      %1646 = vmatpush1.msra.mxu0 %v410
      %1647 = vmatprep.subr.mxu0 %v413
      %1648 = vmatpush1.msra.mxu0 %v412
      %1649 = vmatprep.subr.mxu0 %v415
      %1650 = vmatpush1.msra.mxu0 %v414
      %1651 = vmatprep.subr.mxu0 %v417
      %1652 = vmatpush1.msra.mxu0 %v416
      %1653 = vmatprep.subr.mxu0 %v419
      %1654 = vmatpush1.msra.mxu0 %v418
      %1655 = vmatprep.subr.mxu0 %v421
      %1656 = vmatpush1.msra.mxu0 %v420
      %1657 = vmatprep.subr.mxu0 %v431
      %1658 = vmatpush1.msra.mxu0 %v428
      %1659 = vmatprep.subr.mxu0 0.0
      %1660 = vmatpush1.msra.mxu0 0.0
      %1661 = vmatprep.subr.mxu0 0.0
      %1662 = vmatpush1.msra.mxu0 0.0
      %1663 = vmatprep.subr.mxu0 0.0
      %1664 = vmatpush1.msra.mxu0 0.0
      %1665 = vmatprep.subr.mxu0 0.0
      %1666 = vmatpush1.msra.mxu0 0.0
      %1667 = vmatprep.subr.mxu0 0.0
      %1668 = vmatpush1.msra.mxu0 0.0
      %1669 = vmatprep.subr.mxu0 0.0
      %1670 = vmatpush1.msra.mxu0 0.0
      %1671 = vmatprep.subr.mxu0 0.0
      %1672 = vmatpush1.msra.mxu0 0.0
      %1673 = vmatprep.subr.mxu0 0.0
      %1674 = vmatpush1.msra.mxu0 0.0
      %1675 = vmatprep.subr.mxu0 0.0
      %1676 = vmatpush1.msra.mxu0 0.0
      %1677 = vmatprep.subr.mxu0 0.0
      %1678 = vmatpush1.msra.mxu0 0.0
      %1679 = vmatprep.subr.mxu0 0.0
      %1680 = vmatpush1.msra.mxu0 0.0
      %1681 = vmatprep.subr.mxu0 0.0
      %1682 = vmatpush1.msra.mxu0 0.0
      %1683 = vmatprep.subr.mxu0 0.0
      %1684 = vmatpush1.msra.mxu0 0.0
      %1685 = vmatprep.subr.mxu0 0.0
      %1686 = vmatpush1.msra.mxu0 0.0
      %1687 = vmatprep.subr.mxu0 0.0
      %1688 = vmatpush1.msra.mxu0 0.0
      %1689 = vmatprep.subr.mxu0 0.0
      %1690 = vmatpush1.msra.mxu0 0.0
      %1691 = vmatprep.subr.mxu0 0.0
      %1692 = vmatpush1.msra.mxu0 0.0
      %1693 = vmatprep.subr.mxu0 0.0
      %1694 = vmatpush1.msra.mxu0 0.0
      %1695 = vmatprep.mubr.f32.mxu0 0.0
      %1696 = vmatmul.mubr.f32.gmra.mrb[0].mxu0 %v650
      %v1697 = vpop.f32.mrb[0].mxu0
      %v1698 = vadd.f32 0.0, %v1697
      %v1699 = vpop.f32.mrb[0].mxu0
      %v1700 = vadd.f32 0.0, %v1699
      %1701 = vdwg.mxu0
      %v1702 = vadd.f32 %v1627, %v1698
      %v1703 = vadd.f32 %v1629, %v1700
      %1704 = vmatprep.subr.mxu0 %v510
      %1705 = vmatpush1.msra.mxu0 %v509
      %1706 = vmatprep.subr.mxu0 %v512
      %1707 = vmatpush1.msra.mxu0 %v511
      %1708 = vmatprep.subr.mxu0 %v514
      %1709 = vmatpush1.msra.mxu0 %v513
      %1710 = vmatprep.subr.mxu0 %v516
      %1711 = vmatpush1.msra.mxu0 %v515
      %1712 = vmatprep.subr.mxu0 %v518
      %1713 = vmatpush1.msra.mxu0 %v517
      %1714 = vmatprep.subr.mxu0 %v520
      %1715 = vmatpush1.msra.mxu0 %v519
      %1716 = vmatprep.subr.mxu0 %v522
      %1717 = vmatpush1.msra.mxu0 %v521
      %1718 = vmatprep.subr.mxu0 %v524
      %1719 = vmatpush1.msra.mxu0 %v523
      %1720 = vmatprep.subr.mxu0 %v526
      %1721 = vmatpush1.msra.mxu0 %v525
      %1722 = vmatprep.subr.mxu0 %v528
      %1723 = vmatpush1.msra.mxu0 %v527
      %1724 = vmatprep.subr.mxu0 %v530
      %1725 = vmatpush1.msra.mxu0 %v529
      %1726 = vmatprep.subr.mxu0 %v532
      %1727 = vmatpush1.msra.mxu0 %v531
      %1728 = vmatprep.subr.mxu0 %v534
      %1729 = vmatpush1.msra.mxu0 %v533
      %1730 = vmatprep.subr.mxu0 %v544
      %1731 = vmatpush1.msra.mxu0 %v541
      %1732 = vmatprep.subr.mxu0 0.0
      %1733 = vmatpush1.msra.mxu0 0.0
      %1734 = vmatprep.subr.mxu0 0.0
      %1735 = vmatpush1.msra.mxu0 0.0
      %1736 = vmatprep.subr.mxu0 0.0
      %1737 = vmatpush1.msra.mxu0 0.0
      %1738 = vmatprep.subr.mxu0 0.0
      %1739 = vmatpush1.msra.mxu0 0.0
      %1740 = vmatprep.subr.mxu0 0.0
      %1741 = vmatpush1.msra.mxu0 0.0
      %1742 = vmatprep.subr.mxu0 0.0
      %1743 = vmatpush1.msra.mxu0 0.0
      %1744 = vmatprep.subr.mxu0 0.0
      %1745 = vmatpush1.msra.mxu0 0.0
      %1746 = vmatprep.subr.mxu0 0.0
      %1747 = vmatpush1.msra.mxu0 0.0
      %1748 = vmatprep.subr.mxu0 0.0
      %1749 = vmatpush1.msra.mxu0 0.0
      %1750 = vmatprep.subr.mxu0 0.0
      %1751 = vmatpush1.msra.mxu0 0.0
      %1752 = vmatprep.subr.mxu0 0.0
      %1753 = vmatpush1.msra.mxu0 0.0
      %1754 = vmatprep.subr.mxu0 0.0
      %1755 = vmatpush1.msra.mxu0 0.0
      %1756 = vmatprep.subr.mxu0 0.0
      %1757 = vmatpush1.msra.mxu0 0.0
      %1758 = vmatprep.subr.mxu0 0.0
      %1759 = vmatpush1.msra.mxu0 0.0
      %1760 = vmatprep.subr.mxu0 0.0
      %1761 = vmatpush1.msra.mxu0 0.0
      %1762 = vmatprep.subr.mxu0 0.0
      %1763 = vmatpush1.msra.mxu0 0.0
      %1764 = vmatprep.subr.mxu0 0.0
      %1765 = vmatpush1.msra.mxu0 0.0
      %1766 = vmatprep.subr.mxu0 0.0
      %1767 = vmatpush1.msra.mxu0 0.0
      %1768 = vmatprep.mubr.f32.mxu0 0.0
      %1769 = vmatmul.mubr.f32.gmra.mrb[0].mxu0 %v762
      %v1770 = vpop.f32.mrb[0].mxu0
      %v1771 = vadd.f32 0.0, %v1770
      %v1772 = vpop.f32.mrb[0].mxu0
      %v1773 = vadd.f32 0.0, %v1772
      %1774 = vdwg.mxu0
      %v1775 = vadd.f32 %v1702, %v1771
      %v1776 = vadd.f32 %v1703, %v1773
      %v1777 = vld [vmem:[%s393 + $0x1] sm:$0xff]
      %v1779 = vsel %vm231, %v1777, 0
      %1781 = vmatprep.subr.mxu0 %v622
      %1782 = vmatpush1.msra.mxu0 %v621
      %1783 = vmatprep.subr.mxu0 %v624
      %1784 = vmatpush1.msra.mxu0 %v623
      %1785 = vmatprep.subr.mxu0 %v626
      %1786 = vmatpush1.msra.mxu0 %v625
      %1787 = vmatprep.subr.mxu0 %v628
      %1788 = vmatpush1.msra.mxu0 %v627
      %1789 = vmatprep.subr.mxu0 %v630
      %1790 = vmatpush1.msra.mxu0 %v629
      %1791 = vmatprep.subr.mxu0 %v632
      %1792 = vmatpush1.msra.mxu0 %v631
      %1793 = vmatprep.subr.mxu0 %v634
      %1794 = vmatpush1.msra.mxu0 %v633
      %1795 = vmatprep.subr.mxu0 %v636
      %1796 = vmatpush1.msra.mxu0 %v635
      %1797 = vmatprep.subr.mxu0 %v638
      %1798 = vmatpush1.msra.mxu0 %v637
      %1799 = vmatprep.subr.mxu0 %v640
      %1800 = vmatpush1.msra.mxu0 %v639
      %1801 = vmatprep.subr.mxu0 %v642
      %1802 = vmatpush1.msra.mxu0 %v641
      %1803 = vmatprep.subr.mxu0 %v644
      %1804 = vmatpush1.msra.mxu0 %v643
      %1805 = vmatprep.subr.mxu0 %v646
      %1806 = vmatpush1.msra.mxu0 %v645
      %1807 = vmatprep.subr.mxu0 %v656
      %1808 = vmatpush1.msra.mxu0 %v653
      %1809 = vmatprep.subr.mxu0 0.0
      %1810 = vmatpush1.msra.mxu0 0.0
      %1811 = vmatprep.subr.mxu0 0.0
      %1812 = vmatpush1.msra.mxu0 0.0
      %1813 = vmatprep.subr.mxu0 0.0
      %1814 = vmatpush1.msra.mxu0 0.0
      %1815 = vmatprep.subr.mxu0 0.0
      %1816 = vmatpush1.msra.mxu0 0.0
      %1817 = vmatprep.subr.mxu0 0.0
      %1818 = vmatpush1.msra.mxu0 0.0
      %1819 = vmatprep.subr.mxu0 0.0
      %1820 = vmatpush1.msra.mxu0 0.0
      %1821 = vmatprep.subr.mxu0 0.0
      %1822 = vmatpush1.msra.mxu0 0.0
      %1823 = vmatprep.subr.mxu0 0.0
      %1824 = vmatpush1.msra.mxu0 0.0
      %1825 = vmatprep.subr.mxu0 0.0
      %1826 = vmatpush1.msra.mxu0 0.0
      %1827 = vmatprep.subr.mxu0 0.0
      %1828 = vmatpush1.msra.mxu0 0.0
      %1829 = vmatprep.subr.mxu0 0.0
      %1830 = vmatpush1.msra.mxu0 0.0
      %1831 = vmatprep.subr.mxu0 0.0
      %1832 = vmatpush1.msra.mxu0 0.0
      %1833 = vmatprep.subr.mxu0 0.0
      %1834 = vmatpush1.msra.mxu0 0.0
      %1835 = vmatprep.subr.mxu0 0.0
      %1836 = vmatpush1.msra.mxu0 0.0
      %1837 = vmatprep.subr.mxu0 0.0
      %1838 = vmatpush1.msra.mxu0 0.0
      %1839 = vmatprep.subr.mxu0 0.0
      %1840 = vmatpush1.msra.mxu0 0.0
      %1841 = vmatprep.subr.mxu0 0.0
      %1842 = vmatpush1.msra.mxu0 0.0
      %1843 = vmatprep.subr.mxu0 0.0
      %1844 = vmatpush1.msra.mxu0 0.0
      %1845 = vmatprep.mubr.f32.mxu0 0.0
      %1846 = vmatmul.mubr.f32.gmra.mrb[0].mxu0 %v1779
      %v1847 = vpop.f32.mrb[0].mxu0
      %v1848 = vadd.f32 0.0, %v1847
      %v1849 = vpop.f32.mrb[0].mxu0
      %v1850 = vadd.f32 0.0, %v1849
      %1851 = vdwg.mxu0
      %v1852 = vadd.f32 %v1775, %v1848
      %v1853 = vadd.f32 %v1776, %v1850
      %v1854 = vld [vmem:[%s506 + $0x1] sm:$0xff]
      %v1856 = vsel %vm231, %v1854, 0
      %1858 = vmatprep.subr.mxu0 %v734
      %1859 = vmatpush1.msra.mxu0 %v733
      %1860 = vmatprep.subr.mxu0 %v736
      %1861 = vmatpush1.msra.mxu0 %v735
      %1862 = vmatprep.subr.mxu0 %v738
      %1863 = vmatpush1.msra.mxu0 %v737
      %1864 = vmatprep.subr.mxu0 %v740
      %1865 = vmatpush1.msra.mxu0 %v739
      %1866 = vmatprep.subr.mxu0 %v742
      %1867 = vmatpush1.msra.mxu0 %v741
      %1868 = vmatprep.subr.mxu0 %v744
      %1869 = vmatpush1.msra.mxu0 %v743
      %1870 = vmatprep.subr.mxu0 %v746
      %1871 = vmatpush1.msra.mxu0 %v745
      %1872 = vmatprep.subr.mxu0 %v748
      %1873 = vmatpush1.msra.mxu0 %v747
      %1874 = vmatprep.subr.mxu0 %v750
      %1875 = vmatpush1.msra.mxu0 %v749
      %1876 = vmatprep.subr.mxu0 %v752
      %1877 = vmatpush1.msra.mxu0 %v751
      %1878 = vmatprep.subr.mxu0 %v754
      %1879 = vmatpush1.msra.mxu0 %v753
      %1880 = vmatprep.subr.mxu0 %v756
      %1881 = vmatpush1.msra.mxu0 %v755
      %1882 = vmatprep.subr.mxu0 %v758
      %1883 = vmatpush1.msra.mxu0 %v757
      %1884 = vmatprep.subr.mxu0 %v768
      %1885 = vmatpush1.msra.mxu0 %v765
      %1886 = vmatprep.subr.mxu0 0.0
      %1887 = vmatpush1.msra.mxu0 0.0
      %1888 = vmatprep.subr.mxu0 0.0
      %1889 = vmatpush1.msra.mxu0 0.0
      %1890 = vmatprep.subr.mxu0 0.0
      %1891 = vmatpush1.msra.mxu0 0.0
      %1892 = vmatprep.subr.mxu0 0.0
      %1893 = vmatpush1.msra.mxu0 0.0
      %1894 = vmatprep.subr.mxu0 0.0
      %1895 = vmatpush1.msra.mxu0 0.0
      %1896 = vmatprep.subr.mxu0 0.0
      %1897 = vmatpush1.msra.mxu0 0.0
      %1898 = vmatprep.subr.mxu0 0.0
      %1899 = vmatpush1.msra.mxu0 0.0
      %1900 = vmatprep.subr.mxu0 0.0
      %1901 = vmatpush1.msra.mxu0 0.0
      %1902 = vmatprep.subr.mxu0 0.0
      %1903 = vmatpush1.msra.mxu0 0.0
      %1904 = vmatprep.subr.mxu0 0.0
      %1905 = vmatpush1.msra.mxu0 0.0
      %1906 = vmatprep.subr.mxu0 0.0
      %1907 = vmatpush1.msra.mxu0 0.0
      %1908 = vmatprep.subr.mxu0 0.0
      %1909 = vmatpush1.msra.mxu0 0.0
      %1910 = vmatprep.subr.mxu0 0.0
      %1911 = vmatpush1.msra.mxu0 0.0
      %1912 = vmatprep.subr.mxu0 0.0
      %1913 = vmatpush1.msra.mxu0 0.0
      %1914 = vmatprep.subr.mxu0 0.0
      %1915 = vmatpush1.msra.mxu0 0.0
      %1916 = vmatprep.subr.mxu0 0.0
      %1917 = vmatpush1.msra.mxu0 0.0
      %1918 = vmatprep.subr.mxu0 0.0
      %1919 = vmatpush1.msra.mxu0 0.0
      %1920 = vmatprep.subr.mxu0 0.0
      %1921 = vmatpush1.msra.mxu0 0.0
      %1922 = vmatprep.mubr.f32.mxu0 0.0
      %1923 = vmatmul.mubr.f32.gmra.mrb[0].mxu0 %v1856
      %v1924 = vpop.f32.mrb[0].mxu0
      %v1925 = vadd.f32 0.0, %v1924
      %v1926 = vpop.f32.mrb[0].mxu0
      %v1927 = vadd.f32 0.0, %v1926
      %1928 = vdwg.mxu0
      %v1929 = vadd.f32 %v1852, %v1925
      %v1930 = vadd.f32 %v1853, %v1927
      %v1931 = vmax.f32 %v1487, %v1929
      %v1932 = vmax.f32 %v1488, %v1930
      %1933 = vmatprep.subr.mxu0 %v874
      %1934 = vmatpush1.msra.mxu0 %v873
      %1935 = vmatprep.subr.mxu0 %v876
      %1936 = vmatpush1.msra.mxu0 %v875
      %1937 = vmatprep.subr.mxu0 %v878
      %1938 = vmatpush1.msra.mxu0 %v877
      %1939 = vmatprep.subr.mxu0 %v880
      %1940 = vmatpush1.msra.mxu0 %v879
      %1941 = vmatprep.subr.mxu0 %v882
      %1942 = vmatpush1.msra.mxu0 %v881
      %1943 = vmatprep.subr.mxu0 %v884
      %1944 = vmatpush1.msra.mxu0 %v883
      %1945 = vmatprep.subr.mxu0 %v886
      %1946 = vmatpush1.msra.mxu0 %v885
      %1947 = vmatprep.subr.mxu0 %v888
      %1948 = vmatpush1.msra.mxu0 %v887
      %1949 = vmatprep.subr.mxu0 %v890
      %1950 = vmatpush1.msra.mxu0 %v889
      %1951 = vmatprep.subr.mxu0 %v892
      %1952 = vmatpush1.msra.mxu0 %v891
      %1953 = vmatprep.subr.mxu0 %v894
      %1954 = vmatpush1.msra.mxu0 %v893
      %1955 = vmatprep.subr.mxu0 %v896
      %1956 = vmatpush1.msra.mxu0 %v895
      %1957 = vmatprep.subr.mxu0 %v898
      %1958 = vmatpush1.msra.mxu0 %v897
      %1959 = vmatprep.subr.mxu0 %v905
      %1960 = vmatpush1.msra.mxu0 %v902
      %1961 = vmatprep.subr.mxu0 0.0
      %1962 = vmatpush1.msra.mxu0 0.0
      %1963 = vmatprep.subr.mxu0 0.0
      %1964 = vmatpush1.msra.mxu0 0.0
      %1965 = vmatprep.subr.mxu0 0.0
      %1966 = vmatpush1.msra.mxu0 0.0
      %1967 = vmatprep.subr.mxu0 0.0
      %1968 = vmatpush1.msra.mxu0 0.0
      %1969 = vmatprep.subr.mxu0 0.0
      %1970 = vmatpush1.msra.mxu0 0.0
      %1971 = vmatprep.subr.mxu0 0.0
      %1972 = vmatpush1.msra.mxu0 0.0
      %1973 = vmatprep.subr.mxu0 0.0
      %1974 = vmatpush1.msra.mxu0 0.0
      %1975 = vmatprep.subr.mxu0 0.0
      %1976 = vmatpush1.msra.mxu0 0.0
      %1977 = vmatprep.subr.mxu0 0.0
      %1978 = vmatpush1.msra.mxu0 0.0
      %1979 = vmatprep.subr.mxu0 0.0
      %1980 = vmatpush1.msra.mxu0 0.0
      %1981 = vmatprep.subr.mxu0 0.0
      %1982 = vmatpush1.msra.mxu0 0.0
      %1983 = vmatprep.subr.mxu0 0.0
      %1984 = vmatpush1.msra.mxu0 0.0
      %1985 = vmatprep.subr.mxu0 0.0
      %1986 = vmatpush1.msra.mxu0 0.0
      %1987 = vmatprep.subr.mxu0 0.0
      %1988 = vmatpush1.msra.mxu0 0.0
      %1989 = vmatprep.subr.mxu0 0.0
      %1990 = vmatpush1.msra.mxu0 0.0
      %1991 = vmatprep.subr.mxu0 0.0
      %1992 = vmatpush1.msra.mxu0 0.0
      %1993 = vmatprep.subr.mxu0 0.0
      %1994 = vmatpush1.msra.mxu0 0.0
      %1995 = vmatprep.subr.mxu0 0.0
      %1996 = vmatpush1.msra.mxu0 0.0
      %1997 = vmatprep.mubr.f32.mxu0 0.0
      %1998 = vmatmul.mubr.f32.gmra.mrb[0].mxu0 %v538
      %v1999 = vpop.f32.mrb[0].mxu0
      %v2000 = vadd.f32 0.0, %v1999
      %v2001 = vpop.f32.mrb[0].mxu0
      %v2002 = vadd.f32 0.0, %v2001
      %2003 = vdwg.mxu0
      %2004 = vmatprep.subr.mxu0 %v845
      %2005 = vmatpush1.msra.mxu0 %v844
      %2006 = vmatprep.subr.mxu0 %v847
      %2007 = vmatpush1.msra.mxu0 %v846
      %2008 = vmatprep.subr.mxu0 %v849
      %2009 = vmatpush1.msra.mxu0 %v848
      %2010 = vmatprep.subr.mxu0 %v851
      %2011 = vmatpush1.msra.mxu0 %v850
      %2012 = vmatprep.subr.mxu0 %v853
      %2013 = vmatpush1.msra.mxu0 %v852
      %2014 = vmatprep.subr.mxu0 %v855
      %2015 = vmatpush1.msra.mxu0 %v854
      %2016 = vmatprep.subr.mxu0 %v857
      %2017 = vmatpush1.msra.mxu0 %v856
      %2018 = vmatprep.subr.mxu0 %v859
      %2019 = vmatpush1.msra.mxu0 %v858
      %2020 = vmatprep.subr.mxu0 %v861
      %2021 = vmatpush1.msra.mxu0 %v860
      %2022 = vmatprep.subr.mxu0 %v863
      %2023 = vmatpush1.msra.mxu0 %v862
      %2024 = vmatprep.subr.mxu0 %v865
      %2025 = vmatpush1.msra.mxu0 %v864
      %2026 = vmatprep.subr.mxu0 %v867
      %2027 = vmatpush1.msra.mxu0 %v866
      %2028 = vmatprep.subr.mxu0 %v869
      %2029 = vmatpush1.msra.mxu0 %v868
      %2030 = vmatprep.subr.mxu0 %v982
      %2031 = vmatpush1.msra.mxu0 %v979
      %2032 = vmatprep.subr.mxu0 0.0
      %2033 = vmatpush1.msra.mxu0 0.0
      %2034 = vmatprep.subr.mxu0 0.0
      %2035 = vmatpush1.msra.mxu0 0.0
      %2036 = vmatprep.subr.mxu0 0.0
      %2037 = vmatpush1.msra.mxu0 0.0
      %2038 = vmatprep.subr.mxu0 0.0
      %2039 = vmatpush1.msra.mxu0 0.0
      %2040 = vmatprep.subr.mxu0 0.0
      %2041 = vmatpush1.msra.mxu0 0.0
      %2042 = vmatprep.subr.mxu0 0.0
      %2043 = vmatpush1.msra.mxu0 0.0
      %2044 = vmatprep.subr.mxu0 0.0
      %2045 = vmatpush1.msra.mxu0 0.0
      %2046 = vmatprep.subr.mxu0 0.0
      %2047 = vmatpush1.msra.mxu0 0.0
      %2048 = vmatprep.subr.mxu0 0.0
      %2049 = vmatpush1.msra.mxu0 0.0
      %2050 = vmatprep.subr.mxu0 0.0
      %2051 = vmatpush1.msra.mxu0 0.0
      %2052 = vmatprep.subr.mxu0 0.0
      %2053 = vmatpush1.msra.mxu0 0.0
      %2054 = vmatprep.subr.mxu0 0.0
      %2055 = vmatpush1.msra.mxu0 0.0
      %2056 = vmatprep.subr.mxu0 0.0
      %2057 = vmatpush1.msra.mxu0 0.0
      %2058 = vmatprep.subr.mxu0 0.0
      %2059 = vmatpush1.msra.mxu0 0.0
      %2060 = vmatprep.subr.mxu0 0.0
      %2061 = vmatpush1.msra.mxu0 0.0
      %2062 = vmatprep.subr.mxu0 0.0
      %2063 = vmatpush1.msra.mxu0 0.0
      %2064 = vmatprep.subr.mxu0 0.0
      %2065 = vmatpush1.msra.mxu0 0.0
      %2066 = vmatprep.subr.mxu0 0.0
      %2067 = vmatpush1.msra.mxu0 0.0
      %2068 = vmatprep.mubr.f32.mxu0 0.0
      %2069 = vmatmul.mubr.f32.gmra.mrb[0].mxu0 %v425
      %v2070 = vpop.f32.mrb[0].mxu0
      %v2071 = vadd.f32 %v2000, %v2070
      %v2072 = vpop.f32.mrb[0].mxu0
      %v2073 = vadd.f32 %v2002, %v2072
      %2074 = vdwg.mxu0
      %2075 = vmatprep.subr.mxu0 %v1057
      %2076 = vmatpush1.msra.mxu0 %v1056
      %2077 = vmatprep.subr.mxu0 %v1059
      %2078 = vmatpush1.msra.mxu0 %v1058
      %2079 = vmatprep.subr.mxu0 %v1061
      %2080 = vmatpush1.msra.mxu0 %v1060
      %2081 = vmatprep.subr.mxu0 %v1063
      %2082 = vmatpush1.msra.mxu0 %v1062
      %2083 = vmatprep.subr.mxu0 %v1065
      %2084 = vmatpush1.msra.mxu0 %v1064
      %2085 = vmatprep.subr.mxu0 %v1067
      %2086 = vmatpush1.msra.mxu0 %v1066
      %2087 = vmatprep.subr.mxu0 %v1069
      %2088 = vmatpush1.msra.mxu0 %v1068
      %2089 = vmatprep.subr.mxu0 %v1071
      %2090 = vmatpush1.msra.mxu0 %v1070
      %2091 = vmatprep.subr.mxu0 %v1073
      %2092 = vmatpush1.msra.mxu0 %v1072
      %2093 = vmatprep.subr.mxu0 %v1075
      %2094 = vmatpush1.msra.mxu0 %v1074
      %2095 = vmatprep.subr.mxu0 %v1077
      %2096 = vmatpush1.msra.mxu0 %v1076
      %2097 = vmatprep.subr.mxu0 %v1079
      %2098 = vmatpush1.msra.mxu0 %v1078
      %2099 = vmatprep.subr.mxu0 %v1081
      %2100 = vmatpush1.msra.mxu0 %v1080
      %2101 = vmatprep.subr.mxu0 %v1088
      %2102 = vmatpush1.msra.mxu0 %v1085
      %2103 = vmatprep.subr.mxu0 0.0
      %2104 = vmatpush1.msra.mxu0 0.0
      %2105 = vmatprep.subr.mxu0 0.0
      %2106 = vmatpush1.msra.mxu0 0.0
      %2107 = vmatprep.subr.mxu0 0.0
      %2108 = vmatpush1.msra.mxu0 0.0
      %2109 = vmatprep.subr.mxu0 0.0
      %2110 = vmatpush1.msra.mxu0 0.0
      %2111 = vmatprep.subr.mxu0 0.0
      %2112 = vmatpush1.msra.mxu0 0.0
      %2113 = vmatprep.subr.mxu0 0.0
      %2114 = vmatpush1.msra.mxu0 0.0
      %2115 = vmatprep.subr.mxu0 0.0
      %2116 = vmatpush1.msra.mxu0 0.0
      %2117 = vmatprep.subr.mxu0 0.0
      %2118 = vmatpush1.msra.mxu0 0.0
      %2119 = vmatprep.subr.mxu0 0.0
      %2120 = vmatpush1.msra.mxu0 0.0
      %2121 = vmatprep.subr.mxu0 0.0
      %2122 = vmatpush1.msra.mxu0 0.0
      %2123 = vmatprep.subr.mxu0 0.0
      %2124 = vmatpush1.msra.mxu0 0.0
      %2125 = vmatprep.subr.mxu0 0.0
      %2126 = vmatpush1.msra.mxu0 0.0
      %2127 = vmatprep.subr.mxu0 0.0
      %2128 = vmatpush1.msra.mxu0 0.0
      %2129 = vmatprep.subr.mxu0 0.0
      %2130 = vmatpush1.msra.mxu0 0.0
      %2131 = vmatprep.subr.mxu0 0.0
      %2132 = vmatpush1.msra.mxu0 0.0
      %2133 = vmatprep.subr.mxu0 0.0
      %2134 = vmatpush1.msra.mxu0 0.0
      %2135 = vmatprep.subr.mxu0 0.0
      %2136 = vmatpush1.msra.mxu0 0.0
      %2137 = vmatprep.subr.mxu0 0.0
      %2138 = vmatpush1.msra.mxu0 0.0
      %2139 = vmatprep.mubr.f32.mxu0 0.0
      %2140 = vmatmul.mubr.f32.gmra.mrb[0].mxu0 %v650
      %v2141 = vpop.f32.mrb[0].mxu0
      %v2142 = vadd.f32 0.0, %v2141
      %v2143 = vpop.f32.mrb[0].mxu0
      %v2144 = vadd.f32 0.0, %v2143
      %2145 = vdwg.mxu0
      %v2146 = vadd.f32 %v2071, %v2142
      %v2147 = vadd.f32 %v2073, %v2144
      %2148 = vmatprep.subr.mxu0 %v1165
      %2149 = vmatpush1.msra.mxu0 %v1164
      %2150 = vmatprep.subr.mxu0 %v1167
      %2151 = vmatpush1.msra.mxu0 %v1166
      %2152 = vmatprep.subr.mxu0 %v1169
      %2153 = vmatpush1.msra.mxu0 %v1168
      %2154 = vmatprep.subr.mxu0 %v1171
      %2155 = vmatpush1.msra.mxu0 %v1170
      %2156 = vmatprep.subr.mxu0 %v1173
      %2157 = vmatpush1.msra.mxu0 %v1172
      %2158 = vmatprep.subr.mxu0 %v1175
      %2159 = vmatpush1.msra.mxu0 %v1174
      %2160 = vmatprep.subr.mxu0 %v1177
      %2161 = vmatpush1.msra.mxu0 %v1176
      %2162 = vmatprep.subr.mxu0 %v1179
      %2163 = vmatpush1.msra.mxu0 %v1178
      %2164 = vmatprep.subr.mxu0 %v1181
      %2165 = vmatpush1.msra.mxu0 %v1180
      %2166 = vmatprep.subr.mxu0 %v1183
      %2167 = vmatpush1.msra.mxu0 %v1182
      %2168 = vmatprep.subr.mxu0 %v1185
      %2169 = vmatpush1.msra.mxu0 %v1184
      %2170 = vmatprep.subr.mxu0 %v1187
      %2171 = vmatpush1.msra.mxu0 %v1186
      %2172 = vmatprep.subr.mxu0 %v1189
      %2173 = vmatpush1.msra.mxu0 %v1188
      %2174 = vmatprep.subr.mxu0 %v1196
      %2175 = vmatpush1.msra.mxu0 %v1193
      %2176 = vmatprep.subr.mxu0 0.0
      %2177 = vmatpush1.msra.mxu0 0.0
      %2178 = vmatprep.subr.mxu0 0.0
      %2179 = vmatpush1.msra.mxu0 0.0
      %2180 = vmatprep.subr.mxu0 0.0
      %2181 = vmatpush1.msra.mxu0 0.0
      %2182 = vmatprep.subr.mxu0 0.0
      %2183 = vmatpush1.msra.mxu0 0.0
      %2184 = vmatprep.subr.mxu0 0.0
      %2185 = vmatpush1.msra.mxu0 0.0
      %2186 = vmatprep.subr.mxu0 0.0
      %2187 = vmatpush1.msra.mxu0 0.0
      %2188 = vmatprep.subr.mxu0 0.0
      %2189 = vmatpush1.msra.mxu0 0.0
      %2190 = vmatprep.subr.mxu0 0.0
      %2191 = vmatpush1.msra.mxu0 0.0
      %2192 = vmatprep.subr.mxu0 0.0
      %2193 = vmatpush1.msra.mxu0 0.0
      %2194 = vmatprep.subr.mxu0 0.0
      %2195 = vmatpush1.msra.mxu0 0.0
      %2196 = vmatprep.subr.mxu0 0.0
      %2197 = vmatpush1.msra.mxu0 0.0
      %2198 = vmatprep.subr.mxu0 0.0
      %2199 = vmatpush1.msra.mxu0 0.0
      %2200 = vmatprep.subr.mxu0 0.0
      %2201 = vmatpush1.msra.mxu0 0.0
      %2202 = vmatprep.subr.mxu0 0.0
      %2203 = vmatpush1.msra.mxu0 0.0
      %2204 = vmatprep.subr.mxu0 0.0
      %2205 = vmatpush1.msra.mxu0 0.0
      %2206 = vmatprep.subr.mxu0 0.0
      %2207 = vmatpush1.msra.mxu0 0.0
      %2208 = vmatprep.subr.mxu0 0.0
      %2209 = vmatpush1.msra.mxu0 0.0
      %2210 = vmatprep.subr.mxu0 0.0
      %2211 = vmatpush1.msra.mxu0 0.0
      %2212 = vmatprep.mubr.f32.mxu0 0.0
      %2213 = vmatmul.mubr.f32.gmra.mrb[0].mxu0 %v762
      %v2214 = vpop.f32.mrb[0].mxu0
      %v2215 = vadd.f32 0.0, %v2214
      %v2216 = vpop.f32.mrb[0].mxu0
      %v2217 = vadd.f32 0.0, %v2216
      %2218 = vdwg.mxu0
      %v2219 = vadd.f32 %v2146, %v2215
      %v2220 = vadd.f32 %v2147, %v2217
      %2221 = vmatprep.subr.mxu0 %v1273
      %2222 = vmatpush1.msra.mxu0 %v1272
      %2223 = vmatprep.subr.mxu0 %v1275
      %2224 = vmatpush1.msra.mxu0 %v1274
      %2225 = vmatprep.subr.mxu0 %v1277
      %2226 = vmatpush1.msra.mxu0 %v1276
      %2227 = vmatprep.subr.mxu0 %v1279
      %2228 = vmatpush1.msra.mxu0 %v1278
      %2229 = vmatprep.subr.mxu0 %v1281
      %2230 = vmatpush1.msra.mxu0 %v1280
      %2231 = vmatprep.subr.mxu0 %v1283
      %2232 = vmatpush1.msra.mxu0 %v1282
      %2233 = vmatprep.subr.mxu0 %v1285
      %2234 = vmatpush1.msra.mxu0 %v1284
      %2235 = vmatprep.subr.mxu0 %v1287
      %2236 = vmatpush1.msra.mxu0 %v1286
      %2237 = vmatprep.subr.mxu0 %v1289
      %2238 = vmatpush1.msra.mxu0 %v1288
      %2239 = vmatprep.subr.mxu0 %v1291
      %2240 = vmatpush1.msra.mxu0 %v1290
      %2241 = vmatprep.subr.mxu0 %v1293
      %2242 = vmatpush1.msra.mxu0 %v1292
      %2243 = vmatprep.subr.mxu0 %v1295
      %2244 = vmatpush1.msra.mxu0 %v1294
      %2245 = vmatprep.subr.mxu0 %v1297
      %2246 = vmatpush1.msra.mxu0 %v1296
      %2247 = vmatprep.subr.mxu0 %v1304
      %2248 = vmatpush1.msra.mxu0 %v1301
      %2249 = vmatprep.subr.mxu0 0.0
      %2250 = vmatpush1.msra.mxu0 0.0
      %2251 = vmatprep.subr.mxu0 0.0
      %2252 = vmatpush1.msra.mxu0 0.0
      %2253 = vmatprep.subr.mxu0 0.0
      %2254 = vmatpush1.msra.mxu0 0.0
      %2255 = vmatprep.subr.mxu0 0.0
      %2256 = vmatpush1.msra.mxu0 0.0
      %2257 = vmatprep.subr.mxu0 0.0
      %2258 = vmatpush1.msra.mxu0 0.0
      %2259 = vmatprep.subr.mxu0 0.0
      %2260 = vmatpush1.msra.mxu0 0.0
      %2261 = vmatprep.subr.mxu0 0.0
      %2262 = vmatpush1.msra.mxu0 0.0
      %2263 = vmatprep.subr.mxu0 0.0
      %2264 = vmatpush1.msra.mxu0 0.0
      %2265 = vmatprep.subr.mxu0 0.0
      %2266 = vmatpush1.msra.mxu0 0.0
      %2267 = vmatprep.subr.mxu0 0.0
      %2268 = vmatpush1.msra.mxu0 0.0
      %2269 = vmatprep.subr.mxu0 0.0
      %2270 = vmatpush1.msra.mxu0 0.0
      %2271 = vmatprep.subr.mxu0 0.0
      %2272 = vmatpush1.msra.mxu0 0.0
      %2273 = vmatprep.subr.mxu0 0.0
      %2274 = vmatpush1.msra.mxu0 0.0
      %2275 = vmatprep.subr.mxu0 0.0
      %2276 = vmatpush1.msra.mxu0 0.0
      %2277 = vmatprep.subr.mxu0 0.0
      %2278 = vmatpush1.msra.mxu0 0.0
      %2279 = vmatprep.subr.mxu0 0.0
      %2280 = vmatpush1.msra.mxu0 0.0
      %2281 = vmatprep.subr.mxu0 0.0
      %2282 = vmatpush1.msra.mxu0 0.0
      %2283 = vmatprep.subr.mxu0 0.0
      %2284 = vmatpush1.msra.mxu0 0.0
      %2285 = vmatprep.mubr.f32.mxu0 0.0
      %2286 = vmatmul.mubr.f32.gmra.mrb[0].mxu0 %v1779
      %v2287 = vpop.f32.mrb[0].mxu0
      %v2288 = vadd.f32 0.0, %v2287
      %v2289 = vpop.f32.mrb[0].mxu0
      %v2290 = vadd.f32 0.0, %v2289
      %2291 = vdwg.mxu0
      %v2292 = vadd.f32 %v2219, %v2288
      %v2293 = vadd.f32 %v2220, %v2290
      %2294 = vmatprep.subr.mxu0 %v1381
      %2295 = vmatpush1.msra.mxu0 %v1380
      %2296 = vmatprep.subr.mxu0 %v1383
      %2297 = vmatpush1.msra.mxu0 %v1382
      %2298 = vmatprep.subr.mxu0 %v1385
      %2299 = vmatpush1.msra.mxu0 %v1384
      %2300 = vmatprep.subr.mxu0 %v1387
      %2301 = vmatpush1.msra.mxu0 %v1386
      %2302 = vmatprep.subr.mxu0 %v1389
      %2303 = vmatpush1.msra.mxu0 %v1388
      %2304 = vmatprep.subr.mxu0 %v1391
      %2305 = vmatpush1.msra.mxu0 %v1390
      %2306 = vmatprep.subr.mxu0 %v1393
      %2307 = vmatpush1.msra.mxu0 %v1392
      %2308 = vmatprep.subr.mxu0 %v1395
      %2309 = vmatpush1.msra.mxu0 %v1394
      %2310 = vmatprep.subr.mxu0 %v1397
      %2311 = vmatpush1.msra.mxu0 %v1396
      %2312 = vmatprep.subr.mxu0 %v1399
      %2313 = vmatpush1.msra.mxu0 %v1398
      %2314 = vmatprep.subr.mxu0 %v1401
      %2315 = vmatpush1.msra.mxu0 %v1400
      %2316 = vmatprep.subr.mxu0 %v1403
      %2317 = vmatpush1.msra.mxu0 %v1402
      %2318 = vmatprep.subr.mxu0 %v1405
      %2319 = vmatpush1.msra.mxu0 %v1404
      %2320 = vmatprep.subr.mxu0 %v1412
      %2321 = vmatpush1.msra.mxu0 %v1409
      %2322 = vmatprep.subr.mxu0 0.0
      %2323 = vmatpush1.msra.mxu0 0.0
      %2324 = vmatprep.subr.mxu0 0.0
      %2325 = vmatpush1.msra.mxu0 0.0
      %2326 = vmatprep.subr.mxu0 0.0
      %2327 = vmatpush1.msra.mxu0 0.0
      %2328 = vmatprep.subr.mxu0 0.0
      %2329 = vmatpush1.msra.mxu0 0.0
      %2330 = vmatprep.subr.mxu0 0.0
      %2331 = vmatpush1.msra.mxu0 0.0
      %2332 = vmatprep.subr.mxu0 0.0
      %2333 = vmatpush1.msra.mxu0 0.0
      %2334 = vmatprep.subr.mxu0 0.0
      %2335 = vmatpush1.msra.mxu0 0.0
      %2336 = vmatprep.subr.mxu0 0.0
      %2337 = vmatpush1.msra.mxu0 0.0
      %2338 = vmatprep.subr.mxu0 0.0
      %2339 = vmatpush1.msra.mxu0 0.0
      %2340 = vmatprep.subr.mxu0 0.0
      %2341 = vmatpush1.msra.mxu0 0.0
      %2342 = vmatprep.subr.mxu0 0.0
      %2343 = vmatpush1.msra.mxu0 0.0
      %2344 = vmatprep.subr.mxu0 0.0
      %2345 = vmatpush1.msra.mxu0 0.0
      %2346 = vmatprep.subr.mxu0 0.0
      %2347 = vmatpush1.msra.mxu0 0.0
      %2348 = vmatprep.subr.mxu0 0.0
      %2349 = vmatpush1.msra.mxu0 0.0
      %2350 = vmatprep.subr.mxu0 0.0
      %2351 = vmatpush1.msra.mxu0 0.0
      %2352 = vmatprep.subr.mxu0 0.0
      %2353 = vmatpush1.msra.mxu0 0.0
      %2354 = vmatprep.subr.mxu0 0.0
      %2355 = vmatpush1.msra.mxu0 0.0
      %2356 = vmatprep.subr.mxu0 0.0
      %2357 = vmatpush1.msra.mxu0 0.0
      %2358 = vmatprep.mubr.f32.mxu0 0.0
      %2359 = vmatmul.mubr.f32.gmra.mrb[0].mxu0 %v1856
      %v2360 = vpop.f32.mrb[0].mxu0
      %v2361 = vadd.f32 0.0, %v2360
      %v2362 = vpop.f32.mrb[0].mxu0
      %v2363 = vadd.f32 0.0, %v2362
      %2364 = vdwg.mxu0
      %v2365 = vadd.f32 %v2292, %v2361
      %v2366 = vadd.f32 %v2293, %v2363
      %v2367 = vmax.f32 %v1931, %v2365
      %v2368 = vmax.f32 %v1932, %v2366
      %v2369 = vld [vmem:[%s2] sm:$0x3]
      %v2371 = vlaneseq
      %v2372 = vshrl.u32 %v2371, 7
      %v2373 = vsub.s32 0, %v2372
      %v2374 = vrot.slane %v2369, %v2373
      %v2375 = vlaneseq
      %v2376 = vshrl.u32 %v2375, 7
      %v2377 = vsub.s32 1, %v2376
      %v2378 = vrot.slane %v2369, %v2377
      %v2381 = vadd.f32 %v2367, %v2374
      %v2382 = vadd.f32 %v2368, %v2378
      %v2383 = vmax.f32 %v2381, 0.0
      %v2384 = vmax.f32 %v2382, 0.0
      %2385 = vst [vmem:[%s170] sm:$0xff] %v2383
      %vm2386 = vcmask 523264
      %2387 = vst.msk [vmem:[%s170 + $0x8] sm:$0xff] %vm2386, %v2384
      %p2388 = scmp.lt.s32.totalorder %s14, 1
      %s2389 = scalar_select %p2388, %s14, 1
      %s2390 = smul.addr %s2389, 2
      %s2391 = smul.addr %s2390, 8
      %s2392 = scalar_lea.vmem %s3, %s2391
      // Predicated region
      $region33: #{dainet3_forward.5} parent=31 // pred_check
        %p2393 = pneg %p100
      $region34: #{dainet3_forward.5} parent=31 // pred_check_branch
        %2395 = sbr.rel (%p2393) target = $region36
      $region35: #{dainet3_forward.5} parent=31 // pred_region
        _
      $region36: #{dainet3_forward.5} parent=31 // pred_fallthru
        _
    $region32: #{dainet3_forward.5} parent=5 // pred_fallthru
      _
    %p2396 = scmp.le.s32.totalorder 2, %s9
    // Predicated region
    $region37: #{dainet3_forward.5} parent=5 // pred_check
      %p2397 = pneg %p2396
    $region38: #{dainet3_forward.5} parent=5 // pred_check_branch
      %2399 = sbr.rel (%p2397) target = $region40
    $region39: #{dainet3_forward.5} parent=5 // pred_region
      %s2400 = ssub.s32 %s9, 2
      // Predicated region
      $region41: #{dainet3_forward.5} parent=39 // pred_check
        %p2401 = pneg %p106
      $region42: #{dainet3_forward.5} parent=39 // pred_check_branch
        %2403 = sbr.rel (%p2401) target = $region44
      $region43: #{dainet3_forward.5} parent=39 // pred_region
        %p2404 = scmp.lt.s32.totalorder %s15, 1
        %s2405 = scalar_select %p2404, %s15, 1
        %s2406 = smul.addr %s2405, 2
        %s2407 = smul.addr %s2406, 8
        %s2408 = scalar_lea.vmem %s3, %s2407
      $region44: #{dainet3_forward.5} parent=39 // pred_fallthru
        _
    $region40: #{dainet3_forward.5} parent=5 // pred_fallthru
      _
  $region6: #{dainet3_forward.5} parent=0 // loop_footer
    %s13 = sadd.s32 1, %s9
  $region7: #{dainet3_forward.5} parent=0 // loop_footer_branch
    %8 = sbr.rel target = $region3
  $region8: #{dainet3_forward.5} parent=0 // loop_exit
    _

// kernel: dainet3_forward.6
$region0: #{dainet3_forward.6}
  #allocation0 [shape = 'u32[]', space=smem, size = 0x4, offset = 0x4, fixed_abs, tag = 'smem constant byte address 0x4 - core index']
  #allocation1 [shape = 'u32[144,128]{1,0:T(1,128)}', space=vmem, size = 0x12000, scoped, tag = 'internal scratch']
  %s0 = inlined_call_operand.vmem [shape: f32[2,4,5,120], index: 0, kind: input, shape index: {}]
  %s1 = inlined_call_operand.vmem [shape: f32[12,120,48], index: 1, kind: input, shape index: {}]
  %s2 = inlined_call_operand.vmem [shape: f32[1,48], index: 2, kind: input, shape index: {}]
  %s3 = inlined_call_operand.vmem [shape: f32[2,4,48], index: 3, kind: output, shape index: {}]
  %s4 = sld [smem:[#allocation0]]
  $region45: #{dainet3_forward.6} parent=0
    _
  %s6 = ssub.s32 1, %s4
  %s7 = scalar_select 0, %s6, %s4
  loop: start=0, step=1, limit=4
  $region2: #{dainet3_forward.6} parent=0 // loop_pre_header
    _
  $region3: #{dainet3_forward.6} parent=0 // loop_header
    %s9 = sphi 0, %s13
    %p10 = scmp.ge.s32.totalorder %s9, 4
    %s19 = sphi 0, %s21
    %s22 = sphi 0, %s19
    %s23 = sphi 0, %s22
    %s39 = sphi 0, %s23
    %s43 = sphi 0, %s43
    %s45 = sphi 0, %s43
    %s46 = sphi 0, %s45
    %s60 = sphi 0, %s46
    %s64 = sphi 0, %s64
    %s66 = sphi 0, %s64
    %s67 = sphi 0, %s66
    %s81 = sphi 0, %s67
    %s87 = sphi 0, %s89
    %s90 = sphi 0, %s87
    %s91 = sphi 0, %s90
    %s107 = sphi 0, %s91
  $region4: #{dainet3_forward.6} parent=0 // loop_header_branch
    %12 = sbr.rel (%p10) target = $region8
  $region5: #{dainet3_forward.6} parent=0 // loop_body
    %s14 = ssub.s32 %s9, 1
    %s15 = ssub.s32 %s9, 2
    %s16 = sadd.s32 %s9, 1
    %s17 = ssub.s32 %s9, %s16
    %p18 = scmp.eq.s32.totalorder %s17, 0
    %s20 = sadd.s32 %s19, 1
    %s21 = scalar_select %p18, %s19, %s20
    %p24 = pneg %p18
    %p25 = scmp.eq.s32.totalorder %s9, 1
    %p26 = por %p24, %p25
    %p27 = scmp.ne.s32.totalorder %s19, %s22
    %p28 = scmp.eq.s32.totalorder %s9, 0
    %p29 = por %p27, %p28
    %p30 = scmp.ne.s32.totalorder %s19, %s22
    %p31 = scmp.eq.s32.totalorder %s14, 1
    %p32 = por %p30, %p31
    %p33 = scmp.ne.s32.totalorder %s22, %s23
    %p34 = scmp.eq.s32.totalorder %s14, 0
    %p35 = por %p33, %p34
    %p36 = scmp.ne.s32.totalorder %s22, %s23
    %p37 = scmp.eq.s32.totalorder %s15, 1
    %p38 = por %p36, %p37
    %p40 = scmp.ne.s32.totalorder %s23, %s39
    %p41 = scmp.eq.s32.totalorder %s15, 0
    %p42 = por %p40, %p41
    %s44 = sadd.s32 %s43, 1
    %p47 = scmp.eq.s32.totalorder %s9, 1
    %p48 = scmp.ne.s32.totalorder %s43, %s45
    %p49 = scmp.eq.s32.totalorder %s9, 0
    %p50 = por %p48, %p49
    %p51 = scmp.ne.s32.totalorder %s43, %s45
    %p52 = scmp.eq.s32.totalorder %s14, 1
    %p53 = por %p51, %p52
    %p54 = scmp.ne.s32.totalorder %s45, %s46
    %p55 = scmp.eq.s32.totalorder %s14, 0
    %p56 = por %p54, %p55
    %p57 = scmp.ne.s32.totalorder %s45, %s46
    %p58 = scmp.eq.s32.totalorder %s15, 1
    %p59 = por %p57, %p58
    %p61 = scmp.ne.s32.totalorder %s46, %s60
    %p62 = scmp.eq.s32.totalorder %s15, 0
    %p63 = por %p61, %p62
    %s65 = sadd.s32 %s64, 1
    %p68 = scmp.eq.s32.totalorder %s9, 1
    %p69 = scmp.ne.s32.totalorder %s64, %s66
    %p70 = scmp.eq.s32.totalorder %s9, 0
    %p71 = por %p69, %p70
    %p72 = scmp.ne.s32.totalorder %s64, %s66
    %p73 = scmp.eq.s32.totalorder %s14, 1
    %p74 = por %p72, %p73
    %p75 = scmp.ne.s32.totalorder %s66, %s67
    %p76 = scmp.eq.s32.totalorder %s14, 0
    %p77 = por %p75, %p76
    %p78 = scmp.ne.s32.totalorder %s66, %s67
    %p79 = scmp.eq.s32.totalorder %s15, 1
    %p80 = por %p78, %p79
    %p82 = scmp.ne.s32.totalorder %s67, %s81
    %p83 = scmp.eq.s32.totalorder %s15, 0
    %p84 = por %p82, %p83
    %s85 = ssub.s32 %s9, %s16
    %p86 = scmp.eq.s32.totalorder %s85, 0
    %s88 = sadd.s32 %s87, 1
    %s89 = scalar_select %p86, %s87, %s88
    %p92 = pneg %p86
    %p93 = scmp.eq.s32.totalorder %s9, 1
    %p94 = por %p92, %p93
    %p95 = scmp.ne.s32.totalorder %s87, %s90
    %p96 = scmp.eq.s32.totalorder %s9, 0
    %p97 = por %p95, %p96
    %p98 = scmp.ne.s32.totalorder %s87, %s90
    %p99 = scmp.eq.s32.totalorder %s14, 1
    %p100 = por %p98, %p99
    %p101 = scmp.ne.s32.totalorder %s90, %s91
    %p102 = scmp.eq.s32.totalorder %s14, 0
    %p103 = por %p101, %p102
    %p104 = scmp.ne.s32.totalorder %s90, %s91
    %p105 = scmp.eq.s32.totalorder %s15, 1
    %p106 = por %p104, %p105
    %p108 = scmp.ne.s32.totalorder %s91, %s107
    %p109 = scmp.eq.s32.totalorder %s15, 0
    %p110 = por %p108, %p109
    %p111 = scmp.le.s32.totalorder 1, %s9
    %p112 = scmp.lt.s32.totalorder %s9, 3
    %p113 = pnand %p111, %p112
    %p114 = pneg %p113
    // Predicated region
    $region9: #{dainet3_forward.6} parent=5 // pred_check
      _
    $region10: #{dainet3_forward.6} parent=5 // pred_check_branch
      %116 = sbr.rel (%p113) target = $region12
    $region11: #{dainet3_forward.6} parent=5 // pred_region
      %s117 = ssub.s32 %s9, 1
      // Predicated region
      $region13: #{dainet3_forward.6} parent=11 // pred_check
        %p118 = pneg %p56
      $region14: #{dainet3_forward.6} parent=11 // pred_check_branch
        %120 = sbr.rel (%p118) target = $region16
      $region15: #{dainet3_forward.6} parent=11 // pred_region
        _
      $region16: #{dainet3_forward.6} parent=11 // pred_fallthru
        _
      // Predicated region
      $region17: #{dainet3_forward.6} parent=11 // pred_check
        %p121 = pneg %p77
      $region18: #{dainet3_forward.6} parent=11 // pred_check_branch
        %123 = sbr.rel (%p121) target = $region20
      $region19: #{dainet3_forward.6} parent=11 // pred_region
        _
      $region20: #{dainet3_forward.6} parent=11 // pred_fallthru
        _
    $region12: #{dainet3_forward.6} parent=5 // pred_fallthru
      _
    %p124 = scmp.lt.s32.totalorder %s9, 2
    // Predicated region
    $region21: #{dainet3_forward.6} parent=5 // pred_check
      %p125 = pneg %p124
    $region22: #{dainet3_forward.6} parent=5 // pred_check_branch
      %127 = sbr.rel (%p125) target = $region24
    $region23: #{dainet3_forward.6} parent=5 // pred_region
      // Predicated region
      $region25: #{dainet3_forward.6} parent=23 // pred_check
        %p128 = pneg %p29
      $region26: #{dainet3_forward.6} parent=23 // pred_check_branch
        %130 = sbr.rel (%p128) target = $region28
      $region27: #{dainet3_forward.6} parent=23 // pred_region
        %p131 = scmp.lt.s32.totalorder %s9, 1
        %s132 = scalar_select %p131, %s9, 1
        %s133 = smul.addr %s132, 4
        %s134 = smul.addr %s133, 8
        %s135 = scalar_lea.vmem %s0, %s134
      $region28: #{dainet3_forward.6} parent=23 // pred_fallthru
        _
    $region24: #{dainet3_forward.6} parent=5 // pred_fallthru
      _
    %p136 = scmp.le.s32.totalorder 1, %s9
    %p137 = scmp.lt.s32.totalorder %s9, 3
    %p138 = pnand %p136, %p137
    %p139 = pneg %p138
    // Predicated region
    $region29: #{dainet3_forward.6} parent=5 // pred_check
      _
    $region30: #{dainet3_forward.6} parent=5 // pred_check_branch
      %141 = sbr.rel (%p138) target = $region32
    $region31: #{dainet3_forward.6} parent=5 // pred_region
      %s142 = ssub.s32 %s9, 1
      %p143 = scmp.lt.s32.totalorder %s14, 1
      %s144 = scalar_select %p143, %s14, 1
      %s145 = smul.addr %s144, 4
      %s146 = smul.addr %s145, 8
      %s147 = scalar_lea.vmem %s0, %s146
      %p148 = pneg %p35
      %p149 = pneg %p32
      %p150 = pneg %p56
      %p151 = pneg %p53
      %p152 = pneg %p77
      %p153 = pneg %p74
      %p154 = pneg %p103
      %p155 = pneg %p100
      %p156 = scmp.lt.s32.totalorder %s14, 1
      %s157 = scalar_select %p156, %s14, 1
      %s158 = smul.addr %s157, 4
      %s159 = scalar_lea.vmem %s3, %s158
      %p160 = scmp.lt.s32.totalorder %s14, 1
      %s161 = scalar_select %p160, %s14, 1
      %s162 = smul.addr %s161, 4
      %s163 = smul.addr %s162, 8
      %s164 = scalar_lea.vmem %s0, %s163
      %p165 = scmp.lt.s32.totalorder %s14, 1
      %s166 = scalar_select %p165, %s14, 1
      %s167 = smul.addr %s166, 4
      %s168 = scalar_lea.vmem %s3, %s167
      %v169 = vld [vmem:[%s164] sm:$0xf]
      %v170 = vld [vmem:[%s1] sm:$0xff]
      %v171 = vld [vmem:[%s1 + $0x8] sm:$0xff]
      %v172 = vld [vmem:[%s1 + $0x10] sm:$0xff]
      %v173 = vld [vmem:[%s1 + $0x18] sm:$0xff]
      %v174 = vld [vmem:[%s1 + $0x20] sm:$0xff]
      %v175 = vld [vmem:[%s1 + $0x28] sm:$0xff]
      %v176 = vld [vmem:[%s1 + $0x30] sm:$0xff]
      %v177 = vld [vmem:[%s1 + $0x38] sm:$0xff]
      %v178 = vld [vmem:[%s1 + $0x40] sm:$0xff]
      %v179 = vld [vmem:[%s1 + $0x48] sm:$0xff]
      %v180 = vld [vmem:[%s1 + $0x50] sm:$0xff]
      %v181 = vld [vmem:[%s1 + $0x58] sm:$0xff]
      %v182 = vld [vmem:[%s1 + $0x60] sm:$0xff]
      %v183 = vld [vmem:[%s1 + $0x68] sm:$0xff]
      %v184 = vld [vmem:[%s1 + $0x70] sm:$0xff]
      %s185 = scalar_lea.vmem %s164, 8
      %v186 = vld [vmem:[%s185] sm:$0xf]
      %s187 = scalar_lea.vmem %s1, 120
      %v188 = vld [vmem:[%s187] sm:$0xff]
      %v189 = vld [vmem:[%s187 + $0x8] sm:$0xff]
      %v190 = vld [vmem:[%s187 + $0x10] sm:$0xff]
      %v191 = vld [vmem:[%s187 + $0x18] sm:$0xff]
      %v192 = vld [vmem:[%s187 + $0x20] sm:$0xff]
      %v193 = vld [vmem:[%s187 + $0x28] sm:$0xff]
      %v194 = vld [vmem:[%s187 + $0x30] sm:$0xff]
      %v195 = vld [vmem:[%s187 + $0x38] sm:$0xff]
      %v196 = vld [vmem:[%s187 + $0x40] sm:$0xff]
      %v197 = vld [vmem:[%s187 + $0x48] sm:$0xff]
      %v198 = vld [vmem:[%s187 + $0x50] sm:$0xff]
      %v199 = vld [vmem:[%s187 + $0x58] sm:$0xff]
      %v200 = vld [vmem:[%s187 + $0x60] sm:$0xff]
      %v201 = vld [vmem:[%s187 + $0x68] sm:$0xff]
      %v202 = vld [vmem:[%s187 + $0x70] sm:$0xff]
      %vm203 = vcmask 982016
      %v205 = vsel %vm203, %v186, 0
      %207 = vmatprep.subr.mxu0 0.0
      %208 = vmatpush1.msra.mxu0 %v188
      %209 = vmatprep.subr.mxu0 0.0
      %210 = vmatpush1.msra.mxu0 %v189
      %211 = vmatprep.subr.mxu0 0.0
      %212 = vmatpush1.msra.mxu0 %v190
      %213 = vmatprep.subr.mxu0 0.0
      %214 = vmatpush1.msra.mxu0 %v191
      %215 = vmatprep.subr.mxu0 0.0
      %216 = vmatpush1.msra.mxu0 %v192
      %217 = vmatprep.subr.mxu0 0.0
      %218 = vmatpush1.msra.mxu0 %v193
      %219 = vmatprep.subr.mxu0 0.0
      %220 = vmatpush1.msra.mxu0 %v194
      %221 = vmatprep.subr.mxu0 0.0
      %222 = vmatpush1.msra.mxu0 %v195
      %223 = vmatprep.subr.mxu0 0.0
      %224 = vmatpush1.msra.mxu0 %v196
      %225 = vmatprep.subr.mxu0 0.0
      %226 = vmatpush1.msra.mxu0 %v197
      %227 = vmatprep.subr.mxu0 0.0
      %228 = vmatpush1.msra.mxu0 %v198
      %229 = vmatprep.subr.mxu0 0.0
      %230 = vmatpush1.msra.mxu0 %v199
      %231 = vmatprep.subr.mxu0 0.0
      %232 = vmatpush1.msra.mxu0 %v200
      %233 = vmatprep.subr.mxu0 0.0
      %234 = vmatpush1.msra.mxu0 %v201
      %235 = vmatprep.subr.mxu0 0.0
      %236 = vmatpush1.msra.mxu0 %v202
      %237 = vmatprep.subr.mxu0 0.0
      %238 = vmatpush1.msra.mxu0 0.0
      %239 = vmatprep.subr.mxu0 0.0
      %240 = vmatpush1.msra.mxu0 0.0
      %241 = vmatprep.subr.mxu0 0.0
      %242 = vmatpush1.msra.mxu0 0.0
      %243 = vmatprep.subr.mxu0 0.0
      %244 = vmatpush1.msra.mxu0 0.0
      %245 = vmatprep.subr.mxu0 0.0
      %246 = vmatpush1.msra.mxu0 0.0
      %247 = vmatprep.subr.mxu0 0.0
      %248 = vmatpush1.msra.mxu0 0.0
      %249 = vmatprep.subr.mxu0 0.0
      %250 = vmatpush1.msra.mxu0 0.0
      %251 = vmatprep.subr.mxu0 0.0
      %252 = vmatpush1.msra.mxu0 0.0
      %253 = vmatprep.subr.mxu0 0.0
      %254 = vmatpush1.msra.mxu0 0.0
      %255 = vmatprep.subr.mxu0 0.0
      %256 = vmatpush1.msra.mxu0 0.0
      %257 = vmatprep.subr.mxu0 0.0
      %258 = vmatpush1.msra.mxu0 0.0
      %259 = vmatprep.subr.mxu0 0.0
      %260 = vmatpush1.msra.mxu0 0.0
      %261 = vmatprep.subr.mxu0 0.0
      %262 = vmatpush1.msra.mxu0 0.0
      %263 = vmatprep.subr.mxu0 0.0
      %264 = vmatpush1.msra.mxu0 0.0
      %265 = vmatprep.subr.mxu0 0.0
      %266 = vmatpush1.msra.mxu0 0.0
      %267 = vmatprep.subr.mxu0 0.0
      %268 = vmatpush1.msra.mxu0 0.0
      %269 = vmatprep.subr.mxu0 0.0
      %270 = vmatpush1.msra.mxu0 0.0
      %271 = vmatprep.mubr.f32.mxu0 0.0
      %272 = vmatmul.mubr.f32.gmra.mrb[0].mxu0 %v205
      %v273 = vpop.f32.mrb[0].mxu0
      %v274 = vadd.f32 0.0, %v273
      %v275 = vpop.f32.mrb[0].mxu0
      %276 = vdwg.mxu0
      %v278 = vsel %vm203, %v169, 0
      %280 = vmatprep.subr.mxu0 0.0
      %281 = vmatpush1.msra.mxu0 %v170
      %282 = vmatprep.subr.mxu0 0.0
      %283 = vmatpush1.msra.mxu0 %v171
      %284 = vmatprep.subr.mxu0 0.0
      %285 = vmatpush1.msra.mxu0 %v172
      %286 = vmatprep.subr.mxu0 0.0
      %287 = vmatpush1.msra.mxu0 %v173
      %288 = vmatprep.subr.mxu0 0.0
      %289 = vmatpush1.msra.mxu0 %v174
      %290 = vmatprep.subr.mxu0 0.0
      %291 = vmatpush1.msra.mxu0 %v175
      %292 = vmatprep.subr.mxu0 0.0
      %293 = vmatpush1.msra.mxu0 %v176
      %294 = vmatprep.subr.mxu0 0.0
      %295 = vmatpush1.msra.mxu0 %v177
      %296 = vmatprep.subr.mxu0 0.0
      %297 = vmatpush1.msra.mxu0 %v178
      %298 = vmatprep.subr.mxu0 0.0
      %299 = vmatpush1.msra.mxu0 %v179
      %300 = vmatprep.subr.mxu0 0.0
      %301 = vmatpush1.msra.mxu0 %v180
      %302 = vmatprep.subr.mxu0 0.0
      %303 = vmatpush1.msra.mxu0 %v181
      %304 = vmatprep.subr.mxu0 0.0
      %305 = vmatpush1.msra.mxu0 %v182
      %306 = vmatprep.subr.mxu0 0.0
      %307 = vmatpush1.msra.mxu0 %v183
      %308 = vmatprep.subr.mxu0 0.0
      %309 = vmatpush1.msra.mxu0 %v184
      %310 = vmatprep.subr.mxu0 0.0
      %311 = vmatpush1.msra.mxu0 0.0
      %312 = vmatprep.subr.mxu0 0.0
      %313 = vmatpush1.msra.mxu0 0.0
      %314 = vmatprep.subr.mxu0 0.0
      %315 = vmatpush1.msra.mxu0 0.0
      %316 = vmatprep.subr.mxu0 0.0
      %317 = vmatpush1.msra.mxu0 0.0
      %318 = vmatprep.subr.mxu0 0.0
      %319 = vmatpush1.msra.mxu0 0.0
      %320 = vmatprep.subr.mxu0 0.0
      %321 = vmatpush1.msra.mxu0 0.0
      %322 = vmatprep.subr.mxu0 0.0
      %323 = vmatpush1.msra.mxu0 0.0
      %324 = vmatprep.subr.mxu0 0.0
      %325 = vmatpush1.msra.mxu0 0.0
      %326 = vmatprep.subr.mxu0 0.0
      %327 = vmatpush1.msra.mxu0 0.0
      %328 = vmatprep.subr.mxu0 0.0
      %329 = vmatpush1.msra.mxu0 0.0
      %330 = vmatprep.subr.mxu0 0.0
      %331 = vmatpush1.msra.mxu0 0.0
      %332 = vmatprep.subr.mxu0 0.0
      %333 = vmatpush1.msra.mxu0 0.0
      %334 = vmatprep.subr.mxu0 0.0
      %335 = vmatpush1.msra.mxu0 0.0
      %336 = vmatprep.subr.mxu0 0.0
      %337 = vmatpush1.msra.mxu0 0.0
      %338 = vmatprep.subr.mxu0 0.0
      %339 = vmatpush1.msra.mxu0 0.0
      %340 = vmatprep.subr.mxu0 0.0
      %341 = vmatpush1.msra.mxu0 0.0
      %342 = vmatprep.subr.mxu0 0.0
      %343 = vmatpush1.msra.mxu0 0.0
      %344 = vmatprep.mubr.f32.mxu0 0.0
      %345 = vmatmul.mubr.f32.gmra.mrb[0].mxu0 %v278
      %v346 = vpop.f32.mrb[0].mxu0
      %v347 = vadd.f32 %v274, %v346
      %v348 = vpop.f32.mrb[0].mxu0
      %349 = vdwg.mxu0
      %s350 = scalar_lea.vmem %s164, 16
      %v351 = vld [vmem:[%s350] sm:$0xf]
      %s352 = scalar_lea.vmem %s1, 240
      %v353 = vld [vmem:[%s352] sm:$0xff]
      %v354 = vld [vmem:[%s352 + $0x8] sm:$0xff]
      %v355 = vld [vmem:[%s352 + $0x10] sm:$0xff]
      %v356 = vld [vmem:[%s352 + $0x18] sm:$0xff]
      %v357 = vld [vmem:[%s352 + $0x20] sm:$0xff]
      %v358 = vld [vmem:[%s352 + $0x28] sm:$0xff]
      %v359 = vld [vmem:[%s352 + $0x30] sm:$0xff]
      %v360 = vld [vmem:[%s352 + $0x38] sm:$0xff]
      %v361 = vld [vmem:[%s352 + $0x40] sm:$0xff]
      %v362 = vld [vmem:[%s352 + $0x48] sm:$0xff]
      %v363 = vld [vmem:[%s352 + $0x50] sm:$0xff]
      %v364 = vld [vmem:[%s352 + $0x58] sm:$0xff]
      %v365 = vld [vmem:[%s352 + $0x60] sm:$0xff]
      %v366 = vld [vmem:[%s352 + $0x68] sm:$0xff]
      %v367 = vld [vmem:[%s352 + $0x70] sm:$0xff]
      %v369 = vsel %vm203, %v351, 0
      %371 = vmatprep.subr.mxu0 0.0
      %372 = vmatpush1.msra.mxu0 %v353
      %373 = vmatprep.subr.mxu0 0.0
      %374 = vmatpush1.msra.mxu0 %v354
      %375 = vmatprep.subr.mxu0 0.0
      %376 = vmatpush1.msra.mxu0 %v355
      %377 = vmatprep.subr.mxu0 0.0
      %378 = vmatpush1.msra.mxu0 %v356
      %379 = vmatprep.subr.mxu0 0.0
      %380 = vmatpush1.msra.mxu0 %v357
      %381 = vmatprep.subr.mxu0 0.0
      %382 = vmatpush1.msra.mxu0 %v358
      %383 = vmatprep.subr.mxu0 0.0
      %384 = vmatpush1.msra.mxu0 %v359
      %385 = vmatprep.subr.mxu0 0.0
      %386 = vmatpush1.msra.mxu0 %v360
      %387 = vmatprep.subr.mxu0 0.0
      %388 = vmatpush1.msra.mxu0 %v361
      %389 = vmatprep.subr.mxu0 0.0
      %390 = vmatpush1.msra.mxu0 %v362
      %391 = vmatprep.subr.mxu0 0.0
      %392 = vmatpush1.msra.mxu0 %v363
      %393 = vmatprep.subr.mxu0 0.0
      %394 = vmatpush1.msra.mxu0 %v364
      %395 = vmatprep.subr.mxu0 0.0
      %396 = vmatpush1.msra.mxu0 %v365
      %397 = vmatprep.subr.mxu0 0.0
      %398 = vmatpush1.msra.mxu0 %v366
      %399 = vmatprep.subr.mxu0 0.0
      %400 = vmatpush1.msra.mxu0 %v367
      %401 = vmatprep.subr.mxu0 0.0
      %402 = vmatpush1.msra.mxu0 0.0
      %403 = vmatprep.subr.mxu0 0.0
      %404 = vmatpush1.msra.mxu0 0.0
      %405 = vmatprep.subr.mxu0 0.0
      %406 = vmatpush1.msra.mxu0 0.0
      %407 = vmatprep.subr.mxu0 0.0
      %408 = vmatpush1.msra.mxu0 0.0
      %409 = vmatprep.subr.mxu0 0.0
      %410 = vmatpush1.msra.mxu0 0.0
      %411 = vmatprep.subr.mxu0 0.0
      %412 = vmatpush1.msra.mxu0 0.0
      %413 = vmatprep.subr.mxu0 0.0
      %414 = vmatpush1.msra.mxu0 0.0
      %415 = vmatprep.subr.mxu0 0.0
      %416 = vmatpush1.msra.mxu0 0.0
      %417 = vmatprep.subr.mxu0 0.0
      %418 = vmatpush1.msra.mxu0 0.0
      %419 = vmatprep.subr.mxu0 0.0
      %420 = vmatpush1.msra.mxu0 0.0
      %421 = vmatprep.subr.mxu0 0.0
      %422 = vmatpush1.msra.mxu0 0.0
      %423 = vmatprep.subr.mxu0 0.0
      %424 = vmatpush1.msra.mxu0 0.0
      %425 = vmatprep.subr.mxu0 0.0
      %426 = vmatpush1.msra.mxu0 0.0
      %427 = vmatprep.subr.mxu0 0.0
      %428 = vmatpush1.msra.mxu0 0.0
      %429 = vmatprep.subr.mxu0 0.0
      %430 = vmatpush1.msra.mxu0 0.0
      %431 = vmatprep.subr.mxu0 0.0
      %432 = vmatpush1.msra.mxu0 0.0
      %433 = vmatprep.subr.mxu0 0.0
      %434 = vmatpush1.msra.mxu0 0.0
      %435 = vmatprep.mubr.f32.mxu0 0.0
      %436 = vmatmul.mubr.f32.gmra.mrb[0].mxu0 %v369
      %v437 = vpop.f32.mrb[0].mxu0
      %v438 = vadd.f32 0.0, %v437
      %v439 = vpop.f32.mrb[0].mxu0
      %440 = vdwg.mxu0
      %v441 = vadd.f32 %v347, %v438
      %s442 = scalar_lea.vmem %s164, 24
      %v443 = vld [vmem:[%s442] sm:$0xf]
      %s444 = scalar_lea.vmem %s1, 360
      %v445 = vld [vmem:[%s444] sm:$0xff]
      %v446 = vld [vmem:[%s444 + $0x8] sm:$0xff]
      %v447 = vld [vmem:[%s444 + $0x10] sm:$0xff]
      %v448 = vld [vmem:[%s444 + $0x18] sm:$0xff]
      %v449 = vld [vmem:[%s444 + $0x20] sm:$0xff]
      %v450 = vld [vmem:[%s444 + $0x28] sm:$0xff]
      %v451 = vld [vmem:[%s444 + $0x30] sm:$0xff]
      %v452 = vld [vmem:[%s444 + $0x38] sm:$0xff]
      %v453 = vld [vmem:[%s444 + $0x40] sm:$0xff]
      %v454 = vld [vmem:[%s444 + $0x48] sm:$0xff]
      %v455 = vld [vmem:[%s444 + $0x50] sm:$0xff]
      %v456 = vld [vmem:[%s444 + $0x58] sm:$0xff]
      %v457 = vld [vmem:[%s444 + $0x60] sm:$0xff]
      %v458 = vld [vmem:[%s444 + $0x68] sm:$0xff]
      %v459 = vld [vmem:[%s444 + $0x70] sm:$0xff]
      %v461 = vsel %vm203, %v443, 0
      %463 = vmatprep.subr.mxu0 0.0
      %464 = vmatpush1.msra.mxu0 %v445
      %465 = vmatprep.subr.mxu0 0.0
      %466 = vmatpush1.msra.mxu0 %v446
      %467 = vmatprep.subr.mxu0 0.0
      %468 = vmatpush1.msra.mxu0 %v447
      %469 = vmatprep.subr.mxu0 0.0
      %470 = vmatpush1.msra.mxu0 %v448
      %471 = vmatprep.subr.mxu0 0.0
      %472 = vmatpush1.msra.mxu0 %v449
      %473 = vmatprep.subr.mxu0 0.0
      %474 = vmatpush1.msra.mxu0 %v450
      %475 = vmatprep.subr.mxu0 0.0
      %476 = vmatpush1.msra.mxu0 %v451
      %477 = vmatprep.subr.mxu0 0.0
      %478 = vmatpush1.msra.mxu0 %v452
      %479 = vmatprep.subr.mxu0 0.0
      %480 = vmatpush1.msra.mxu0 %v453
      %481 = vmatprep.subr.mxu0 0.0
      %482 = vmatpush1.msra.mxu0 %v454
      %483 = vmatprep.subr.mxu0 0.0
      %484 = vmatpush1.msra.mxu0 %v455
      %485 = vmatprep.subr.mxu0 0.0
      %486 = vmatpush1.msra.mxu0 %v456
      %487 = vmatprep.subr.mxu0 0.0
      %488 = vmatpush1.msra.mxu0 %v457
      %489 = vmatprep.subr.mxu0 0.0
      %490 = vmatpush1.msra.mxu0 %v458
      %491 = vmatprep.subr.mxu0 0.0
      %492 = vmatpush1.msra.mxu0 %v459
      %493 = vmatprep.subr.mxu0 0.0
      %494 = vmatpush1.msra.mxu0 0.0
      %495 = vmatprep.subr.mxu0 0.0
      %496 = vmatpush1.msra.mxu0 0.0
      %497 = vmatprep.subr.mxu0 0.0
      %498 = vmatpush1.msra.mxu0 0.0
      %499 = vmatprep.subr.mxu0 0.0
      %500 = vmatpush1.msra.mxu0 0.0
      %501 = vmatprep.subr.mxu0 0.0
      %502 = vmatpush1.msra.mxu0 0.0
      %503 = vmatprep.subr.mxu0 0.0
      %504 = vmatpush1.msra.mxu0 0.0
      %505 = vmatprep.subr.mxu0 0.0
      %506 = vmatpush1.msra.mxu0 0.0
      %507 = vmatprep.subr.mxu0 0.0
      %508 = vmatpush1.msra.mxu0 0.0
      %509 = vmatprep.subr.mxu0 0.0
      %510 = vmatpush1.msra.mxu0 0.0
      %511 = vmatprep.subr.mxu0 0.0
      %512 = vmatpush1.msra.mxu0 0.0
      %513 = vmatprep.subr.mxu0 0.0
      %514 = vmatpush1.msra.mxu0 0.0
      %515 = vmatprep.subr.mxu0 0.0
      %516 = vmatpush1.msra.mxu0 0.0
      %517 = vmatprep.subr.mxu0 0.0
      %518 = vmatpush1.msra.mxu0 0.0
      %519 = vmatprep.subr.mxu0 0.0
      %520 = vmatpush1.msra.mxu0 0.0
      %521 = vmatprep.subr.mxu0 0.0
      %522 = vmatpush1.msra.mxu0 0.0
      %523 = vmatprep.subr.mxu0 0.0
      %524 = vmatpush1.msra.mxu0 0.0
      %525 = vmatprep.subr.mxu0 0.0
      %526 = vmatpush1.msra.mxu0 0.0
      %527 = vmatprep.mubr.f32.mxu0 0.0
      %528 = vmatmul.mubr.f32.gmra.mrb[0].mxu0 %v461
      %v529 = vpop.f32.mrb[0].mxu0
      %v530 = vadd.f32 0.0, %v529
      %v531 = vpop.f32.mrb[0].mxu0
      %532 = vdwg.mxu0
      %v533 = vadd.f32 %v441, %v530
      %v534 = vld [vmem:[%s164 + $0x1] sm:$0xf]
      %s535 = scalar_lea.vmem %s1, 480
      %v536 = vld [vmem:[%s535] sm:$0xff]
      %v537 = vld [vmem:[%s535 + $0x8] sm:$0xff]
      %v538 = vld [vmem:[%s535 + $0x10] sm:$0xff]
      %v539 = vld [vmem:[%s535 + $0x18] sm:$0xff]
      %v540 = vld [vmem:[%s535 + $0x20] sm:$0xff]
      %v541 = vld [vmem:[%s535 + $0x28] sm:$0xff]
      %v542 = vld [vmem:[%s535 + $0x30] sm:$0xff]
      %v543 = vld [vmem:[%s535 + $0x38] sm:$0xff]
      %v544 = vld [vmem:[%s535 + $0x40] sm:$0xff]
      %v545 = vld [vmem:[%s535 + $0x48] sm:$0xff]
      %v546 = vld [vmem:[%s535 + $0x50] sm:$0xff]
      %v547 = vld [vmem:[%s535 + $0x58] sm:$0xff]
      %v548 = vld [vmem:[%s535 + $0x60] sm:$0xff]
      %v549 = vld [vmem:[%s535 + $0x68] sm:$0xff]
      %v550 = vld [vmem:[%s535 + $0x70] sm:$0xff]
      %v552 = vsel %vm203, %v534, 0
      %554 = vmatprep.subr.mxu0 0.0
      %555 = vmatpush1.msra.mxu0 %v536
      %556 = vmatprep.subr.mxu0 0.0
      %557 = vmatpush1.msra.mxu0 %v537
      %558 = vmatprep.subr.mxu0 0.0
      %559 = vmatpush1.msra.mxu0 %v538
      %560 = vmatprep.subr.mxu0 0.0
      %561 = vmatpush1.msra.mxu0 %v539
      %562 = vmatprep.subr.mxu0 0.0
      %563 = vmatpush1.msra.mxu0 %v540
      %564 = vmatprep.subr.mxu0 0.0
      %565 = vmatpush1.msra.mxu0 %v541
      %566 = vmatprep.subr.mxu0 0.0
      %567 = vmatpush1.msra.mxu0 %v542
      %568 = vmatprep.subr.mxu0 0.0
      %569 = vmatpush1.msra.mxu0 %v543
      %570 = vmatprep.subr.mxu0 0.0
      %571 = vmatpush1.msra.mxu0 %v544
      %572 = vmatprep.subr.mxu0 0.0
      %573 = vmatpush1.msra.mxu0 %v545
      %574 = vmatprep.subr.mxu0 0.0
      %575 = vmatpush1.msra.mxu0 %v546
      %576 = vmatprep.subr.mxu0 0.0
      %577 = vmatpush1.msra.mxu0 %v547
      %578 = vmatprep.subr.mxu0 0.0
      %579 = vmatpush1.msra.mxu0 %v548
      %580 = vmatprep.subr.mxu0 0.0
      %581 = vmatpush1.msra.mxu0 %v549
      %582 = vmatprep.subr.mxu0 0.0
      %583 = vmatpush1.msra.mxu0 %v550
      %584 = vmatprep.subr.mxu0 0.0
      %585 = vmatpush1.msra.mxu0 0.0
      %586 = vmatprep.subr.mxu0 0.0
      %587 = vmatpush1.msra.mxu0 0.0
      %588 = vmatprep.subr.mxu0 0.0
      %589 = vmatpush1.msra.mxu0 0.0
      %590 = vmatprep.subr.mxu0 0.0
      %591 = vmatpush1.msra.mxu0 0.0
      %592 = vmatprep.subr.mxu0 0.0
      %593 = vmatpush1.msra.mxu0 0.0
      %594 = vmatprep.subr.mxu0 0.0
      %595 = vmatpush1.msra.mxu0 0.0
      %596 = vmatprep.subr.mxu0 0.0
      %597 = vmatpush1.msra.mxu0 0.0
      %598 = vmatprep.subr.mxu0 0.0
      %599 = vmatpush1.msra.mxu0 0.0
      %600 = vmatprep.subr.mxu0 0.0
      %601 = vmatpush1.msra.mxu0 0.0
      %602 = vmatprep.subr.mxu0 0.0
      %603 = vmatpush1.msra.mxu0 0.0
      %604 = vmatprep.subr.mxu0 0.0
      %605 = vmatpush1.msra.mxu0 0.0
      %606 = vmatprep.subr.mxu0 0.0
      %607 = vmatpush1.msra.mxu0 0.0
      %608 = vmatprep.subr.mxu0 0.0
      %609 = vmatpush1.msra.mxu0 0.0
      %610 = vmatprep.subr.mxu0 0.0
      %611 = vmatpush1.msra.mxu0 0.0
      %612 = vmatprep.subr.mxu0 0.0
      %613 = vmatpush1.msra.mxu0 0.0
      %614 = vmatprep.subr.mxu0 0.0
      %615 = vmatpush1.msra.mxu0 0.0
      %616 = vmatprep.subr.mxu0 0.0
      %617 = vmatpush1.msra.mxu0 0.0
      %618 = vmatprep.mubr.f32.mxu0 0.0
      %619 = vmatmul.mubr.f32.gmra.mrb[0].mxu0 %v552
      %v620 = vpop.f32.mrb[0].mxu0
      %v621 = vadd.f32 0.0, %v620
      %v622 = vpop.f32.mrb[0].mxu0
      %623 = vdwg.mxu0
      %v624 = vadd.f32 %v533, %v621
      %v625 = vld [vmem:[%s185 + $0x1] sm:$0xf]
      %s626 = scalar_lea.vmem %s1, 600
      %v627 = vld [vmem:[%s626] sm:$0xff]
      %v628 = vld [vmem:[%s626 + $0x8] sm:$0xff]
      %v629 = vld [vmem:[%s626 + $0x10] sm:$0xff]
      %v630 = vld [vmem:[%s626 + $0x18] sm:$0xff]
      %v631 = vld [vmem:[%s626 + $0x20] sm:$0xff]
      %v632 = vld [vmem:[%s626 + $0x28] sm:$0xff]
      %v633 = vld [vmem:[%s626 + $0x30] sm:$0xff]
      %v634 = vld [vmem:[%s626 + $0x38] sm:$0xff]
      %v635 = vld [vmem:[%s626 + $0x40] sm:$0xff]
      %v636 = vld [vmem:[%s626 + $0x48] sm:$0xff]
      %v637 = vld [vmem:[%s626 + $0x50] sm:$0xff]
      %v638 = vld [vmem:[%s626 + $0x58] sm:$0xff]
      %v639 = vld [vmem:[%s626 + $0x60] sm:$0xff]
      %v640 = vld [vmem:[%s626 + $0x68] sm:$0xff]
      %v641 = vld [vmem:[%s626 + $0x70] sm:$0xff]
      %v643 = vsel %vm203, %v625, 0
      %645 = vmatprep.subr.mxu0 0.0
      %646 = vmatpush1.msra.mxu0 %v627
      %647 = vmatprep.subr.mxu0 0.0
      %648 = vmatpush1.msra.mxu0 %v628
      %649 = vmatprep.subr.mxu0 0.0
      %650 = vmatpush1.msra.mxu0 %v629
      %651 = vmatprep.subr.mxu0 0.0
      %652 = vmatpush1.msra.mxu0 %v630
      %653 = vmatprep.subr.mxu0 0.0
      %654 = vmatpush1.msra.mxu0 %v631
      %655 = vmatprep.subr.mxu0 0.0
      %656 = vmatpush1.msra.mxu0 %v632
      %657 = vmatprep.subr.mxu0 0.0
      %658 = vmatpush1.msra.mxu0 %v633
      %659 = vmatprep.subr.mxu0 0.0
      %660 = vmatpush1.msra.mxu0 %v634
      %661 = vmatprep.subr.mxu0 0.0
      %662 = vmatpush1.msra.mxu0 %v635
      %663 = vmatprep.subr.mxu0 0.0
      %664 = vmatpush1.msra.mxu0 %v636
      %665 = vmatprep.subr.mxu0 0.0
      %666 = vmatpush1.msra.mxu0 %v637
      %667 = vmatprep.subr.mxu0 0.0
      %668 = vmatpush1.msra.mxu0 %v638
      %669 = vmatprep.subr.mxu0 0.0
      %670 = vmatpush1.msra.mxu0 %v639
      %671 = vmatprep.subr.mxu0 0.0
      %672 = vmatpush1.msra.mxu0 %v640
      %673 = vmatprep.subr.mxu0 0.0
      %674 = vmatpush1.msra.mxu0 %v641
      %675 = vmatprep.subr.mxu0 0.0
      %676 = vmatpush1.msra.mxu0 0.0
      %677 = vmatprep.subr.mxu0 0.0
      %678 = vmatpush1.msra.mxu0 0.0
      %679 = vmatprep.subr.mxu0 0.0
      %680 = vmatpush1.msra.mxu0 0.0
      %681 = vmatprep.subr.mxu0 0.0
      %682 = vmatpush1.msra.mxu0 0.0
      %683 = vmatprep.subr.mxu0 0.0
      %684 = vmatpush1.msra.mxu0 0.0
      %685 = vmatprep.subr.mxu0 0.0
      %686 = vmatpush1.msra.mxu0 0.0
      %687 = vmatprep.subr.mxu0 0.0
      %688 = vmatpush1.msra.mxu0 0.0
      %689 = vmatprep.subr.mxu0 0.0
      %690 = vmatpush1.msra.mxu0 0.0
      %691 = vmatprep.subr.mxu0 0.0
      %692 = vmatpush1.msra.mxu0 0.0
      %693 = vmatprep.subr.mxu0 0.0
      %694 = vmatpush1.msra.mxu0 0.0
      %695 = vmatprep.subr.mxu0 0.0
      %696 = vmatpush1.msra.mxu0 0.0
      %697 = vmatprep.subr.mxu0 0.0
      %698 = vmatpush1.msra.mxu0 0.0
      %699 = vmatprep.subr.mxu0 0.0
      %700 = vmatpush1.msra.mxu0 0.0
      %701 = vmatprep.subr.mxu0 0.0
      %702 = vmatpush1.msra.mxu0 0.0
      %703 = vmatprep.subr.mxu0 0.0
      %704 = vmatpush1.msra.mxu0 0.0
      %705 = vmatprep.subr.mxu0 0.0
      %706 = vmatpush1.msra.mxu0 0.0
      %707 = vmatprep.subr.mxu0 0.0
      %708 = vmatpush1.msra.mxu0 0.0
      %709 = vmatprep.mubr.f32.mxu0 0.0
      %710 = vmatmul.mubr.f32.gmra.mrb[0].mxu0 %v643
      %v711 = vpop.f32.mrb[0].mxu0
      %v712 = vadd.f32 0.0, %v711
      %v713 = vpop.f32.mrb[0].mxu0
      %714 = vdwg.mxu0
      %v715 = vadd.f32 %v624, %v712
      %s716 = scalar_lea.vmem %s1, 720
      %v717 = vld [vmem:[%s716] sm:$0xff]
      %v718 = vld [vmem:[%s716 + $0x8] sm:$0xff]
      %v719 = vld [vmem:[%s716 + $0x10] sm:$0xff]
      %v720 = vld [vmem:[%s716 + $0x18] sm:$0xff]
      %v721 = vld [vmem:[%s716 + $0x20] sm:$0xff]
      %v722 = vld [vmem:[%s716 + $0x28] sm:$0xff]
      %v723 = vld [vmem:[%s716 + $0x30] sm:$0xff]
      %v724 = vld [vmem:[%s716 + $0x38] sm:$0xff]
      %v725 = vld [vmem:[%s716 + $0x40] sm:$0xff]
      %v726 = vld [vmem:[%s716 + $0x48] sm:$0xff]
      %v727 = vld [vmem:[%s716 + $0x50] sm:$0xff]
      %v728 = vld [vmem:[%s716 + $0x58] sm:$0xff]
      %v729 = vld [vmem:[%s716 + $0x60] sm:$0xff]
      %v730 = vld [vmem:[%s716 + $0x68] sm:$0xff]
      %v731 = vld [vmem:[%s716 + $0x70] sm:$0xff]
      %s732 = scalar_lea.vmem %s1, 840
      %v733 = vld [vmem:[%s732] sm:$0xff]
      %v734 = vld [vmem:[%s732 + $0x8] sm:$0xff]
      %v735 = vld [vmem:[%s732 + $0x10] sm:$0xff]
      %v736 = vld [vmem:[%s732 + $0x18] sm:$0xff]
      %v737 = vld [vmem:[%s732 + $0x20] sm:$0xff]
      %v738 = vld [vmem:[%s732 + $0x28] sm:$0xff]
      %v739 = vld [vmem:[%s732 + $0x30] sm:$0xff]
      %v740 = vld [vmem:[%s732 + $0x38] sm:$0xff]
      %v741 = vld [vmem:[%s732 + $0x40] sm:$0xff]
      %v742 = vld [vmem:[%s732 + $0x48] sm:$0xff]
      %v743 = vld [vmem:[%s732 + $0x50] sm:$0xff]
      %v744 = vld [vmem:[%s732 + $0x58] sm:$0xff]
      %v745 = vld [vmem:[%s732 + $0x60] sm:$0xff]
      %v746 = vld [vmem:[%s732 + $0x68] sm:$0xff]
      %v747 = vld [vmem:[%s732 + $0x70] sm:$0xff]
      %748 = vmatprep.subr.mxu0 0.0
      %749 = vmatpush1.msra.mxu0 %v733
      %750 = vmatprep.subr.mxu0 0.0
      %751 = vmatpush1.msra.mxu0 %v734
      %752 = vmatprep.subr.mxu0 0.0
      %753 = vmatpush1.msra.mxu0 %v735
      %754 = vmatprep.subr.mxu0 0.0
      %755 = vmatpush1.msra.mxu0 %v736
      %756 = vmatprep.subr.mxu0 0.0
      %757 = vmatpush1.msra.mxu0 %v737
      %758 = vmatprep.subr.mxu0 0.0
      %759 = vmatpush1.msra.mxu0 %v738
      %760 = vmatprep.subr.mxu0 0.0
      %761 = vmatpush1.msra.mxu0 %v739
      %762 = vmatprep.subr.mxu0 0.0
      %763 = vmatpush1.msra.mxu0 %v740
      %764 = vmatprep.subr.mxu0 0.0
      %765 = vmatpush1.msra.mxu0 %v741
      %766 = vmatprep.subr.mxu0 0.0
      %767 = vmatpush1.msra.mxu0 %v742
      %768 = vmatprep.subr.mxu0 0.0
      %769 = vmatpush1.msra.mxu0 %v743
      %770 = vmatprep.subr.mxu0 0.0
      %771 = vmatpush1.msra.mxu0 %v744
      %772 = vmatprep.subr.mxu0 0.0
      %773 = vmatpush1.msra.mxu0 %v745
      %774 = vmatprep.subr.mxu0 0.0
      %775 = vmatpush1.msra.mxu0 %v746
      %776 = vmatprep.subr.mxu0 0.0
      %777 = vmatpush1.msra.mxu0 %v747
      %778 = vmatprep.subr.mxu0 0.0
      %779 = vmatpush1.msra.mxu0 0.0
      %780 = vmatprep.subr.mxu0 0.0
      %781 = vmatpush1.msra.mxu0 0.0
      %782 = vmatprep.subr.mxu0 0.0
      %783 = vmatpush1.msra.mxu0 0.0
      %784 = vmatprep.subr.mxu0 0.0
      %785 = vmatpush1.msra.mxu0 0.0
      %786 = vmatprep.subr.mxu0 0.0
      %787 = vmatpush1.msra.mxu0 0.0
      %788 = vmatprep.subr.mxu0 0.0
      %789 = vmatpush1.msra.mxu0 0.0
      %790 = vmatprep.subr.mxu0 0.0
      %791 = vmatpush1.msra.mxu0 0.0
      %792 = vmatprep.subr.mxu0 0.0
      %793 = vmatpush1.msra.mxu0 0.0
      %794 = vmatprep.subr.mxu0 0.0
      %795 = vmatpush1.msra.mxu0 0.0
      %796 = vmatprep.subr.mxu0 0.0
      %797 = vmatpush1.msra.mxu0 0.0
      %798 = vmatprep.subr.mxu0 0.0
      %799 = vmatpush1.msra.mxu0 0.0
      %800 = vmatprep.subr.mxu0 0.0
      %801 = vmatpush1.msra.mxu0 0.0
      %802 = vmatprep.subr.mxu0 0.0
      %803 = vmatpush1.msra.mxu0 0.0
      %804 = vmatprep.subr.mxu0 0.0
      %805 = vmatpush1.msra.mxu0 0.0
      %806 = vmatprep.subr.mxu0 0.0
      %807 = vmatpush1.msra.mxu0 0.0
      %808 = vmatprep.subr.mxu0 0.0
      %809 = vmatpush1.msra.mxu0 0.0
      %810 = vmatprep.subr.mxu0 0.0
      %811 = vmatpush1.msra.mxu0 0.0
      %812 = vmatprep.mubr.f32.mxu0 0.0
      %813 = vmatmul.mubr.f32.gmra.mrb[0].mxu0 %v205
      %v814 = vpop.f32.mrb[0].mxu0
      %v815 = vadd.f32 0.0, %v814
      %v816 = vpop.f32.mrb[0].mxu0
      %817 = vdwg.mxu0
      %818 = vmatprep.subr.mxu0 0.0
      %819 = vmatpush1.msra.mxu0 %v717
      %820 = vmatprep.subr.mxu0 0.0
      %821 = vmatpush1.msra.mxu0 %v718
      %822 = vmatprep.subr.mxu0 0.0
      %823 = vmatpush1.msra.mxu0 %v719
      %824 = vmatprep.subr.mxu0 0.0
      %825 = vmatpush1.msra.mxu0 %v720
      %826 = vmatprep.subr.mxu0 0.0
      %827 = vmatpush1.msra.mxu0 %v721
      %828 = vmatprep.subr.mxu0 0.0
      %829 = vmatpush1.msra.mxu0 %v722
      %830 = vmatprep.subr.mxu0 0.0
      %831 = vmatpush1.msra.mxu0 %v723
      %832 = vmatprep.subr.mxu0 0.0
      %833 = vmatpush1.msra.mxu0 %v724
      %834 = vmatprep.subr.mxu0 0.0
      %835 = vmatpush1.msra.mxu0 %v725
      %836 = vmatprep.subr.mxu0 0.0
      %837 = vmatpush1.msra.mxu0 %v726
      %838 = vmatprep.subr.mxu0 0.0
      %839 = vmatpush1.msra.mxu0 %v727
      %840 = vmatprep.subr.mxu0 0.0
      %841 = vmatpush1.msra.mxu0 %v728
      %842 = vmatprep.subr.mxu0 0.0
      %843 = vmatpush1.msra.mxu0 %v729
      %844 = vmatprep.subr.mxu0 0.0
      %845 = vmatpush1.msra.mxu0 %v730
      %846 = vmatprep.subr.mxu0 0.0
      %847 = vmatpush1.msra.mxu0 %v731
      %848 = vmatprep.subr.mxu0 0.0
      %849 = vmatpush1.msra.mxu0 0.0
      %850 = vmatprep.subr.mxu0 0.0
      %851 = vmatpush1.msra.mxu0 0.0
      %852 = vmatprep.subr.mxu0 0.0
      %853 = vmatpush1.msra.mxu0 0.0
      %854 = vmatprep.subr.mxu0 0.0
      %855 = vmatpush1.msra.mxu0 0.0
      %856 = vmatprep.subr.mxu0 0.0
      %857 = vmatpush1.msra.mxu0 0.0
      %858 = vmatprep.subr.mxu0 0.0
      %859 = vmatpush1.msra.mxu0 0.0
      %860 = vmatprep.subr.mxu0 0.0
      %861 = vmatpush1.msra.mxu0 0.0
      %862 = vmatprep.subr.mxu0 0.0
      %863 = vmatpush1.msra.mxu0 0.0
      %864 = vmatprep.subr.mxu0 0.0
      %865 = vmatpush1.msra.mxu0 0.0
      %866 = vmatprep.subr.mxu0 0.0
      %867 = vmatpush1.msra.mxu0 0.0
      %868 = vmatprep.subr.mxu0 0.0
      %869 = vmatpush1.msra.mxu0 0.0
      %870 = vmatprep.subr.mxu0 0.0
      %871 = vmatpush1.msra.mxu0 0.0
      %872 = vmatprep.subr.mxu0 0.0
      %873 = vmatpush1.msra.mxu0 0.0
      %874 = vmatprep.subr.mxu0 0.0
      %875 = vmatpush1.msra.mxu0 0.0
      %876 = vmatprep.subr.mxu0 0.0
      %877 = vmatpush1.msra.mxu0 0.0
      %878 = vmatprep.subr.mxu0 0.0
      %879 = vmatpush1.msra.mxu0 0.0
      %880 = vmatprep.subr.mxu0 0.0
      %881 = vmatpush1.msra.mxu0 0.0
      %882 = vmatprep.mubr.f32.mxu0 0.0
      %883 = vmatmul.mubr.f32.gmra.mrb[0].mxu0 %v278
      %v884 = vpop.f32.mrb[0].mxu0
      %v885 = vadd.f32 %v815, %v884
      %v886 = vpop.f32.mrb[0].mxu0
      %887 = vdwg.mxu0
      %s888 = scalar_lea.vmem %s1, 960
      %v889 = vld [vmem:[%s888] sm:$0xff]
      %v890 = vld [vmem:[%s888 + $0x8] sm:$0xff]
      %v891 = vld [vmem:[%s888 + $0x10] sm:$0xff]
      %v892 = vld [vmem:[%s888 + $0x18] sm:$0xff]
      %v893 = vld [vmem:[%s888 + $0x20] sm:$0xff]
      %v894 = vld [vmem:[%s888 + $0x28] sm:$0xff]
      %v895 = vld [vmem:[%s888 + $0x30] sm:$0xff]
      %v896 = vld [vmem:[%s888 + $0x38] sm:$0xff]
      %v897 = vld [vmem:[%s888 + $0x40] sm:$0xff]
      %v898 = vld [vmem:[%s888 + $0x48] sm:$0xff]
      %v899 = vld [vmem:[%s888 + $0x50] sm:$0xff]
      %v900 = vld [vmem:[%s888 + $0x58] sm:$0xff]
      %v901 = vld [vmem:[%s888 + $0x60] sm:$0xff]
      %v902 = vld [vmem:[%s888 + $0x68] sm:$0xff]
      %v903 = vld [vmem:[%s888 + $0x70] sm:$0xff]
      %904 = vmatprep.subr.mxu0 0.0
      %905 = vmatpush1.msra.mxu0 %v889
      %906 = vmatprep.subr.mxu0 0.0
      %907 = vmatpush1.msra.mxu0 %v890
      %908 = vmatprep.subr.mxu0 0.0
      %909 = vmatpush1.msra.mxu0 %v891
      %910 = vmatprep.subr.mxu0 0.0
      %911 = vmatpush1.msra.mxu0 %v892
      %912 = vmatprep.subr.mxu0 0.0
      %913 = vmatpush1.msra.mxu0 %v893
      %914 = vmatprep.subr.mxu0 0.0
      %915 = vmatpush1.msra.mxu0 %v894
      %916 = vmatprep.subr.mxu0 0.0
      %917 = vmatpush1.msra.mxu0 %v895
      %918 = vmatprep.subr.mxu0 0.0
      %919 = vmatpush1.msra.mxu0 %v896
      %920 = vmatprep.subr.mxu0 0.0
      %921 = vmatpush1.msra.mxu0 %v897
      %922 = vmatprep.subr.mxu0 0.0
      %923 = vmatpush1.msra.mxu0 %v898
      %924 = vmatprep.subr.mxu0 0.0
      %925 = vmatpush1.msra.mxu0 %v899
      %926 = vmatprep.subr.mxu0 0.0
      %927 = vmatpush1.msra.mxu0 %v900
      %928 = vmatprep.subr.mxu0 0.0
      %929 = vmatpush1.msra.mxu0 %v901
      %930 = vmatprep.subr.mxu0 0.0
      %931 = vmatpush1.msra.mxu0 %v902
      %932 = vmatprep.subr.mxu0 0.0
      %933 = vmatpush1.msra.mxu0 %v903
      %934 = vmatprep.subr.mxu0 0.0
      %935 = vmatpush1.msra.mxu0 0.0
      %936 = vmatprep.subr.mxu0 0.0
      %937 = vmatpush1.msra.mxu0 0.0
      %938 = vmatprep.subr.mxu0 0.0
      %939 = vmatpush1.msra.mxu0 0.0
      %940 = vmatprep.subr.mxu0 0.0
      %941 = vmatpush1.msra.mxu0 0.0
      %942 = vmatprep.subr.mxu0 0.0
      %943 = vmatpush1.msra.mxu0 0.0
      %944 = vmatprep.subr.mxu0 0.0
      %945 = vmatpush1.msra.mxu0 0.0
      %946 = vmatprep.subr.mxu0 0.0
      %947 = vmatpush1.msra.mxu0 0.0
      %948 = vmatprep.subr.mxu0 0.0
      %949 = vmatpush1.msra.mxu0 0.0
      %950 = vmatprep.subr.mxu0 0.0
      %951 = vmatpush1.msra.mxu0 0.0
      %952 = vmatprep.subr.mxu0 0.0
      %953 = vmatpush1.msra.mxu0 0.0
      %954 = vmatprep.subr.mxu0 0.0
      %955 = vmatpush1.msra.mxu0 0.0
      %956 = vmatprep.subr.mxu0 0.0
      %957 = vmatpush1.msra.mxu0 0.0
      %958 = vmatprep.subr.mxu0 0.0
      %959 = vmatpush1.msra.mxu0 0.0
      %960 = vmatprep.subr.mxu0 0.0
      %961 = vmatpush1.msra.mxu0 0.0
      %962 = vmatprep.subr.mxu0 0.0
      %963 = vmatpush1.msra.mxu0 0.0
      %964 = vmatprep.subr.mxu0 0.0
      %965 = vmatpush1.msra.mxu0 0.0
      %966 = vmatprep.subr.mxu0 0.0
      %967 = vmatpush1.msra.mxu0 0.0
      %968 = vmatprep.mubr.f32.mxu0 0.0
      %969 = vmatmul.mubr.f32.gmra.mrb[0].mxu0 %v369
      %v970 = vpop.f32.mrb[0].mxu0
      %v971 = vadd.f32 0.0, %v970
      %v972 = vpop.f32.mrb[0].mxu0
      %973 = vdwg.mxu0
      %v974 = vadd.f32 %v885, %v971
      %s975 = scalar_lea.vmem %s1, 1080
      %v976 = vld [vmem:[%s975] sm:$0xff]
      %v977 = vld [vmem:[%s975 + $0x8] sm:$0xff]
      %v978 = vld [vmem:[%s975 + $0x10] sm:$0xff]
      %v979 = vld [vmem:[%s975 + $0x18] sm:$0xff]
      %v980 = vld [vmem:[%s975 + $0x20] sm:$0xff]
      %v981 = vld [vmem:[%s975 + $0x28] sm:$0xff]
      %v982 = vld [vmem:[%s975 + $0x30] sm:$0xff]
      %v983 = vld [vmem:[%s975 + $0x38] sm:$0xff]
      %v984 = vld [vmem:[%s975 + $0x40] sm:$0xff]
      %v985 = vld [vmem:[%s975 + $0x48] sm:$0xff]
      %v986 = vld [vmem:[%s975 + $0x50] sm:$0xff]
      %v987 = vld [vmem:[%s975 + $0x58] sm:$0xff]
      %v988 = vld [vmem:[%s975 + $0x60] sm:$0xff]
      %v989 = vld [vmem:[%s975 + $0x68] sm:$0xff]
      %v990 = vld [vmem:[%s975 + $0x70] sm:$0xff]
      %991 = vmatprep.subr.mxu0 0.0
      %992 = vmatpush1.msra.mxu0 %v976
      %993 = vmatprep.subr.mxu0 0.0
      %994 = vmatpush1.msra.mxu0 %v977
      %995 = vmatprep.subr.mxu0 0.0
      %996 = vmatpush1.msra.mxu0 %v978
      %997 = vmatprep.subr.mxu0 0.0
      %998 = vmatpush1.msra.mxu0 %v979
      %999 = vmatprep.subr.mxu0 0.0
      %1000 = vmatpush1.msra.mxu0 %v980
      %1001 = vmatprep.subr.mxu0 0.0
      %1002 = vmatpush1.msra.mxu0 %v981
      %1003 = vmatprep.subr.mxu0 0.0
      %1004 = vmatpush1.msra.mxu0 %v982
      %1005 = vmatprep.subr.mxu0 0.0
      %1006 = vmatpush1.msra.mxu0 %v983
      %1007 = vmatprep.subr.mxu0 0.0
      %1008 = vmatpush1.msra.mxu0 %v984
      %1009 = vmatprep.subr.mxu0 0.0
      %1010 = vmatpush1.msra.mxu0 %v985
      %1011 = vmatprep.subr.mxu0 0.0
      %1012 = vmatpush1.msra.mxu0 %v986
      %1013 = vmatprep.subr.mxu0 0.0
      %1014 = vmatpush1.msra.mxu0 %v987
      %1015 = vmatprep.subr.mxu0 0.0
      %1016 = vmatpush1.msra.mxu0 %v988
      %1017 = vmatprep.subr.mxu0 0.0
      %1018 = vmatpush1.msra.mxu0 %v989
      %1019 = vmatprep.subr.mxu0 0.0
      %1020 = vmatpush1.msra.mxu0 %v990
      %1021 = vmatprep.subr.mxu0 0.0
      %1022 = vmatpush1.msra.mxu0 0.0
      %1023 = vmatprep.subr.mxu0 0.0
      %1024 = vmatpush1.msra.mxu0 0.0
      %1025 = vmatprep.subr.mxu0 0.0
      %1026 = vmatpush1.msra.mxu0 0.0
      %1027 = vmatprep.subr.mxu0 0.0
      %1028 = vmatpush1.msra.mxu0 0.0
      %1029 = vmatprep.subr.mxu0 0.0
      %1030 = vmatpush1.msra.mxu0 0.0
      %1031 = vmatprep.subr.mxu0 0.0
      %1032 = vmatpush1.msra.mxu0 0.0
      %1033 = vmatprep.subr.mxu0 0.0
      %1034 = vmatpush1.msra.mxu0 0.0
      %1035 = vmatprep.subr.mxu0 0.0
      %1036 = vmatpush1.msra.mxu0 0.0
      %1037 = vmatprep.subr.mxu0 0.0
      %1038 = vmatpush1.msra.mxu0 0.0
      %1039 = vmatprep.subr.mxu0 0.0
      %1040 = vmatpush1.msra.mxu0 0.0
      %1041 = vmatprep.subr.mxu0 0.0
      %1042 = vmatpush1.msra.mxu0 0.0
      %1043 = vmatprep.subr.mxu0 0.0
      %1044 = vmatpush1.msra.mxu0 0.0
      %1045 = vmatprep.subr.mxu0 0.0
      %1046 = vmatpush1.msra.mxu0 0.0
      %1047 = vmatprep.subr.mxu0 0.0
      %1048 = vmatpush1.msra.mxu0 0.0
      %1049 = vmatprep.subr.mxu0 0.0
      %1050 = vmatpush1.msra.mxu0 0.0
      %1051 = vmatprep.subr.mxu0 0.0
      %1052 = vmatpush1.msra.mxu0 0.0
      %1053 = vmatprep.subr.mxu0 0.0
      %1054 = vmatpush1.msra.mxu0 0.0
      %1055 = vmatprep.mubr.f32.mxu0 0.0
      %1056 = vmatmul.mubr.f32.gmra.mrb[0].mxu0 %v461
      %v1057 = vpop.f32.mrb[0].mxu0
      %v1058 = vadd.f32 0.0, %v1057
      %v1059 = vpop.f32.mrb[0].mxu0
      %1060 = vdwg.mxu0
      %v1061 = vadd.f32 %v974, %v1058
      %s1062 = scalar_lea.vmem %s1, 1200
      %v1063 = vld [vmem:[%s1062] sm:$0xff]
      %v1064 = vld [vmem:[%s1062 + $0x8] sm:$0xff]
      %v1065 = vld [vmem:[%s1062 + $0x10] sm:$0xff]
      %v1066 = vld [vmem:[%s1062 + $0x18] sm:$0xff]
      %v1067 = vld [vmem:[%s1062 + $0x20] sm:$0xff]
      %v1068 = vld [vmem:[%s1062 + $0x28] sm:$0xff]
      %v1069 = vld [vmem:[%s1062 + $0x30] sm:$0xff]
      %v1070 = vld [vmem:[%s1062 + $0x38] sm:$0xff]
      %v1071 = vld [vmem:[%s1062 + $0x40] sm:$0xff]
      %v1072 = vld [vmem:[%s1062 + $0x48] sm:$0xff]
      %v1073 = vld [vmem:[%s1062 + $0x50] sm:$0xff]
      %v1074 = vld [vmem:[%s1062 + $0x58] sm:$0xff]
      %v1075 = vld [vmem:[%s1062 + $0x60] sm:$0xff]
      %v1076 = vld [vmem:[%s1062 + $0x68] sm:$0xff]
      %v1077 = vld [vmem:[%s1062 + $0x70] sm:$0xff]
      %1078 = vmatprep.subr.mxu0 0.0
      %1079 = vmatpush1.msra.mxu0 %v1063
      %1080 = vmatprep.subr.mxu0 0.0
      %1081 = vmatpush1.msra.mxu0 %v1064
      %1082 = vmatprep.subr.mxu0 0.0
      %1083 = vmatpush1.msra.mxu0 %v1065
      %1084 = vmatprep.subr.mxu0 0.0
      %1085 = vmatpush1.msra.mxu0 %v1066
      %1086 = vmatprep.subr.mxu0 0.0
      %1087 = vmatpush1.msra.mxu0 %v1067
      %1088 = vmatprep.subr.mxu0 0.0
      %1089 = vmatpush1.msra.mxu0 %v1068
      %1090 = vmatprep.subr.mxu0 0.0
      %1091 = vmatpush1.msra.mxu0 %v1069
      %1092 = vmatprep.subr.mxu0 0.0
      %1093 = vmatpush1.msra.mxu0 %v1070
      %1094 = vmatprep.subr.mxu0 0.0
      %1095 = vmatpush1.msra.mxu0 %v1071
      %1096 = vmatprep.subr.mxu0 0.0
      %1097 = vmatpush1.msra.mxu0 %v1072
      %1098 = vmatprep.subr.mxu0 0.0
      %1099 = vmatpush1.msra.mxu0 %v1073
      %1100 = vmatprep.subr.mxu0 0.0
      %1101 = vmatpush1.msra.mxu0 %v1074
      %1102 = vmatprep.subr.mxu0 0.0
      %1103 = vmatpush1.msra.mxu0 %v1075
      %1104 = vmatprep.subr.mxu0 0.0
      %1105 = vmatpush1.msra.mxu0 %v1076
      %1106 = vmatprep.subr.mxu0 0.0
      %1107 = vmatpush1.msra.mxu0 %v1077
      %1108 = vmatprep.subr.mxu0 0.0
      %1109 = vmatpush1.msra.mxu0 0.0
      %1110 = vmatprep.subr.mxu0 0.0
      %1111 = vmatpush1.msra.mxu0 0.0
      %1112 = vmatprep.subr.mxu0 0.0
      %1113 = vmatpush1.msra.mxu0 0.0
      %1114 = vmatprep.subr.mxu0 0.0
      %1115 = vmatpush1.msra.mxu0 0.0
      %1116 = vmatprep.subr.mxu0 0.0
      %1117 = vmatpush1.msra.mxu0 0.0
      %1118 = vmatprep.subr.mxu0 0.0
      %1119 = vmatpush1.msra.mxu0 0.0
      %1120 = vmatprep.subr.mxu0 0.0
      %1121 = vmatpush1.msra.mxu0 0.0
      %1122 = vmatprep.subr.mxu0 0.0
      %1123 = vmatpush1.msra.mxu0 0.0
      %1124 = vmatprep.subr.mxu0 0.0
      %1125 = vmatpush1.msra.mxu0 0.0
      %1126 = vmatprep.subr.mxu0 0.0
      %1127 = vmatpush1.msra.mxu0 0.0
      %1128 = vmatprep.subr.mxu0 0.0
      %1129 = vmatpush1.msra.mxu0 0.0
      %1130 = vmatprep.subr.mxu0 0.0
      %1131 = vmatpush1.msra.mxu0 0.0
      %1132 = vmatprep.subr.mxu0 0.0
      %1133 = vmatpush1.msra.mxu0 0.0
      %1134 = vmatprep.subr.mxu0 0.0
      %1135 = vmatpush1.msra.mxu0 0.0
      %1136 = vmatprep.subr.mxu0 0.0
      %1137 = vmatpush1.msra.mxu0 0.0
      %1138 = vmatprep.subr.mxu0 0.0
      %1139 = vmatpush1.msra.mxu0 0.0
      %1140 = vmatprep.subr.mxu0 0.0
      %1141 = vmatpush1.msra.mxu0 0.0
      %1142 = vmatprep.mubr.f32.mxu0 0.0
      %1143 = vmatmul.mubr.f32.gmra.mrb[0].mxu0 %v552
      %v1144 = vpop.f32.mrb[0].mxu0
      %v1145 = vadd.f32 0.0, %v1144
      %v1146 = vpop.f32.mrb[0].mxu0
      %1147 = vdwg.mxu0
      %v1148 = vadd.f32 %v1061, %v1145
      %s1149 = scalar_lea.vmem %s1, 1320
      %v1150 = vld [vmem:[%s1149] sm:$0xff]
      %v1151 = vld [vmem:[%s1149 + $0x8] sm:$0xff]
      %v1152 = vld [vmem:[%s1149 + $0x10] sm:$0xff]
      %v1153 = vld [vmem:[%s1149 + $0x18] sm:$0xff]
      %v1154 = vld [vmem:[%s1149 + $0x20] sm:$0xff]
      %v1155 = vld [vmem:[%s1149 + $0x28] sm:$0xff]
      %v1156 = vld [vmem:[%s1149 + $0x30] sm:$0xff]
      %v1157 = vld [vmem:[%s1149 + $0x38] sm:$0xff]
      %v1158 = vld [vmem:[%s1149 + $0x40] sm:$0xff]
      %v1159 = vld [vmem:[%s1149 + $0x48] sm:$0xff]
      %v1160 = vld [vmem:[%s1149 + $0x50] sm:$0xff]
      %v1161 = vld [vmem:[%s1149 + $0x58] sm:$0xff]
      %v1162 = vld [vmem:[%s1149 + $0x60] sm:$0xff]
      %v1163 = vld [vmem:[%s1149 + $0x68] sm:$0xff]
      %v1164 = vld [vmem:[%s1149 + $0x70] sm:$0xff]
      %1165 = vmatprep.subr.mxu0 0.0
      %1166 = vmatpush1.msra.mxu0 %v1150
      %1167 = vmatprep.subr.mxu0 0.0
      %1168 = vmatpush1.msra.mxu0 %v1151
      %1169 = vmatprep.subr.mxu0 0.0
      %1170 = vmatpush1.msra.mxu0 %v1152
      %1171 = vmatprep.subr.mxu0 0.0
      %1172 = vmatpush1.msra.mxu0 %v1153
      %1173 = vmatprep.subr.mxu0 0.0
      %1174 = vmatpush1.msra.mxu0 %v1154
      %1175 = vmatprep.subr.mxu0 0.0
      %1176 = vmatpush1.msra.mxu0 %v1155
      %1177 = vmatprep.subr.mxu0 0.0
      %1178 = vmatpush1.msra.mxu0 %v1156
      %1179 = vmatprep.subr.mxu0 0.0
      %1180 = vmatpush1.msra.mxu0 %v1157
      %1181 = vmatprep.subr.mxu0 0.0
      %1182 = vmatpush1.msra.mxu0 %v1158
      %1183 = vmatprep.subr.mxu0 0.0
      %1184 = vmatpush1.msra.mxu0 %v1159
      %1185 = vmatprep.subr.mxu0 0.0
      %1186 = vmatpush1.msra.mxu0 %v1160
      %1187 = vmatprep.subr.mxu0 0.0
      %1188 = vmatpush1.msra.mxu0 %v1161
      %1189 = vmatprep.subr.mxu0 0.0
      %1190 = vmatpush1.msra.mxu0 %v1162
      %1191 = vmatprep.subr.mxu0 0.0
      %1192 = vmatpush1.msra.mxu0 %v1163
      %1193 = vmatprep.subr.mxu0 0.0
      %1194 = vmatpush1.msra.mxu0 %v1164
      %1195 = vmatprep.subr.mxu0 0.0
      %1196 = vmatpush1.msra.mxu0 0.0
      %1197 = vmatprep.subr.mxu0 0.0
      %1198 = vmatpush1.msra.mxu0 0.0
      %1199 = vmatprep.subr.mxu0 0.0
      %1200 = vmatpush1.msra.mxu0 0.0
      %1201 = vmatprep.subr.mxu0 0.0
      %1202 = vmatpush1.msra.mxu0 0.0
      %1203 = vmatprep.subr.mxu0 0.0
      %1204 = vmatpush1.msra.mxu0 0.0
      %1205 = vmatprep.subr.mxu0 0.0
      %1206 = vmatpush1.msra.mxu0 0.0
      %1207 = vmatprep.subr.mxu0 0.0
      %1208 = vmatpush1.msra.mxu0 0.0
      %1209 = vmatprep.subr.mxu0 0.0
      %1210 = vmatpush1.msra.mxu0 0.0
      %1211 = vmatprep.subr.mxu0 0.0
      %1212 = vmatpush1.msra.mxu0 0.0
      %1213 = vmatprep.subr.mxu0 0.0
      %1214 = vmatpush1.msra.mxu0 0.0
      %1215 = vmatprep.subr.mxu0 0.0
      %1216 = vmatpush1.msra.mxu0 0.0
      %1217 = vmatprep.subr.mxu0 0.0
      %1218 = vmatpush1.msra.mxu0 0.0
      %1219 = vmatprep.subr.mxu0 0.0
      %1220 = vmatpush1.msra.mxu0 0.0
      %1221 = vmatprep.subr.mxu0 0.0
      %1222 = vmatpush1.msra.mxu0 0.0
      %1223 = vmatprep.subr.mxu0 0.0
      %1224 = vmatpush1.msra.mxu0 0.0
      %1225 = vmatprep.subr.mxu0 0.0
      %1226 = vmatpush1.msra.mxu0 0.0
      %1227 = vmatprep.subr.mxu0 0.0
      %1228 = vmatpush1.msra.mxu0 0.0
      %1229 = vmatprep.mubr.f32.mxu0 0.0
      %1230 = vmatmul.mubr.f32.gmra.mrb[0].mxu0 %v643
      %v1231 = vpop.f32.mrb[0].mxu0
      %v1232 = vadd.f32 0.0, %v1231
      %v1233 = vpop.f32.mrb[0].mxu0
      %1234 = vdwg.mxu0
      %v1235 = vadd.f32 %v1148, %v1232
      %v1236 = vmax.f32 %v715, %v1235
      %1237 = vmatprep.subr.mxu0 0.0
      %1238 = vmatpush1.msra.mxu0 %v188
      %1239 = vmatprep.subr.mxu0 0.0
      %1240 = vmatpush1.msra.mxu0 %v189
      %1241 = vmatprep.subr.mxu0 0.0
      %1242 = vmatpush1.msra.mxu0 %v190
      %1243 = vmatprep.subr.mxu0 0.0
      %1244 = vmatpush1.msra.mxu0 %v191
      %1245 = vmatprep.subr.mxu0 0.0
      %1246 = vmatpush1.msra.mxu0 %v192
      %1247 = vmatprep.subr.mxu0 0.0
      %1248 = vmatpush1.msra.mxu0 %v193
      %1249 = vmatprep.subr.mxu0 0.0
      %1250 = vmatpush1.msra.mxu0 %v194
      %1251 = vmatprep.subr.mxu0 0.0
      %1252 = vmatpush1.msra.mxu0 %v195
      %1253 = vmatprep.subr.mxu0 0.0
      %1254 = vmatpush1.msra.mxu0 %v196
      %1255 = vmatprep.subr.mxu0 0.0
      %1256 = vmatpush1.msra.mxu0 %v197
      %1257 = vmatprep.subr.mxu0 0.0
      %1258 = vmatpush1.msra.mxu0 %v198
      %1259 = vmatprep.subr.mxu0 0.0
      %1260 = vmatpush1.msra.mxu0 %v199
      %1261 = vmatprep.subr.mxu0 0.0
      %1262 = vmatpush1.msra.mxu0 %v200
      %1263 = vmatprep.subr.mxu0 0.0
      %1264 = vmatpush1.msra.mxu0 %v201
      %1265 = vmatprep.subr.mxu0 0.0
      %1266 = vmatpush1.msra.mxu0 %v202
      %1267 = vmatprep.subr.mxu0 0.0
      %1268 = vmatpush1.msra.mxu0 0.0
      %1269 = vmatprep.subr.mxu0 0.0
      %1270 = vmatpush1.msra.mxu0 0.0
      %1271 = vmatprep.subr.mxu0 0.0
      %1272 = vmatpush1.msra.mxu0 0.0
      %1273 = vmatprep.subr.mxu0 0.0
      %1274 = vmatpush1.msra.mxu0 0.0
      %1275 = vmatprep.subr.mxu0 0.0
      %1276 = vmatpush1.msra.mxu0 0.0
      %1277 = vmatprep.subr.mxu0 0.0
      %1278 = vmatpush1.msra.mxu0 0.0
      %1279 = vmatprep.subr.mxu0 0.0
      %1280 = vmatpush1.msra.mxu0 0.0
      %1281 = vmatprep.subr.mxu0 0.0
      %1282 = vmatpush1.msra.mxu0 0.0
      %1283 = vmatprep.subr.mxu0 0.0
      %1284 = vmatpush1.msra.mxu0 0.0
      %1285 = vmatprep.subr.mxu0 0.0
      %1286 = vmatpush1.msra.mxu0 0.0
      %1287 = vmatprep.subr.mxu0 0.0
      %1288 = vmatpush1.msra.mxu0 0.0
      %1289 = vmatprep.subr.mxu0 0.0
      %1290 = vmatpush1.msra.mxu0 0.0
      %1291 = vmatprep.subr.mxu0 0.0
      %1292 = vmatpush1.msra.mxu0 0.0
      %1293 = vmatprep.subr.mxu0 0.0
      %1294 = vmatpush1.msra.mxu0 0.0
      %1295 = vmatprep.subr.mxu0 0.0
      %1296 = vmatpush1.msra.mxu0 0.0
      %1297 = vmatprep.subr.mxu0 0.0
      %1298 = vmatpush1.msra.mxu0 0.0
      %1299 = vmatprep.subr.mxu0 0.0
      %1300 = vmatpush1.msra.mxu0 0.0
      %1301 = vmatprep.mubr.f32.mxu0 0.0
      %1302 = vmatmul.mubr.f32.gmra.mrb[0].mxu0 %v461
      %v1303 = vpop.f32.mrb[0].mxu0
      %v1304 = vadd.f32 0.0, %v1303
      %v1305 = vpop.f32.mrb[0].mxu0
      %1306 = vdwg.mxu0
      %1307 = vmatprep.subr.mxu0 0.0
      %1308 = vmatpush1.msra.mxu0 %v170
      %1309 = vmatprep.subr.mxu0 0.0
      %1310 = vmatpush1.msra.mxu0 %v171
      %1311 = vmatprep.subr.mxu0 0.0
      %1312 = vmatpush1.msra.mxu0 %v172
      %1313 = vmatprep.subr.mxu0 0.0
      %1314 = vmatpush1.msra.mxu0 %v173
      %1315 = vmatprep.subr.mxu0 0.0
      %1316 = vmatpush1.msra.mxu0 %v174
      %1317 = vmatprep.subr.mxu0 0.0
      %1318 = vmatpush1.msra.mxu0 %v175
      %1319 = vmatprep.subr.mxu0 0.0
      %1320 = vmatpush1.msra.mxu0 %v176
      %1321 = vmatprep.subr.mxu0 0.0
      %1322 = vmatpush1.msra.mxu0 %v177
      %1323 = vmatprep.subr.mxu0 0.0
      %1324 = vmatpush1.msra.mxu0 %v178
      %1325 = vmatprep.subr.mxu0 0.0
      %1326 = vmatpush1.msra.mxu0 %v179
      %1327 = vmatprep.subr.mxu0 0.0
      %1328 = vmatpush1.msra.mxu0 %v180
      %1329 = vmatprep.subr.mxu0 0.0
      %1330 = vmatpush1.msra.mxu0 %v181
      %1331 = vmatprep.subr.mxu0 0.0
      %1332 = vmatpush1.msra.mxu0 %v182
      %1333 = vmatprep.subr.mxu0 0.0
      %1334 = vmatpush1.msra.mxu0 %v183
      %1335 = vmatprep.subr.mxu0 0.0
      %1336 = vmatpush1.msra.mxu0 %v184
      %1337 = vmatprep.subr.mxu0 0.0
      %1338 = vmatpush1.msra.mxu0 0.0
      %1339 = vmatprep.subr.mxu0 0.0
      %1340 = vmatpush1.msra.mxu0 0.0
      %1341 = vmatprep.subr.mxu0 0.0
      %1342 = vmatpush1.msra.mxu0 0.0
      %1343 = vmatprep.subr.mxu0 0.0
      %1344 = vmatpush1.msra.mxu0 0.0
      %1345 = vmatprep.subr.mxu0 0.0
      %1346 = vmatpush1.msra.mxu0 0.0
      %1347 = vmatprep.subr.mxu0 0.0
      %1348 = vmatpush1.msra.mxu0 0.0
      %1349 = vmatprep.subr.mxu0 0.0
      %1350 = vmatpush1.msra.mxu0 0.0
      %1351 = vmatprep.subr.mxu0 0.0
      %1352 = vmatpush1.msra.mxu0 0.0
      %1353 = vmatprep.subr.mxu0 0.0
      %1354 = vmatpush1.msra.mxu0 0.0
      %1355 = vmatprep.subr.mxu0 0.0
      %1356 = vmatpush1.msra.mxu0 0.0
      %1357 = vmatprep.subr.mxu0 0.0
      %1358 = vmatpush1.msra.mxu0 0.0
      %1359 = vmatprep.subr.mxu0 0.0
      %1360 = vmatpush1.msra.mxu0 0.0
      %1361 = vmatprep.subr.mxu0 0.0
      %1362 = vmatpush1.msra.mxu0 0.0
      %1363 = vmatprep.subr.mxu0 0.0
      %1364 = vmatpush1.msra.mxu0 0.0
      %1365 = vmatprep.subr.mxu0 0.0
      %1366 = vmatpush1.msra.mxu0 0.0
      %1367 = vmatprep.subr.mxu0 0.0
      %1368 = vmatpush1.msra.mxu0 0.0
      %1369 = vmatprep.subr.mxu0 0.0
      %1370 = vmatpush1.msra.mxu0 0.0
      %1371 = vmatprep.mubr.f32.mxu0 0.0
      %1372 = vmatmul.mubr.f32.gmra.mrb[0].mxu0 %v369
      %v1373 = vpop.f32.mrb[0].mxu0
      %v1374 = vadd.f32 %v1304, %v1373
      %v1375 = vpop.f32.mrb[0].mxu0
      %1376 = vdwg.mxu0
      %1377 = vmatprep.subr.mxu0 0.0
      %1378 = vmatpush1.msra.mxu0 %v353
      %1379 = vmatprep.subr.mxu0 0.0
      %1380 = vmatpush1.msra.mxu0 %v354
      %1381 = vmatprep.subr.mxu0 0.0
      %1382 = vmatpush1.msra.mxu0 %v355
      %1383 = vmatprep.subr.mxu0 0.0
      %1384 = vmatpush1.msra.mxu0 %v356
      %1385 = vmatprep.subr.mxu0 0.0
      %1386 = vmatpush1.msra.mxu0 %v357
      %1387 = vmatprep.subr.mxu0 0.0
      %1388 = vmatpush1.msra.mxu0 %v358
      %1389 = vmatprep.subr.mxu0 0.0
      %1390 = vmatpush1.msra.mxu0 %v359
      %1391 = vmatprep.subr.mxu0 0.0
      %1392 = vmatpush1.msra.mxu0 %v360
      %1393 = vmatprep.subr.mxu0 0.0
      %1394 = vmatpush1.msra.mxu0 %v361
      %1395 = vmatprep.subr.mxu0 0.0
      %1396 = vmatpush1.msra.mxu0 %v362
      %1397 = vmatprep.subr.mxu0 0.0
      %1398 = vmatpush1.msra.mxu0 %v363
      %1399 = vmatprep.subr.mxu0 0.0
      %1400 = vmatpush1.msra.mxu0 %v364
      %1401 = vmatprep.subr.mxu0 0.0
      %1402 = vmatpush1.msra.mxu0 %v365
      %1403 = vmatprep.subr.mxu0 0.0
      %1404 = vmatpush1.msra.mxu0 %v366
      %1405 = vmatprep.subr.mxu0 0.0
      %1406 = vmatpush1.msra.mxu0 %v367
      %1407 = vmatprep.subr.mxu0 0.0
      %1408 = vmatpush1.msra.mxu0 0.0
      %1409 = vmatprep.subr.mxu0 0.0
      %1410 = vmatpush1.msra.mxu0 0.0
      %1411 = vmatprep.subr.mxu0 0.0
      %1412 = vmatpush1.msra.mxu0 0.0
      %1413 = vmatprep.subr.mxu0 0.0
      %1414 = vmatpush1.msra.mxu0 0.0
      %1415 = vmatprep.subr.mxu0 0.0
      %1416 = vmatpush1.msra.mxu0 0.0
      %1417 = vmatprep.subr.mxu0 0.0
      %1418 = vmatpush1.msra.mxu0 0.0
      %1419 = vmatprep.subr.mxu0 0.0
      %1420 = vmatpush1.msra.mxu0 0.0
      %1421 = vmatprep.subr.mxu0 0.0
      %1422 = vmatpush1.msra.mxu0 0.0
      %1423 = vmatprep.subr.mxu0 0.0
      %1424 = vmatpush1.msra.mxu0 0.0
      %1425 = vmatprep.subr.mxu0 0.0
      %1426 = vmatpush1.msra.mxu0 0.0
      %1427 = vmatprep.subr.mxu0 0.0
      %1428 = vmatpush1.msra.mxu0 0.0
      %1429 = vmatprep.subr.mxu0 0.0
      %1430 = vmatpush1.msra.mxu0 0.0
      %1431 = vmatprep.subr.mxu0 0.0
      %1432 = vmatpush1.msra.mxu0 0.0
      %1433 = vmatprep.subr.mxu0 0.0
      %1434 = vmatpush1.msra.mxu0 0.0
      %1435 = vmatprep.subr.mxu0 0.0
      %1436 = vmatpush1.msra.mxu0 0.0
      %1437 = vmatprep.subr.mxu0 0.0
      %1438 = vmatpush1.msra.mxu0 0.0
      %1439 = vmatprep.subr.mxu0 0.0
      %1440 = vmatpush1.msra.mxu0 0.0
      %1441 = vmatprep.mubr.f32.mxu0 0.0
      %1442 = vmatmul.mubr.f32.gmra.mrb[0].mxu0 %v552
      %v1443 = vpop.f32.mrb[0].mxu0
      %v1444 = vadd.f32 0.0, %v1443
      %v1445 = vpop.f32.mrb[0].mxu0
      %1446 = vdwg.mxu0
      %v1447 = vadd.f32 %v1374, %v1444
      %1448 = vmatprep.subr.mxu0 0.0
      %1449 = vmatpush1.msra.mxu0 %v445
      %1450 = vmatprep.subr.mxu0 0.0
      %1451 = vmatpush1.msra.mxu0 %v446
      %1452 = vmatprep.subr.mxu0 0.0
      %1453 = vmatpush1.msra.mxu0 %v447
      %1454 = vmatprep.subr.mxu0 0.0
      %1455 = vmatpush1.msra.mxu0 %v448
      %1456 = vmatprep.subr.mxu0 0.0
      %1457 = vmatpush1.msra.mxu0 %v449
      %1458 = vmatprep.subr.mxu0 0.0
      %1459 = vmatpush1.msra.mxu0 %v450
      %1460 = vmatprep.subr.mxu0 0.0
      %1461 = vmatpush1.msra.mxu0 %v451
      %1462 = vmatprep.subr.mxu0 0.0
      %1463 = vmatpush1.msra.mxu0 %v452
      %1464 = vmatprep.subr.mxu0 0.0
      %1465 = vmatpush1.msra.mxu0 %v453
      %1466 = vmatprep.subr.mxu0 0.0
      %1467 = vmatpush1.msra.mxu0 %v454
      %1468 = vmatprep.subr.mxu0 0.0
      %1469 = vmatpush1.msra.mxu0 %v455
      %1470 = vmatprep.subr.mxu0 0.0
      %1471 = vmatpush1.msra.mxu0 %v456
      %1472 = vmatprep.subr.mxu0 0.0
      %1473 = vmatpush1.msra.mxu0 %v457
      %1474 = vmatprep.subr.mxu0 0.0
      %1475 = vmatpush1.msra.mxu0 %v458
      %1476 = vmatprep.subr.mxu0 0.0
      %1477 = vmatpush1.msra.mxu0 %v459
      %1478 = vmatprep.subr.mxu0 0.0
      %1479 = vmatpush1.msra.mxu0 0.0
      %1480 = vmatprep.subr.mxu0 0.0
      %1481 = vmatpush1.msra.mxu0 0.0
      %1482 = vmatprep.subr.mxu0 0.0
      %1483 = vmatpush1.msra.mxu0 0.0
      %1484 = vmatprep.subr.mxu0 0.0
      %1485 = vmatpush1.msra.mxu0 0.0
      %1486 = vmatprep.subr.mxu0 0.0
      %1487 = vmatpush1.msra.mxu0 0.0
      %1488 = vmatprep.subr.mxu0 0.0
      %1489 = vmatpush1.msra.mxu0 0.0
      %1490 = vmatprep.subr.mxu0 0.0
      %1491 = vmatpush1.msra.mxu0 0.0
      %1492 = vmatprep.subr.mxu0 0.0
      %1493 = vmatpush1.msra.mxu0 0.0
      %1494 = vmatprep.subr.mxu0 0.0
      %1495 = vmatpush1.msra.mxu0 0.0
      %1496 = vmatprep.subr.mxu0 0.0
      %1497 = vmatpush1.msra.mxu0 0.0
      %1498 = vmatprep.subr.mxu0 0.0
      %1499 = vmatpush1.msra.mxu0 0.0
      %1500 = vmatprep.subr.mxu0 0.0
      %1501 = vmatpush1.msra.mxu0 0.0
      %1502 = vmatprep.subr.mxu0 0.0
      %1503 = vmatpush1.msra.mxu0 0.0
      %1504 = vmatprep.subr.mxu0 0.0
      %1505 = vmatpush1.msra.mxu0 0.0
      %1506 = vmatprep.subr.mxu0 0.0
      %1507 = vmatpush1.msra.mxu0 0.0
      %1508 = vmatprep.subr.mxu0 0.0
      %1509 = vmatpush1.msra.mxu0 0.0
      %1510 = vmatprep.subr.mxu0 0.0
      %1511 = vmatpush1.msra.mxu0 0.0
      %1512 = vmatprep.mubr.f32.mxu0 0.0
      %1513 = vmatmul.mubr.f32.gmra.mrb[0].mxu0 %v643
      %v1514 = vpop.f32.mrb[0].mxu0
      %v1515 = vadd.f32 0.0, %v1514
      %v1516 = vpop.f32.mrb[0].mxu0
      %1517 = vdwg.mxu0
      %v1518 = vadd.f32 %v1447, %v1515
      %v1519 = vld [vmem:[%s350 + $0x1] sm:$0xf]
      %v1521 = vsel %vm203, %v1519, 0
      %1523 = vmatprep.subr.mxu0 0.0
      %1524 = vmatpush1.msra.mxu0 %v536
      %1525 = vmatprep.subr.mxu0 0.0
      %1526 = vmatpush1.msra.mxu0 %v537
      %1527 = vmatprep.subr.mxu0 0.0
      %1528 = vmatpush1.msra.mxu0 %v538
      %1529 = vmatprep.subr.mxu0 0.0
      %1530 = vmatpush1.msra.mxu0 %v539
      %1531 = vmatprep.subr.mxu0 0.0
      %1532 = vmatpush1.msra.mxu0 %v540
      %1533 = vmatprep.subr.mxu0 0.0
      %1534 = vmatpush1.msra.mxu0 %v541
      %1535 = vmatprep.subr.mxu0 0.0
      %1536 = vmatpush1.msra.mxu0 %v542
      %1537 = vmatprep.subr.mxu0 0.0
      %1538 = vmatpush1.msra.mxu0 %v543
      %1539 = vmatprep.subr.mxu0 0.0
      %1540 = vmatpush1.msra.mxu0 %v544
      %1541 = vmatprep.subr.mxu0 0.0
      %1542 = vmatpush1.msra.mxu0 %v545
      %1543 = vmatprep.subr.mxu0 0.0
      %1544 = vmatpush1.msra.mxu0 %v546
      %1545 = vmatprep.subr.mxu0 0.0
      %1546 = vmatpush1.msra.mxu0 %v547
      %1547 = vmatprep.subr.mxu0 0.0
      %1548 = vmatpush1.msra.mxu0 %v548
      %1549 = vmatprep.subr.mxu0 0.0
      %1550 = vmatpush1.msra.mxu0 %v549
      %1551 = vmatprep.subr.mxu0 0.0
      %1552 = vmatpush1.msra.mxu0 %v550
      %1553 = vmatprep.subr.mxu0 0.0
      %1554 = vmatpush1.msra.mxu0 0.0
      %1555 = vmatprep.subr.mxu0 0.0
      %1556 = vmatpush1.msra.mxu0 0.0
      %1557 = vmatprep.subr.mxu0 0.0
      %1558 = vmatpush1.msra.mxu0 0.0
      %1559 = vmatprep.subr.mxu0 0.0
      %1560 = vmatpush1.msra.mxu0 0.0
      %1561 = vmatprep.subr.mxu0 0.0
      %1562 = vmatpush1.msra.mxu0 0.0
      %1563 = vmatprep.subr.mxu0 0.0
      %1564 = vmatpush1.msra.mxu0 0.0
      %1565 = vmatprep.subr.mxu0 0.0
      %1566 = vmatpush1.msra.mxu0 0.0
      %1567 = vmatprep.subr.mxu0 0.0
      %1568 = vmatpush1.msra.mxu0 0.0
      %1569 = vmatprep.subr.mxu0 0.0
      %1570 = vmatpush1.msra.mxu0 0.0
      %1571 = vmatprep.subr.mxu0 0.0
      %1572 = vmatpush1.msra.mxu0 0.0
      %1573 = vmatprep.subr.mxu0 0.0
      %1574 = vmatpush1.msra.mxu0 0.0
      %1575 = vmatprep.subr.mxu0 0.0
      %1576 = vmatpush1.msra.mxu0 0.0
      %1577 = vmatprep.subr.mxu0 0.0
      %1578 = vmatpush1.msra.mxu0 0.0
      %1579 = vmatprep.subr.mxu0 0.0
      %1580 = vmatpush1.msra.mxu0 0.0
      %1581 = vmatprep.subr.mxu0 0.0
      %1582 = vmatpush1.msra.mxu0 0.0
      %1583 = vmatprep.subr.mxu0 0.0
      %1584 = vmatpush1.msra.mxu0 0.0
      %1585 = vmatprep.subr.mxu0 0.0
      %1586 = vmatpush1.msra.mxu0 0.0
      %1587 = vmatprep.mubr.f32.mxu0 0.0
      %1588 = vmatmul.mubr.f32.gmra.mrb[0].mxu0 %v1521
      %v1589 = vpop.f32.mrb[0].mxu0
      %v1590 = vadd.f32 0.0, %v1589
      %v1591 = vpop.f32.mrb[0].mxu0
      %1592 = vdwg.mxu0
      %v1593 = vadd.f32 %v1518, %v1590
      %v1594 = vld [vmem:[%s442 + $0x1] sm:$0xf]
      %v1596 = vsel %vm203, %v1594, 0
      %1598 = vmatprep.subr.mxu0 0.0
      %1599 = vmatpush1.msra.mxu0 %v627
      %1600 = vmatprep.subr.mxu0 0.0
      %1601 = vmatpush1.msra.mxu0 %v628
      %1602 = vmatprep.subr.mxu0 0.0
      %1603 = vmatpush1.msra.mxu0 %v629
      %1604 = vmatprep.subr.mxu0 0.0
      %1605 = vmatpush1.msra.mxu0 %v630
      %1606 = vmatprep.subr.mxu0 0.0
      %1607 = vmatpush1.msra.mxu0 %v631
      %1608 = vmatprep.subr.mxu0 0.0
      %1609 = vmatpush1.msra.mxu0 %v632
      %1610 = vmatprep.subr.mxu0 0.0
      %1611 = vmatpush1.msra.mxu0 %v633
      %1612 = vmatprep.subr.mxu0 0.0
      %1613 = vmatpush1.msra.mxu0 %v634
      %1614 = vmatprep.subr.mxu0 0.0
      %1615 = vmatpush1.msra.mxu0 %v635
      %1616 = vmatprep.subr.mxu0 0.0
      %1617 = vmatpush1.msra.mxu0 %v636
      %1618 = vmatprep.subr.mxu0 0.0
      %1619 = vmatpush1.msra.mxu0 %v637
      %1620 = vmatprep.subr.mxu0 0.0
      %1621 = vmatpush1.msra.mxu0 %v638
      %1622 = vmatprep.subr.mxu0 0.0
      %1623 = vmatpush1.msra.mxu0 %v639
      %1624 = vmatprep.subr.mxu0 0.0
      %1625 = vmatpush1.msra.mxu0 %v640
      %1626 = vmatprep.subr.mxu0 0.0
      %1627 = vmatpush1.msra.mxu0 %v641
      %1628 = vmatprep.subr.mxu0 0.0
      %1629 = vmatpush1.msra.mxu0 0.0
      %1630 = vmatprep.subr.mxu0 0.0
      %1631 = vmatpush1.msra.mxu0 0.0
      %1632 = vmatprep.subr.mxu0 0.0
      %1633 = vmatpush1.msra.mxu0 0.0
      %1634 = vmatprep.subr.mxu0 0.0
      %1635 = vmatpush1.msra.mxu0 0.0
      %1636 = vmatprep.subr.mxu0 0.0
      %1637 = vmatpush1.msra.mxu0 0.0
      %1638 = vmatprep.subr.mxu0 0.0
      %1639 = vmatpush1.msra.mxu0 0.0
      %1640 = vmatprep.subr.mxu0 0.0
      %1641 = vmatpush1.msra.mxu0 0.0
      %1642 = vmatprep.subr.mxu0 0.0
      %1643 = vmatpush1.msra.mxu0 0.0
      %1644 = vmatprep.subr.mxu0 0.0
      %1645 = vmatpush1.msra.mxu0 0.0
      %1646 = vmatprep.subr.mxu0 0.0
      %1647 = vmatpush1.msra.mxu0 0.0
      %1648 = vmatprep.subr.mxu0 0.0
      %1649 = vmatpush1.msra.mxu0 0.0
      %1650 = vmatprep.subr.mxu0 0.0
      %1651 = vmatpush1.msra.mxu0 0.0
      %1652 = vmatprep.subr.mxu0 0.0
      %1653 = vmatpush1.msra.mxu0 0.0
      %1654 = vmatprep.subr.mxu0 0.0
      %1655 = vmatpush1.msra.mxu0 0.0
      %1656 = vmatprep.subr.mxu0 0.0
      %1657 = vmatpush1.msra.mxu0 0.0
      %1658 = vmatprep.subr.mxu0 0.0
      %1659 = vmatpush1.msra.mxu0 0.0
      %1660 = vmatprep.subr.mxu0 0.0
      %1661 = vmatpush1.msra.mxu0 0.0
      %1662 = vmatprep.mubr.f32.mxu0 0.0
      %1663 = vmatmul.mubr.f32.gmra.mrb[0].mxu0 %v1596
      %v1664 = vpop.f32.mrb[0].mxu0
      %v1665 = vadd.f32 0.0, %v1664
      %v1666 = vpop.f32.mrb[0].mxu0
      %1667 = vdwg.mxu0
      %v1668 = vadd.f32 %v1593, %v1665
      %v1669 = vmax.f32 %v1236, %v1668
      %1670 = vmatprep.subr.mxu0 0.0
      %1671 = vmatpush1.msra.mxu0 %v733
      %1672 = vmatprep.subr.mxu0 0.0
      %1673 = vmatpush1.msra.mxu0 %v734
      %1674 = vmatprep.subr.mxu0 0.0
      %1675 = vmatpush1.msra.mxu0 %v735
      %1676 = vmatprep.subr.mxu0 0.0
      %1677 = vmatpush1.msra.mxu0 %v736
      %1678 = vmatprep.subr.mxu0 0.0
      %1679 = vmatpush1.msra.mxu0 %v737
      %1680 = vmatprep.subr.mxu0 0.0
      %1681 = vmatpush1.msra.mxu0 %v738
      %1682 = vmatprep.subr.mxu0 0.0
      %1683 = vmatpush1.msra.mxu0 %v739
      %1684 = vmatprep.subr.mxu0 0.0
      %1685 = vmatpush1.msra.mxu0 %v740
      %1686 = vmatprep.subr.mxu0 0.0
      %1687 = vmatpush1.msra.mxu0 %v741
      %1688 = vmatprep.subr.mxu0 0.0
      %1689 = vmatpush1.msra.mxu0 %v742
      %1690 = vmatprep.subr.mxu0 0.0
      %1691 = vmatpush1.msra.mxu0 %v743
      %1692 = vmatprep.subr.mxu0 0.0
      %1693 = vmatpush1.msra.mxu0 %v744
      %1694 = vmatprep.subr.mxu0 0.0
      %1695 = vmatpush1.msra.mxu0 %v745
      %1696 = vmatprep.subr.mxu0 0.0
      %1697 = vmatpush1.msra.mxu0 %v746
      %1698 = vmatprep.subr.mxu0 0.0
      %1699 = vmatpush1.msra.mxu0 %v747
      %1700 = vmatprep.subr.mxu0 0.0
      %1701 = vmatpush1.msra.mxu0 0.0
      %1702 = vmatprep.subr.mxu0 0.0
      %1703 = vmatpush1.msra.mxu0 0.0
      %1704 = vmatprep.subr.mxu0 0.0
      %1705 = vmatpush1.msra.mxu0 0.0
      %1706 = vmatprep.subr.mxu0 0.0
      %1707 = vmatpush1.msra.mxu0 0.0
      %1708 = vmatprep.subr.mxu0 0.0
      %1709 = vmatpush1.msra.mxu0 0.0
      %1710 = vmatprep.subr.mxu0 0.0
      %1711 = vmatpush1.msra.mxu0 0.0
      %1712 = vmatprep.subr.mxu0 0.0
      %1713 = vmatpush1.msra.mxu0 0.0
      %1714 = vmatprep.subr.mxu0 0.0
      %1715 = vmatpush1.msra.mxu0 0.0
      %1716 = vmatprep.subr.mxu0 0.0
      %1717 = vmatpush1.msra.mxu0 0.0
      %1718 = vmatprep.subr.mxu0 0.0
      %1719 = vmatpush1.msra.mxu0 0.0
      %1720 = vmatprep.subr.mxu0 0.0
      %1721 = vmatpush1.msra.mxu0 0.0
      %1722 = vmatprep.subr.mxu0 0.0
      %1723 = vmatpush1.msra.mxu0 0.0
      %1724 = vmatprep.subr.mxu0 0.0
      %1725 = vmatpush1.msra.mxu0 0.0
      %1726 = vmatprep.subr.mxu0 0.0
      %1727 = vmatpush1.msra.mxu0 0.0
      %1728 = vmatprep.subr.mxu0 0.0
      %1729 = vmatpush1.msra.mxu0 0.0
      %1730 = vmatprep.subr.mxu0 0.0
      %1731 = vmatpush1.msra.mxu0 0.0
      %1732 = vmatprep.subr.mxu0 0.0
      %1733 = vmatpush1.msra.mxu0 0.0
      %1734 = vmatprep.mubr.f32.mxu0 0.0
      %1735 = vmatmul.mubr.f32.gmra.mrb[0].mxu0 %v461
      %v1736 = vpop.f32.mrb[0].mxu0
      %v1737 = vadd.f32 0.0, %v1736
      %v1738 = vpop.f32.mrb[0].mxu0
      %1739 = vdwg.mxu0
      %1740 = vmatprep.subr.mxu0 0.0
      %1741 = vmatpush1.msra.mxu0 %v717
      %1742 = vmatprep.subr.mxu0 0.0
      %1743 = vmatpush1.msra.mxu0 %v718
      %1744 = vmatprep.subr.mxu0 0.0
      %1745 = vmatpush1.msra.mxu0 %v719
      %1746 = vmatprep.subr.mxu0 0.0
      %1747 = vmatpush1.msra.mxu0 %v720
      %1748 = vmatprep.subr.mxu0 0.0
      %1749 = vmatpush1.msra.mxu0 %v721
      %1750 = vmatprep.subr.mxu0 0.0
      %1751 = vmatpush1.msra.mxu0 %v722
      %1752 = vmatprep.subr.mxu0 0.0
      %1753 = vmatpush1.msra.mxu0 %v723
      %1754 = vmatprep.subr.mxu0 0.0
      %1755 = vmatpush1.msra.mxu0 %v724
      %1756 = vmatprep.subr.mxu0 0.0
      %1757 = vmatpush1.msra.mxu0 %v725
      %1758 = vmatprep.subr.mxu0 0.0
      %1759 = vmatpush1.msra.mxu0 %v726
      %1760 = vmatprep.subr.mxu0 0.0
      %1761 = vmatpush1.msra.mxu0 %v727
      %1762 = vmatprep.subr.mxu0 0.0
      %1763 = vmatpush1.msra.mxu0 %v728
      %1764 = vmatprep.subr.mxu0 0.0
      %1765 = vmatpush1.msra.mxu0 %v729
      %1766 = vmatprep.subr.mxu0 0.0
      %1767 = vmatpush1.msra.mxu0 %v730
      %1768 = vmatprep.subr.mxu0 0.0
      %1769 = vmatpush1.msra.mxu0 %v731
      %1770 = vmatprep.subr.mxu0 0.0
      %1771 = vmatpush1.msra.mxu0 0.0
      %1772 = vmatprep.subr.mxu0 0.0
      %1773 = vmatpush1.msra.mxu0 0.0
      %1774 = vmatprep.subr.mxu0 0.0
      %1775 = vmatpush1.msra.mxu0 0.0
      %1776 = vmatprep.subr.mxu0 0.0
      %1777 = vmatpush1.msra.mxu0 0.0
      %1778 = vmatprep.subr.mxu0 0.0
      %1779 = vmatpush1.msra.mxu0 0.0
      %1780 = vmatprep.subr.mxu0 0.0
      %1781 = vmatpush1.msra.mxu0 0.0
      %1782 = vmatprep.subr.mxu0 0.0
      %1783 = vmatpush1.msra.mxu0 0.0
      %1784 = vmatprep.subr.mxu0 0.0
      %1785 = vmatpush1.msra.mxu0 0.0
      %1786 = vmatprep.subr.mxu0 0.0
      %1787 = vmatpush1.msra.mxu0 0.0
      %1788 = vmatprep.subr.mxu0 0.0
      %1789 = vmatpush1.msra.mxu0 0.0
      %1790 = vmatprep.subr.mxu0 0.0
      %1791 = vmatpush1.msra.mxu0 0.0
      %1792 = vmatprep.subr.mxu0 0.0
      %1793 = vmatpush1.msra.mxu0 0.0
      %1794 = vmatprep.subr.mxu0 0.0
      %1795 = vmatpush1.msra.mxu0 0.0
      %1796 = vmatprep.subr.mxu0 0.0
      %1797 = vmatpush1.msra.mxu0 0.0
      %1798 = vmatprep.subr.mxu0 0.0
      %1799 = vmatpush1.msra.mxu0 0.0
      %1800 = vmatprep.subr.mxu0 0.0
      %1801 = vmatpush1.msra.mxu0 0.0
      %1802 = vmatprep.subr.mxu0 0.0
      %1803 = vmatpush1.msra.mxu0 0.0
      %1804 = vmatprep.mubr.f32.mxu0 0.0
      %1805 = vmatmul.mubr.f32.gmra.mrb[0].mxu0 %v369
      %v1806 = vpop.f32.mrb[0].mxu0
      %v1807 = vadd.f32 %v1737, %v1806
      %v1808 = vpop.f32.mrb[0].mxu0
      %1809 = vdwg.mxu0
      %1810 = vmatprep.subr.mxu0 0.0
      %1811 = vmatpush1.msra.mxu0 %v889
      %1812 = vmatprep.subr.mxu0 0.0
      %1813 = vmatpush1.msra.mxu0 %v890
      %1814 = vmatprep.subr.mxu0 0.0
      %1815 = vmatpush1.msra.mxu0 %v891
      %1816 = vmatprep.subr.mxu0 0.0
      %1817 = vmatpush1.msra.mxu0 %v892
      %1818 = vmatprep.subr.mxu0 0.0
      %1819 = vmatpush1.msra.mxu0 %v893
      %1820 = vmatprep.subr.mxu0 0.0
      %1821 = vmatpush1.msra.mxu0 %v894
      %1822 = vmatprep.subr.mxu0 0.0
      %1823 = vmatpush1.msra.mxu0 %v895
      %1824 = vmatprep.subr.mxu0 0.0
      %1825 = vmatpush1.msra.mxu0 %v896
      %1826 = vmatprep.subr.mxu0 0.0
      %1827 = vmatpush1.msra.mxu0 %v897
      %1828 = vmatprep.subr.mxu0 0.0
      %1829 = vmatpush1.msra.mxu0 %v898
      %1830 = vmatprep.subr.mxu0 0.0
      %1831 = vmatpush1.msra.mxu0 %v899
      %1832 = vmatprep.subr.mxu0 0.0
      %1833 = vmatpush1.msra.mxu0 %v900
      %1834 = vmatprep.subr.mxu0 0.0
      %1835 = vmatpush1.msra.mxu0 %v901
      %1836 = vmatprep.subr.mxu0 0.0
      %1837 = vmatpush1.msra.mxu0 %v902
      %1838 = vmatprep.subr.mxu0 0.0
      %1839 = vmatpush1.msra.mxu0 %v903
      %1840 = vmatprep.subr.mxu0 0.0
      %1841 = vmatpush1.msra.mxu0 0.0
      %1842 = vmatprep.subr.mxu0 0.0
      %1843 = vmatpush1.msra.mxu0 0.0
      %1844 = vmatprep.subr.mxu0 0.0
      %1845 = vmatpush1.msra.mxu0 0.0
      %1846 = vmatprep.subr.mxu0 0.0
      %1847 = vmatpush1.msra.mxu0 0.0
      %1848 = vmatprep.subr.mxu0 0.0
      %1849 = vmatpush1.msra.mxu0 0.0
      %1850 = vmatprep.subr.mxu0 0.0
      %1851 = vmatpush1.msra.mxu0 0.0
      %1852 = vmatprep.subr.mxu0 0.0
      %1853 = vmatpush1.msra.mxu0 0.0
      %1854 = vmatprep.subr.mxu0 0.0
      %1855 = vmatpush1.msra.mxu0 0.0
      %1856 = vmatprep.subr.mxu0 0.0
      %1857 = vmatpush1.msra.mxu0 0.0
      %1858 = vmatprep.subr.mxu0 0.0
      %1859 = vmatpush1.msra.mxu0 0.0
      %1860 = vmatprep.subr.mxu0 0.0
      %1861 = vmatpush1.msra.mxu0 0.0
      %1862 = vmatprep.subr.mxu0 0.0
      %1863 = vmatpush1.msra.mxu0 0.0
      %1864 = vmatprep.subr.mxu0 0.0
      %1865 = vmatpush1.msra.mxu0 0.0
      %1866 = vmatprep.subr.mxu0 0.0
      %1867 = vmatpush1.msra.mxu0 0.0
      %1868 = vmatprep.subr.mxu0 0.0
      %1869 = vmatpush1.msra.mxu0 0.0
      %1870 = vmatprep.subr.mxu0 0.0
      %1871 = vmatpush1.msra.mxu0 0.0
      %1872 = vmatprep.subr.mxu0 0.0
      %1873 = vmatpush1.msra.mxu0 0.0
      %1874 = vmatprep.mubr.f32.mxu0 0.0
      %1875 = vmatmul.mubr.f32.gmra.mrb[0].mxu0 %v552
      %v1876 = vpop.f32.mrb[0].mxu0
      %v1877 = vadd.f32 0.0, %v1876
      %v1878 = vpop.f32.mrb[0].mxu0
      %1879 = vdwg.mxu0
      %v1880 = vadd.f32 %v1807, %v1877
      %1881 = vmatprep.subr.mxu0 0.0
      %1882 = vmatpush1.msra.mxu0 %v976
      %1883 = vmatprep.subr.mxu0 0.0
      %1884 = vmatpush1.msra.mxu0 %v977
      %1885 = vmatprep.subr.mxu0 0.0
      %1886 = vmatpush1.msra.mxu0 %v978
      %1887 = vmatprep.subr.mxu0 0.0
      %1888 = vmatpush1.msra.mxu0 %v979
      %1889 = vmatprep.subr.mxu0 0.0
      %1890 = vmatpush1.msra.mxu0 %v980
      %1891 = vmatprep.subr.mxu0 0.0
      %1892 = vmatpush1.msra.mxu0 %v981
      %1893 = vmatprep.subr.mxu0 0.0
      %1894 = vmatpush1.msra.mxu0 %v982
      %1895 = vmatprep.subr.mxu0 0.0
      %1896 = vmatpush1.msra.mxu0 %v983
      %1897 = vmatprep.subr.mxu0 0.0
      %1898 = vmatpush1.msra.mxu0 %v984
      %1899 = vmatprep.subr.mxu0 0.0
      %1900 = vmatpush1.msra.mxu0 %v985
      %1901 = vmatprep.subr.mxu0 0.0
      %1902 = vmatpush1.msra.mxu0 %v986
      %1903 = vmatprep.subr.mxu0 0.0
      %1904 = vmatpush1.msra.mxu0 %v987
      %1905 = vmatprep.subr.mxu0 0.0
      %1906 = vmatpush1.msra.mxu0 %v988
      %1907 = vmatprep.subr.mxu0 0.0
      %1908 = vmatpush1.msra.mxu0 %v989
      %1909 = vmatprep.subr.mxu0 0.0
      %1910 = vmatpush1.msra.mxu0 %v990
      %1911 = vmatprep.subr.mxu0 0.0
      %1912 = vmatpush1.msra.mxu0 0.0
      %1913 = vmatprep.subr.mxu0 0.0
      %1914 = vmatpush1.msra.mxu0 0.0
      %1915 = vmatprep.subr.mxu0 0.0
      %1916 = vmatpush1.msra.mxu0 0.0
      %1917 = vmatprep.subr.mxu0 0.0
      %1918 = vmatpush1.msra.mxu0 0.0
      %1919 = vmatprep.subr.mxu0 0.0
      %1920 = vmatpush1.msra.mxu0 0.0
      %1921 = vmatprep.subr.mxu0 0.0
      %1922 = vmatpush1.msra.mxu0 0.0
      %1923 = vmatprep.subr.mxu0 0.0
      %1924 = vmatpush1.msra.mxu0 0.0
      %1925 = vmatprep.subr.mxu0 0.0
      %1926 = vmatpush1.msra.mxu0 0.0
      %1927 = vmatprep.subr.mxu0 0.0
      %1928 = vmatpush1.msra.mxu0 0.0
      %1929 = vmatprep.subr.mxu0 0.0
      %1930 = vmatpush1.msra.mxu0 0.0
      %1931 = vmatprep.subr.mxu0 0.0
      %1932 = vmatpush1.msra.mxu0 0.0
      %1933 = vmatprep.subr.mxu0 0.0
      %1934 = vmatpush1.msra.mxu0 0.0
      %1935 = vmatprep.subr.mxu0 0.0
      %1936 = vmatpush1.msra.mxu0 0.0
      %1937 = vmatprep.subr.mxu0 0.0
      %1938 = vmatpush1.msra.mxu0 0.0
      %1939 = vmatprep.subr.mxu0 0.0
      %1940 = vmatpush1.msra.mxu0 0.0
      %1941 = vmatprep.subr.mxu0 0.0
      %1942 = vmatpush1.msra.mxu0 0.0
      %1943 = vmatprep.subr.mxu0 0.0
      %1944 = vmatpush1.msra.mxu0 0.0
      %1945 = vmatprep.mubr.f32.mxu0 0.0
      %1946 = vmatmul.mubr.f32.gmra.mrb[0].mxu0 %v643
      %v1947 = vpop.f32.mrb[0].mxu0
      %v1948 = vadd.f32 0.0, %v1947
      %v1949 = vpop.f32.mrb[0].mxu0
      %1950 = vdwg.mxu0
      %v1951 = vadd.f32 %v1880, %v1948
      %1952 = vmatprep.subr.mxu0 0.0
      %1953 = vmatpush1.msra.mxu0 %v1063
      %1954 = vmatprep.subr.mxu0 0.0
      %1955 = vmatpush1.msra.mxu0 %v1064
      %1956 = vmatprep.subr.mxu0 0.0
      %1957 = vmatpush1.msra.mxu0 %v1065
      %1958 = vmatprep.subr.mxu0 0.0
      %1959 = vmatpush1.msra.mxu0 %v1066
      %1960 = vmatprep.subr.mxu0 0.0
      %1961 = vmatpush1.msra.mxu0 %v1067
      %1962 = vmatprep.subr.mxu0 0.0
      %1963 = vmatpush1.msra.mxu0 %v1068
      %1964 = vmatprep.subr.mxu0 0.0
      %1965 = vmatpush1.msra.mxu0 %v1069
      %1966 = vmatprep.subr.mxu0 0.0
      %1967 = vmatpush1.msra.mxu0 %v1070
      %1968 = vmatprep.subr.mxu0 0.0
      %1969 = vmatpush1.msra.mxu0 %v1071
      %1970 = vmatprep.subr.mxu0 0.0
      %1971 = vmatpush1.msra.mxu0 %v1072
      %1972 = vmatprep.subr.mxu0 0.0
      %1973 = vmatpush1.msra.mxu0 %v1073
      %1974 = vmatprep.subr.mxu0 0.0
      %1975 = vmatpush1.msra.mxu0 %v1074
      %1976 = vmatprep.subr.mxu0 0.0
      %1977 = vmatpush1.msra.mxu0 %v1075
      %1978 = vmatprep.subr.mxu0 0.0
      %1979 = vmatpush1.msra.mxu0 %v1076
      %1980 = vmatprep.subr.mxu0 0.0
      %1981 = vmatpush1.msra.mxu0 %v1077
      %1982 = vmatprep.subr.mxu0 0.0
      %1983 = vmatpush1.msra.mxu0 0.0
      %1984 = vmatprep.subr.mxu0 0.0
      %1985 = vmatpush1.msra.mxu0 0.0
      %1986 = vmatprep.subr.mxu0 0.0
      %1987 = vmatpush1.msra.mxu0 0.0
      %1988 = vmatprep.subr.mxu0 0.0
      %1989 = vmatpush1.msra.mxu0 0.0
      %1990 = vmatprep.subr.mxu0 0.0
      %1991 = vmatpush1.msra.mxu0 0.0
      %1992 = vmatprep.subr.mxu0 0.0
      %1993 = vmatpush1.msra.mxu0 0.0
      %1994 = vmatprep.subr.mxu0 0.0
      %1995 = vmatpush1.msra.mxu0 0.0
      %1996 = vmatprep.subr.mxu0 0.0
      %1997 = vmatpush1.msra.mxu0 0.0
      %1998 = vmatprep.subr.mxu0 0.0
      %1999 = vmatpush1.msra.mxu0 0.0
      %2000 = vmatprep.subr.mxu0 0.0
      %2001 = vmatpush1.msra.mxu0 0.0
      %2002 = vmatprep.subr.mxu0 0.0
      %2003 = vmatpush1.msra.mxu0 0.0
      %2004 = vmatprep.subr.mxu0 0.0
      %2005 = vmatpush1.msra.mxu0 0.0
      %2006 = vmatprep.subr.mxu0 0.0
      %2007 = vmatpush1.msra.mxu0 0.0
      %2008 = vmatprep.subr.mxu0 0.0
      %2009 = vmatpush1.msra.mxu0 0.0
      %2010 = vmatprep.subr.mxu0 0.0
      %2011 = vmatpush1.msra.mxu0 0.0
      %2012 = vmatprep.subr.mxu0 0.0
      %2013 = vmatpush1.msra.mxu0 0.0
      %2014 = vmatprep.subr.mxu0 0.0
      %2015 = vmatpush1.msra.mxu0 0.0
      %2016 = vmatprep.mubr.f32.mxu0 0.0
      %2017 = vmatmul.mubr.f32.gmra.mrb[0].mxu0 %v1521
      %v2018 = vpop.f32.mrb[0].mxu0
      %v2019 = vadd.f32 0.0, %v2018
      %v2020 = vpop.f32.mrb[0].mxu0
      %2021 = vdwg.mxu0
      %v2022 = vadd.f32 %v1951, %v2019
      %2023 = vmatprep.subr.mxu0 0.0
      %2024 = vmatpush1.msra.mxu0 %v1150
      %2025 = vmatprep.subr.mxu0 0.0
      %2026 = vmatpush1.msra.mxu0 %v1151
      %2027 = vmatprep.subr.mxu0 0.0
      %2028 = vmatpush1.msra.mxu0 %v1152
      %2029 = vmatprep.subr.mxu0 0.0
      %2030 = vmatpush1.msra.mxu0 %v1153
      %2031 = vmatprep.subr.mxu0 0.0
      %2032 = vmatpush1.msra.mxu0 %v1154
      %2033 = vmatprep.subr.mxu0 0.0
      %2034 = vmatpush1.msra.mxu0 %v1155
      %2035 = vmatprep.subr.mxu0 0.0
      %2036 = vmatpush1.msra.mxu0 %v1156
      %2037 = vmatprep.subr.mxu0 0.0
      %2038 = vmatpush1.msra.mxu0 %v1157
      %2039 = vmatprep.subr.mxu0 0.0
      %2040 = vmatpush1.msra.mxu0 %v1158
      %2041 = vmatprep.subr.mxu0 0.0
      %2042 = vmatpush1.msra.mxu0 %v1159
      %2043 = vmatprep.subr.mxu0 0.0
      %2044 = vmatpush1.msra.mxu0 %v1160
      %2045 = vmatprep.subr.mxu0 0.0
      %2046 = vmatpush1.msra.mxu0 %v1161
      %2047 = vmatprep.subr.mxu0 0.0
      %2048 = vmatpush1.msra.mxu0 %v1162
      %2049 = vmatprep.subr.mxu0 0.0
      %2050 = vmatpush1.msra.mxu0 %v1163
      %2051 = vmatprep.subr.mxu0 0.0
      %2052 = vmatpush1.msra.mxu0 %v1164
      %2053 = vmatprep.subr.mxu0 0.0
      %2054 = vmatpush1.msra.mxu0 0.0
      %2055 = vmatprep.subr.mxu0 0.0
      %2056 = vmatpush1.msra.mxu0 0.0
      %2057 = vmatprep.subr.mxu0 0.0
      %2058 = vmatpush1.msra.mxu0 0.0
      %2059 = vmatprep.subr.mxu0 0.0
      %2060 = vmatpush1.msra.mxu0 0.0
      %2061 = vmatprep.subr.mxu0 0.0
      %2062 = vmatpush1.msra.mxu0 0.0
      %2063 = vmatprep.subr.mxu0 0.0
      %2064 = vmatpush1.msra.mxu0 0.0
      %2065 = vmatprep.subr.mxu0 0.0
      %2066 = vmatpush1.msra.mxu0 0.0
      %2067 = vmatprep.subr.mxu0 0.0
      %2068 = vmatpush1.msra.mxu0 0.0
      %2069 = vmatprep.subr.mxu0 0.0
      %2070 = vmatpush1.msra.mxu0 0.0
      %2071 = vmatprep.subr.mxu0 0.0
      %2072 = vmatpush1.msra.mxu0 0.0
      %2073 = vmatprep.subr.mxu0 0.0
      %2074 = vmatpush1.msra.mxu0 0.0
      %2075 = vmatprep.subr.mxu0 0.0
      %2076 = vmatpush1.msra.mxu0 0.0
      %2077 = vmatprep.subr.mxu0 0.0
      %2078 = vmatpush1.msra.mxu0 0.0
      %2079 = vmatprep.subr.mxu0 0.0
      %2080 = vmatpush1.msra.mxu0 0.0
      %2081 = vmatprep.subr.mxu0 0.0
      %2082 = vmatpush1.msra.mxu0 0.0
      %2083 = vmatprep.subr.mxu0 0.0
      %2084 = vmatpush1.msra.mxu0 0.0
      %2085 = vmatprep.subr.mxu0 0.0
      %2086 = vmatpush1.msra.mxu0 0.0
      %2087 = vmatprep.mubr.f32.mxu0 0.0
      %2088 = vmatmul.mubr.f32.gmra.mrb[0].mxu0 %v1596
      %v2089 = vpop.f32.mrb[0].mxu0
      %v2090 = vadd.f32 0.0, %v2089
      %v2091 = vpop.f32.mrb[0].mxu0
      %2092 = vdwg.mxu0
      %v2093 = vadd.f32 %v2022, %v2090
      %v2094 = vmax.f32 %v1669, %v2093
      %v2095 = vld [vmem:[%s2] sm:$0x1]
      %v2097 = vlaneseq
      %v2098 = vshrl.u32 %v2097, 7
      %v2099 = vsub.s32 0, %v2098
      %v2100 = vrot.slane %v2095, %v2099
      %v2102 = vadd.f32 %v2094, %v2100
      %v2103 = vmax.f32 %v2102, 0.0
      %vm2104 = vcmask 388096
      %2105 = vst.msk [vmem:[%s168] sm:$0xf] %vm2104, %v2103
      %p2106 = scmp.lt.s32.totalorder %s14, 1
      %s2107 = scalar_select %p2106, %s14, 1
      %s2108 = smul.addr %s2107, 4
      %s2109 = scalar_lea.vmem %s3, %s2108
      // Predicated region
      $region33: #{dainet3_forward.6} parent=31 // pred_check
        %p2110 = pneg %p100
      $region34: #{dainet3_forward.6} parent=31 // pred_check_branch
        %2112 = sbr.rel (%p2110) target = $region36
      $region35: #{dainet3_forward.6} parent=31 // pred_region
        _
      $region36: #{dainet3_forward.6} parent=31 // pred_fallthru
        _
    $region32: #{dainet3_forward.6} parent=5 // pred_fallthru
      _
    %p2113 = scmp.le.s32.totalorder 2, %s9
    // Predicated region
    $region37: #{dainet3_forward.6} parent=5 // pred_check
      %p2114 = pneg %p2113
    $region38: #{dainet3_forward.6} parent=5 // pred_check_branch
      %2116 = sbr.rel (%p2114) target = $region40
    $region39: #{dainet3_forward.6} parent=5 // pred_region
      %s2117 = ssub.s32 %s9, 2
      // Predicated region
      $region41: #{dainet3_forward.6} parent=39 // pred_check
        %p2118 = pneg %p106
      $region42: #{dainet3_forward.6} parent=39 // pred_check_branch
        %2120 = sbr.rel (%p2118) target = $region44
      $region43: #{dainet3_forward.6} parent=39 // pred_region
        %p2121 = scmp.lt.s32.totalorder %s15, 1
        %s2122 = scalar_select %p2121, %s15, 1
        %s2123 = smul.addr %s2122, 4
        %s2124 = scalar_lea.vmem %s3, %s2123
      $region44: #{dainet3_forward.6} parent=39 // pred_fallthru
        _
    $region40: #{dainet3_forward.6} parent=5 // pred_fallthru
      _
  $region6: #{dainet3_forward.6} parent=0 // loop_footer
    %s13 = sadd.s32 1, %s9
  $region7: #{dainet3_forward.6} parent=0 // loop_footer_branch
    %8 = sbr.rel target = $region3
  $region8: #{dainet3_forward.6} parent=0 // loop_exit
    _

// kernel: dainet3_forward.7
$region0: #{dainet3_forward.7}
  #allocation0 [shape = 'u32[]', space=smem, size = 0x4, offset = 0x4, fixed_abs, tag = 'smem constant byte address 0x4 - core index']
  #allocation1 [shape = 'u32[144,128]{1,0:T(1,128)}', space=vmem, size = 0x12000, scoped, tag = 'internal scratch']
  %s0 = inlined_call_operand.vmem [shape: f32[2,192], index: 0, kind: input, shape index: {}]
  %s1 = inlined_call_operand.vmem [shape: f32[192,128], index: 1, kind: input, shape index: {}]
  %s2 = inlined_call_operand.vmem [shape: f32[1,128], index: 2, kind: input, shape index: {}]
  %s3 = inlined_call_operand.vmem [shape: f32[128,84], index: 3, kind: input, shape index: {}]
  %s4 = inlined_call_operand.vmem [shape: f32[1,84], index: 4, kind: input, shape index: {}]
  %s5 = inlined_call_operand.vmem [shape: f32[84,10], index: 5, kind: input, shape index: {}]
  %s6 = inlined_call_operand.vmem [shape: f32[1,10], index: 6, kind: input, shape index: {}]
  %s7 = inlined_call_operand.hbm [shape: f32[2,10], index: 7, kind: output, shape index: {}]
  %s8 = sld [smem:[#allocation0]]
  $region38: #{dainet3_forward.7} parent=0
    _
  %s10 = ssub.s32 1, %s8
  %s11 = scalar_select 0, %s10, %s8
  $region1: #{dainet3_forward.7} parent=0
    #allocation2 [shape = 'u8[1024]{0}', space=vmem, size = 0x400, scoped, tag = 'output window, operand 0, single buffered']
    #allocation3 [shape = 's32[1]{0}', space=sflag, size = 0x4, scoped, tag = 'scoped memory for dainet3_forward.7']
    %12 = vsyncpa [#allocation3], 0
    // Predicated region
    $region2: #{dainet3_forward.7} parent=1 // pred_check
      _
    $region3: #{dainet3_forward.7} parent=1 // pred_check_branch
      %14 = sbr.rel (0) target = $region5
    $region4: #{dainet3_forward.7} parent=1 // pred_region
      _
    $region5: #{dainet3_forward.7} parent=1 // pred_fallthru
      _
    // Predicated region
    $region6: #{dainet3_forward.7} parent=1 // pred_check
      _
    $region7: #{dainet3_forward.7} parent=1 // pred_check_branch
      %16 = sbr.rel (0) target = $region9
    $region8: #{dainet3_forward.7} parent=1 // pred_region
      _
    $region9: #{dainet3_forward.7} parent=1 // pred_fallthru
      _
    // Predicated region
    $region10: #{dainet3_forward.7} parent=1 // pred_check
      _
    $region11: #{dainet3_forward.7} parent=1 // pred_check_branch
      %18 = sbr.rel (0) target = $region13
    $region12: #{dainet3_forward.7} parent=1 // pred_region
      _
    $region13: #{dainet3_forward.7} parent=1 // pred_fallthru
      _
    // Predicated region
    $region14: #{dainet3_forward.7} parent=1 // pred_check
      _
    $region15: #{dainet3_forward.7} parent=1 // pred_check_branch
      %20 = sbr.rel (0) target = $region17
    $region16: #{dainet3_forward.7} parent=1 // pred_region
      _
    $region17: #{dainet3_forward.7} parent=1 // pred_fallthru
      _
    // Predicated region
    $region18: #{dainet3_forward.7} parent=1 // pred_check
      _
    $region19: #{dainet3_forward.7} parent=1 // pred_check_branch
      %22 = sbr.rel (0) target = $region21
    $region20: #{dainet3_forward.7} parent=1 // pred_region
      _
    $region21: #{dainet3_forward.7} parent=1 // pred_fallthru
      _
    // Predicated region
    $region22: #{dainet3_forward.7} parent=1 // pred_check
      _
    $region23: #{dainet3_forward.7} parent=1 // pred_check_branch
      %24 = sbr.rel (0) target = $region25
    $region24: #{dainet3_forward.7} parent=1 // pred_region
      _
    $region25: #{dainet3_forward.7} parent=1 // pred_fallthru
      _
    // Predicated region
    $region26: #{dainet3_forward.7} parent=1 // pred_check
      _
    $region27: #{dainet3_forward.7} parent=1 // pred_check_branch
      %26 = sbr.rel (0) target = $region29
    $region28: #{dainet3_forward.7} parent=1 // pred_region
      _
    $region29: #{dainet3_forward.7} parent=1 // pred_fallthru
      _
    %v27 = vld [vmem:[%s0] sm:$0xf]
    %v28 = vld [vmem:[%s1] sm:$0xff]
    %v29 = vld [vmem:[%s1 + $0x8] sm:$0xff]
    %v30 = vld [vmem:[%s1 + $0x10] sm:$0xff]
    %v31 = vld [vmem:[%s1 + $0x18] sm:$0xff]
    %v32 = vld [vmem:[%s1 + $0x20] sm:$0xff]
    %v33 = vld [vmem:[%s1 + $0x28] sm:$0xff]
    %v34 = vld [vmem:[%s1 + $0x30] sm:$0xff]
    %v35 = vld [vmem:[%s1 + $0x38] sm:$0xff]
    %v36 = vld [vmem:[%s1 + $0x40] sm:$0xff]
    %v37 = vld [vmem:[%s1 + $0x48] sm:$0xff]
    %v38 = vld [vmem:[%s1 + $0x50] sm:$0xff]
    %v39 = vld [vmem:[%s1 + $0x58] sm:$0xff]
    %v40 = vld [vmem:[%s1 + $0x60] sm:$0xff]
    %v41 = vld [vmem:[%s1 + $0x68] sm:$0xff]
    %v42 = vld [vmem:[%s1 + $0x70] sm:$0xff]
    %v43 = vld [vmem:[%s1 + $0x78] sm:$0xff]
    %v44 = vld [vmem:[%s1 + $0x80] sm:$0xff]
    %v45 = vld [vmem:[%s1 + $0x88] sm:$0xff]
    %v46 = vld [vmem:[%s1 + $0x90] sm:$0xff]
    %v47 = vld [vmem:[%s1 + $0x98] sm:$0xff]
    %v48 = vld [vmem:[%s1 + $0xa0] sm:$0xff]
    %v49 = vld [vmem:[%s1 + $0xa8] sm:$0xff]
    %v50 = vld [vmem:[%s1 + $0xb0] sm:$0xff]
    %v51 = vld [vmem:[%s1 + $0xb8] sm:$0xff]
    %v52 = vld [vmem:[%s2] sm:$0x1]
    %v54 = vlaneseq
    %v55 = vshrl.u32 %v54, 7
    %v56 = vsub.s32 0, %v55
    %v57 = vrot.slane %v52, %v56
    %v61 = vunpack.c.l.s4 1983009808
    %v62 = vunpack.c.0.s8 %v61
    %v63 = vlaneseq
    %v64 = vshrl.u32 %v63, 7
    %v65 = vsub.s32 %v62, %v64
    %v66 = vrot.slane %v27, %v65
    %v67 = vcombine.high %v66, %v66
    %vm69 = vcmask 523264
    %v70 = vsel %vm69, %v67, 0
    %72 = vmatprep.subr.mxu0 0.0
    %73 = vmatpush1.msra.mxu0 %v28
    %74 = vmatprep.subr.mxu0 0.0
    %75 = vmatpush1.msra.mxu0 %v29
    %76 = vmatprep.subr.mxu0 0.0
    %77 = vmatpush1.msra.mxu0 %v30
    %78 = vmatprep.subr.mxu0 0.0
    %79 = vmatpush1.msra.mxu0 %v31
    %80 = vmatprep.subr.mxu0 0.0
    %81 = vmatpush1.msra.mxu0 %v32
    %82 = vmatprep.subr.mxu0 0.0
    %83 = vmatpush1.msra.mxu0 %v33
    %84 = vmatprep.subr.mxu0 0.0
    %85 = vmatpush1.msra.mxu0 %v34
    %86 = vmatprep.subr.mxu0 0.0
    %87 = vmatpush1.msra.mxu0 %v35
    %88 = vmatprep.subr.mxu0 0.0
    %89 = vmatpush1.msra.mxu0 %v36
    %90 = vmatprep.subr.mxu0 0.0
    %91 = vmatpush1.msra.mxu0 %v37
    %92 = vmatprep.subr.mxu0 0.0
    %93 = vmatpush1.msra.mxu0 %v38
    %94 = vmatprep.subr.mxu0 0.0
    %95 = vmatpush1.msra.mxu0 %v39
    %96 = vmatprep.subr.mxu0 0.0
    %97 = vmatpush1.msra.mxu0 %v40
    %98 = vmatprep.subr.mxu0 0.0
    %99 = vmatpush1.msra.mxu0 %v41
    %100 = vmatprep.subr.mxu0 0.0
    %101 = vmatpush1.msra.mxu0 %v42
    %102 = vmatprep.subr.mxu0 0.0
    %103 = vmatpush1.msra.mxu0 %v43
    %104 = vmatprep.subr.mxu0 0.0
    %105 = vmatpush1.msra.mxu0 %v44
    %106 = vmatprep.subr.mxu0 0.0
    %107 = vmatpush1.msra.mxu0 %v45
    %108 = vmatprep.subr.mxu0 0.0
    %109 = vmatpush1.msra.mxu0 %v46
    %110 = vmatprep.subr.mxu0 0.0
    %111 = vmatpush1.msra.mxu0 %v47
    %112 = vmatprep.subr.mxu0 0.0
    %113 = vmatpush1.msra.mxu0 %v48
    %114 = vmatprep.subr.mxu0 0.0
    %115 = vmatpush1.msra.mxu0 %v49
    %116 = vmatprep.subr.mxu0 0.0
    %117 = vmatpush1.msra.mxu0 %v50
    %118 = vmatprep.subr.mxu0 0.0
    %119 = vmatpush1.msra.mxu0 %v51
    %120 = vmatprep.subr.mxu0 0.0
    %121 = vmatpush1.msra.mxu0 0.0
    %122 = vmatprep.subr.mxu0 0.0
    %123 = vmatpush1.msra.mxu0 0.0
    %124 = vmatprep.subr.mxu0 0.0
    %125 = vmatpush1.msra.mxu0 0.0
    %126 = vmatprep.subr.mxu0 0.0
    %127 = vmatpush1.msra.mxu0 0.0
    %128 = vmatprep.subr.mxu0 0.0
    %129 = vmatpush1.msra.mxu0 0.0
    %130 = vmatprep.subr.mxu0 0.0
    %131 = vmatpush1.msra.mxu0 0.0
    %132 = vmatprep.subr.mxu0 0.0
    %133 = vmatpush1.msra.mxu0 0.0
    %134 = vmatprep.subr.mxu0 0.0
    %135 = vmatpush1.msra.mxu0 0.0
    %136 = vmatprep.mubr.f32.mxu0 %v70
    %137 = vmatmul.mubr.f32.gmra.mrb[0].mxu0 %v66
    %v138 = vpop.f32.mrb[0].mxu0
    %v139 = vadd.f32 %v57, %v138
    %v140 = vpop.f32.mrb[0].mxu0
    %141 = vdwg.mxu0
    %v142 = vmax.f32 %v139, 0.0
    %v143 = vld [vmem:[%s3] sm:$0xff]
    %v144 = vld [vmem:[%s3 + $0x8] sm:$0xff]
    %v145 = vld [vmem:[%s3 + $0x10] sm:$0xff]
    %v146 = vld [vmem:[%s3 + $0x18] sm:$0xff]
    %v147 = vld [vmem:[%s3 + $0x20] sm:$0xff]
    %v148 = vld [vmem:[%s3 + $0x28] sm:$0xff]
    %v149 = vld [vmem:[%s3 + $0x30] sm:$0xff]
    %v150 = vld [vmem:[%s3 + $0x38] sm:$0xff]
    %v151 = vld [vmem:[%s3 + $0x40] sm:$0xff]
    %v152 = vld [vmem:[%s3 + $0x48] sm:$0xff]
    %v153 = vld [vmem:[%s3 + $0x50] sm:$0xff]
    %v154 = vld [vmem:[%s3 + $0x58] sm:$0xff]
    %v155 = vld [vmem:[%s3 + $0x60] sm:$0xff]
    %v156 = vld [vmem:[%s3 + $0x68] sm:$0xff]
    %v157 = vld [vmem:[%s3 + $0x70] sm:$0xff]
    %v158 = vld [vmem:[%s3 + $0x78] sm:$0xff]
    %v159 = vld [vmem:[%s4] sm:$0x1]
    %v161 = vlaneseq
    %v162 = vshrl.u32 %v161, 7
    %v163 = vsub.s32 0, %v162
    %v164 = vrot.slane %v159, %v163
    %166 = vmatprep.subr.mxu0 0.0
    %167 = vmatpush1.msra.mxu0 %v143
    %168 = vmatprep.subr.mxu0 0.0
    %169 = vmatpush1.msra.mxu0 %v144
    %170 = vmatprep.subr.mxu0 0.0
    %171 = vmatpush1.msra.mxu0 %v145
    %172 = vmatprep.subr.mxu0 0.0
    %173 = vmatpush1.msra.mxu0 %v146
    %174 = vmatprep.subr.mxu0 0.0
    %175 = vmatpush1.msra.mxu0 %v147
    %176 = vmatprep.subr.mxu0 0.0
    %177 = vmatpush1.msra.mxu0 %v148
    %178 = vmatprep.subr.mxu0 0.0
    %179 = vmatpush1.msra.mxu0 %v149
    %180 = vmatprep.subr.mxu0 0.0
    %181 = vmatpush1.msra.mxu0 %v150
    %182 = vmatprep.subr.mxu0 0.0
    %183 = vmatpush1.msra.mxu0 %v151
    %184 = vmatprep.subr.mxu0 0.0
    %185 = vmatpush1.msra.mxu0 %v152
    %186 = vmatprep.subr.mxu0 0.0
    %187 = vmatpush1.msra.mxu0 %v153
    %188 = vmatprep.subr.mxu0 0.0
    %189 = vmatpush1.msra.mxu0 %v154
    %190 = vmatprep.subr.mxu0 0.0
    %191 = vmatpush1.msra.mxu0 %v155
    %192 = vmatprep.subr.mxu0 0.0
    %193 = vmatpush1.msra.mxu0 %v156
    %194 = vmatprep.subr.mxu0 0.0
    %195 = vmatpush1.msra.mxu0 %v157
    %196 = vmatprep.subr.mxu0 0.0
    %197 = vmatpush1.msra.mxu0 %v158
    %198 = vmatprep.subr.mxu0 0.0
    %199 = vmatpush1.msra.mxu0 0.0
    %200 = vmatprep.subr.mxu0 0.0
    %201 = vmatpush1.msra.mxu0 0.0
    %202 = vmatprep.subr.mxu0 0.0
    %203 = vmatpush1.msra.mxu0 0.0
    %204 = vmatprep.subr.mxu0 0.0
    %205 = vmatpush1.msra.mxu0 0.0
    %206 = vmatprep.subr.mxu0 0.0
    %207 = vmatpush1.msra.mxu0 0.0
    %208 = vmatprep.subr.mxu0 0.0
    %209 = vmatpush1.msra.mxu0 0.0
    %210 = vmatprep.subr.mxu0 0.0
    %211 = vmatpush1.msra.mxu0 0.0
    %212 = vmatprep.subr.mxu0 0.0
    %213 = vmatpush1.msra.mxu0 0.0
    %214 = vmatprep.subr.mxu0 0.0
    %215 = vmatpush1.msra.mxu0 0.0
    %216 = vmatprep.subr.mxu0 0.0
    %217 = vmatpush1.msra.mxu0 0.0
    %218 = vmatprep.subr.mxu0 0.0
    %219 = vmatpush1.msra.mxu0 0.0
    %220 = vmatprep.subr.mxu0 0.0
    %221 = vmatpush1.msra.mxu0 0.0
    %222 = vmatprep.subr.mxu0 0.0
    %223 = vmatpush1.msra.mxu0 0.0
    %224 = vmatprep.subr.mxu0 0.0
    %225 = vmatpush1.msra.mxu0 0.0
    %226 = vmatprep.subr.mxu0 0.0
    %227 = vmatpush1.msra.mxu0 0.0
    %228 = vmatprep.subr.mxu0 0.0
    %229 = vmatpush1.msra.mxu0 0.0
    %230 = vmatprep.mubr.f32.mxu0 0.0
    %231 = vmatmul.mubr.f32.gmra.mrb[0].mxu0 %v142
    %v232 = vpop.f32.mrb[0].mxu0
    %v233 = vadd.f32 %v164, %v232
    %v234 = vpop.f32.mrb[0].mxu0
    %235 = vdwg.mxu0
    %v236 = vmax.f32 %v233, 0.0
    %v237 = vld [vmem:[%s5] sm:$0xff]
    %v238 = vld [vmem:[%s5 + $0x8] sm:$0xff]
    %v239 = vld [vmem:[%s5 + $0x10] sm:$0xff]
    %v240 = vld [vmem:[%s5 + $0x18] sm:$0xff]
    %v241 = vld [vmem:[%s5 + $0x20] sm:$0xff]
    %v242 = vld [vmem:[%s5 + $0x28] sm:$0xff]
    %v243 = vld [vmem:[%s5 + $0x30] sm:$0xff]
    %v244 = vld [vmem:[%s5 + $0x38] sm:$0xff]
    %v245 = vld [vmem:[%s5 + $0x40] sm:$0xff]
    %v246 = vld [vmem:[%s5 + $0x48] sm:$0xff]
    %v247 = vld [vmem:[%s5 + $0x50] sm:$0xf]
    %v248 = vld [vmem:[%s6] sm:$0x1]
    %v250 = vlaneseq
    %v251 = vshrl.u32 %v250, 7
    %v252 = vsub.s32 0, %v251
    %v253 = vrot.slane %v248, %v252
    %vm255 = vcmask 687104
    %v257 = vsel %vm255, %v236, 0
    %vm259 = vcmask 1043456
    %v261 = vsel %vm259, %v247, 0
    %263 = vmatprep.subr.mxu0 0.0
    %264 = vmatpush1.msra.mxu0 %v237
    %265 = vmatprep.subr.mxu0 0.0
    %266 = vmatpush1.msra.mxu0 %v238
    %267 = vmatprep.subr.mxu0 0.0
    %268 = vmatpush1.msra.mxu0 %v239
    %269 = vmatprep.subr.mxu0 0.0
    %270 = vmatpush1.msra.mxu0 %v240
    %271 = vmatprep.subr.mxu0 0.0
    %272 = vmatpush1.msra.mxu0 %v241
    %273 = vmatprep.subr.mxu0 0.0
    %274 = vmatpush1.msra.mxu0 %v242
    %275 = vmatprep.subr.mxu0 0.0
    %276 = vmatpush1.msra.mxu0 %v243
    %277 = vmatprep.subr.mxu0 0.0
    %278 = vmatpush1.msra.mxu0 %v244
    %279 = vmatprep.subr.mxu0 0.0
    %280 = vmatpush1.msra.mxu0 %v245
    %281 = vmatprep.subr.mxu0 0.0
    %282 = vmatpush1.msra.mxu0 %v246
    %283 = vmatprep.subr.mxu0 0.0
    %284 = vmatpush1.msra.mxu0 %v261
    %285 = vmatprep.subr.mxu0 0.0
    %286 = vmatpush1.msra.mxu0 0.0
    %287 = vmatprep.subr.mxu0 0.0
    %288 = vmatpush1.msra.mxu0 0.0
    %289 = vmatprep.subr.mxu0 0.0
    %290 = vmatpush1.msra.mxu0 0.0
    %291 = vmatprep.subr.mxu0 0.0
    %292 = vmatpush1.msra.mxu0 0.0
    %293 = vmatprep.subr.mxu0 0.0
    %294 = vmatpush1.msra.mxu0 0.0
    %295 = vmatprep.subr.mxu0 0.0
    %296 = vmatpush1.msra.mxu0 0.0
    %297 = vmatprep.subr.mxu0 0.0
    %298 = vmatpush1.msra.mxu0 0.0
    %299 = vmatprep.subr.mxu0 0.0
    %300 = vmatpush1.msra.mxu0 0.0
    %301 = vmatprep.subr.mxu0 0.0
    %302 = vmatpush1.msra.mxu0 0.0
    %303 = vmatprep.subr.mxu0 0.0
    %304 = vmatpush1.msra.mxu0 0.0
    %305 = vmatprep.subr.mxu0 0.0
    %306 = vmatpush1.msra.mxu0 0.0
    %307 = vmatprep.subr.mxu0 0.0
    %308 = vmatpush1.msra.mxu0 0.0
    %309 = vmatprep.subr.mxu0 0.0
    %310 = vmatpush1.msra.mxu0 0.0
    %311 = vmatprep.subr.mxu0 0.0
    %312 = vmatpush1.msra.mxu0 0.0
    %313 = vmatprep.subr.mxu0 0.0
    %314 = vmatpush1.msra.mxu0 0.0
    %315 = vmatprep.subr.mxu0 0.0
    %316 = vmatpush1.msra.mxu0 0.0
    %317 = vmatprep.subr.mxu0 0.0
    %318 = vmatpush1.msra.mxu0 0.0
    %319 = vmatprep.subr.mxu0 0.0
    %320 = vmatpush1.msra.mxu0 0.0
    %321 = vmatprep.subr.mxu0 0.0
    %322 = vmatpush1.msra.mxu0 0.0
    %323 = vmatprep.subr.mxu0 0.0
    %324 = vmatpush1.msra.mxu0 0.0
    %325 = vmatprep.subr.mxu0 0.0
    %326 = vmatpush1.msra.mxu0 0.0
    %327 = vmatprep.mubr.f32.mxu0 0.0
    %328 = vmatmul.mubr.f32.gmra.mrb[0].mxu0 %v257
    %v329 = vpop.f32.mrb[0].mxu0
    %v330 = vadd.f32 %v253, %v329
    %v331 = vpop.f32.mrb[0].mxu0
    %332 = vdwg.mxu0
    %vm333 = vcmask 74752
    %334 = vst.msk [vmem:[#allocation2] sm:$0x3] %vm333, %v330
    // Predicated region
    $region30: #{dainet3_forward.7} parent=1 // pred_check
      _
    $region31: #{dainet3_forward.7} parent=1 // pred_check_branch
      %336 = sbr.rel (0) target = $region33
    $region32: #{dainet3_forward.7} parent=1 // pred_region
      %s338 = ssub.s32 32, 32
      %339 = vsyncadd [#allocation3], %s338
      %s341 = sshll.u32 [#allocation2], 4
      %s342 = int_to_ptr.vmem [resolvable:$true] %s341
      %344 = dma.vmem_to_hbm [thread:$0]  %s342, 32, %s7, [#allocation3]
    $region33: #{dainet3_forward.7} parent=1 // pred_fallthru
      _
    // Predicated region
    $region34: #{dainet3_forward.7} parent=1 // pred_check
      _
    $region35: #{dainet3_forward.7} parent=1 // pred_check_branch
      %346 = sbr.rel (0) target = $region37
    $region36: #{dainet3_forward.7} parent=1 // pred_region
      %347 = dma.done [#allocation3], 32
    $region37: #{dainet3_forward.7} parent=1 // pred_fallthru
      _
    %348 = vsyncpa [#allocation3], 1

</llo_original>
